<compile_context>
chip_gen: v5e
topology: v5e:2x2
jax: 0.10.0
libtpu: 0.0.40
codegen_flags: <defaults>
</compile_context>

<pallas_src>
import math
from functools import partial

import jax
import jax.numpy as jnp
from jax.experimental import pallas as pl
from jax.experimental.pallas import tpu as pltpu

EPS = 1e-5
NEG_INF = -1e9


# ----------------------------- tiling helpers ------------------------------

def _round_up(x, m):
    return ((x + m - 1) // m) * m


def _pick_tile(dim, target, align):
    """Largest tile <= target that is either the full dim or an aligned divisor."""
    if dim <= target:
        return dim
    t = (target // align) * align
    while t >= align:
        if dim % t == 0:
            return t
        t -= align
    # TODO(synk): pad awkward K / seq dims instead of a full-dim fallback.
    return dim


def _tile_pad(dim, target, align):
    """Pick a tile (multiple of `align`) and the padded dim it divides exactly."""
    t = min(target, _round_up(dim, align))
    return t, _round_up(dim, t)


def _pad_rows(x, mp):
    m = x.shape[0]
    return x if mp == m else jnp.pad(x, ((0, mp - m), (0, 0)))


# ----------------------------- Pallas kernels ------------------------------

def _matmul_bias_kernel(x_ref, w_ref, b_ref, o_ref, acc_ref):
    """o = x @ w + b, accumulated over the K grid axis (innermost)."""
    k = pl.program_id(2)

    @pl.when(k == 0)
    def _init():
        acc_ref[...] = jnp.zeros_like(acc_ref)

    acc_ref[...] += jnp.dot(
        x_ref[...].astype(jnp.bfloat16), w_ref[...].astype(jnp.bfloat16),
        preferred_element_type=jnp.float32)

    @pl.when(k == pl.num_programs(2) - 1)
    def _done():
        o_ref[...] = (acc_ref[...] + b_ref[...]).astype(o_ref.dtype)


def linear_bias(x2d, w, b, *, out_dtype=jnp.bfloat16, tm=512, tn=512, tk=512):
    """Tiled (M, N, K) matmul with bias; bf16 MXU inputs, f32 accumulation.

    M and N are padded to tile multiples (padding sliced off on return)."""
    M, K = x2d.shape
    _, N = w.shape
    tm, Mp = _tile_pad(M, tm, 16)
    tn, Np = _tile_pad(N, tn, 128)
    tk = _pick_tile(K, tk, 128)

    xp = _pad_rows(x2d, Mp)
    wp = w if Np == N else jnp.pad(w, ((0, 0), (0, Np - N)))
    bp = b if Np == N else jnp.pad(b, ((0, Np - N),))

    grid = (Mp // tm, Np // tn, K // tk)
    out = pl.pallas_call(
        _matmul_bias_kernel,
        out_shape=jax.ShapeDtypeStruct((Mp, Np), out_dtype),
        grid=grid,
        in_specs=[
            pl.BlockSpec((tm, tk), lambda i, j, k: (i, k)),
            pl.BlockSpec((tk, tn), lambda i, j, k: (k, j)),
            pl.BlockSpec((1, tn), lambda i, j, k: (0, j)),
        ],
        out_specs=pl.BlockSpec((tm, tn), lambda i, j, k: (i, j)),
        scratch_shapes=[pltpu.VMEM((tm, tn), jnp.float32)],
        compiler_params=pltpu.CompilerParams(
            dimension_semantics=("parallel", "parallel", "arbitrary")),
        cost_estimate=pl.CostEstimate(
            flops=2 * Mp * Np * K, transcendentals=0,
            bytes_accessed=2 * (Mp * K + K * Np + Mp * Np)),
    )(xp, wp, bp.reshape(1, Np))
    if Mp != M or Np != N:
        out = out[:M, :N]
    return out


def _matmul_res_ln_kernel(x_ref, w_ref, b_ref, r_ref, g_ref, bb_ref, o_ref, acc_ref):
    """o = LayerNorm(r + x @ w + b) * g + bb; K grid axis innermost."""
    k = pl.program_id(1)

    @pl.when(k == 0)
    def _init():
        acc_ref[...] = jnp.zeros_like(acc_ref)

    acc_ref[...] += jnp.dot(
        x_ref[...].astype(jnp.bfloat16), w_ref[...].astype(jnp.bfloat16),
        preferred_element_type=jnp.float32)

    @pl.when(k == pl.num_programs(1) - 1)
    def _done():
        y = acc_ref[...] + b_ref[...] + r_ref[...].astype(jnp.float32)
        mu = jnp.mean(y, axis=-1, keepdims=True)
        var = jnp.mean(jnp.square(y - mu), axis=-1, keepdims=True)
        o_ref[...] = ((y - mu) * jax.lax.rsqrt(var + EPS) * g_ref[...]
                      + bb_ref[...]).astype(o_ref.dtype)


def matmul_residual_ln(x2d, w, b, res2d, gamma, beta, *,
                       out_dtype=jnp.bfloat16, tm=256, tk=512):
    """Fused projection + residual + LayerNorm epilogue (N = d_model kept whole)."""
    M, K = x2d.shape
    _, N = w.shape
    tm, Mp = _tile_pad(M, tm, 16)
    tk = _pick_tile(K, tk, 128)
    xp = _pad_rows(x2d, Mp)
    rp = _pad_rows(res2d, Mp)

    grid = (Mp // tm, K // tk)
    out = pl.pallas_call(
        _matmul_res_ln_kernel,
        out_shape=jax.ShapeDtypeStruct((Mp, N), out_dtype),
        grid=grid,
        in_specs=[
            pl.BlockSpec((tm, tk), lambda i, k: (i, k)),
            pl.BlockSpec((tk, N), lambda i, k: (k, 0)),
            pl.BlockSpec((1, N), lambda i, k: (0, 0)),
            pl.BlockSpec((tm, N), lambda i, k: (i, 0)),
            pl.BlockSpec((1, N), lambda i, k: (0, 0)),
            pl.BlockSpec((1, N), lambda i, k: (0, 0)),
        ],
        out_specs=pl.BlockSpec((tm, N), lambda i, k: (i, 0)),
        scratch_shapes=[pltpu.VMEM((tm, N), jnp.float32)],
        compiler_params=pltpu.CompilerParams(
            dimension_semantics=("parallel", "arbitrary")),
    )(xp, w, b.reshape(1, N), rp, gamma.reshape(1, N), beta.reshape(1, N))
    return out if Mp == M else out[:M]


def _ffn_res_ln_kernel(x_ref, w1_ref, b1_ref, w2_ref, b2_ref, g_ref, bb_ref,
                       o_ref, acc_ref):
    """o = LayerNorm(x + relu(x@w1+b1)@w2 + b2)*g + bb, hidden dim tiled on axis 1."""
    f = pl.program_id(1)

    @pl.when(f == 0)
    def _init():
        acc_ref[...] = jnp.zeros_like(acc_ref)

    h = jnp.dot(x_ref[...].astype(jnp.bfloat16), w1_ref[...].astype(jnp.bfloat16),
                preferred_element_type=jnp.float32) + b1_ref[...]
    h = jnp.maximum(h, 0.0)
    acc_ref[...] += jnp.dot(h.astype(jnp.bfloat16), w2_ref[...].astype(jnp.bfloat16),
                            preferred_element_type=jnp.float32)

    @pl.when(f == pl.num_programs(1) - 1)
    def _done():
        y = acc_ref[...] + b2_ref[...] + x_ref[...].astype(jnp.float32)
        mu = jnp.mean(y, axis=-1, keepdims=True)
        var = jnp.mean(jnp.square(y - mu), axis=-1, keepdims=True)
        o_ref[...] = ((y - mu) * jax.lax.rsqrt(var + EPS) * g_ref[...]
                      + bb_ref[...]).astype(o_ref.dtype)


def ffn_residual_ln(x2d, w1, b1, w2, b2, gamma, beta, *,
                    out_dtype=jnp.bfloat16, tm=256, tf=512):
    """FFN fused with residual + LayerNorm; rows and the hidden dim are tiled
    (no giant resident weights -> fits scoped VMEM on v5e/v6e/v7x)."""
    M, D = x2d.shape
    F = w1.shape[1]
    tm, Mp = _tile_pad(M, tm, 16)
    tf = _pick_tile(F, tf, 128)
    xp = _pad_rows(x2d, Mp)

    grid = (Mp // tm, F // tf)
    out = pl.pallas_call(
        _ffn_res_ln_kernel,
        out_shape=jax.ShapeDtypeStruct((Mp, D), out_dtype),
        grid=grid,
        in_specs=[
            pl.BlockSpec((tm, D), lambda i, f: (i, 0)),
            pl.BlockSpec((D, tf), lambda i, f: (0, f)),
            pl.BlockSpec((1, tf), lambda i, f: (0, f)),
            pl.BlockSpec((tf, D), lambda i, f: (f, 0)),
            pl.BlockSpec((1, D), lambda i, f: (0, 0)),
            pl.BlockSpec((1, D), lambda i, f: (0, 0)),
            pl.BlockSpec((1, D), lambda i, f: (0, 0)),
        ],
        out_specs=pl.BlockSpec((tm, D), lambda i, f: (i, 0)),
        scratch_shapes=[pltpu.VMEM((tm, D), jnp.float32)],
        compiler_params=pltpu.CompilerParams(
            dimension_semantics=("parallel", "arbitrary")),
    )(xp, w1, b1.reshape(1, F), w2, b2.reshape(1, D),
      gamma.reshape(1, D), beta.reshape(1, D))
    return out if Mp == M else out[:M]


def _make_flash_attention_kernel(num_heads, d_head, causal, has_mask, tq, tkv):
    def kernel(*refs):
        if has_mask:
            q_ref, k_ref, v_ref, m_ref, o_ref, m_sc, l_sc, acc_sc = refs
        else:
            q_ref, k_ref, v_ref, o_ref, m_sc, l_sc, acc_sc = refs
        ki = pl.program_id(2)

        @pl.when(ki == 0)
        def _init():
            m_sc[...] = jnp.full_like(m_sc, -1e30)
            l_sc[...] = jnp.zeros_like(l_sc)
            acc_sc[...] = jnp.zeros_like(acc_sc)

        q = q_ref[0]                       # [tq, D]  (D = H*Dh on the lane axis)
        k = k_ref[0]                       # [tkv, D]
        v = v_ref[0]                       # [tkv, D]
        Dh = d_head
        scale = 1.0 / math.sqrt(Dh)

        bias = None
        if has_mask:
            # NOTE: mask is treated as an additive float bias (0 / -1e9), matching
            # the additive-mask convention; boolean PyTorch masks must be converted
            # by the caller.
            bias = m_ref[...]
        if causal:
            q0 = pl.program_id(1) * tq
            k0 = ki * tkv
            qi = q0 + jax.lax.broadcasted_iota(jnp.int32, (tq, tkv), 0)
            kj = k0 + jax.lax.broadcasted_iota(jnp.int32, (tq, tkv), 1)
            cb = jnp.where(kj <= qi, 0.0, NEG_INF).astype(jnp.float32)
            bias = cb if bias is None else bias + cb

        # TODO(synk): switch to lax.fori_loop over heads (pl.ds head slices) for
        # very large head counts to bound live ranges.
        for h in range(num_heads):
            lo, hi = h * Dh, (h + 1) * Dh
            qh = q[:, lo:hi].astype(jnp.bfloat16)
            kh = k[:, lo:hi].astype(jnp.bfloat16)
            vh = v[:, lo:hi].astype(jnp.bfloat16)
            s = jax.lax.dot_general(
                qh, kh, (((1,), (1,)), ((), ())),
                preferred_element_type=jnp.float32) * scale
            if bias is not None:
                s = s + bias
            m_prev = m_sc[h]                                   # (tq, 1)
            m_new = jnp.maximum(m_prev, jnp.max(s, axis=-1, keepdims=True))
            alpha = jnp.exp(m_prev - m_new)
            p = jnp.exp(s - m_new)
            l_sc[h] = alpha * l_sc[h] + jnp.sum(p, axis=-1, keepdims=True)
            acc_sc[:, lo:hi] = alpha * acc_sc[:, lo:hi] + jnp.dot(
                p.astype(jnp.bfloat16), vh, preferred_element_type=jnp.float32)
            m_sc[h] = m_new

        @pl.when(ki == pl.num_programs(2) - 1)
        def _done():
            outs = []
            for h in range(num_heads):
                lo, hi = h * Dh, (h + 1) * Dh
                inv_l = pl.reciprocal(l_sc[h], approx=True)
                outs.append(acc_sc[:, lo:hi] * inv_l)
            # Single full-width (lane-dense over D) store.
            o_ref[0] = jnp.concatenate(outs, axis=-1).astype(o_ref.dtype)

    return kernel


def attention(q_arr, k_arr, v_arr, num_heads, *, d_model, q_col=0, k_col=0,
              v_col=0, mask=None, causal=False, tq=256, tkv=512,
              out_dtype=jnp.bfloat16):
    """Flash-style multi-head attention in [B, S, D] layout.

    q_arr / k_arr / v_arr may be fused projection outputs ([B,S,3D] or [B,S,2D]);
    *_col selects the D-wide column block via the BlockSpec index_map so no XLA
    slicing / extra HBM pass is needed."""
    B, Sq = q_arr.shape[0], q_arr.shape[1]
    Sk = k_arr.shape[1]
    D = d_model
    Dh = D // num_heads
    tq = _pick_tile(Sq, tq, 16)
    tkv = _pick_tile(Sk, tkv, 128)
    has_mask = mask is not None

    kernel = _make_flash_attention_kernel(num_heads, Dh, causal, has_mask, tq, tkv)
    in_specs = [
        pl.BlockSpec((1, tq, D), lambda b, qi, ki: (b, qi, q_col)),
        pl.BlockSpec((1, tkv, D), lambda b, qi, ki: (b, ki, k_col)),
        pl.BlockSpec((1, tkv, D), lambda b, qi, ki: (b, ki, v_col)),
    ]
    args = [q_arr, k_arr, v_arr]
    if has_mask:
        # TODO(synk): for key-padding masks, prefetch per-batch lengths via
        # PrefetchScalarGridSpec and build the bias in-kernel instead of a dense mask.
        in_specs.append(pl.BlockSpec((tq, tkv), lambda b, qi, ki: (qi, ki)))
        args.append(mask.astype(jnp.float32))

    grid = (B, Sq // tq, Sk // tkv)
    return pl.pallas_call(
        kernel,
        out_shape=jax.ShapeDtypeStruct((B, Sq, D), out_dtype),
        grid=grid,
        in_specs=in_specs,
        out_specs=pl.BlockSpec((1, tq, D), lambda b, qi, ki: (b, qi, 0)),
        scratch_shapes=[
            pltpu.VMEM((num_heads, tq, 1), jnp.float32),   # running max
            pltpu.VMEM((num_heads, tq, 1), jnp.float32),   # running denom
            pltpu.VMEM((tq, D), jnp.float32),              # running numerator
        ],
        compiler_params=pltpu.CompilerParams(
            dimension_semantics=("parallel", "parallel", "arbitrary")),
    )(*args)


# ----------------------------- Model (JAX glue) -----------------------------

def self_attention_residual_ln(x, ap, ln_g, ln_b, num_heads, mask=None, causal=False):
    """LayerNorm(x + SelfAttn(x) @ Wo + bo)  (post-LN; dropout(p=0) == identity)."""
    B, S, D = x.shape
    x2d = x.reshape(B * S, D)
    qkv = linear_bias(x2d, ap["w_qkv"], ap["b_qkv"]).reshape(B, S, 3 * D)
    if D % 128 == 0:
        o = attention(qkv, qkv, qkv, num_heads, d_model=D,
                      q_col=0, k_col=1, v_col=2, mask=mask, causal=causal)
    else:
        q = qkv[:, :, 0:D]
        k = qkv[:, :, D:2 * D]
        v = qkv[:, :, 2 * D:]
        o = attention(q, k, v, num_heads, d_model=D, mask=mask, causal=causal)
    y = matmul_residual_ln(o.reshape(B * S, D), ap["wo"], ap["bo"], x2d, ln_g, ln_b)
    return y.reshape(B, S, D)


def cross_attention_residual_ln(x, memory, ap, ln_g, ln_b, num_heads, mask=None):
    """LayerNorm(x + CrossAttn(x, memory) @ Wo + bo)."""
    B, Sq, D = x.shape
    Sk = memory.shape[1]
    x2d = x.reshape(B * Sq, D)
    m2d = memory.reshape(B * Sk, D)
    q = linear_bias(x2d, ap["wq"], ap["bq"]).reshape(B, Sq, D)
    kv = linear_bias(m2d, ap["w_kv"], ap["b_kv"]).reshape(B, Sk, 2 * D)
    if D % 128 == 0:
        o = attention(q, kv, kv, num_heads, d_model=D,
                      q_col=0, k_col=0, v_col=1, mask=mask, causal=False)
    else:
        k = kv[:, :, 0:D]
        v = kv[:, :, D:]
        o = attention(q, k, v, num_heads, d_model=D, mask=mask, causal=False)
    y = matmul_residual_ln(o.reshape(B * Sq, D), ap["wo"], ap["bo"], x2d, ln_g, ln_b)
    return y.reshape(B, Sq, D)


def encoder_layer_forward(x, p, num_heads, mask=None):
    x = self_attention_residual_ln(x, p["attn"], p["ln1_g"], p["ln1_b"],
                                   num_heads, mask=mask, causal=False)
    B, S, D = x.shape
    y = ffn_residual_ln(x.reshape(B * S, D), p["ff_w1"], p["ff_b1"],
                        p["ff_w2"], p["ff_b2"], p["ln2_g"], p["ln2_b"])
    return y.reshape(B, S, D)


def decoder_layer_forward(x, memory, p, num_heads, self_mask=None,
                          self_causal=False, cross_mask=None):
    x = self_attention_residual_ln(x, p["self_attn"], p["ln1_g"], p["ln1_b"],
                                   num_heads, mask=self_mask, causal=self_causal)
    x = cross_attention_residual_ln(x, memory, p["cross_attn"], p["ln2_g"],
                                    p["ln2_b"], num_heads, mask=cross_mask)
    B, S, D = x.shape
    y = ffn_residual_ln(x.reshape(B * S, D), p["ff_w1"], p["ff_b1"],
                        p["ff_w2"], p["ff_b2"], p["ln3_g"], p["ln3_b"])
    return y.reshape(B, S, D)


def transformer_forward(params, src_tokens, tgt_tokens, num_heads,
                        src_mask=None, tgt_mask=None, tgt_causal=False,
                        memory_mask=None):
    B, S_src = src_tokens.shape
    _, S_tgt = tgt_tokens.shape
    vocab, D = params["tok_emb"].shape

    def embed(tokens):
        # CombinedEmbedding: token embedding + learned positional embedding
        # (gather left to XLA; not the matmul hot path). bf16 activations downstream.
        S = tokens.shape[1]
        e = jnp.take(params["tok_emb"], tokens, axis=0) + params["pos_emb"][:S][None]
        return e.astype(jnp.bfloat16)

    memory = embed(src_tokens)
    for layer in params["encoder_layers"]:
        memory = encoder_layer_forward(memory, layer, num_heads, mask=src_mask)

    # Cross-attention mask must be (S_tgt, S_src). Prefer an explicit memory_mask;
    # reuse src_mask only when its shape actually matches.
    cross_mask = memory_mask
    if cross_mask is None and src_mask is not None and src_mask.shape == (S_tgt, S_src):
        cross_mask = src_mask
    # TODO(synk): derive a (S_tgt, S_src) key-padding cross mask from a src padding
    # mask when S_tgt != S_src (PyTorch uses a separate memory_mask for this).

    out = embed(tgt_tokens)
    for layer in params["decoder_layers"]:
        out = decoder_layer_forward(out, memory, layer, num_heads,
                                    self_mask=tgt_mask, self_causal=tgt_causal,
                                    cross_mask=cross_mask)

    logits = linear_bias(out.reshape(B * S_tgt, D), params["out_w"],
                         params["out_b"], out_dtype=jnp.float32)
    return logits.reshape(B, S_tgt, vocab)


# ----------------------------- Parameter init -------------------------------

def init_params(key, vocab_size, d_model, n_heads, num_enc, num_dec, d_ff, max_len):
    keys = iter(jax.random.split(key, 4096))

    def nk():
        return next(keys)

    def wmat(din, dout):
        # Matmul weights stored in bf16 (MXU-native inputs, half the HBM bytes).
        return (0.02 * jax.random.normal(nk(), (din, dout), jnp.float32)).astype(jnp.bfloat16)

    def zeros(n):
        return jnp.zeros((n,), jnp.float32)

    def ln():
        return jnp.ones((d_model,), jnp.float32), jnp.zeros((d_model,), jnp.float32)

    def self_attn():
        return dict(
            w_qkv=jnp.concatenate([wmat(d_model, d_model) for _ in range(3)], axis=1),
            b_qkv=zeros(3 * d_model),
            wo=wmat(d_model, d_model), bo=zeros(d_model))

    def cross_attn():
        return dict(
            wq=wmat(d_model, d_model), bq=zeros(d_model),
            w_kv=jnp.concatenate([wmat(d_model, d_model) for _ in range(2)], axis=1),
            b_kv=zeros(2 * d_model),
            wo=wmat(d_model, d_model), bo=zeros(d_model))

    def enc_layer():
        g1, b1 = ln()
        g2, b2 = ln()
        return dict(attn=self_attn(), ln1_g=g1, ln1_b=b1, ln2_g=g2, ln2_b=b2,
                    ff_w1=wmat(d_model, d_ff), ff_b1=zeros(d_ff),
                    ff_w2=wmat(d_ff, d_model), ff_b2=zeros(d_model))

    def dec_layer():
        g1, b1 = ln()
        g2, b2 = ln()
        g3, b3 = ln()
        return dict(self_attn=self_attn(), cross_attn=cross_attn(),
                    ln1_g=g1, ln1_b=b1, ln2_g=g2, ln2_b=b2, ln3_g=g3, ln3_b=b3,
                    ff_w1=wmat(d_model, d_ff), ff_b1=zeros(d_ff),
                    ff_w2=wmat(d_ff, d_model), ff_b2=zeros(d_model))

    return dict(
        tok_emb=0.02 * jax.random.normal(nk(), (vocab_size, d_model), jnp.float32),
        pos_emb=0.02 * jax.random.normal(nk(), (max_len, d_model), jnp.float32),
        encoder_layers=[enc_layer() for _ in range(num_enc)],
        decoder_layers=[dec_layer() for _ in range(num_dec)],
        out_w=wmat(d_model, vocab_size), out_b=zeros(vocab_size),
    )


# ---------------------------------- Main ------------------------------------

if __name__ == "__main__":
    # Small but 128-lane-aligned d_model so the fused QKV -> attention
    # column-block path (no XLA slicing) is exercised.
    VOCAB, D_MODEL, N_HEADS, D_FF, MAX_LEN = 512, 128, 4, 256, 16
    N_ENC, N_DEC = 2, 2
    B, S_SRC, S_TGT = 2, 8, 8

    key = jax.random.PRNGKey(0)
    pkey, skey, tkey = jax.random.split(key, 3)
    params = init_params(pkey, VOCAB, D_MODEL, N_HEADS, N_ENC, N_DEC, D_FF, MAX_LEN)

    src = jax.random.randint(skey, (B, S_SRC), 0, VOCAB, dtype=jnp.int32)
    tgt = jax.random.randint(tkey, (B, S_TGT), 0, VOCAB, dtype=jnp.int32)

    # Decoder self-attention uses the in-kernel causal mask (no dense HBM mask).
    fwd = jax.jit(partial(transformer_forward, num_heads=N_HEADS,
                          src_mask=None, tgt_mask=None, tgt_causal=True))
    logits = fwd(params, src, tgt)
    jax.block_until_ready(logits)

    assert logits.shape == (B, S_TGT, VOCAB), logits.shape
    assert bool(jnp.all(jnp.isfinite(logits)))
    print("KERNEL_OK")
</pallas_src>

<mosaic_0001>
module attributes {stable_mosaic.version = 11 : i64} {
  func.func @_matmul_bias_kernel(%arg0: i32, %arg1: i32, %arg2: i32, %arg3: memref<16x128xbf16, #tpu.memory_space<vmem>>, %arg4: memref<128x384xbf16, #tpu.memory_space<vmem>>, %arg5: memref<1x384xf32, #tpu.memory_space<vmem>>, %arg6: memref<16x384xbf16, #tpu.memory_space<vmem>>, %arg7: memref<16x384xf32, #tpu.memory_space<vmem>>) attributes {dimension_semantics = [#tpu.dimension_semantics<parallel>, #tpu.dimension_semantics<parallel>, #tpu.dimension_semantics<arbitrary>], iteration_bounds = array<i64: 1, 1, 1>, scalar_prefetch = 0 : i64, scratch_operands = 1 : i64, tpu.core_type = #tpu.core_type<tc>, window_params = [{transform_indices = @transform_0, window_bounds = array<i64: 16, 128>}, {transform_indices = @transform_1, window_bounds = array<i64: 128, 384>}, {transform_indices = @transform_2, window_bounds = array<i64: 1, 384>}, {transform_indices = @transform_3, window_bounds = array<i64: 16, 384>}]} {
    %c0_i32 = arith.constant 0 : i32
    %0 = arith.cmpi eq, %arg2, %c0_i32 : i32
    %1 = arith.extui %0 : i1 to i32
    %c0_i32_0 = arith.constant 0 : i32
    %2 = arith.cmpi ne, %1, %c0_i32_0 : i32
    scf.if %2 {
      %cst_10 = arith.constant 0.000000e+00 : f32
      %12 = vector.broadcast %cst_10 : f32 to vector<16x384xf32>
      %c0_11 = arith.constant 0 : index
      %c0_12 = arith.constant 0 : index
      %13 = vector.load %arg7[%c0_11, %c0_12] : memref<16x384xf32, #tpu.memory_space<vmem>>, vector<16x384xf32>
      tpu.vector_store %arg7[%c0_11, %c0_12], %12 {strides = array<i32>} : memref<16x384xf32, #tpu.memory_space<vmem>>, vector<16x384xf32>,
    } else {
    }
    %c0 = arith.constant 0 : index
    %c0_1 = arith.constant 0 : index
    %3 = vector.load %arg7[%c0, %c0_1] : memref<16x384xf32, #tpu.memory_space<vmem>>, vector<16x384xf32>
    %c0_2 = arith.constant 0 : index
    %c0_3 = arith.constant 0 : index
    %4 = vector.load %arg3[%c0_2, %c0_3] : memref<16x128xbf16, #tpu.memory_space<vmem>>, vector<16x128xbf16>
    %c0_4 = arith.constant 0 : index
    %c0_5 = arith.constant 0 : index
    %5 = vector.load %arg4[%c0_4, %c0_5] : memref<128x384xbf16, #tpu.memory_space<vmem>>, vector<128x384xbf16>
    %cst = arith.constant dense<0.000000e+00> : vector<16x384xf32>
    %6 = tpu.matmul %4, %5, %cst {dimension_numbers = #tpu.dot_dimension_numbers<[1], [0], [0], [1], [0, 0, 1, 1], [], []>} : vector<16x128xbf16>, vector<128x384xbf16>, vector<16x384xf32> -> vector<16x384xf32>
    %7 = arith.addf %3, %6 : vector<16x384xf32>
    %c0_6 = arith.constant 0 : index
    %c0_7 = arith.constant 0 : index
    %8 = vector.load %arg7[%c0_6, %c0_7] : memref<16x384xf32, #tpu.memory_space<vmem>>, vector<16x384xf32>
    tpu.vector_store %arg7[%c0_6, %c0_7], %7 {strides = array<i32>} : memref<16x384xf32, #tpu.memory_space<vmem>>, vector<16x384xf32>,
    %c0_i32_8 = arith.constant 0 : i32
    %9 = arith.cmpi eq, %arg2, %c0_i32_8 : i32
    %10 = arith.extui %9 : i1 to i32
    %c0_i32_9 = arith.constant 0 : i32
    %11 = arith.cmpi ne, %10, %c0_i32_9 : i32
    scf.if %11 {
      %c0_10 = arith.constant 0 : index
      %c0_11 = arith.constant 0 : index
      %12 = vector.load %arg7[%c0_10, %c0_11] : memref<16x384xf32, #tpu.memory_space<vmem>>, vector<16x384xf32>
      %c0_12 = arith.constant 0 : index
      %c0_13 = arith.constant 0 : index
      %13 = vector.load %arg5[%c0_12, %c0_13] : memref<1x384xf32, #tpu.memory_space<vmem>>, vector<1x384xf32>
      %14 = vector.broadcast %13 : vector<1x384xf32> to vector<16x384xf32>
      %15 = arith.addf %12, %14 : vector<16x384xf32>
      %16 = arith.truncf %15 : vector<16x384xf32> to vector<16x384xbf16>
      %c0_14 = arith.constant 0 : index
      %c0_15 = arith.constant 0 : index
      %17 = vector.load %arg6[%c0_14, %c0_15] : memref<16x384xbf16, #tpu.memory_space<vmem>>, vector<16x384xbf16>
      tpu.vector_store %arg6[%c0_14, %c0_15], %16 {strides = array<i32>} : memref<16x384xbf16, #tpu.memory_space<vmem>>, vector<16x384xbf16>,
    } else {
    }
    return
  }
  func.func @transform_0(%arg0: i32, %arg1: i32, %arg2: i32) -> (i32, i32) {
    %c0_i32 = arith.constant 0 : i32
    return %arg0, %arg2 : i32, i32
  }
  func.func @transform_1(%arg0: i32, %arg1: i32, %arg2: i32) -> (i32, i32) {
    %c0_i32 = arith.constant 0 : i32
    return %arg2, %arg1 : i32, i32
  }
  func.func @transform_2(%arg0: i32, %arg1: i32, %arg2: i32) -> (i32, i32) {
    %c0_i32 = arith.constant 0 : i32
    %c0_i32_0 = arith.constant 0 : i32
    return %c0_i32, %arg1 : i32, i32
  }
  func.func @transform_3(%arg0: i32, %arg1: i32, %arg2: i32) -> (i32, i32) {
    %c0_i32 = arith.constant 0 : i32
    return %arg0, %arg1 : i32, i32
  }
}

module attributes {stable_mosaic.version = 11 : i64} {
  func.func @_matmul_res_ln_kernel(%arg0: i32, %arg1: i32, %arg2: memref<16x128xbf16, #tpu.memory_space<vmem>>, %arg3: memref<128x128xbf16, #tpu.memory_space<vmem>>, %arg4: memref<1x128xf32, #tpu.memory_space<vmem>>, %arg5: memref<16x128xbf16, #tpu.memory_space<vmem>>, %arg6: memref<1x128xf32, #tpu.memory_space<vmem>>, %arg7: memref<1x128xf32, #tpu.memory_space<vmem>>, %arg8: memref<16x128xbf16, #tpu.memory_space<vmem>>, %arg9: memref<16x128xf32, #tpu.memory_space<vmem>>) attributes {dimension_semantics = [#tpu.dimension_semantics<parallel>, #tpu.dimension_semantics<arbitrary>], iteration_bounds = array<i64: 1, 1>, scalar_prefetch = 0 : i64, scratch_operands = 1 : i64, tpu.core_type = #tpu.core_type<tc>, window_params = [{transform_indices = @transform_0, window_bounds = array<i64: 16, 128>}, {transform_indices = @transform_1, window_bounds = array<i64: 128, 128>}, {pipeline_mode = #tpu.pipeline_mode<synchronous>, transform_indices = @transform_2, window_bounds = array<i64: 1, 128>}, {transform_indices = @transform_3, window_bounds = array<i64: 16, 128>}, {pipeline_mode = #tpu.pipeline_mode<synchronous>, transform_indices = @transform_4, window_bounds = array<i64: 1, 128>}, {pipeline_mode = #tpu.pipeline_mode<synchronous>, transform_indices = @transform_5, window_bounds = array<i64: 1, 128>}, {transform_indices = @transform_6, window_bounds = array<i64: 16, 128>}]} {
    %c0_i32 = arith.constant 0 : i32
    %0 = arith.cmpi eq, %arg1, %c0_i32 : i32
    %1 = arith.extui %0 : i1 to i32
    %c0_i32_0 = arith.constant 0 : i32
    %2 = arith.cmpi ne, %1, %c0_i32_0 : i32
    scf.if %2 {
      %cst_10 = arith.constant 0.000000e+00 : f32
      %12 = vector.broadcast %cst_10 : f32 to vector<16x128xf32>
      %c0_11 = arith.constant 0 : index
      %c0_12 = arith.constant 0 : index
      %13 = vector.load %arg9[%c0_11, %c0_12] : memref<16x128xf32, #tpu.memory_space<vmem>>, vector<16x128xf32>
      tpu.vector_store %arg9[%c0_11, %c0_12], %12 {strides = array<i32>} : memref<16x128xf32, #tpu.memory_space<vmem>>, vector<16x128xf32>,
    } else {
    }
    %c0 = arith.constant 0 : index
    %c0_1 = arith.constant 0 : index
    %3 = vector.load %arg9[%c0, %c0_1] : memref<16x128xf32, #tpu.memory_space<vmem>>, vector<16x128xf32>
    %c0_2 = arith.constant 0 : index
    %c0_3 = arith.constant 0 : index
    %4 = vector.load %arg2[%c0_2, %c0_3] : memref<16x128xbf16, #tpu.memory_space<vmem>>, vector<16x128xbf16>
    %c0_4 = arith.constant 0 : index
    %c0_5 = arith.constant 0 : index
    %5 = vector.load %arg3[%c0_4, %c0_5] : memref<128x128xbf16, #tpu.memory_space<vmem>>, vector<128x128xbf16>
    %cst = arith.constant dense<0.000000e+00> : vector<16x128xf32>
    %6 = tpu.matmul %4, %5, %cst {dimension_numbers = #tpu.dot_dimension_numbers<[1], [0], [0], [1], [0, 0, 1, 1], [], []>} : vector<16x128xbf16>, vector<128x128xbf16>, vector<16x128xf32> -> vector<16x128xf32>
    %7 = arith.addf %3, %6 : vector<16x128xf32>
    %c0_6 = arith.constant 0 : index
    %c0_7 = arith.constant 0 : index
    %8 = vector.load %arg9[%c0_6, %c0_7] : memref<16x128xf32, #tpu.memory_space<vmem>>, vector<16x128xf32>
    tpu.vector_store %arg9[%c0_6, %c0_7], %7 {strides = array<i32>} : memref<16x128xf32, #tpu.memory_space<vmem>>, vector<16x128xf32>,
    %c0_i32_8 = arith.constant 0 : i32
    %9 = arith.cmpi eq, %arg1, %c0_i32_8 : i32
    %10 = arith.extui %9 : i1 to i32
    %c0_i32_9 = arith.constant 0 : i32
    %11 = arith.cmpi ne, %10, %c0_i32_9 : i32
    scf.if %11 {
      %c0_10 = arith.constant 0 : index
      %c0_11 = arith.constant 0 : index
      %12 = vector.load %arg9[%c0_10, %c0_11] : memref<16x128xf32, #tpu.memory_space<vmem>>, vector<16x128xf32>
      %c0_12 = arith.constant 0 : index
      %c0_13 = arith.constant 0 : index
      %13 = vector.load %arg4[%c0_12, %c0_13] : memref<1x128xf32, #tpu.memory_space<vmem>>, vector<1x128xf32>
      %14 = vector.broadcast %13 : vector<1x128xf32> to vector<16x128xf32>
      %15 = arith.addf %12, %14 : vector<16x128xf32>
      %c0_14 = arith.constant 0 : index
      %c0_15 = arith.constant 0 : index
      %16 = vector.load %arg5[%c0_14, %c0_15] : memref<16x128xbf16, #tpu.memory_space<vmem>>, vector<16x128xbf16>
      %17 = arith.extf %16 : vector<16x128xbf16> to vector<16x128xf32>
      %18 = arith.addf %15, %17 : vector<16x128xf32>
      %cst_16 = arith.constant dense<0.000000e+00> : vector<16xf32>
      %19 = vector.multi_reduction <add>, %18, %cst_16 [1] : vector<16x128xf32> to vector<16xf32>
      %20 = vector.shape_cast %19 : vector<16xf32> to vector<16x1xf32>
      %cst_17 = arith.constant 1.280000e+02 : f32
      %21 = vector.broadcast %cst_17 : f32 to vector<16x1xf32>
      %22 = arith.divf %20, %21 : vector<16x1xf32>
      %23 = vector.broadcast %22 : vector<16x1xf32> to vector<16x128xf32>
      %24 = arith.subf %18, %23 : vector<16x128xf32>
      %25 = arith.mulf %24, %24 : vector<16x128xf32>
      %cst_18 = arith.constant dense<0.000000e+00> : vector<16xf32>
      %26 = vector.multi_reduction <add>, %25, %cst_18 [1] : vector<16x128xf32> to vector<16xf32>
      %27 = vector.shape_cast %26 : vector<16xf32> to vector<16x1xf32>
      %cst_19 = arith.constant 1.280000e+02 : f32
      %28 = vector.broadcast %cst_19 : f32 to vector<16x1xf32>
      %29 = arith.divf %27, %28 : vector<16x1xf32>
      %30 = vector.broadcast %22 : vector<16x1xf32> to vector<16x128xf32>
      %31 = arith.subf %18, %30 : vector<16x128xf32>
      %cst_20 = arith.constant 9.99999974E-6 : f32
      %32 = vector.broadcast %cst_20 : f32 to vector<16x1xf32>
      %33 = arith.addf %29, %32 : vector<16x1xf32>
      %34 = math.rsqrt %33 : vector<16x1xf32>
      %35 = vector.broadcast %34 : vector<16x1xf32> to vector<16x128xf32>
      %36 = arith.mulf %31, %35 : vector<16x128xf32>
      %c0_21 = arith.constant 0 : index
      %c0_22 = arith.constant 0 : index
      %37 = vector.load %arg6[%c0_21, %c0_22] : memref<1x128xf32, #tpu.memory_space<vmem>>, vector<1x128xf32>
      %38 = vector.broadcast %37 : vector<1x128xf32> to vector<16x128xf32>
      %39 = arith.mulf %36, %38 : vector<16x128xf32>
      %c0_23 = arith.constant 0 : index
      %c0_24 = arith.constant 0 : index
      %40 = vector.load %arg7[%c0_23, %c0_24] : memref<1x128xf32, #tpu.memory_space<vmem>>, vector<1x128xf32>
      %41 = vector.broadcast %40 : vector<1x128xf32> to vector<16x128xf32>
      %42 = arith.addf %39, %41 : vector<16x128xf32>
      %43 = arith.truncf %42 : vector<16x128xf32> to vector<16x128xbf16>
      %c0_25 = arith.constant 0 : index
      %c0_26 = arith.constant 0 : index
      %44 = vector.load %arg8[%c0_25, %c0_26] : memref<16x128xbf16, #tpu.memory_space<vmem>>, vector<16x128xbf16>
      tpu.vector_store %arg8[%c0_25, %c0_26], %43 {strides = array<i32>} : memref<16x128xbf16, #tpu.memory_space<vmem>>, vector<16x128xbf16>,
    } else {
    }
    return
  }
  func.func @transform_0(%arg0: i32, %arg1: i32) -> (i32, i32) {
    %c0_i32 = arith.constant 0 : i32
    return %arg0, %arg1 : i32, i32
  }
  func.func @transform_1(%arg0: i32, %arg1: i32) -> (i32, i32) {
    %c0_i32 = arith.constant 0 : i32
    %c0_i32_0 = arith.constant 0 : i32
    return %arg1, %c0_i32 : i32, i32
  }
  func.func @transform_2(%arg0: i32, %arg1: i32) -> (i32, i32) {
    %c0_i32 = arith.constant 0 : i32
    %c0_i32_0 = arith.constant 0 : i32
    %c0_i32_1 = arith.constant 0 : i32
    return %c0_i32, %c0_i32_0 : i32, i32
  }
  func.func @transform_3(%arg0: i32, %arg1: i32) -> (i32, i32) {
    %c0_i32 = arith.constant 0 : i32
    %c0_i32_0 = arith.constant 0 : i32
    return %arg0, %c0_i32 : i32, i32
  }
  func.func @transform_4(%arg0: i32, %arg1: i32) -> (i32, i32) {
    %c0_i32 = arith.constant 0 : i32
    %c0_i32_0 = arith.constant 0 : i32
    %c0_i32_1 = arith.constant 0 : i32
    return %c0_i32, %c0_i32_0 : i32, i32
  }
  func.func @transform_5(%arg0: i32, %arg1: i32) -> (i32, i32) {
    %c0_i32 = arith.constant 0 : i32
    %c0_i32_0 = arith.constant 0 : i32
    %c0_i32_1 = arith.constant 0 : i32
    return %c0_i32, %c0_i32_0 : i32, i32
  }
  func.func @transform_6(%arg0: i32, %arg1: i32) -> (i32, i32) {
    %c0_i32 = arith.constant 0 : i32
    %c0_i32_0 = arith.constant 0 : i32
    return %arg0, %c0_i32 : i32, i32
  }
}

module attributes {stable_mosaic.version = 11 : i64} {
  func.func @kernel(%arg0: i32, %arg1: i32, %arg2: i32, %arg3: memref<1x8x128xbf16, #tpu.memory_space<vmem>>, %arg4: memref<1x8x128xbf16, #tpu.memory_space<vmem>>, %arg5: memref<1x8x128xbf16, #tpu.memory_space<vmem>>, %arg6: memref<1x8x128xbf16, #tpu.memory_space<vmem>>, %arg7: memref<4x8x1xf32, #tpu.memory_space<vmem>>, %arg8: memref<4x8x1xf32, #tpu.memory_space<vmem>>, %arg9: memref<8x128xf32, #tpu.memory_space<vmem>>) attributes {dimension_semantics = [#tpu.dimension_semantics<parallel>, #tpu.dimension_semantics<parallel>, #tpu.dimension_semantics<arbitrary>], iteration_bounds = array<i64: 2, 1, 1>, scalar_prefetch = 0 : i64, scratch_operands = 3 : i64, tpu.core_type = #tpu.core_type<tc>, window_params = [{transform_indices = @transform_0, window_bounds = array<i64: 1, 8, 128>}, {transform_indices = @transform_1, window_bounds = array<i64: 1, 8, 128>}, {transform_indices = @transform_2, window_bounds = array<i64: 1, 8, 128>}, {transform_indices = @transform_3, window_bounds = array<i64: 1, 8, 128>}]} {
    %c0_i32 = arith.constant 0 : i32
    %0 = arith.cmpi eq, %arg2, %c0_i32 : i32
    %1 = arith.extui %0 : i1 to i32
    %c0_i32_0 = arith.constant 0 : i32
    %2 = arith.cmpi ne, %1, %c0_i32_0 : i32
    scf.if %2 {
      %cst_88 = arith.constant -1.000000e+30 : f32
      %152 = vector.broadcast %cst_88 : f32 to vector<4x8x1xf32>
      %c0_89 = arith.constant 0 : index
      %c0_90 = arith.constant 0 : index
      %c0_91 = arith.constant 0 : index
      %153 = vector.load %arg7[%c0_89, %c0_90, %c0_91] : memref<4x8x1xf32, #tpu.memory_space<vmem>>, vector<4x8x1xf32>
      tpu.vector_store %arg7[%c0_89, %c0_90, %c0_91], %152 {strides = array<i32>} : memref<4x8x1xf32, #tpu.memory_space<vmem>>, vector<4x8x1xf32>,
      %cst_92 = arith.constant 0.000000e+00 : f32
      %154 = vector.broadcast %cst_92 : f32 to vector<4x8x1xf32>
      %c0_93 = arith.constant 0 : index
      %c0_94 = arith.constant 0 : index
      %c0_95 = arith.constant 0 : index
      %155 = vector.load %arg8[%c0_93, %c0_94, %c0_95] : memref<4x8x1xf32, #tpu.memory_space<vmem>>, vector<4x8x1xf32>
      tpu.vector_store %arg8[%c0_93, %c0_94, %c0_95], %154 {strides = array<i32>} : memref<4x8x1xf32, #tpu.memory_space<vmem>>, vector<4x8x1xf32>,
      %cst_96 = arith.constant 0.000000e+00 : f32
      %156 = vector.broadcast %cst_96 : f32 to vector<8x128xf32>
      %c0_97 = arith.constant 0 : index
      %c0_98 = arith.constant 0 : index
      %157 = vector.load %arg9[%c0_97, %c0_98] : memref<8x128xf32, #tpu.memory_space<vmem>>, vector<8x128xf32>
      tpu.vector_store %arg9[%c0_97, %c0_98], %156 {strides = array<i32>} : memref<8x128xf32, #tpu.memory_space<vmem>>, vector<8x128xf32>,
    } else {
    }
    %c0 = arith.constant 0 : index
    %c0_1 = arith.constant 0 : index
    %c0_2 = arith.constant 0 : index
    %3 = vector.load %arg3[%c0, %c0_1, %c0_2] : memref<1x8x128xbf16, #tpu.memory_space<vmem>>, vector<1x8x128xbf16>
    %4 = vector.shape_cast %3 : vector<1x8x128xbf16> to vector<8x128xbf16>
    %c0_3 = arith.constant 0 : index
    %c0_4 = arith.constant 0 : index
    %c0_5 = arith.constant 0 : index
    %5 = vector.load %arg4[%c0_3, %c0_4, %c0_5] : memref<1x8x128xbf16, #tpu.memory_space<vmem>>, vector<1x8x128xbf16>
    %6 = vector.shape_cast %5 : vector<1x8x128xbf16> to vector<8x128xbf16>
    %c0_6 = arith.constant 0 : index
    %c0_7 = arith.constant 0 : index
    %c0_8 = arith.constant 0 : index
    %7 = vector.load %arg5[%c0_6, %c0_7, %c0_8] : memref<1x8x128xbf16, #tpu.memory_space<vmem>>, vector<1x8x128xbf16>
    %8 = vector.shape_cast %7 : vector<1x8x128xbf16> to vector<8x128xbf16>
    %9 = vector.extract_strided_slice %4 {offsets = [0, 0], sizes = [8, 32], strides = [1, 1]} : vector<8x128xbf16> to vector<8x32xbf16>
    %10 = vector.extract_strided_slice %6 {offsets = [0, 0], sizes = [8, 32], strides = [1, 1]} : vector<8x128xbf16> to vector<8x32xbf16>
    %11 = vector.extract_strided_slice %8 {offsets = [0, 0], sizes = [8, 32], strides = [1, 1]} : vector<8x128xbf16> to vector<8x32xbf16>
    %cst = arith.constant dense<0.000000e+00> : vector<8x8xf32>
    %12 = tpu.matmul %9, %10, %cst {dimension_numbers = #tpu.dot_dimension_numbers<[1], [1], [0], [0], [0, 0, 1, 0], [], []>} : vector<8x32xbf16>, vector<8x32xbf16>, vector<8x8xf32> -> vector<8x8xf32>
    %cst_9 = arith.constant 0.176776692 : f32
    %13 = vector.broadcast %cst_9 : f32 to vector<8x8xf32>
    %14 = arith.mulf %12, %13 : vector<8x8xf32>
    %c0_10 = arith.constant 0 : index
    %c0_11 = arith.constant 0 : index
    %c0_12 = arith.constant 0 : index
    %15 = vector.load %arg7[%c0_10, %c0_11, %c0_12] : memref<4x8x1xf32, #tpu.memory_space<vmem>>, vector<1x8x1xf32>
    %16 = vector.shape_cast %15 : vector<1x8x1xf32> to vector<8x1xf32>
    %cst_13 = arith.constant dense<0xFF800000> : vector<8xf32>
    %17 = vector.multi_reduction <maximumf>, %14, %cst_13 [1] : vector<8x8xf32> to vector<8xf32>
    %18 = vector.shape_cast %17 : vector<8xf32> to vector<8x1xf32>
    %19 = arith.maximumf %16, %18 : vector<8x1xf32>
    %20 = arith.subf %16, %19 : vector<8x1xf32>
    %21 = math.exp %20 : vector<8x1xf32>
    %22 = vector.broadcast %19 : vector<8x1xf32> to vector<8x8xf32>
    %23 = arith.subf %14, %22 : vector<8x8xf32>
    %24 = math.exp %23 : vector<8x8xf32>
    %c0_14 = arith.constant 0 : index
    %c0_15 = arith.constant 0 : index
    %c0_16 = arith.constant 0 : index
    %25 = vector.load %arg8[%c0_14, %c0_15, %c0_16] : memref<4x8x1xf32, #tpu.memory_space<vmem>>, vector<1x8x1xf32>
    %26 = vector.shape_cast %25 : vector<1x8x1xf32> to vector<8x1xf32>
    %27 = arith.mulf %21, %26 : vector<8x1xf32>
    %cst_17 = arith.constant dense<0.000000e+00> : vector<8xf32>
    %28 = vector.multi_reduction <add>, %24, %cst_17 [1] : vector<8x8xf32> to vector<8xf32>
    %29 = vector.shape_cast %28 : vector<8xf32> to vector<8x1xf32>
    %30 = arith.addf %27, %29 : vector<8x1xf32>
    %c0_18 = arith.constant 0 : index
    %c0_19 = arith.constant 0 : index
    %c0_20 = arith.constant 0 : index
    %31 = vector.load %arg8[%c0_18, %c0_19, %c0_20] : memref<4x8x1xf32, #tpu.memory_space<vmem>>, vector<1x8x1xf32>
    %32 = vector.shape_cast %31 : vector<1x8x1xf32> to vector<8x1xf32>
    %33 = vector.shape_cast %30 : vector<8x1xf32> to vector<1x8x1xf32>
    tpu.vector_store %arg8[%c0_18, %c0_19, %c0_20], %33 {strides = array<i32>} : memref<4x8x1xf32, #tpu.memory_space<vmem>>, vector<1x8x1xf32>,
    %c0_21 = arith.constant 0 : index
    %c0_22 = arith.constant 0 : index
    %34 = vector.load %arg9[%c0_21, %c0_22] : memref<8x128xf32, #tpu.memory_space<vmem>>, vector<8x32xf32>
    %35 = vector.broadcast %21 : vector<8x1xf32> to vector<8x32xf32>
    %36 = arith.mulf %35, %34 : vector<8x32xf32>
    %37 = arith.truncf %24 : vector<8x8xf32> to vector<8x8xbf16>
    %cst_23 = arith.constant dense<0.000000e+00> : vector<8x32xf32>
    %38 = tpu.matmul %37, %11, %cst_23 {dimension_numbers = #tpu.dot_dimension_numbers<[1], [0], [0], [1], [0, 0, 1, 1], [], []>} : vector<8x8xbf16>, vector<8x32xbf16>, vector<8x32xf32> -> vector<8x32xf32>
    %39 = arith.addf %36, %38 : vector<8x32xf32>
    %c0_24 = arith.constant 0 : index
    %c0_25 = arith.constant 0 : index
    %40 = vector.load %arg9[%c0_24, %c0_25] : memref<8x128xf32, #tpu.memory_space<vmem>>, vector<8x32xf32>
    tpu.vector_store %arg9[%c0_24, %c0_25], %39 {strides = array<i32>} : memref<8x128xf32, #tpu.memory_space<vmem>>, vector<8x32xf32>,
    %c0_26 = arith.constant 0 : index
    %c0_27 = arith.constant 0 : index
    %c0_28 = arith.constant 0 : index
    %41 = vector.load %arg7[%c0_26, %c0_27, %c0_28] : memref<4x8x1xf32, #tpu.memory_space<vmem>>, vector<1x8x1xf32>
    %42 = vector.shape_cast %41 : vector<1x8x1xf32> to vector<8x1xf32>
    %43 = vector.shape_cast %19 : vector<8x1xf32> to vector<1x8x1xf32>
    tpu.vector_store %arg7[%c0_26, %c0_27, %c0_28], %43 {strides = array<i32>} : memref<4x8x1xf32, #tpu.memory_space<vmem>>, vector<1x8x1xf32>,
    %44 = vector.extract_strided_slice %4 {offsets = [0, 32], sizes = [8, 32], strides = [1, 1]} : vector<8x128xbf16> to vector<8x32xbf16>
    %45 = vector.extract_strided_slice %6 {offsets = [0, 32], sizes = [8, 32], strides = [1, 1]} : vector<8x128xbf16> to vector<8x32xbf16>
    %46 = vector.extract_strided_slice %8 {offsets = [0, 32], sizes = [8, 32], strides = [1, 1]} : vector<8x128xbf16> to vector<8x32xbf16>
    %cst_29 = arith.constant dense<0.000000e+00> : vector<8x8xf32>
    %47 = tpu.matmul %44, %45, %cst_29 {dimension_numbers = #tpu.dot_dimension_numbers<[1], [1], [0], [0], [0, 0, 1, 0], [], []>} : vector<8x32xbf16>, vector<8x32xbf16>, vector<8x8xf32> -> vector<8x8xf32>
    %cst_30 = arith.constant 0.176776692 : f32
    %48 = vector.broadcast %cst_30 : f32 to vector<8x8xf32>
    %49 = arith.mulf %47, %48 : vector<8x8xf32>
    %c1 = arith.constant 1 : index
    %c0_31 = arith.constant 0 : index
    %c0_32 = arith.constant 0 : index
    %50 = vector.load %arg7[%c1, %c0_31, %c0_32] : memref<4x8x1xf32, #tpu.memory_space<vmem>>, vector<1x8x1xf32>
    %51 = vector.shape_cast %50 : vector<1x8x1xf32> to vector<8x1xf32>
    %cst_33 = arith.constant dense<0xFF800000> : vector<8xf32>
    %52 = vector.multi_reduction <maximumf>, %49, %cst_33 [1] : vector<8x8xf32> to vector<8xf32>
    %53 = vector.shape_cast %52 : vector<8xf32> to vector<8x1xf32>
    %54 = arith.maximumf %51, %53 : vector<8x1xf32>
    %55 = arith.subf %51, %54 : vector<8x1xf32>
    %56 = math.exp %55 : vector<8x1xf32>
    %57 = vector.broadcast %54 : vector<8x1xf32> to vector<8x8xf32>
    %58 = arith.subf %49, %57 : vector<8x8xf32>
    %59 = math.exp %58 : vector<8x8xf32>
    %c1_34 = arith.constant 1 : index
    %c0_35 = arith.constant 0 : index
    %c0_36 = arith.constant 0 : index
    %60 = vector.load %arg8[%c1_34, %c0_35, %c0_36] : memref<4x8x1xf32, #tpu.memory_space<vmem>>, vector<1x8x1xf32>
    %61 = vector.shape_cast %60 : vector<1x8x1xf32> to vector<8x1xf32>
    %62 = arith.mulf %56, %61 : vector<8x1xf32>
    %cst_37 = arith.constant dense<0.000000e+00> : vector<8xf32>
    %63 = vector.multi_reduction <add>, %59, %cst_37 [1] : vector<8x8xf32> to vector<8xf32>
    %64 = vector.shape_cast %63 : vector<8xf32> to vector<8x1xf32>
    %65 = arith.addf %62, %64 : vector<8x1xf32>
    %c1_38 = arith.constant 1 : index
    %c0_39 = arith.constant 0 : index
    %c0_40 = arith.constant 0 : index
    %66 = vector.load %arg8[%c1_38, %c0_39, %c0_40] : memref<4x8x1xf32, #tpu.memory_space<vmem>>, vector<1x8x1xf32>
    %67 = vector.shape_cast %66 : vector<1x8x1xf32> to vector<8x1xf32>
    %68 = vector.shape_cast %65 : vector<8x1xf32> to vector<1x8x1xf32>
    tpu.vector_store %arg8[%c1_38, %c0_39, %c0_40], %68 {strides = array<i32>} : memref<4x8x1xf32, #tpu.memory_space<vmem>>, vector<1x8x1xf32>,
    %c0_41 = arith.constant 0 : index
    %c32 = arith.constant 32 : index
    %69 = vector.load %arg9[%c0_41, %c32] : memref<8x128xf32, #tpu.memory_space<vmem>>, vector<8x32xf32>
    %70 = vector.broadcast %56 : vector<8x1xf32> to vector<8x32xf32>
    %71 = arith.mulf %70, %69 : vector<8x32xf32>
    %72 = arith.truncf %59 : vector<8x8xf32> to vector<8x8xbf16>
    %cst_42 = arith.constant dense<0.000000e+00> : vector<8x32xf32>
    %73 = tpu.matmul %72, %46, %cst_42 {dimension_numbers = #tpu.dot_dimension_numbers<[1], [0], [0], [1], [0, 0, 1, 1], [], []>} : vector<8x8xbf16>, vector<8x32xbf16>, vector<8x32xf32> -> vector<8x32xf32>
    %74 = arith.addf %71, %73 : vector<8x32xf32>
    %c0_43 = arith.constant 0 : index
    %c32_44 = arith.constant 32 : index
    %75 = vector.load %arg9[%c0_43, %c32_44] : memref<8x128xf32, #tpu.memory_space<vmem>>, vector<8x32xf32>
    tpu.vector_store %arg9[%c0_43, %c32_44], %74 {strides = array<i32>} : memref<8x128xf32, #tpu.memory_space<vmem>>, vector<8x32xf32>,
    %c1_45 = arith.constant 1 : index
    %c0_46 = arith.constant 0 : index
    %c0_47 = arith.constant 0 : index
    %76 = vector.load %arg7[%c1_45, %c0_46, %c0_47] : memref<4x8x1xf32, #tpu.memory_space<vmem>>, vector<1x8x1xf32>
    %77 = vector.shape_cast %76 : vector<1x8x1xf32> to vector<8x1xf32>
    %78 = vector.shape_cast %54 : vector<8x1xf32> to vector<1x8x1xf32>
    tpu.vector_store %arg7[%c1_45, %c0_46, %c0_47], %78 {strides = array<i32>} : memref<4x8x1xf32, #tpu.memory_space<vmem>>, vector<1x8x1xf32>,
    %79 = vector.extract_strided_slice %4 {offsets = [0, 64], sizes = [8, 32], strides = [1, 1]} : vector<8x128xbf16> to vector<8x32xbf16>
    %80 = vector.extract_strided_slice %6 {offsets = [0, 64], sizes = [8, 32], strides = [1, 1]} : vector<8x128xbf16> to vector<8x32xbf16>
    %81 = vector.extract_strided_slice %8 {offsets = [0, 64], sizes = [8, 32], strides = [1, 1]} : vector<8x128xbf16> to vector<8x32xbf16>
    %cst_48 = arith.constant dense<0.000000e+00> : vector<8x8xf32>
    %82 = tpu.matmul %79, %80, %cst_48 {dimension_numbers = #tpu.dot_dimension_numbers<[1], [1], [0], [0], [0, 0, 1, 0], [], []>} : vector<8x32xbf16>, vector<8x32xbf16>, vector<8x8xf32> -> vector<8x8xf32>
    %cst_49 = arith.constant 0.176776692 : f32
    %83 = vector.broadcast %cst_49 : f32 to vector<8x8xf32>
    %84 = arith.mulf %82, %83 : vector<8x8xf32>
    %c2 = arith.constant 2 : index
    %c0_50 = arith.constant 0 : index
    %c0_51 = arith.constant 0 : index
    %85 = vector.load %arg7[%c2, %c0_50, %c0_51] : memref<4x8x1xf32, #tpu.memory_space<vmem>>, vector<1x8x1xf32>
    %86 = vector.shape_cast %85 : vector<1x8x1xf32> to vector<8x1xf32>
    %cst_52 = arith.constant dense<0xFF800000> : vector<8xf32>
    %87 = vector.multi_reduction <maximumf>, %84, %cst_52 [1] : vector<8x8xf32> to vector<8xf32>
    %88 = vector.shape_cast %87 : vector<8xf32> to vector<8x1xf32>
    %89 = arith.maximumf %86, %88 : vector<8x1xf32>
    %90 = arith.subf %86, %89 : vector<8x1xf32>
    %91 = math.exp %90 : vector<8x1xf32>
    %92 = vector.broadcast %89 : vector<8x1xf32> to vector<8x8xf32>
    %93 = arith.subf %84, %92 : vector<8x8xf32>
    %94 = math.exp %93 : vector<8x8xf32>
    %c2_53 = arith.constant 2 : index
    %c0_54 = arith.constant 0 : index
    %c0_55 = arith.constant 0 : index
    %95 = vector.load %arg8[%c2_53, %c0_54, %c0_55] : memref<4x8x1xf32, #tpu.memory_space<vmem>>, vector<1x8x1xf32>
    %96 = vector.shape_cast %95 : vector<1x8x1xf32> to vector<8x1xf32>
    %97 = arith.mulf %91, %96 : vector<8x1xf32>
    %cst_56 = arith.constant dense<0.000000e+00> : vector<8xf32>
    %98 = vector.multi_reduction <add>, %94, %cst_56 [1] : vector<8x8xf32> to vector<8xf32>
    %99 = vector.shape_cast %98 : vector<8xf32> to vector<8x1xf32>
    %100 = arith.addf %97, %99 : vector<8x1xf32>
    %c2_57 = arith.constant 2 : index
    %c0_58 = arith.constant 0 : index
    %c0_59 = arith.constant 0 : index
    %101 = vector.load %arg8[%c2_57, %c0_58, %c0_59] : memref<4x8x1xf32, #tpu.memory_space<vmem>>, vector<1x8x1xf32>
    %102 = vector.shape_cast %101 : vector<1x8x1xf32> to vector<8x1xf32>
    %103 = vector.shape_cast %100 : vector<8x1xf32> to vector<1x8x1xf32>
    tpu.vector_store %arg8[%c2_57, %c0_58, %c0_59], %103 {strides = array<i32>} : memref<4x8x1xf32, #tpu.memory_space<vmem>>, vector<1x8x1xf32>,
    %c0_60 = arith.constant 0 : index
    %c64 = arith.constant 64 : index
    %104 = vector.load %arg9[%c0_60, %c64] : memref<8x128xf32, #tpu.memory_space<vmem>>, vector<8x32xf32>
    %105 = vector.broadcast %91 : vector<8x1xf32> to vector<8x32xf32>
    %106 = arith.mulf %105, %104 : vector<8x32xf32>
    %107 = arith.truncf %94 : vector<8x8xf32> to vector<8x8xbf16>
    %cst_61 = arith.constant dense<0.000000e+00> : vector<8x32xf32>
    %108 = tpu.matmul %107, %81, %cst_61 {dimension_numbers = #tpu.dot_dimension_numbers<[1], [0], [0], [1], [0, 0, 1, 1], [], []>} : vector<8x8xbf16>, vector<8x32xbf16>, vector<8x32xf32> -> vector<8x32xf32>
    %109 = arith.addf %106, %108 : vector<8x32xf32>
    %c0_62 = arith.constant 0 : index
    %c64_63 = arith.constant 64 : index
    %110 = vector.load %arg9[%c0_62, %c64_63] : memref<8x128xf32, #tpu.memory_space<vmem>>, vector<8x32xf32>
    tpu.vector_store %arg9[%c0_62, %c64_63], %109 {strides = array<i32>} : memref<8x128xf32, #tpu.memory_space<vmem>>, vector<8x32xf32>,
    %c2_64 = arith.constant 2 : index
    %c0_65 = arith.constant 0 : index
    %c0_66 = arith.constant 0 : index
    %111 = vector.load %arg7[%c2_64, %c0_65, %c0_66] : memref<4x8x1xf32, #tpu.memory_space<vmem>>, vector<1x8x1xf32>
    %112 = vector.shape_cast %111 : vector<1x8x1xf32> to vector<8x1xf32>
    %113 = vector.shape_cast %89 : vector<8x1xf32> to vector<1x8x1xf32>
    tpu.vector_store %arg7[%c2_64, %c0_65, %c0_66], %113 {strides = array<i32>} : memref<4x8x1xf32, #tpu.memory_space<vmem>>, vector<1x8x1xf32>,
    %114 = vector.extract_strided_slice %4 {offsets = [0, 96], sizes = [8, 32], strides = [1, 1]} : vector<8x128xbf16> to vector<8x32xbf16>
    %115 = vector.extract_strided_slice %6 {offsets = [0, 96], sizes = [8, 32], strides = [1, 1]} : vector<8x128xbf16> to vector<8x32xbf16>
    %116 = vector.extract_strided_slice %8 {offsets = [0, 96], sizes = [8, 32], strides = [1, 1]} : vector<8x128xbf16> to vector<8x32xbf16>
    %cst_67 = arith.constant dense<0.000000e+00> : vector<8x8xf32>
    %117 = tpu.matmul %114, %115, %cst_67 {dimension_numbers = #tpu.dot_dimension_numbers<[1], [1], [0], [0], [0, 0, 1, 0], [], []>} : vector<8x32xbf16>, vector<8x32xbf16>, vector<8x8xf32> -> vector<8x8xf32>
    %cst_68 = arith.constant 0.176776692 : f32
    %118 = vector.broadcast %cst_68 : f32 to vector<8x8xf32>
    %119 = arith.mulf %117, %118 : vector<8x8xf32>
    %c3 = arith.constant 3 : index
    %c0_69 = arith.constant 0 : index
    %c0_70 = arith.constant 0 : index
    %120 = vector.load %arg7[%c3, %c0_69, %c0_70] : memref<4x8x1xf32, #tpu.memory_space<vmem>>, vector<1x8x1xf32>
    %121 = vector.shape_cast %120 : vector<1x8x1xf32> to vector<8x1xf32>
    %cst_71 = arith.constant dense<0xFF800000> : vector<8xf32>
    %122 = vector.multi_reduction <maximumf>, %119, %cst_71 [1] : vector<8x8xf32> to vector<8xf32>
    %123 = vector.shape_cast %122 : vector<8xf32> to vector<8x1xf32>
    %124 = arith.maximumf %121, %123 : vector<8x1xf32>
    %125 = arith.subf %121, %124 : vector<8x1xf32>
    %126 = math.exp %125 : vector<8x1xf32>
    %127 = vector.broadcast %124 : vector<8x1xf32> to vector<8x8xf32>
    %128 = arith.subf %119, %127 : vector<8x8xf32>
    %129 = math.exp %128 : vector<8x8xf32>
    %c3_72 = arith.constant 3 : index
    %c0_73 = arith.constant 0 : index
    %c0_74 = arith.constant 0 : index
    %130 = vector.load %arg8[%c3_72, %c0_73, %c0_74] : memref<4x8x1xf32, #tpu.memory_space<vmem>>, vector<1x8x1xf32>
    %131 = vector.shape_cast %130 : vector<1x8x1xf32> to vector<8x1xf32>
    %132 = arith.mulf %126, %131 : vector<8x1xf32>
    %cst_75 = arith.constant dense<0.000000e+00> : vector<8xf32>
    %133 = vector.multi_reduction <add>, %129, %cst_75 [1] : vector<8x8xf32> to vector<8xf32>
    %134 = vector.shape_cast %133 : vector<8xf32> to vector<8x1xf32>
    %135 = arith.addf %132, %134 : vector<8x1xf32>
    %c3_76 = arith.constant 3 : index
    %c0_77 = arith.constant 0 : index
    %c0_78 = arith.constant 0 : index
    %136 = vector.load %arg8[%c3_76, %c0_77, %c0_78] : memref<4x8x1xf32, #tpu.memory_space<vmem>>, vector<1x8x1xf32>
    %137 = vector.shape_cast %136 : vector<1x8x1xf32> to vector<8x1xf32>
    %138 = vector.shape_cast %135 : vector<8x1xf32> to vector<1x8x1xf32>
    tpu.vector_store %arg8[%c3_76, %c0_77, %c0_78], %138 {strides = array<i32>} : memref<4x8x1xf32, #tpu.memory_space<vmem>>, vector<1x8x1xf32>,
    %c0_79 = arith.constant 0 : index
    %c96 = arith.constant 96 : index
    %139 = vector.load %arg9[%c0_79, %c96] : memref<8x128xf32, #tpu.memory_space<vmem>>, vector<8x32xf32>
    %140 = vector.broadcast %126 : vector<8x1xf32> to vector<8x32xf32>
    %141 = arith.mulf %140, %139 : vector<8x32xf32>
    %142 = arith.truncf %129 : vector<8x8xf32> to vector<8x8xbf16>
    %cst_80 = arith.constant dense<0.000000e+00> : vector<8x32xf32>
    %143 = tpu.matmul %142, %116, %cst_80 {dimension_numbers = #tpu.dot_dimension_numbers<[1], [0], [0], [1], [0, 0, 1, 1], [], []>} : vector<8x8xbf16>, vector<8x32xbf16>, vector<8x32xf32> -> vector<8x32xf32>
    %144 = arith.addf %141, %143 : vector<8x32xf32>
    %c0_81 = arith.constant 0 : index
    %c96_82 = arith.constant 96 : index
    %145 = vector.load %arg9[%c0_81, %c96_82] : memref<8x128xf32, #tpu.memory_space<vmem>>, vector<8x32xf32>
    tpu.vector_store %arg9[%c0_81, %c96_82], %144 {strides = array<i32>} : memref<8x128xf32, #tpu.memory_space<vmem>>, vector<8x32xf32>,
    %c3_83 = arith.constant 3 : index
    %c0_84 = arith.constant 0 : index
    %c0_85 = arith.constant 0 : index
    %146 = vector.load %arg7[%c3_83, %c0_84, %c0_85] : memref<4x8x1xf32, #tpu.memory_space<vmem>>, vector<1x8x1xf32>
    %147 = vector.shape_cast %146 : vector<1x8x1xf32> to vector<8x1xf32>
    %148 = vector.shape_cast %124 : vector<8x1xf32> to vector<1x8x1xf32>
    tpu.vector_store %arg7[%c3_83, %c0_84, %c0_85], %148 {strides = array<i32>} : memref<4x8x1xf32, #tpu.memory_space<vmem>>, vector<1x8x1xf32>,
    %c0_i32_86 = arith.constant 0 : i32
    %149 = arith.cmpi eq, %arg2, %c0_i32_86 : i32
    %150 = arith.extui %149 : i1 to i32
    %c0_i32_87 = arith.constant 0 : i32
    %151 = arith.cmpi ne, %150, %c0_i32_87 : i32
    scf.if %151 {
      %c0_88 = arith.constant 0 : index
      %c0_89 = arith.constant 0 : index
      %c0_90 = arith.constant 0 : index
      %152 = vector.load %arg8[%c0_88, %c0_89, %c0_90] : memref<4x8x1xf32, #tpu.memory_space<vmem>>, vector<1x8x1xf32>
      %153 = vector.shape_cast %152 : vector<1x8x1xf32> to vector<8x1xf32>
      %154 = tpu.reciprocal %153 {approx = true} : vector<8x1xf32> -> vector<8x1xf32>
      %c0_91 = arith.constant 0 : index
      %c0_92 = arith.constant 0 : index
      %155 = vector.load %arg9[%c0_91, %c0_92] : memref<8x128xf32, #tpu.memory_space<vmem>>, vector<8x32xf32>
      %156 = vector.broadcast %154 : vector<8x1xf32> to vector<8x32xf32>
      %157 = arith.mulf %155, %156 : vector<8x32xf32>
      %c1_93 = arith.constant 1 : index
      %c0_94 = arith.constant 0 : index
      %c0_95 = arith.constant 0 : index
      %158 = vector.load %arg8[%c1_93, %c0_94, %c0_95] : memref<4x8x1xf32, #tpu.memory_space<vmem>>, vector<1x8x1xf32>
      %159 = vector.shape_cast %158 : vector<1x8x1xf32> to vector<8x1xf32>
      %160 = tpu.reciprocal %159 {approx = true} : vector<8x1xf32> -> vector<8x1xf32>
      %c0_96 = arith.constant 0 : index
      %c32_97 = arith.constant 32 : index
      %161 = vector.load %arg9[%c0_96, %c32_97] : memref<8x128xf32, #tpu.memory_space<vmem>>, vector<8x32xf32>
      %162 = vector.broadcast %160 : vector<8x1xf32> to vector<8x32xf32>
      %163 = arith.mulf %161, %162 : vector<8x32xf32>
      %c2_98 = arith.constant 2 : index
      %c0_99 = arith.constant 0 : index
      %c0_100 = arith.constant 0 : index
      %164 = vector.load %arg8[%c2_98, %c0_99, %c0_100] : memref<4x8x1xf32, #tpu.memory_space<vmem>>, vector<1x8x1xf32>
      %165 = vector.shape_cast %164 : vector<1x8x1xf32> to vector<8x1xf32>
      %166 = tpu.reciprocal %165 {approx = true} : vector<8x1xf32> -> vector<8x1xf32>
      %c0_101 = arith.constant 0 : index
      %c64_102 = arith.constant 64 : index
      %167 = vector.load %arg9[%c0_101, %c64_102] : memref<8x128xf32, #tpu.memory_space<vmem>>, vector<8x32xf32>
      %168 = vector.broadcast %166 : vector<8x1xf32> to vector<8x32xf32>
      %169 = arith.mulf %167, %168 : vector<8x32xf32>
      %c3_103 = arith.constant 3 : index
      %c0_104 = arith.constant 0 : index
      %c0_105 = arith.constant 0 : index
      %170 = vector.load %arg8[%c3_103, %c0_104, %c0_105] : memref<4x8x1xf32, #tpu.memory_space<vmem>>, vector<1x8x1xf32>
      %171 = vector.shape_cast %170 : vector<1x8x1xf32> to vector<8x1xf32>
      %172 = tpu.reciprocal %171 {approx = true} : vector<8x1xf32> -> vector<8x1xf32>
      %c0_106 = arith.constant 0 : index
      %c96_107 = arith.constant 96 : index
      %173 = vector.load %arg9[%c0_106, %c96_107] : memref<8x128xf32, #tpu.memory_space<vmem>>, vector<8x32xf32>
      %174 = vector.broadcast %172 : vector<8x1xf32> to vector<8x32xf32>
      %175 = arith.mulf %173, %174 : vector<8x32xf32>
      %176 = tpu.concatenate %157, %163, %169, %175 in 1 : vector<8x32xf32>, vector<8x32xf32>, vector<8x32xf32>, vector<8x32xf32> -> vector<8x128xf32>
      %177 = arith.truncf %176 : vector<8x128xf32> to vector<8x128xbf16>
      %c0_108 = arith.constant 0 : index
      %c0_109 = arith.constant 0 : index
      %c0_110 = arith.constant 0 : index
      %178 = vector.load %arg6[%c0_108, %c0_109, %c0_110] : memref<1x8x128xbf16, #tpu.memory_space<vmem>>, vector<1x8x128xbf16>
      %179 = vector.shape_cast %178 : vector<1x8x128xbf16> to vector<8x128xbf16>
      %180 = vector.shape_cast %177 : vector<8x128xbf16> to vector<1x8x128xbf16>
      tpu.vector_store %arg6[%c0_108, %c0_109, %c0_110], %180 {strides = array<i32>} : memref<1x8x128xbf16, #tpu.memory_space<vmem>>, vector<1x8x128xbf16>,
    } else {
    }
    return
  }
  func.func @transform_0(%arg0: i32, %arg1: i32, %arg2: i32) -> (i32, i32, i32) {
    %c0_i32 = arith.constant 0 : i32
    %c0_i32_0 = arith.constant 0 : i32
    return %arg0, %arg1, %c0_i32 : i32, i32, i32
  }
  func.func @transform_1(%arg0: i32, %arg1: i32, %arg2: i32) -> (i32, i32, i32) {
    %c1_i32 = arith.constant 1 : i32
    %c0_i32 = arith.constant 0 : i32
    return %arg0, %arg2, %c1_i32 : i32, i32, i32
  }
  func.func @transform_2(%arg0: i32, %arg1: i32, %arg2: i32) -> (i32, i32, i32) {
    %c2_i32 = arith.constant 2 : i32
    %c0_i32 = arith.constant 0 : i32
    return %arg0, %arg2, %c2_i32 : i32, i32, i32
  }
  func.func @transform_3(%arg0: i32, %arg1: i32, %arg2: i32) -> (i32, i32, i32) {
    %c0_i32 = arith.constant 0 : i32
    %c0_i32_0 = arith.constant 0 : i32
    return %arg0, %arg1, %c0_i32 : i32, i32, i32
  }
}

module attributes {stable_mosaic.version = 11 : i64} {
  func.func @_ffn_res_ln_kernel(%arg0: i32, %arg1: i32, %arg2: memref<16x128xbf16, #tpu.memory_space<vmem>>, %arg3: memref<128x256xbf16, #tpu.memory_space<vmem>>, %arg4: memref<1x256xf32, #tpu.memory_space<vmem>>, %arg5: memref<256x128xbf16, #tpu.memory_space<vmem>>, %arg6: memref<1x128xf32, #tpu.memory_space<vmem>>, %arg7: memref<1x128xf32, #tpu.memory_space<vmem>>, %arg8: memref<1x128xf32, #tpu.memory_space<vmem>>, %arg9: memref<16x128xbf16, #tpu.memory_space<vmem>>, %arg10: memref<16x128xf32, #tpu.memory_space<vmem>>) attributes {dimension_semantics = [#tpu.dimension_semantics<parallel>, #tpu.dimension_semantics<arbitrary>], iteration_bounds = array<i64: 1, 1>, scalar_prefetch = 0 : i64, scratch_operands = 1 : i64, tpu.core_type = #tpu.core_type<tc>, window_params = [{transform_indices = @transform_0, window_bounds = array<i64: 16, 128>}, {transform_indices = @transform_1, window_bounds = array<i64: 128, 256>}, {transform_indices = @transform_2, window_bounds = array<i64: 1, 256>}, {transform_indices = @transform_3, window_bounds = array<i64: 256, 128>}, {pipeline_mode = #tpu.pipeline_mode<synchronous>, transform_indices = @transform_4, window_bounds = array<i64: 1, 128>}, {pipeline_mode = #tpu.pipeline_mode<synchronous>, transform_indices = @transform_5, window_bounds = array<i64: 1, 128>}, {pipeline_mode = #tpu.pipeline_mode<synchronous>, transform_indices = @transform_6, window_bounds = array<i64: 1, 128>}, {transform_indices = @transform_7, window_bounds = array<i64: 16, 128>}]} {
    %c0_i32 = arith.constant 0 : i32
    %0 = arith.cmpi eq, %arg1, %c0_i32 : i32
    %1 = arith.extui %0 : i1 to i32
    %c0_i32_0 = arith.constant 0 : i32
    %2 = arith.cmpi ne, %1, %c0_i32_0 : i32
    scf.if %2 {
      %cst_16 = arith.constant 0.000000e+00 : f32
      %20 = vector.broadcast %cst_16 : f32 to vector<16x128xf32>
      %c0_17 = arith.constant 0 : index
      %c0_18 = arith.constant 0 : index
      %21 = vector.load %arg10[%c0_17, %c0_18] : memref<16x128xf32, #tpu.memory_space<vmem>>, vector<16x128xf32>
      tpu.vector_store %arg10[%c0_17, %c0_18], %20 {strides = array<i32>} : memref<16x128xf32, #tpu.memory_space<vmem>>, vector<16x128xf32>,
    } else {
    }
    %c0 = arith.constant 0 : index
    %c0_1 = arith.constant 0 : index
    %3 = vector.load %arg2[%c0, %c0_1] : memref<16x128xbf16, #tpu.memory_space<vmem>>, vector<16x128xbf16>
    %c0_2 = arith.constant 0 : index
    %c0_3 = arith.constant 0 : index
    %4 = vector.load %arg3[%c0_2, %c0_3] : memref<128x256xbf16, #tpu.memory_space<vmem>>, vector<128x256xbf16>
    %cst = arith.constant dense<0.000000e+00> : vector<16x256xf32>
    %5 = tpu.matmul %3, %4, %cst {dimension_numbers = #tpu.dot_dimension_numbers<[1], [0], [0], [1], [0, 0, 1, 1], [], []>} : vector<16x128xbf16>, vector<128x256xbf16>, vector<16x256xf32> -> vector<16x256xf32>
    %c0_4 = arith.constant 0 : index
    %c0_5 = arith.constant 0 : index
    %6 = vector.load %arg4[%c0_4, %c0_5] : memref<1x256xf32, #tpu.memory_space<vmem>>, vector<1x256xf32>
    %7 = vector.broadcast %6 : vector<1x256xf32> to vector<16x256xf32>
    %8 = arith.addf %5, %7 : vector<16x256xf32>
    %cst_6 = arith.constant 0.000000e+00 : f32
    %9 = vector.broadcast %cst_6 : f32 to vector<16x256xf32>
    %10 = arith.maximumf %8, %9 : vector<16x256xf32>
    %c0_7 = arith.constant 0 : index
    %c0_8 = arith.constant 0 : index
    %11 = vector.load %arg10[%c0_7, %c0_8] : memref<16x128xf32, #tpu.memory_space<vmem>>, vector<16x128xf32>
    %12 = arith.truncf %10 : vector<16x256xf32> to vector<16x256xbf16>
    %c0_9 = arith.constant 0 : index
    %c0_10 = arith.constant 0 : index
    %13 = vector.load %arg5[%c0_9, %c0_10] : memref<256x128xbf16, #tpu.memory_space<vmem>>, vector<256x128xbf16>
    %cst_11 = arith.constant dense<0.000000e+00> : vector<16x128xf32>
    %14 = tpu.matmul %12, %13, %cst_11 {dimension_numbers = #tpu.dot_dimension_numbers<[1], [0], [0], [1], [0, 0, 1, 1], [], []>} : vector<16x256xbf16>, vector<256x128xbf16>, vector<16x128xf32> -> vector<16x128xf32>
    %15 = arith.addf %11, %14 : vector<16x128xf32>
    %c0_12 = arith.constant 0 : index
    %c0_13 = arith.constant 0 : index
    %16 = vector.load %arg10[%c0_12, %c0_13] : memref<16x128xf32, #tpu.memory_space<vmem>>, vector<16x128xf32>
    tpu.vector_store %arg10[%c0_12, %c0_13], %15 {strides = array<i32>} : memref<16x128xf32, #tpu.memory_space<vmem>>, vector<16x128xf32>,
    %c0_i32_14 = arith.constant 0 : i32
    %17 = arith.cmpi eq, %arg1, %c0_i32_14 : i32
    %18 = arith.extui %17 : i1 to i32
    %c0_i32_15 = arith.constant 0 : i32
    %19 = arith.cmpi ne, %18, %c0_i32_15 : i32
    scf.if %19 {
      %c0_16 = arith.constant 0 : index
      %c0_17 = arith.constant 0 : index
      %20 = vector.load %arg10[%c0_16, %c0_17] : memref<16x128xf32, #tpu.memory_space<vmem>>, vector<16x128xf32>
      %c0_18 = arith.constant 0 : index
      %c0_19 = arith.constant 0 : index
      %21 = vector.load %arg6[%c0_18, %c0_19] : memref<1x128xf32, #tpu.memory_space<vmem>>, vector<1x128xf32>
      %22 = vector.broadcast %21 : vector<1x128xf32> to vector<16x128xf32>
      %23 = arith.addf %20, %22 : vector<16x128xf32>
      %c0_20 = arith.constant 0 : index
      %c0_21 = arith.constant 0 : index
      %24 = vector.load %arg2[%c0_20, %c0_21] : memref<16x128xbf16, #tpu.memory_space<vmem>>, vector<16x128xbf16>
      %25 = arith.extf %24 : vector<16x128xbf16> to vector<16x128xf32>
      %26 = arith.addf %23, %25 : vector<16x128xf32>
      %cst_22 = arith.constant dense<0.000000e+00> : vector<16xf32>
      %27 = vector.multi_reduction <add>, %26, %cst_22 [1] : vector<16x128xf32> to vector<16xf32>
      %28 = vector.shape_cast %27 : vector<16xf32> to vector<16x1xf32>
      %cst_23 = arith.constant 1.280000e+02 : f32
      %29 = vector.broadcast %cst_23 : f32 to vector<16x1xf32>
      %30 = arith.divf %28, %29 : vector<16x1xf32>
      %31 = vector.broadcast %30 : vector<16x1xf32> to vector<16x128xf32>
      %32 = arith.subf %26, %31 : vector<16x128xf32>
      %33 = arith.mulf %32, %32 : vector<16x128xf32>
      %cst_24 = arith.constant dense<0.000000e+00> : vector<16xf32>
      %34 = vector.multi_reduction <add>, %33, %cst_24 [1] : vector<16x128xf32> to vector<16xf32>
      %35 = vector.shape_cast %34 : vector<16xf32> to vector<16x1xf32>
      %cst_25 = arith.constant 1.280000e+02 : f32
      %36 = vector.broadcast %cst_25 : f32 to vector<16x1xf32>
      %37 = arith.divf %35, %36 : vector<16x1xf32>
      %38 = vector.broadcast %30 : vector<16x1xf32> to vector<16x128xf32>
      %39 = arith.subf %26, %38 : vector<16x128xf32>
      %cst_26 = arith.constant 9.99999974E-6 : f32
      %40 = vector.broadcast %cst_26 : f32 to vector<16x1xf32>
      %41 = arith.addf %37, %40 : vector<16x1xf32>
      %42 = math.rsqrt %41 : vector<16x1xf32>
      %43 = vector.broadcast %42 : vector<16x1xf32> to vector<16x128xf32>
      %44 = arith.mulf %39, %43 : vector<16x128xf32>
      %c0_27 = arith.constant 0 : index
      %c0_28 = arith.constant 0 : index
      %45 = vector.load %arg7[%c0_27, %c0_28] : memref<1x128xf32, #tpu.memory_space<vmem>>, vector<1x128xf32>
      %46 = vector.broadcast %45 : vector<1x128xf32> to vector<16x128xf32>
      %47 = arith.mulf %44, %46 : vector<16x128xf32>
      %c0_29 = arith.constant 0 : index
      %c0_30 = arith.constant 0 : index
      %48 = vector.load %arg8[%c0_29, %c0_30] : memref<1x128xf32, #tpu.memory_space<vmem>>, vector<1x128xf32>
      %49 = vector.broadcast %48 : vector<1x128xf32> to vector<16x128xf32>
      %50 = arith.addf %47, %49 : vector<16x128xf32>
      %51 = arith.truncf %50 : vector<16x128xf32> to vector<16x128xbf16>
      %c0_31 = arith.constant 0 : index
      %c0_32 = arith.constant 0 : index
      %52 = vector.load %arg9[%c0_31, %c0_32] : memref<16x128xbf16, #tpu.memory_space<vmem>>, vector<16x128xbf16>
      tpu.vector_store %arg9[%c0_31, %c0_32], %51 {strides = array<i32>} : memref<16x128xbf16, #tpu.memory_space<vmem>>, vector<16x128xbf16>,
    } else {
    }
    return
  }
  func.func @transform_0(%arg0: i32, %arg1: i32) -> (i32, i32) {
    %c0_i32 = arith.constant 0 : i32
    %c0_i32_0 = arith.constant 0 : i32
    return %arg0, %c0_i32 : i32, i32
  }
  func.func @transform_1(%arg0: i32, %arg1: i32) -> (i32, i32) {
    %c0_i32 = arith.constant 0 : i32
    %c0_i32_0 = arith.constant 0 : i32
    return %c0_i32, %arg1 : i32, i32
  }
  func.func @transform_2(%arg0: i32, %arg1: i32) -> (i32, i32) {
    %c0_i32 = arith.constant 0 : i32
    %c0_i32_0 = arith.constant 0 : i32
    return %c0_i32, %arg1 : i32, i32
  }
  func.func @transform_3(%arg0: i32, %arg1: i32) -> (i32, i32) {
    %c0_i32 = arith.constant 0 : i32
    %c0_i32_0 = arith.constant 0 : i32
    return %arg1, %c0_i32 : i32, i32
  }
  func.func @transform_4(%arg0: i32, %arg1: i32) -> (i32, i32) {
    %c0_i32 = arith.constant 0 : i32
    %c0_i32_0 = arith.constant 0 : i32
    %c0_i32_1 = arith.constant 0 : i32
    return %c0_i32, %c0_i32_0 : i32, i32
  }
  func.func @transform_5(%arg0: i32, %arg1: i32) -> (i32, i32) {
    %c0_i32 = arith.constant 0 : i32
    %c0_i32_0 = arith.constant 0 : i32
    %c0_i32_1 = arith.constant 0 : i32
    return %c0_i32, %c0_i32_0 : i32, i32
  }
  func.func @transform_6(%arg0: i32, %arg1: i32) -> (i32, i32) {
    %c0_i32 = arith.constant 0 : i32
    %c0_i32_0 = arith.constant 0 : i32
    %c0_i32_1 = arith.constant 0 : i32
    return %c0_i32, %c0_i32_0 : i32, i32
  }
  func.func @transform_7(%arg0: i32, %arg1: i32) -> (i32, i32) {
    %c0_i32 = arith.constant 0 : i32
    %c0_i32_0 = arith.constant 0 : i32
    return %arg0, %c0_i32 : i32, i32
  }
}

module attributes {stable_mosaic.version = 11 : i64} {
  func.func @_matmul_res_ln_kernel(%arg0: i32, %arg1: i32, %arg2: memref<16x128xbf16, #tpu.memory_space<vmem>>, %arg3: memref<128x128xbf16, #tpu.memory_space<vmem>>, %arg4: memref<1x128xf32, #tpu.memory_space<vmem>>, %arg5: memref<16x128xbf16, #tpu.memory_space<vmem>>, %arg6: memref<1x128xf32, #tpu.memory_space<vmem>>, %arg7: memref<1x128xf32, #tpu.memory_space<vmem>>, %arg8: memref<16x128xbf16, #tpu.memory_space<vmem>>, %arg9: memref<16x128xf32, #tpu.memory_space<vmem>>) attributes {dimension_semantics = [#tpu.dimension_semantics<parallel>, #tpu.dimension_semantics<arbitrary>], iteration_bounds = array<i64: 1, 1>, scalar_prefetch = 0 : i64, scratch_operands = 1 : i64, tpu.core_type = #tpu.core_type<tc>, window_params = [{transform_indices = @transform_0, window_bounds = array<i64: 16, 128>}, {transform_indices = @transform_1, window_bounds = array<i64: 128, 128>}, {pipeline_mode = #tpu.pipeline_mode<synchronous>, transform_indices = @transform_2, window_bounds = array<i64: 1, 128>}, {transform_indices = @transform_3, window_bounds = array<i64: 16, 128>}, {pipeline_mode = #tpu.pipeline_mode<synchronous>, transform_indices = @transform_4, window_bounds = array<i64: 1, 128>}, {pipeline_mode = #tpu.pipeline_mode<synchronous>, transform_indices = @transform_5, window_bounds = array<i64: 1, 128>}, {transform_indices = @transform_6, window_bounds = array<i64: 16, 128>}]} {
    %c0_i32 = arith.constant 0 : i32
    %0 = arith.cmpi eq, %arg1, %c0_i32 : i32
    %1 = arith.extui %0 : i1 to i32
    %c0_i32_0 = arith.constant 0 : i32
    %2 = arith.cmpi ne, %1, %c0_i32_0 : i32
    scf.if %2 {
      %cst_10 = arith.constant 0.000000e+00 : f32
      %12 = vector.broadcast %cst_10 : f32 to vector<16x128xf32>
      %c0_11 = arith.constant 0 : index
      %c0_12 = arith.constant 0 : index
      %13 = vector.load %arg9[%c0_11, %c0_12] : memref<16x128xf32, #tpu.memory_space<vmem>>, vector<16x128xf32>
      tpu.vector_store %arg9[%c0_11, %c0_12], %12 {strides = array<i32>} : memref<16x128xf32, #tpu.memory_space<vmem>>, vector<16x128xf32>,
    } else {
    }
    %c0 = arith.constant 0 : index
    %c0_1 = arith.constant 0 : index
    %3 = vector.load %arg9[%c0, %c0_1] : memref<16x128xf32, #tpu.memory_space<vmem>>, vector<16x128xf32>
    %c0_2 = arith.constant 0 : index
    %c0_3 = arith.constant 0 : index
    %4 = vector.load %arg2[%c0_2, %c0_3] : memref<16x128xbf16, #tpu.memory_space<vmem>>, vector<16x128xbf16>
    %c0_4 = arith.constant 0 : index
    %c0_5 = arith.constant 0 : index
    %5 = vector.load %arg3[%c0_4, %c0_5] : memref<128x128xbf16, #tpu.memory_space<vmem>>, vector<128x128xbf16>
    %cst = arith.constant dense<0.000000e+00> : vector<16x128xf32>
    %6 = tpu.matmul %4, %5, %cst {dimension_numbers = #tpu.dot_dimension_numbers<[1], [0], [0], [1], [0, 0, 1, 1], [], []>} : vector<16x128xbf16>, vector<128x128xbf16>, vector<16x128xf32> -> vector<16x128xf32>
    %7 = arith.addf %3, %6 : vector<16x128xf32>
    %c0_6 = arith.constant 0 : index
    %c0_7 = arith.constant 0 : index
    %8 = vector.load %arg9[%c0_6, %c0_7] : memref<16x128xf32, #tpu.memory_space<vmem>>, vector<16x128xf32>
    tpu.vector_store %arg9[%c0_6, %c0_7], %7 {strides = array<i32>} : memref<16x128xf32, #tpu.memory_space<vmem>>, vector<16x128xf32>,
    %c0_i32_8 = arith.constant 0 : i32
    %9 = arith.cmpi eq, %arg1, %c0_i32_8 : i32
    %10 = arith.extui %9 : i1 to i32
    %c0_i32_9 = arith.constant 0 : i32
    %11 = arith.cmpi ne, %10, %c0_i32_9 : i32
    scf.if %11 {
      %c0_10 = arith.constant 0 : index
      %c0_11 = arith.constant 0 : index
      %12 = vector.load %arg9[%c0_10, %c0_11] : memref<16x128xf32, #tpu.memory_space<vmem>>, vector<16x128xf32>
      %c0_12 = arith.constant 0 : index
      %c0_13 = arith.constant 0 : index
      %13 = vector.load %arg4[%c0_12, %c0_13] : memref<1x128xf32, #tpu.memory_space<vmem>>, vector<1x128xf32>
      %14 = vector.broadcast %13 : vector<1x128xf32> to vector<16x128xf32>
      %15 = arith.addf %12, %14 : vector<16x128xf32>
      %c0_14 = arith.constant 0 : index
      %c0_15 = arith.constant 0 : index
      %16 = vector.load %arg5[%c0_14, %c0_15] : memref<16x128xbf16, #tpu.memory_space<vmem>>, vector<16x128xbf16>
      %17 = arith.extf %16 : vector<16x128xbf16> to vector<16x128xf32>
      %18 = arith.addf %15, %17 : vector<16x128xf32>
      %cst_16 = arith.constant dense<0.000000e+00> : vector<16xf32>
      %19 = vector.multi_reduction <add>, %18, %cst_16 [1] : vector<16x128xf32> to vector<16xf32>
      %20 = vector.shape_cast %19 : vector<16xf32> to vector<16x1xf32>
      %cst_17 = arith.constant 1.280000e+02 : f32
      %21 = vector.broadcast %cst_17 : f32 to vector<16x1xf32>
      %22 = arith.divf %20, %21 : vector<16x1xf32>
      %23 = vector.broadcast %22 : vector<16x1xf32> to vector<16x128xf32>
      %24 = arith.subf %18, %23 : vector<16x128xf32>
      %25 = arith.mulf %24, %24 : vector<16x128xf32>
      %cst_18 = arith.constant dense<0.000000e+00> : vector<16xf32>
      %26 = vector.multi_reduction <add>, %25, %cst_18 [1] : vector<16x128xf32> to vector<16xf32>
      %27 = vector.shape_cast %26 : vector<16xf32> to vector<16x1xf32>
      %cst_19 = arith.constant 1.280000e+02 : f32
      %28 = vector.broadcast %cst_19 : f32 to vector<16x1xf32>
      %29 = arith.divf %27, %28 : vector<16x1xf32>
      %30 = vector.broadcast %22 : vector<16x1xf32> to vector<16x128xf32>
      %31 = arith.subf %18, %30 : vector<16x128xf32>
      %cst_20 = arith.constant 9.99999974E-6 : f32
      %32 = vector.broadcast %cst_20 : f32 to vector<16x1xf32>
      %33 = arith.addf %29, %32 : vector<16x1xf32>
      %34 = math.rsqrt %33 : vector<16x1xf32>
      %35 = vector.broadcast %34 : vector<16x1xf32> to vector<16x128xf32>
      %36 = arith.mulf %31, %35 : vector<16x128xf32>
      %c0_21 = arith.constant 0 : index
      %c0_22 = arith.constant 0 : index
      %37 = vector.load %arg6[%c0_21, %c0_22] : memref<1x128xf32, #tpu.memory_space<vmem>>, vector<1x128xf32>
      %38 = vector.broadcast %37 : vector<1x128xf32> to vector<16x128xf32>
      %39 = arith.mulf %36, %38 : vector<16x128xf32>
      %c0_23 = arith.constant 0 : index
      %c0_24 = arith.constant 0 : index
      %40 = vector.load %arg7[%c0_23, %c0_24] : memref<1x128xf32, #tpu.memory_space<vmem>>, vector<1x128xf32>
      %41 = vector.broadcast %40 : vector<1x128xf32> to vector<16x128xf32>
      %42 = arith.addf %39, %41 : vector<16x128xf32>
      %43 = arith.truncf %42 : vector<16x128xf32> to vector<16x128xbf16>
      %c0_25 = arith.constant 0 : index
      %c0_26 = arith.constant 0 : index
      %44 = vector.load %arg8[%c0_25, %c0_26] : memref<16x128xbf16, #tpu.memory_space<vmem>>, vector<16x128xbf16>
      tpu.vector_store %arg8[%c0_25, %c0_26], %43 {strides = array<i32>} : memref<16x128xbf16, #tpu.memory_space<vmem>>, vector<16x128xbf16>,
    } else {
    }
    return
  }
  func.func @transform_0(%arg0: i32, %arg1: i32) -> (i32, i32) {
    %c0_i32 = arith.constant 0 : i32
    return %arg0, %arg1 : i32, i32
  }
  func.func @transform_1(%arg0: i32, %arg1: i32) -> (i32, i32) {
    %c0_i32 = arith.constant 0 : i32
    %c0_i32_0 = arith.constant 0 : i32
    return %arg1, %c0_i32 : i32, i32
  }
  func.func @transform_2(%arg0: i32, %arg1: i32) -> (i32, i32) {
    %c0_i32 = arith.constant 0 : i32
    %c0_i32_0 = arith.constant 0 : i32
    %c0_i32_1 = arith.constant 0 : i32
    return %c0_i32, %c0_i32_0 : i32, i32
  }
  func.func @transform_3(%arg0: i32, %arg1: i32) -> (i32, i32) {
    %c0_i32 = arith.constant 0 : i32
    %c0_i32_0 = arith.constant 0 : i32
    return %arg0, %c0_i32 : i32, i32
  }
  func.func @transform_4(%arg0: i32, %arg1: i32) -> (i32, i32) {
    %c0_i32 = arith.constant 0 : i32
    %c0_i32_0 = arith.constant 0 : i32
    %c0_i32_1 = arith.constant 0 : i32
    return %c0_i32, %c0_i32_0 : i32, i32
  }
  func.func @transform_5(%arg0: i32, %arg1: i32) -> (i32, i32) {
    %c0_i32 = arith.constant 0 : i32
    %c0_i32_0 = arith.constant 0 : i32
    %c0_i32_1 = arith.constant 0 : i32
    return %c0_i32, %c0_i32_0 : i32, i32
  }
  func.func @transform_6(%arg0: i32, %arg1: i32) -> (i32, i32) {
    %c0_i32 = arith.constant 0 : i32
    %c0_i32_0 = arith.constant 0 : i32
    return %arg0, %c0_i32 : i32, i32
  }
}

module attributes {stable_mosaic.version = 11 : i64} {
  func.func @_ffn_res_ln_kernel(%arg0: i32, %arg1: i32, %arg2: memref<16x128xbf16, #tpu.memory_space<vmem>>, %arg3: memref<128x256xbf16, #tpu.memory_space<vmem>>, %arg4: memref<1x256xf32, #tpu.memory_space<vmem>>, %arg5: memref<256x128xbf16, #tpu.memory_space<vmem>>, %arg6: memref<1x128xf32, #tpu.memory_space<vmem>>, %arg7: memref<1x128xf32, #tpu.memory_space<vmem>>, %arg8: memref<1x128xf32, #tpu.memory_space<vmem>>, %arg9: memref<16x128xbf16, #tpu.memory_space<vmem>>, %arg10: memref<16x128xf32, #tpu.memory_space<vmem>>) attributes {dimension_semantics = [#tpu.dimension_semantics<parallel>, #tpu.dimension_semantics<arbitrary>], iteration_bounds = array<i64: 1, 1>, scalar_prefetch = 0 : i64, scratch_operands = 1 : i64, tpu.core_type = #tpu.core_type<tc>, window_params = [{transform_indices = @transform_0, window_bounds = array<i64: 16, 128>}, {transform_indices = @transform_1, window_bounds = array<i64: 128, 256>}, {transform_indices = @transform_2, window_bounds = array<i64: 1, 256>}, {transform_indices = @transform_3, window_bounds = array<i64: 256, 128>}, {pipeline_mode = #tpu.pipeline_mode<synchronous>, transform_indices = @transform_4, window_bounds = array<i64: 1, 128>}, {pipeline_mode = #tpu.pipeline_mode<synchronous>, transform_indices = @transform_5, window_bounds = array<i64: 1, 128>}, {pipeline_mode = #tpu.pipeline_mode<synchronous>, transform_indices = @transform_6, window_bounds = array<i64: 1, 128>}, {transform_indices = @transform_7, window_bounds = array<i64: 16, 128>}]} {
    %c0_i32 = arith.constant 0 : i32
    %0 = arith.cmpi eq, %arg1, %c0_i32 : i32
    %1 = arith.extui %0 : i1 to i32
    %c0_i32_0 = arith.constant 0 : i32
    %2 = arith.cmpi ne, %1, %c0_i32_0 : i32
    scf.if %2 {
      %cst_16 = arith.constant 0.000000e+00 : f32
      %20 = vector.broadcast %cst_16 : f32 to vector<16x128xf32>
      %c0_17 = arith.constant 0 : index
      %c0_18 = arith.constant 0 : index
      %21 = vector.load %arg10[%c0_17, %c0_18] : memref<16x128xf32, #tpu.memory_space<vmem>>, vector<16x128xf32>
      tpu.vector_store %arg10[%c0_17, %c0_18], %20 {strides = array<i32>} : memref<16x128xf32, #tpu.memory_space<vmem>>, vector<16x128xf32>,
    } else {
    }
    %c0 = arith.constant 0 : index
    %c0_1 = arith.constant 0 : index
    %3 = vector.load %arg2[%c0, %c0_1] : memref<16x128xbf16, #tpu.memory_space<vmem>>, vector<16x128xbf16>
    %c0_2 = arith.constant 0 : index
    %c0_3 = arith.constant 0 : index
    %4 = vector.load %arg3[%c0_2, %c0_3] : memref<128x256xbf16, #tpu.memory_space<vmem>>, vector<128x256xbf16>
    %cst = arith.constant dense<0.000000e+00> : vector<16x256xf32>
    %5 = tpu.matmul %3, %4, %cst {dimension_numbers = #tpu.dot_dimension_numbers<[1], [0], [0], [1], [0, 0, 1, 1], [], []>} : vector<16x128xbf16>, vector<128x256xbf16>, vector<16x256xf32> -> vector<16x256xf32>
    %c0_4 = arith.constant 0 : index
    %c0_5 = arith.constant 0 : index
    %6 = vector.load %arg4[%c0_4, %c0_5] : memref<1x256xf32, #tpu.memory_space<vmem>>, vector<1x256xf32>
    %7 = vector.broadcast %6 : vector<1x256xf32> to vector<16x256xf32>
    %8 = arith.addf %5, %7 : vector<16x256xf32>
    %cst_6 = arith.constant 0.000000e+00 : f32
    %9 = vector.broadcast %cst_6 : f32 to vector<16x256xf32>
    %10 = arith.maximumf %8, %9 : vector<16x256xf32>
    %c0_7 = arith.constant 0 : index
    %c0_8 = arith.constant 0 : index
    %11 = vector.load %arg10[%c0_7, %c0_8] : memref<16x128xf32, #tpu.memory_space<vmem>>, vector<16x128xf32>
    %12 = arith.truncf %10 : vector<16x256xf32> to vector<16x256xbf16>
    %c0_9 = arith.constant 0 : index
    %c0_10 = arith.constant 0 : index
    %13 = vector.load %arg5[%c0_9, %c0_10] : memref<256x128xbf16, #tpu.memory_space<vmem>>, vector<256x128xbf16>
    %cst_11 = arith.constant dense<0.000000e+00> : vector<16x128xf32>
    %14 = tpu.matmul %12, %13, %cst_11 {dimension_numbers = #tpu.dot_dimension_numbers<[1], [0], [0], [1], [0, 0, 1, 1], [], []>} : vector<16x256xbf16>, vector<256x128xbf16>, vector<16x128xf32> -> vector<16x128xf32>
    %15 = arith.addf %11, %14 : vector<16x128xf32>
    %c0_12 = arith.constant 0 : index
    %c0_13 = arith.constant 0 : index
    %16 = vector.load %arg10[%c0_12, %c0_13] : memref<16x128xf32, #tpu.memory_space<vmem>>, vector<16x128xf32>
    tpu.vector_store %arg10[%c0_12, %c0_13], %15 {strides = array<i32>} : memref<16x128xf32, #tpu.memory_space<vmem>>, vector<16x128xf32>,
    %c0_i32_14 = arith.constant 0 : i32
    %17 = arith.cmpi eq, %arg1, %c0_i32_14 : i32
    %18 = arith.extui %17 : i1 to i32
    %c0_i32_15 = arith.constant 0 : i32
    %19 = arith.cmpi ne, %18, %c0_i32_15 : i32
    scf.if %19 {
      %c0_16 = arith.constant 0 : index
      %c0_17 = arith.constant 0 : index
      %20 = vector.load %arg10[%c0_16, %c0_17] : memref<16x128xf32, #tpu.memory_space<vmem>>, vector<16x128xf32>
      %c0_18 = arith.constant 0 : index
      %c0_19 = arith.constant 0 : index
      %21 = vector.load %arg6[%c0_18, %c0_19] : memref<1x128xf32, #tpu.memory_space<vmem>>, vector<1x128xf32>
      %22 = vector.broadcast %21 : vector<1x128xf32> to vector<16x128xf32>
      %23 = arith.addf %20, %22 : vector<16x128xf32>
      %c0_20 = arith.constant 0 : index
      %c0_21 = arith.constant 0 : index
      %24 = vector.load %arg2[%c0_20, %c0_21] : memref<16x128xbf16, #tpu.memory_space<vmem>>, vector<16x128xbf16>
      %25 = arith.extf %24 : vector<16x128xbf16> to vector<16x128xf32>
      %26 = arith.addf %23, %25 : vector<16x128xf32>
      %cst_22 = arith.constant dense<0.000000e+00> : vector<16xf32>
      %27 = vector.multi_reduction <add>, %26, %cst_22 [1] : vector<16x128xf32> to vector<16xf32>
      %28 = vector.shape_cast %27 : vector<16xf32> to vector<16x1xf32>
      %cst_23 = arith.constant 1.280000e+02 : f32
      %29 = vector.broadcast %cst_23 : f32 to vector<16x1xf32>
      %30 = arith.divf %28, %29 : vector<16x1xf32>
      %31 = vector.broadcast %30 : vector<16x1xf32> to vector<16x128xf32>
      %32 = arith.subf %26, %31 : vector<16x128xf32>
      %33 = arith.mulf %32, %32 : vector<16x128xf32>
      %cst_24 = arith.constant dense<0.000000e+00> : vector<16xf32>
      %34 = vector.multi_reduction <add>, %33, %cst_24 [1] : vector<16x128xf32> to vector<16xf32>
      %35 = vector.shape_cast %34 : vector<16xf32> to vector<16x1xf32>
      %cst_25 = arith.constant 1.280000e+02 : f32
      %36 = vector.broadcast %cst_25 : f32 to vector<16x1xf32>
      %37 = arith.divf %35, %36 : vector<16x1xf32>
      %38 = vector.broadcast %30 : vector<16x1xf32> to vector<16x128xf32>
      %39 = arith.subf %26, %38 : vector<16x128xf32>
      %cst_26 = arith.constant 9.99999974E-6 : f32
      %40 = vector.broadcast %cst_26 : f32 to vector<16x1xf32>
      %41 = arith.addf %37, %40 : vector<16x1xf32>
      %42 = math.rsqrt %41 : vector<16x1xf32>
      %43 = vector.broadcast %42 : vector<16x1xf32> to vector<16x128xf32>
      %44 = arith.mulf %39, %43 : vector<16x128xf32>
      %c0_27 = arith.constant 0 : index
      %c0_28 = arith.constant 0 : index
      %45 = vector.load %arg7[%c0_27, %c0_28] : memref<1x128xf32, #tpu.memory_space<vmem>>, vector<1x128xf32>
      %46 = vector.broadcast %45 : vector<1x128xf32> to vector<16x128xf32>
      %47 = arith.mulf %44, %46 : vector<16x128xf32>
      %c0_29 = arith.constant 0 : index
      %c0_30 = arith.constant 0 : index
      %48 = vector.load %arg8[%c0_29, %c0_30] : memref<1x128xf32, #tpu.memory_space<vmem>>, vector<1x128xf32>
      %49 = vector.broadcast %48 : vector<1x128xf32> to vector<16x128xf32>
      %50 = arith.addf %47, %49 : vector<16x128xf32>
      %51 = arith.truncf %50 : vector<16x128xf32> to vector<16x128xbf16>
      %c0_31 = arith.constant 0 : index
      %c0_32 = arith.constant 0 : index
      %52 = vector.load %arg9[%c0_31, %c0_32] : memref<16x128xbf16, #tpu.memory_space<vmem>>, vector<16x128xbf16>
      tpu.vector_store %arg9[%c0_31, %c0_32], %51 {strides = array<i32>} : memref<16x128xbf16, #tpu.memory_space<vmem>>, vector<16x128xbf16>,
    } else {
    }
    return
  }
  func.func @transform_0(%arg0: i32, %arg1: i32) -> (i32, i32) {
    %c0_i32 = arith.constant 0 : i32
    %c0_i32_0 = arith.constant 0 : i32
    return %arg0, %c0_i32 : i32, i32
  }
  func.func @transform_1(%arg0: i32, %arg1: i32) -> (i32, i32) {
    %c0_i32 = arith.constant 0 : i32
    %c0_i32_0 = arith.constant 0 : i32
    return %c0_i32, %arg1 : i32, i32
  }
  func.func @transform_2(%arg0: i32, %arg1: i32) -> (i32, i32) {
    %c0_i32 = arith.constant 0 : i32
    %c0_i32_0 = arith.constant 0 : i32
    return %c0_i32, %arg1 : i32, i32
  }
  func.func @transform_3(%arg0: i32, %arg1: i32) -> (i32, i32) {
    %c0_i32 = arith.constant 0 : i32
    %c0_i32_0 = arith.constant 0 : i32
    return %arg1, %c0_i32 : i32, i32
  }
  func.func @transform_4(%arg0: i32, %arg1: i32) -> (i32, i32) {
    %c0_i32 = arith.constant 0 : i32
    %c0_i32_0 = arith.constant 0 : i32
    %c0_i32_1 = arith.constant 0 : i32
    return %c0_i32, %c0_i32_0 : i32, i32
  }
  func.func @transform_5(%arg0: i32, %arg1: i32) -> (i32, i32) {
    %c0_i32 = arith.constant 0 : i32
    %c0_i32_0 = arith.constant 0 : i32
    %c0_i32_1 = arith.constant 0 : i32
    return %c0_i32, %c0_i32_0 : i32, i32
  }
  func.func @transform_6(%arg0: i32, %arg1: i32) -> (i32, i32) {
    %c0_i32 = arith.constant 0 : i32
    %c0_i32_0 = arith.constant 0 : i32
    %c0_i32_1 = arith.constant 0 : i32
    return %c0_i32, %c0_i32_0 : i32, i32
  }
  func.func @transform_7(%arg0: i32, %arg1: i32) -> (i32, i32) {
    %c0_i32 = arith.constant 0 : i32
    %c0_i32_0 = arith.constant 0 : i32
    return %arg0, %c0_i32 : i32, i32
  }
}

module attributes {stable_mosaic.version = 11 : i64} {
  func.func @_matmul_bias_kernel(%arg0: i32, %arg1: i32, %arg2: i32, %arg3: memref<16x128xbf16, #tpu.memory_space<vmem>>, %arg4: memref<128x256xbf16, #tpu.memory_space<vmem>>, %arg5: memref<1x256xf32, #tpu.memory_space<vmem>>, %arg6: memref<16x256xbf16, #tpu.memory_space<vmem>>, %arg7: memref<16x256xf32, #tpu.memory_space<vmem>>) attributes {dimension_semantics = [#tpu.dimension_semantics<parallel>, #tpu.dimension_semantics<parallel>, #tpu.dimension_semantics<arbitrary>], iteration_bounds = array<i64: 1, 1, 1>, scalar_prefetch = 0 : i64, scratch_operands = 1 : i64, tpu.core_type = #tpu.core_type<tc>, window_params = [{transform_indices = @transform_0, window_bounds = array<i64: 16, 128>}, {transform_indices = @transform_1, window_bounds = array<i64: 128, 256>}, {transform_indices = @transform_2, window_bounds = array<i64: 1, 256>}, {transform_indices = @transform_3, window_bounds = array<i64: 16, 256>}]} {
    %c0_i32 = arith.constant 0 : i32
    %0 = arith.cmpi eq, %arg2, %c0_i32 : i32
    %1 = arith.extui %0 : i1 to i32
    %c0_i32_0 = arith.constant 0 : i32
    %2 = arith.cmpi ne, %1, %c0_i32_0 : i32
    scf.if %2 {
      %cst_10 = arith.constant 0.000000e+00 : f32
      %12 = vector.broadcast %cst_10 : f32 to vector<16x256xf32>
      %c0_11 = arith.constant 0 : index
      %c0_12 = arith.constant 0 : index
      %13 = vector.load %arg7[%c0_11, %c0_12] : memref<16x256xf32, #tpu.memory_space<vmem>>, vector<16x256xf32>
      tpu.vector_store %arg7[%c0_11, %c0_12], %12 {strides = array<i32>} : memref<16x256xf32, #tpu.memory_space<vmem>>, vector<16x256xf32>,
    } else {
    }
    %c0 = arith.constant 0 : index
    %c0_1 = arith.constant 0 : index
    %3 = vector.load %arg7[%c0, %c0_1] : memref<16x256xf32, #tpu.memory_space<vmem>>, vector<16x256xf32>
    %c0_2 = arith.constant 0 : index
    %c0_3 = arith.constant 0 : index
    %4 = vector.load %arg3[%c0_2, %c0_3] : memref<16x128xbf16, #tpu.memory_space<vmem>>, vector<16x128xbf16>
    %c0_4 = arith.constant 0 : index
    %c0_5 = arith.constant 0 : index
    %5 = vector.load %arg4[%c0_4, %c0_5] : memref<128x256xbf16, #tpu.memory_space<vmem>>, vector<128x256xbf16>
    %cst = arith.constant dense<0.000000e+00> : vector<16x256xf32>
    %6 = tpu.matmul %4, %5, %cst {dimension_numbers = #tpu.dot_dimension_numbers<[1], [0], [0], [1], [0, 0, 1, 1], [], []>} : vector<16x128xbf16>, vector<128x256xbf16>, vector<16x256xf32> -> vector<16x256xf32>
    %7 = arith.addf %3, %6 : vector<16x256xf32>
    %c0_6 = arith.constant 0 : index
    %c0_7 = arith.constant 0 : index
    %8 = vector.load %arg7[%c0_6, %c0_7] : memref<16x256xf32, #tpu.memory_space<vmem>>, vector<16x256xf32>
    tpu.vector_store %arg7[%c0_6, %c0_7], %7 {strides = array<i32>} : memref<16x256xf32, #tpu.memory_space<vmem>>, vector<16x256xf32>,
    %c0_i32_8 = arith.constant 0 : i32
    %9 = arith.cmpi eq, %arg2, %c0_i32_8 : i32
    %10 = arith.extui %9 : i1 to i32
    %c0_i32_9 = arith.constant 0 : i32
    %11 = arith.cmpi ne, %10, %c0_i32_9 : i32
    scf.if %11 {
      %c0_10 = arith.constant 0 : index
      %c0_11 = arith.constant 0 : index
      %12 = vector.load %arg7[%c0_10, %c0_11] : memref<16x256xf32, #tpu.memory_space<vmem>>, vector<16x256xf32>
      %c0_12 = arith.constant 0 : index
      %c0_13 = arith.constant 0 : index
      %13 = vector.load %arg5[%c0_12, %c0_13] : memref<1x256xf32, #tpu.memory_space<vmem>>, vector<1x256xf32>
      %14 = vector.broadcast %13 : vector<1x256xf32> to vector<16x256xf32>
      %15 = arith.addf %12, %14 : vector<16x256xf32>
      %16 = arith.truncf %15 : vector<16x256xf32> to vector<16x256xbf16>
      %c0_14 = arith.constant 0 : index
      %c0_15 = arith.constant 0 : index
      %17 = vector.load %arg6[%c0_14, %c0_15] : memref<16x256xbf16, #tpu.memory_space<vmem>>, vector<16x256xbf16>
      tpu.vector_store %arg6[%c0_14, %c0_15], %16 {strides = array<i32>} : memref<16x256xbf16, #tpu.memory_space<vmem>>, vector<16x256xbf16>,
    } else {
    }
    return
  }
  func.func @transform_0(%arg0: i32, %arg1: i32, %arg2: i32) -> (i32, i32) {
    %c0_i32 = arith.constant 0 : i32
    return %arg0, %arg2 : i32, i32
  }
  func.func @transform_1(%arg0: i32, %arg1: i32, %arg2: i32) -> (i32, i32) {
    %c0_i32 = arith.constant 0 : i32
    return %arg2, %arg1 : i32, i32
  }
  func.func @transform_2(%arg0: i32, %arg1: i32, %arg2: i32) -> (i32, i32) {
    %c0_i32 = arith.constant 0 : i32
    %c0_i32_0 = arith.constant 0 : i32
    return %c0_i32, %arg1 : i32, i32
  }
  func.func @transform_3(%arg0: i32, %arg1: i32, %arg2: i32) -> (i32, i32) {
    %c0_i32 = arith.constant 0 : i32
    return %arg0, %arg1 : i32, i32
  }
}

module attributes {stable_mosaic.version = 11 : i64} {
  func.func @kernel(%arg0: i32, %arg1: i32, %arg2: i32, %arg3: memref<1x8x128xbf16, #tpu.memory_space<vmem>>, %arg4: memref<1x8x128xbf16, #tpu.memory_space<vmem>>, %arg5: memref<1x8x128xbf16, #tpu.memory_space<vmem>>, %arg6: memref<1x8x128xbf16, #tpu.memory_space<vmem>>, %arg7: memref<4x8x1xf32, #tpu.memory_space<vmem>>, %arg8: memref<4x8x1xf32, #tpu.memory_space<vmem>>, %arg9: memref<8x128xf32, #tpu.memory_space<vmem>>) attributes {dimension_semantics = [#tpu.dimension_semantics<parallel>, #tpu.dimension_semantics<parallel>, #tpu.dimension_semantics<arbitrary>], iteration_bounds = array<i64: 2, 1, 1>, scalar_prefetch = 0 : i64, scratch_operands = 3 : i64, tpu.core_type = #tpu.core_type<tc>, window_params = [{transform_indices = @transform_0, window_bounds = array<i64: 1, 8, 128>}, {transform_indices = @transform_1, window_bounds = array<i64: 1, 8, 128>}, {transform_indices = @transform_2, window_bounds = array<i64: 1, 8, 128>}, {transform_indices = @transform_3, window_bounds = array<i64: 1, 8, 128>}]} {
    %c0_i32 = arith.constant 0 : i32
    %0 = arith.cmpi eq, %arg2, %c0_i32 : i32
    %1 = arith.extui %0 : i1 to i32
    %c0_i32_0 = arith.constant 0 : i32
    %2 = arith.cmpi ne, %1, %c0_i32_0 : i32
    scf.if %2 {
      %cst_91 = arith.constant -1.000000e+30 : f32
      %168 = vector.broadcast %cst_91 : f32 to vector<4x8x1xf32>
      %c0_92 = arith.constant 0 : index
      %c0_93 = arith.constant 0 : index
      %c0_94 = arith.constant 0 : index
      %169 = vector.load %arg7[%c0_92, %c0_93, %c0_94] : memref<4x8x1xf32, #tpu.memory_space<vmem>>, vector<4x8x1xf32>
      tpu.vector_store %arg7[%c0_92, %c0_93, %c0_94], %168 {strides = array<i32>} : memref<4x8x1xf32, #tpu.memory_space<vmem>>, vector<4x8x1xf32>,
      %cst_95 = arith.constant 0.000000e+00 : f32
      %170 = vector.broadcast %cst_95 : f32 to vector<4x8x1xf32>
      %c0_96 = arith.constant 0 : index
      %c0_97 = arith.constant 0 : index
      %c0_98 = arith.constant 0 : index
      %171 = vector.load %arg8[%c0_96, %c0_97, %c0_98] : memref<4x8x1xf32, #tpu.memory_space<vmem>>, vector<4x8x1xf32>
      tpu.vector_store %arg8[%c0_96, %c0_97, %c0_98], %170 {strides = array<i32>} : memref<4x8x1xf32, #tpu.memory_space<vmem>>, vector<4x8x1xf32>,
      %cst_99 = arith.constant 0.000000e+00 : f32
      %172 = vector.broadcast %cst_99 : f32 to vector<8x128xf32>
      %c0_100 = arith.constant 0 : index
      %c0_101 = arith.constant 0 : index
      %173 = vector.load %arg9[%c0_100, %c0_101] : memref<8x128xf32, #tpu.memory_space<vmem>>, vector<8x128xf32>
      tpu.vector_store %arg9[%c0_100, %c0_101], %172 {strides = array<i32>} : memref<8x128xf32, #tpu.memory_space<vmem>>, vector<8x128xf32>,
    } else {
    }
    %c0 = arith.constant 0 : index
    %c0_1 = arith.constant 0 : index
    %c0_2 = arith.constant 0 : index
    %3 = vector.load %arg3[%c0, %c0_1, %c0_2] : memref<1x8x128xbf16, #tpu.memory_space<vmem>>, vector<1x8x128xbf16>
    %4 = vector.shape_cast %3 : vector<1x8x128xbf16> to vector<8x128xbf16>
    %c0_3 = arith.constant 0 : index
    %c0_4 = arith.constant 0 : index
    %c0_5 = arith.constant 0 : index
    %5 = vector.load %arg4[%c0_3, %c0_4, %c0_5] : memref<1x8x128xbf16, #tpu.memory_space<vmem>>, vector<1x8x128xbf16>
    %6 = vector.shape_cast %5 : vector<1x8x128xbf16> to vector<8x128xbf16>
    %c0_6 = arith.constant 0 : index
    %c0_7 = arith.constant 0 : index
    %c0_8 = arith.constant 0 : index
    %7 = vector.load %arg5[%c0_6, %c0_7, %c0_8] : memref<1x8x128xbf16, #tpu.memory_space<vmem>>, vector<1x8x128xbf16>
    %8 = vector.shape_cast %7 : vector<1x8x128xbf16> to vector<8x128xbf16>
    %c8_i32 = arith.constant 8 : i32
    %9 = arith.muli %arg1, %c8_i32 : i32
    %c8_i32_9 = arith.constant 8 : i32
    %10 = arith.muli %arg2, %c8_i32_9 : i32
    %11 = tpu.iota {dimensions = array<i32: 0>} : vector<8x8xi32>
    %12 = vector.broadcast %9 : i32 to vector<8x8xi32>
    %13 = arith.addi %12, %11 : vector<8x8xi32>
    %14 = tpu.iota {dimensions = array<i32: 1>} : vector<8x8xi32>
    %15 = vector.broadcast %10 : i32 to vector<8x8xi32>
    %16 = arith.addi %15, %14 : vector<8x8xi32>
    %17 = arith.cmpi sle, %16, %13 : vector<8x8xi32>
    %cst = arith.constant 0.000000e+00 : f32
    %cst_10 = arith.constant -1.000000e+09 : f32
    %18 = vector.broadcast %cst : f32 to vector<8x8xf32>
    %19 = vector.broadcast %cst_10 : f32 to vector<8x8xf32>
    %20 = arith.select %17, %18, %19 : vector<8x8xi1>, vector<8x8xf32>
    %21 = vector.extract_strided_slice %4 {offsets = [0, 0], sizes = [8, 32], strides = [1, 1]} : vector<8x128xbf16> to vector<8x32xbf16>
    %22 = vector.extract_strided_slice %6 {offsets = [0, 0], sizes = [8, 32], strides = [1, 1]} : vector<8x128xbf16> to vector<8x32xbf16>
    %23 = vector.extract_strided_slice %8 {offsets = [0, 0], sizes = [8, 32], strides = [1, 1]} : vector<8x128xbf16> to vector<8x32xbf16>
    %cst_11 = arith.constant dense<0.000000e+00> : vector<8x8xf32>
    %24 = tpu.matmul %21, %22, %cst_11 {dimension_numbers = #tpu.dot_dimension_numbers<[1], [1], [0], [0], [0, 0, 1, 0], [], []>} : vector<8x32xbf16>, vector<8x32xbf16>, vector<8x8xf32> -> vector<8x8xf32>
    %cst_12 = arith.constant 0.176776692 : f32
    %25 = vector.broadcast %cst_12 : f32 to vector<8x8xf32>
    %26 = arith.mulf %24, %25 : vector<8x8xf32>
    %27 = arith.addf %26, %20 : vector<8x8xf32>
    %c0_13 = arith.constant 0 : index
    %c0_14 = arith.constant 0 : index
    %c0_15 = arith.constant 0 : index
    %28 = vector.load %arg7[%c0_13, %c0_14, %c0_15] : memref<4x8x1xf32, #tpu.memory_space<vmem>>, vector<1x8x1xf32>
    %29 = vector.shape_cast %28 : vector<1x8x1xf32> to vector<8x1xf32>
    %cst_16 = arith.constant dense<0xFF800000> : vector<8xf32>
    %30 = vector.multi_reduction <maximumf>, %27, %cst_16 [1] : vector<8x8xf32> to vector<8xf32>
    %31 = vector.shape_cast %30 : vector<8xf32> to vector<8x1xf32>
    %32 = arith.maximumf %29, %31 : vector<8x1xf32>
    %33 = arith.subf %29, %32 : vector<8x1xf32>
    %34 = math.exp %33 : vector<8x1xf32>
    %35 = vector.broadcast %32 : vector<8x1xf32> to vector<8x8xf32>
    %36 = arith.subf %27, %35 : vector<8x8xf32>
    %37 = math.exp %36 : vector<8x8xf32>
    %c0_17 = arith.constant 0 : index
    %c0_18 = arith.constant 0 : index
    %c0_19 = arith.constant 0 : index
    %38 = vector.load %arg8[%c0_17, %c0_18, %c0_19] : memref<4x8x1xf32, #tpu.memory_space<vmem>>, vector<1x8x1xf32>
    %39 = vector.shape_cast %38 : vector<1x8x1xf32> to vector<8x1xf32>
    %40 = arith.mulf %34, %39 : vector<8x1xf32>
    %cst_20 = arith.constant dense<0.000000e+00> : vector<8xf32>
    %41 = vector.multi_reduction <add>, %37, %cst_20 [1] : vector<8x8xf32> to vector<8xf32>
    %42 = vector.shape_cast %41 : vector<8xf32> to vector<8x1xf32>
    %43 = arith.addf %40, %42 : vector<8x1xf32>
    %c0_21 = arith.constant 0 : index
    %c0_22 = arith.constant 0 : index
    %c0_23 = arith.constant 0 : index
    %44 = vector.load %arg8[%c0_21, %c0_22, %c0_23] : memref<4x8x1xf32, #tpu.memory_space<vmem>>, vector<1x8x1xf32>
    %45 = vector.shape_cast %44 : vector<1x8x1xf32> to vector<8x1xf32>
    %46 = vector.shape_cast %43 : vector<8x1xf32> to vector<1x8x1xf32>
    tpu.vector_store %arg8[%c0_21, %c0_22, %c0_23], %46 {strides = array<i32>} : memref<4x8x1xf32, #tpu.memory_space<vmem>>, vector<1x8x1xf32>,
    %c0_24 = arith.constant 0 : index
    %c0_25 = arith.constant 0 : index
    %47 = vector.load %arg9[%c0_24, %c0_25] : memref<8x128xf32, #tpu.memory_space<vmem>>, vector<8x32xf32>
    %48 = vector.broadcast %34 : vector<8x1xf32> to vector<8x32xf32>
    %49 = arith.mulf %48, %47 : vector<8x32xf32>
    %50 = arith.truncf %37 : vector<8x8xf32> to vector<8x8xbf16>
    %cst_26 = arith.constant dense<0.000000e+00> : vector<8x32xf32>
    %51 = tpu.matmul %50, %23, %cst_26 {dimension_numbers = #tpu.dot_dimension_numbers<[1], [0], [0], [1], [0, 0, 1, 1], [], []>} : vector<8x8xbf16>, vector<8x32xbf16>, vector<8x32xf32> -> vector<8x32xf32>
    %52 = arith.addf %49, %51 : vector<8x32xf32>
    %c0_27 = arith.constant 0 : index
    %c0_28 = arith.constant 0 : index
    %53 = vector.load %arg9[%c0_27, %c0_28] : memref<8x128xf32, #tpu.memory_space<vmem>>, vector<8x32xf32>
    tpu.vector_store %arg9[%c0_27, %c0_28], %52 {strides = array<i32>} : memref<8x128xf32, #tpu.memory_space<vmem>>, vector<8x32xf32>,
    %c0_29 = arith.constant 0 : index
    %c0_30 = arith.constant 0 : index
    %c0_31 = arith.constant 0 : index
    %54 = vector.load %arg7[%c0_29, %c0_30, %c0_31] : memref<4x8x1xf32, #tpu.memory_space<vmem>>, vector<1x8x1xf32>
    %55 = vector.shape_cast %54 : vector<1x8x1xf32> to vector<8x1xf32>
    %56 = vector.shape_cast %32 : vector<8x1xf32> to vector<1x8x1xf32>
    tpu.vector_store %arg7[%c0_29, %c0_30, %c0_31], %56 {strides = array<i32>} : memref<4x8x1xf32, #tpu.memory_space<vmem>>, vector<1x8x1xf32>,
    %57 = vector.extract_strided_slice %4 {offsets = [0, 32], sizes = [8, 32], strides = [1, 1]} : vector<8x128xbf16> to vector<8x32xbf16>
    %58 = vector.extract_strided_slice %6 {offsets = [0, 32], sizes = [8, 32], strides = [1, 1]} : vector<8x128xbf16> to vector<8x32xbf16>
    %59 = vector.extract_strided_slice %8 {offsets = [0, 32], sizes = [8, 32], strides = [1, 1]} : vector<8x128xbf16> to vector<8x32xbf16>
    %cst_32 = arith.constant dense<0.000000e+00> : vector<8x8xf32>
    %60 = tpu.matmul %57, %58, %cst_32 {dimension_numbers = #tpu.dot_dimension_numbers<[1], [1], [0], [0], [0, 0, 1, 0], [], []>} : vector<8x32xbf16>, vector<8x32xbf16>, vector<8x8xf32> -> vector<8x8xf32>
    %cst_33 = arith.constant 0.176776692 : f32
    %61 = vector.broadcast %cst_33 : f32 to vector<8x8xf32>
    %62 = arith.mulf %60, %61 : vector<8x8xf32>
    %63 = arith.addf %62, %20 : vector<8x8xf32>
    %c1 = arith.constant 1 : index
    %c0_34 = arith.constant 0 : index
    %c0_35 = arith.constant 0 : index
    %64 = vector.load %arg7[%c1, %c0_34, %c0_35] : memref<4x8x1xf32, #tpu.memory_space<vmem>>, vector<1x8x1xf32>
    %65 = vector.shape_cast %64 : vector<1x8x1xf32> to vector<8x1xf32>
    %cst_36 = arith.constant dense<0xFF800000> : vector<8xf32>
    %66 = vector.multi_reduction <maximumf>, %63, %cst_36 [1] : vector<8x8xf32> to vector<8xf32>
    %67 = vector.shape_cast %66 : vector<8xf32> to vector<8x1xf32>
    %68 = arith.maximumf %65, %67 : vector<8x1xf32>
    %69 = arith.subf %65, %68 : vector<8x1xf32>
    %70 = math.exp %69 : vector<8x1xf32>
    %71 = vector.broadcast %68 : vector<8x1xf32> to vector<8x8xf32>
    %72 = arith.subf %63, %71 : vector<8x8xf32>
    %73 = math.exp %72 : vector<8x8xf32>
    %c1_37 = arith.constant 1 : index
    %c0_38 = arith.constant 0 : index
    %c0_39 = arith.constant 0 : index
    %74 = vector.load %arg8[%c1_37, %c0_38, %c0_39] : memref<4x8x1xf32, #tpu.memory_space<vmem>>, vector<1x8x1xf32>
    %75 = vector.shape_cast %74 : vector<1x8x1xf32> to vector<8x1xf32>
    %76 = arith.mulf %70, %75 : vector<8x1xf32>
    %cst_40 = arith.constant dense<0.000000e+00> : vector<8xf32>
    %77 = vector.multi_reduction <add>, %73, %cst_40 [1] : vector<8x8xf32> to vector<8xf32>
    %78 = vector.shape_cast %77 : vector<8xf32> to vector<8x1xf32>
    %79 = arith.addf %76, %78 : vector<8x1xf32>
    %c1_41 = arith.constant 1 : index
    %c0_42 = arith.constant 0 : index
    %c0_43 = arith.constant 0 : index
    %80 = vector.load %arg8[%c1_41, %c0_42, %c0_43] : memref<4x8x1xf32, #tpu.memory_space<vmem>>, vector<1x8x1xf32>
    %81 = vector.shape_cast %80 : vector<1x8x1xf32> to vector<8x1xf32>
    %82 = vector.shape_cast %79 : vector<8x1xf32> to vector<1x8x1xf32>
    tpu.vector_store %arg8[%c1_41, %c0_42, %c0_43], %82 {strides = array<i32>} : memref<4x8x1xf32, #tpu.memory_space<vmem>>, vector<1x8x1xf32>,
    %c0_44 = arith.constant 0 : index
    %c32 = arith.constant 32 : index
    %83 = vector.load %arg9[%c0_44, %c32] : memref<8x128xf32, #tpu.memory_space<vmem>>, vector<8x32xf32>
    %84 = vector.broadcast %70 : vector<8x1xf32> to vector<8x32xf32>
    %85 = arith.mulf %84, %83 : vector<8x32xf32>
    %86 = arith.truncf %73 : vector<8x8xf32> to vector<8x8xbf16>
    %cst_45 = arith.constant dense<0.000000e+00> : vector<8x32xf32>
    %87 = tpu.matmul %86, %59, %cst_45 {dimension_numbers = #tpu.dot_dimension_numbers<[1], [0], [0], [1], [0, 0, 1, 1], [], []>} : vector<8x8xbf16>, vector<8x32xbf16>, vector<8x32xf32> -> vector<8x32xf32>
    %88 = arith.addf %85, %87 : vector<8x32xf32>
    %c0_46 = arith.constant 0 : index
    %c32_47 = arith.constant 32 : index
    %89 = vector.load %arg9[%c0_46, %c32_47] : memref<8x128xf32, #tpu.memory_space<vmem>>, vector<8x32xf32>
    tpu.vector_store %arg9[%c0_46, %c32_47], %88 {strides = array<i32>} : memref<8x128xf32, #tpu.memory_space<vmem>>, vector<8x32xf32>,
    %c1_48 = arith.constant 1 : index
    %c0_49 = arith.constant 0 : index
    %c0_50 = arith.constant 0 : index
    %90 = vector.load %arg7[%c1_48, %c0_49, %c0_50] : memref<4x8x1xf32, #tpu.memory_space<vmem>>, vector<1x8x1xf32>
    %91 = vector.shape_cast %90 : vector<1x8x1xf32> to vector<8x1xf32>
    %92 = vector.shape_cast %68 : vector<8x1xf32> to vector<1x8x1xf32>
    tpu.vector_store %arg7[%c1_48, %c0_49, %c0_50], %92 {strides = array<i32>} : memref<4x8x1xf32, #tpu.memory_space<vmem>>, vector<1x8x1xf32>,
    %93 = vector.extract_strided_slice %4 {offsets = [0, 64], sizes = [8, 32], strides = [1, 1]} : vector<8x128xbf16> to vector<8x32xbf16>
    %94 = vector.extract_strided_slice %6 {offsets = [0, 64], sizes = [8, 32], strides = [1, 1]} : vector<8x128xbf16> to vector<8x32xbf16>
    %95 = vector.extract_strided_slice %8 {offsets = [0, 64], sizes = [8, 32], strides = [1, 1]} : vector<8x128xbf16> to vector<8x32xbf16>
    %cst_51 = arith.constant dense<0.000000e+00> : vector<8x8xf32>
    %96 = tpu.matmul %93, %94, %cst_51 {dimension_numbers = #tpu.dot_dimension_numbers<[1], [1], [0], [0], [0, 0, 1, 0], [], []>} : vector<8x32xbf16>, vector<8x32xbf16>, vector<8x8xf32> -> vector<8x8xf32>
    %cst_52 = arith.constant 0.176776692 : f32
    %97 = vector.broadcast %cst_52 : f32 to vector<8x8xf32>
    %98 = arith.mulf %96, %97 : vector<8x8xf32>
    %99 = arith.addf %98, %20 : vector<8x8xf32>
    %c2 = arith.constant 2 : index
    %c0_53 = arith.constant 0 : index
    %c0_54 = arith.constant 0 : index
    %100 = vector.load %arg7[%c2, %c0_53, %c0_54] : memref<4x8x1xf32, #tpu.memory_space<vmem>>, vector<1x8x1xf32>
    %101 = vector.shape_cast %100 : vector<1x8x1xf32> to vector<8x1xf32>
    %cst_55 = arith.constant dense<0xFF800000> : vector<8xf32>
    %102 = vector.multi_reduction <maximumf>, %99, %cst_55 [1] : vector<8x8xf32> to vector<8xf32>
    %103 = vector.shape_cast %102 : vector<8xf32> to vector<8x1xf32>
    %104 = arith.maximumf %101, %103 : vector<8x1xf32>
    %105 = arith.subf %101, %104 : vector<8x1xf32>
    %106 = math.exp %105 : vector<8x1xf32>
    %107 = vector.broadcast %104 : vector<8x1xf32> to vector<8x8xf32>
    %108 = arith.subf %99, %107 : vector<8x8xf32>
    %109 = math.exp %108 : vector<8x8xf32>
    %c2_56 = arith.constant 2 : index
    %c0_57 = arith.constant 0 : index
    %c0_58 = arith.constant 0 : index
    %110 = vector.load %arg8[%c2_56, %c0_57, %c0_58] : memref<4x8x1xf32, #tpu.memory_space<vmem>>, vector<1x8x1xf32>
    %111 = vector.shape_cast %110 : vector<1x8x1xf32> to vector<8x1xf32>
    %112 = arith.mulf %106, %111 : vector<8x1xf32>
    %cst_59 = arith.constant dense<0.000000e+00> : vector<8xf32>
    %113 = vector.multi_reduction <add>, %109, %cst_59 [1] : vector<8x8xf32> to vector<8xf32>
    %114 = vector.shape_cast %113 : vector<8xf32> to vector<8x1xf32>
    %115 = arith.addf %112, %114 : vector<8x1xf32>
    %c2_60 = arith.constant 2 : index
    %c0_61 = arith.constant 0 : index
    %c0_62 = arith.constant 0 : index
    %116 = vector.load %arg8[%c2_60, %c0_61, %c0_62] : memref<4x8x1xf32, #tpu.memory_space<vmem>>, vector<1x8x1xf32>
    %117 = vector.shape_cast %116 : vector<1x8x1xf32> to vector<8x1xf32>
    %118 = vector.shape_cast %115 : vector<8x1xf32> to vector<1x8x1xf32>
    tpu.vector_store %arg8[%c2_60, %c0_61, %c0_62], %118 {strides = array<i32>} : memref<4x8x1xf32, #tpu.memory_space<vmem>>, vector<1x8x1xf32>,
    %c0_63 = arith.constant 0 : index
    %c64 = arith.constant 64 : index
    %119 = vector.load %arg9[%c0_63, %c64] : memref<8x128xf32, #tpu.memory_space<vmem>>, vector<8x32xf32>
    %120 = vector.broadcast %106 : vector<8x1xf32> to vector<8x32xf32>
    %121 = arith.mulf %120, %119 : vector<8x32xf32>
    %122 = arith.truncf %109 : vector<8x8xf32> to vector<8x8xbf16>
    %cst_64 = arith.constant dense<0.000000e+00> : vector<8x32xf32>
    %123 = tpu.matmul %122, %95, %cst_64 {dimension_numbers = #tpu.dot_dimension_numbers<[1], [0], [0], [1], [0, 0, 1, 1], [], []>} : vector<8x8xbf16>, vector<8x32xbf16>, vector<8x32xf32> -> vector<8x32xf32>
    %124 = arith.addf %121, %123 : vector<8x32xf32>
    %c0_65 = arith.constant 0 : index
    %c64_66 = arith.constant 64 : index
    %125 = vector.load %arg9[%c0_65, %c64_66] : memref<8x128xf32, #tpu.memory_space<vmem>>, vector<8x32xf32>
    tpu.vector_store %arg9[%c0_65, %c64_66], %124 {strides = array<i32>} : memref<8x128xf32, #tpu.memory_space<vmem>>, vector<8x32xf32>,
    %c2_67 = arith.constant 2 : index
    %c0_68 = arith.constant 0 : index
    %c0_69 = arith.constant 0 : index
    %126 = vector.load %arg7[%c2_67, %c0_68, %c0_69] : memref<4x8x1xf32, #tpu.memory_space<vmem>>, vector<1x8x1xf32>
    %127 = vector.shape_cast %126 : vector<1x8x1xf32> to vector<8x1xf32>
    %128 = vector.shape_cast %104 : vector<8x1xf32> to vector<1x8x1xf32>
    tpu.vector_store %arg7[%c2_67, %c0_68, %c0_69], %128 {strides = array<i32>} : memref<4x8x1xf32, #tpu.memory_space<vmem>>, vector<1x8x1xf32>,
    %129 = vector.extract_strided_slice %4 {offsets = [0, 96], sizes = [8, 32], strides = [1, 1]} : vector<8x128xbf16> to vector<8x32xbf16>
    %130 = vector.extract_strided_slice %6 {offsets = [0, 96], sizes = [8, 32], strides = [1, 1]} : vector<8x128xbf16> to vector<8x32xbf16>
    %131 = vector.extract_strided_slice %8 {offsets = [0, 96], sizes = [8, 32], strides = [1, 1]} : vector<8x128xbf16> to vector<8x32xbf16>
    %cst_70 = arith.constant dense<0.000000e+00> : vector<8x8xf32>
    %132 = tpu.matmul %129, %130, %cst_70 {dimension_numbers = #tpu.dot_dimension_numbers<[1], [1], [0], [0], [0, 0, 1, 0], [], []>} : vector<8x32xbf16>, vector<8x32xbf16>, vector<8x8xf32> -> vector<8x8xf32>
    %cst_71 = arith.constant 0.176776692 : f32
    %133 = vector.broadcast %cst_71 : f32 to vector<8x8xf32>
    %134 = arith.mulf %132, %133 : vector<8x8xf32>
    %135 = arith.addf %134, %20 : vector<8x8xf32>
    %c3 = arith.constant 3 : index
    %c0_72 = arith.constant 0 : index
    %c0_73 = arith.constant 0 : index
    %136 = vector.load %arg7[%c3, %c0_72, %c0_73] : memref<4x8x1xf32, #tpu.memory_space<vmem>>, vector<1x8x1xf32>
    %137 = vector.shape_cast %136 : vector<1x8x1xf32> to vector<8x1xf32>
    %cst_74 = arith.constant dense<0xFF800000> : vector<8xf32>
    %138 = vector.multi_reduction <maximumf>, %135, %cst_74 [1] : vector<8x8xf32> to vector<8xf32>
    %139 = vector.shape_cast %138 : vector<8xf32> to vector<8x1xf32>
    %140 = arith.maximumf %137, %139 : vector<8x1xf32>
    %141 = arith.subf %137, %140 : vector<8x1xf32>
    %142 = math.exp %141 : vector<8x1xf32>
    %143 = vector.broadcast %140 : vector<8x1xf32> to vector<8x8xf32>
    %144 = arith.subf %135, %143 : vector<8x8xf32>
    %145 = math.exp %144 : vector<8x8xf32>
    %c3_75 = arith.constant 3 : index
    %c0_76 = arith.constant 0 : index
    %c0_77 = arith.constant 0 : index
    %146 = vector.load %arg8[%c3_75, %c0_76, %c0_77] : memref<4x8x1xf32, #tpu.memory_space<vmem>>, vector<1x8x1xf32>
    %147 = vector.shape_cast %146 : vector<1x8x1xf32> to vector<8x1xf32>
    %148 = arith.mulf %142, %147 : vector<8x1xf32>
    %cst_78 = arith.constant dense<0.000000e+00> : vector<8xf32>
    %149 = vector.multi_reduction <add>, %145, %cst_78 [1] : vector<8x8xf32> to vector<8xf32>
    %150 = vector.shape_cast %149 : vector<8xf32> to vector<8x1xf32>
    %151 = arith.addf %148, %150 : vector<8x1xf32>
    %c3_79 = arith.constant 3 : index
    %c0_80 = arith.constant 0 : index
    %c0_81 = arith.constant 0 : index
    %152 = vector.load %arg8[%c3_79, %c0_80, %c0_81] : memref<4x8x1xf32, #tpu.memory_space<vmem>>, vector<1x8x1xf32>
    %153 = vector.shape_cast %152 : vector<1x8x1xf32> to vector<8x1xf32>
    %154 = vector.shape_cast %151 : vector<8x1xf32> to vector<1x8x1xf32>
    tpu.vector_store %arg8[%c3_79, %c0_80, %c0_81], %154 {strides = array<i32>} : memref<4x8x1xf32, #tpu.memory_space<vmem>>, vector<1x8x1xf32>,
    %c0_82 = arith.constant 0 : index
    %c96 = arith.constant 96 : index
    %155 = vector.load %arg9[%c0_82, %c96] : memref<8x128xf32, #tpu.memory_space<vmem>>, vector<8x32xf32>
    %156 = vector.broadcast %142 : vector<8x1xf32> to vector<8x32xf32>
    %157 = arith.mulf %156, %155 : vector<8x32xf32>
    %158 = arith.truncf %145 : vector<8x8xf32> to vector<8x8xbf16>
    %cst_83 = arith.constant dense<0.000000e+00> : vector<8x32xf32>
    %159 = tpu.matmul %158, %131, %cst_83 {dimension_numbers = #tpu.dot_dimension_numbers<[1], [0], [0], [1], [0, 0, 1, 1], [], []>} : vector<8x8xbf16>, vector<8x32xbf16>, vector<8x32xf32> -> vector<8x32xf32>
    %160 = arith.addf %157, %159 : vector<8x32xf32>
    %c0_84 = arith.constant 0 : index
    %c96_85 = arith.constant 96 : index
    %161 = vector.load %arg9[%c0_84, %c96_85] : memref<8x128xf32, #tpu.memory_space<vmem>>, vector<8x32xf32>
    tpu.vector_store %arg9[%c0_84, %c96_85], %160 {strides = array<i32>} : memref<8x128xf32, #tpu.memory_space<vmem>>, vector<8x32xf32>,
    %c3_86 = arith.constant 3 : index
    %c0_87 = arith.constant 0 : index
    %c0_88 = arith.constant 0 : index
    %162 = vector.load %arg7[%c3_86, %c0_87, %c0_88] : memref<4x8x1xf32, #tpu.memory_space<vmem>>, vector<1x8x1xf32>
    %163 = vector.shape_cast %162 : vector<1x8x1xf32> to vector<8x1xf32>
    %164 = vector.shape_cast %140 : vector<8x1xf32> to vector<1x8x1xf32>
    tpu.vector_store %arg7[%c3_86, %c0_87, %c0_88], %164 {strides = array<i32>} : memref<4x8x1xf32, #tpu.memory_space<vmem>>, vector<1x8x1xf32>,
    %c0_i32_89 = arith.constant 0 : i32
    %165 = arith.cmpi eq, %arg2, %c0_i32_89 : i32
    %166 = arith.extui %165 : i1 to i32
    %c0_i32_90 = arith.constant 0 : i32
    %167 = arith.cmpi ne, %166, %c0_i32_90 : i32
    scf.if %167 {
      %c0_91 = arith.constant 0 : index
      %c0_92 = arith.constant 0 : index
      %c0_93 = arith.constant 0 : index
      %168 = vector.load %arg8[%c0_91, %c0_92, %c0_93] : memref<4x8x1xf32, #tpu.memory_space<vmem>>, vector<1x8x1xf32>
      %169 = vector.shape_cast %168 : vector<1x8x1xf32> to vector<8x1xf32>
      %170 = tpu.reciprocal %169 {approx = true} : vector<8x1xf32> -> vector<8x1xf32>
      %c0_94 = arith.constant 0 : index
      %c0_95 = arith.constant 0 : index
      %171 = vector.load %arg9[%c0_94, %c0_95] : memref<8x128xf32, #tpu.memory_space<vmem>>, vector<8x32xf32>
      %172 = vector.broadcast %170 : vector<8x1xf32> to vector<8x32xf32>
      %173 = arith.mulf %171, %172 : vector<8x32xf32>
      %c1_96 = arith.constant 1 : index
      %c0_97 = arith.constant 0 : index
      %c0_98 = arith.constant 0 : index
      %174 = vector.load %arg8[%c1_96, %c0_97, %c0_98] : memref<4x8x1xf32, #tpu.memory_space<vmem>>, vector<1x8x1xf32>
      %175 = vector.shape_cast %174 : vector<1x8x1xf32> to vector<8x1xf32>
      %176 = tpu.reciprocal %175 {approx = true} : vector<8x1xf32> -> vector<8x1xf32>
      %c0_99 = arith.constant 0 : index
      %c32_100 = arith.constant 32 : index
      %177 = vector.load %arg9[%c0_99, %c32_100] : memref<8x128xf32, #tpu.memory_space<vmem>>, vector<8x32xf32>
      %178 = vector.broadcast %176 : vector<8x1xf32> to vector<8x32xf32>
      %179 = arith.mulf %177, %178 : vector<8x32xf32>
      %c2_101 = arith.constant 2 : index
      %c0_102 = arith.constant 0 : index
      %c0_103 = arith.constant 0 : index
      %180 = vector.load %arg8[%c2_101, %c0_102, %c0_103] : memref<4x8x1xf32, #tpu.memory_space<vmem>>, vector<1x8x1xf32>
      %181 = vector.shape_cast %180 : vector<1x8x1xf32> to vector<8x1xf32>
      %182 = tpu.reciprocal %181 {approx = true} : vector<8x1xf32> -> vector<8x1xf32>
      %c0_104 = arith.constant 0 : index
      %c64_105 = arith.constant 64 : index
      %183 = vector.load %arg9[%c0_104, %c64_105] : memref<8x128xf32, #tpu.memory_space<vmem>>, vector<8x32xf32>
      %184 = vector.broadcast %182 : vector<8x1xf32> to vector<8x32xf32>
      %185 = arith.mulf %183, %184 : vector<8x32xf32>
      %c3_106 = arith.constant 3 : index
      %c0_107 = arith.constant 0 : index
      %c0_108 = arith.constant 0 : index
      %186 = vector.load %arg8[%c3_106, %c0_107, %c0_108] : memref<4x8x1xf32, #tpu.memory_space<vmem>>, vector<1x8x1xf32>
      %187 = vector.shape_cast %186 : vector<1x8x1xf32> to vector<8x1xf32>
      %188 = tpu.reciprocal %187 {approx = true} : vector<8x1xf32> -> vector<8x1xf32>
      %c0_109 = arith.constant 0 : index
      %c96_110 = arith.constant 96 : index
      %189 = vector.load %arg9[%c0_109, %c96_110] : memref<8x128xf32, #tpu.memory_space<vmem>>, vector<8x32xf32>
      %190 = vector.broadcast %188 : vector<8x1xf32> to vector<8x32xf32>
      %191 = arith.mulf %189, %190 : vector<8x32xf32>
      %192 = tpu.concatenate %173, %179, %185, %191 in 1 : vector<8x32xf32>, vector<8x32xf32>, vector<8x32xf32>, vector<8x32xf32> -> vector<8x128xf32>
      %193 = arith.truncf %192 : vector<8x128xf32> to vector<8x128xbf16>
      %c0_111 = arith.constant 0 : index
      %c0_112 = arith.constant 0 : index
      %c0_113 = arith.constant 0 : index
      %194 = vector.load %arg6[%c0_111, %c0_112, %c0_113] : memref<1x8x128xbf16, #tpu.memory_space<vmem>>, vector<1x8x128xbf16>
      %195 = vector.shape_cast %194 : vector<1x8x128xbf16> to vector<8x128xbf16>
      %196 = vector.shape_cast %193 : vector<8x128xbf16> to vector<1x8x128xbf16>
      tpu.vector_store %arg6[%c0_111, %c0_112, %c0_113], %196 {strides = array<i32>} : memref<1x8x128xbf16, #tpu.memory_space<vmem>>, vector<1x8x128xbf16>,
    } else {
    }
    return
  }
  func.func @transform_0(%arg0: i32, %arg1: i32, %arg2: i32) -> (i32, i32, i32) {
    %c0_i32 = arith.constant 0 : i32
    %c0_i32_0 = arith.constant 0 : i32
    return %arg0, %arg1, %c0_i32 : i32, i32, i32
  }
  func.func @transform_1(%arg0: i32, %arg1: i32, %arg2: i32) -> (i32, i32, i32) {
    %c1_i32 = arith.constant 1 : i32
    %c0_i32 = arith.constant 0 : i32
    return %arg0, %arg2, %c1_i32 : i32, i32, i32
  }
  func.func @transform_2(%arg0: i32, %arg1: i32, %arg2: i32) -> (i32, i32, i32) {
    %c2_i32 = arith.constant 2 : i32
    %c0_i32 = arith.constant 0 : i32
    return %arg0, %arg2, %c2_i32 : i32, i32, i32
  }
  func.func @transform_3(%arg0: i32, %arg1: i32, %arg2: i32) -> (i32, i32, i32) {
    %c0_i32 = arith.constant 0 : i32
    %c0_i32_0 = arith.constant 0 : i32
    return %arg0, %arg1, %c0_i32 : i32, i32, i32
  }
}

module attributes {stable_mosaic.version = 11 : i64} {
  func.func @kernel(%arg0: i32, %arg1: i32, %arg2: i32, %arg3: memref<1x8x128xbf16, #tpu.memory_space<vmem>>, %arg4: memref<1x8x128xbf16, #tpu.memory_space<vmem>>, %arg5: memref<1x8x128xbf16, #tpu.memory_space<vmem>>, %arg6: memref<1x8x128xbf16, #tpu.memory_space<vmem>>, %arg7: memref<4x8x1xf32, #tpu.memory_space<vmem>>, %arg8: memref<4x8x1xf32, #tpu.memory_space<vmem>>, %arg9: memref<8x128xf32, #tpu.memory_space<vmem>>) attributes {dimension_semantics = [#tpu.dimension_semantics<parallel>, #tpu.dimension_semantics<parallel>, #tpu.dimension_semantics<arbitrary>], iteration_bounds = array<i64: 2, 1, 1>, scalar_prefetch = 0 : i64, scratch_operands = 3 : i64, tpu.core_type = #tpu.core_type<tc>, window_params = [{transform_indices = @transform_0, window_bounds = array<i64: 1, 8, 128>}, {transform_indices = @transform_1, window_bounds = array<i64: 1, 8, 128>}, {transform_indices = @transform_2, window_bounds = array<i64: 1, 8, 128>}, {transform_indices = @transform_3, window_bounds = array<i64: 1, 8, 128>}]} {
    %c0_i32 = arith.constant 0 : i32
    %0 = arith.cmpi eq, %arg2, %c0_i32 : i32
    %1 = arith.extui %0 : i1 to i32
    %c0_i32_0 = arith.constant 0 : i32
    %2 = arith.cmpi ne, %1, %c0_i32_0 : i32
    scf.if %2 {
      %cst_88 = arith.constant -1.000000e+30 : f32
      %152 = vector.broadcast %cst_88 : f32 to vector<4x8x1xf32>
      %c0_89 = arith.constant 0 : index
      %c0_90 = arith.constant 0 : index
      %c0_91 = arith.constant 0 : index
      %153 = vector.load %arg7[%c0_89, %c0_90, %c0_91] : memref<4x8x1xf32, #tpu.memory_space<vmem>>, vector<4x8x1xf32>
      tpu.vector_store %arg7[%c0_89, %c0_90, %c0_91], %152 {strides = array<i32>} : memref<4x8x1xf32, #tpu.memory_space<vmem>>, vector<4x8x1xf32>,
      %cst_92 = arith.constant 0.000000e+00 : f32
      %154 = vector.broadcast %cst_92 : f32 to vector<4x8x1xf32>
      %c0_93 = arith.constant 0 : index
      %c0_94 = arith.constant 0 : index
      %c0_95 = arith.constant 0 : index
      %155 = vector.load %arg8[%c0_93, %c0_94, %c0_95] : memref<4x8x1xf32, #tpu.memory_space<vmem>>, vector<4x8x1xf32>
      tpu.vector_store %arg8[%c0_93, %c0_94, %c0_95], %154 {strides = array<i32>} : memref<4x8x1xf32, #tpu.memory_space<vmem>>, vector<4x8x1xf32>,
      %cst_96 = arith.constant 0.000000e+00 : f32
      %156 = vector.broadcast %cst_96 : f32 to vector<8x128xf32>
      %c0_97 = arith.constant 0 : index
      %c0_98 = arith.constant 0 : index
      %157 = vector.load %arg9[%c0_97, %c0_98] : memref<8x128xf32, #tpu.memory_space<vmem>>, vector<8x128xf32>
      tpu.vector_store %arg9[%c0_97, %c0_98], %156 {strides = array<i32>} : memref<8x128xf32, #tpu.memory_space<vmem>>, vector<8x128xf32>,
    } else {
    }
    %c0 = arith.constant 0 : index
    %c0_1 = arith.constant 0 : index
    %c0_2 = arith.constant 0 : index
    %3 = vector.load %arg3[%c0, %c0_1, %c0_2] : memref<1x8x128xbf16, #tpu.memory_space<vmem>>, vector<1x8x128xbf16>
    %4 = vector.shape_cast %3 : vector<1x8x128xbf16> to vector<8x128xbf16>
    %c0_3 = arith.constant 0 : index
    %c0_4 = arith.constant 0 : index
    %c0_5 = arith.constant 0 : index
    %5 = vector.load %arg4[%c0_3, %c0_4, %c0_5] : memref<1x8x128xbf16, #tpu.memory_space<vmem>>, vector<1x8x128xbf16>
    %6 = vector.shape_cast %5 : vector<1x8x128xbf16> to vector<8x128xbf16>
    %c0_6 = arith.constant 0 : index
    %c0_7 = arith.constant 0 : index
    %c0_8 = arith.constant 0 : index
    %7 = vector.load %arg5[%c0_6, %c0_7, %c0_8] : memref<1x8x128xbf16, #tpu.memory_space<vmem>>, vector<1x8x128xbf16>
    %8 = vector.shape_cast %7 : vector<1x8x128xbf16> to vector<8x128xbf16>
    %9 = vector.extract_strided_slice %4 {offsets = [0, 0], sizes = [8, 32], strides = [1, 1]} : vector<8x128xbf16> to vector<8x32xbf16>
    %10 = vector.extract_strided_slice %6 {offsets = [0, 0], sizes = [8, 32], strides = [1, 1]} : vector<8x128xbf16> to vector<8x32xbf16>
    %11 = vector.extract_strided_slice %8 {offsets = [0, 0], sizes = [8, 32], strides = [1, 1]} : vector<8x128xbf16> to vector<8x32xbf16>
    %cst = arith.constant dense<0.000000e+00> : vector<8x8xf32>
    %12 = tpu.matmul %9, %10, %cst {dimension_numbers = #tpu.dot_dimension_numbers<[1], [1], [0], [0], [0, 0, 1, 0], [], []>} : vector<8x32xbf16>, vector<8x32xbf16>, vector<8x8xf32> -> vector<8x8xf32>
    %cst_9 = arith.constant 0.176776692 : f32
    %13 = vector.broadcast %cst_9 : f32 to vector<8x8xf32>
    %14 = arith.mulf %12, %13 : vector<8x8xf32>
    %c0_10 = arith.constant 0 : index
    %c0_11 = arith.constant 0 : index
    %c0_12 = arith.constant 0 : index
    %15 = vector.load %arg7[%c0_10, %c0_11, %c0_12] : memref<4x8x1xf32, #tpu.memory_space<vmem>>, vector<1x8x1xf32>
    %16 = vector.shape_cast %15 : vector<1x8x1xf32> to vector<8x1xf32>
    %cst_13 = arith.constant dense<0xFF800000> : vector<8xf32>
    %17 = vector.multi_reduction <maximumf>, %14, %cst_13 [1] : vector<8x8xf32> to vector<8xf32>
    %18 = vector.shape_cast %17 : vector<8xf32> to vector<8x1xf32>
    %19 = arith.maximumf %16, %18 : vector<8x1xf32>
    %20 = arith.subf %16, %19 : vector<8x1xf32>
    %21 = math.exp %20 : vector<8x1xf32>
    %22 = vector.broadcast %19 : vector<8x1xf32> to vector<8x8xf32>
    %23 = arith.subf %14, %22 : vector<8x8xf32>
    %24 = math.exp %23 : vector<8x8xf32>
    %c0_14 = arith.constant 0 : index
    %c0_15 = arith.constant 0 : index
    %c0_16 = arith.constant 0 : index
    %25 = vector.load %arg8[%c0_14, %c0_15, %c0_16] : memref<4x8x1xf32, #tpu.memory_space<vmem>>, vector<1x8x1xf32>
    %26 = vector.shape_cast %25 : vector<1x8x1xf32> to vector<8x1xf32>
    %27 = arith.mulf %21, %26 : vector<8x1xf32>
    %cst_17 = arith.constant dense<0.000000e+00> : vector<8xf32>
    %28 = vector.multi_reduction <add>, %24, %cst_17 [1] : vector<8x8xf32> to vector<8xf32>
    %29 = vector.shape_cast %28 : vector<8xf32> to vector<8x1xf32>
    %30 = arith.addf %27, %29 : vector<8x1xf32>
    %c0_18 = arith.constant 0 : index
    %c0_19 = arith.constant 0 : index
    %c0_20 = arith.constant 0 : index
    %31 = vector.load %arg8[%c0_18, %c0_19, %c0_20] : memref<4x8x1xf32, #tpu.memory_space<vmem>>, vector<1x8x1xf32>
    %32 = vector.shape_cast %31 : vector<1x8x1xf32> to vector<8x1xf32>
    %33 = vector.shape_cast %30 : vector<8x1xf32> to vector<1x8x1xf32>
    tpu.vector_store %arg8[%c0_18, %c0_19, %c0_20], %33 {strides = array<i32>} : memref<4x8x1xf32, #tpu.memory_space<vmem>>, vector<1x8x1xf32>,
    %c0_21 = arith.constant 0 : index
    %c0_22 = arith.constant 0 : index
    %34 = vector.load %arg9[%c0_21, %c0_22] : memref<8x128xf32, #tpu.memory_space<vmem>>, vector<8x32xf32>
    %35 = vector.broadcast %21 : vector<8x1xf32> to vector<8x32xf32>
    %36 = arith.mulf %35, %34 : vector<8x32xf32>
    %37 = arith.truncf %24 : vector<8x8xf32> to vector<8x8xbf16>
    %cst_23 = arith.constant dense<0.000000e+00> : vector<8x32xf32>
    %38 = tpu.matmul %37, %11, %cst_23 {dimension_numbers = #tpu.dot_dimension_numbers<[1], [0], [0], [1], [0, 0, 1, 1], [], []>} : vector<8x8xbf16>, vector<8x32xbf16>, vector<8x32xf32> -> vector<8x32xf32>
    %39 = arith.addf %36, %38 : vector<8x32xf32>
    %c0_24 = arith.constant 0 : index
    %c0_25 = arith.constant 0 : index
    %40 = vector.load %arg9[%c0_24, %c0_25] : memref<8x128xf32, #tpu.memory_space<vmem>>, vector<8x32xf32>
    tpu.vector_store %arg9[%c0_24, %c0_25], %39 {strides = array<i32>} : memref<8x128xf32, #tpu.memory_space<vmem>>, vector<8x32xf32>,
    %c0_26 = arith.constant 0 : index
    %c0_27 = arith.constant 0 : index
    %c0_28 = arith.constant 0 : index
    %41 = vector.load %arg7[%c0_26, %c0_27, %c0_28] : memref<4x8x1xf32, #tpu.memory_space<vmem>>, vector<1x8x1xf32>
    %42 = vector.shape_cast %41 : vector<1x8x1xf32> to vector<8x1xf32>
    %43 = vector.shape_cast %19 : vector<8x1xf32> to vector<1x8x1xf32>
    tpu.vector_store %arg7[%c0_26, %c0_27, %c0_28], %43 {strides = array<i32>} : memref<4x8x1xf32, #tpu.memory_space<vmem>>, vector<1x8x1xf32>,
    %44 = vector.extract_strided_slice %4 {offsets = [0, 32], sizes = [8, 32], strides = [1, 1]} : vector<8x128xbf16> to vector<8x32xbf16>
    %45 = vector.extract_strided_slice %6 {offsets = [0, 32], sizes = [8, 32], strides = [1, 1]} : vector<8x128xbf16> to vector<8x32xbf16>
    %46 = vector.extract_strided_slice %8 {offsets = [0, 32], sizes = [8, 32], strides = [1, 1]} : vector<8x128xbf16> to vector<8x32xbf16>
    %cst_29 = arith.constant dense<0.000000e+00> : vector<8x8xf32>
    %47 = tpu.matmul %44, %45, %cst_29 {dimension_numbers = #tpu.dot_dimension_numbers<[1], [1], [0], [0], [0, 0, 1, 0], [], []>} : vector<8x32xbf16>, vector<8x32xbf16>, vector<8x8xf32> -> vector<8x8xf32>
    %cst_30 = arith.constant 0.176776692 : f32
    %48 = vector.broadcast %cst_30 : f32 to vector<8x8xf32>
    %49 = arith.mulf %47, %48 : vector<8x8xf32>
    %c1 = arith.constant 1 : index
    %c0_31 = arith.constant 0 : index
    %c0_32 = arith.constant 0 : index
    %50 = vector.load %arg7[%c1, %c0_31, %c0_32] : memref<4x8x1xf32, #tpu.memory_space<vmem>>, vector<1x8x1xf32>
    %51 = vector.shape_cast %50 : vector<1x8x1xf32> to vector<8x1xf32>
    %cst_33 = arith.constant dense<0xFF800000> : vector<8xf32>
    %52 = vector.multi_reduction <maximumf>, %49, %cst_33 [1] : vector<8x8xf32> to vector<8xf32>
    %53 = vector.shape_cast %52 : vector<8xf32> to vector<8x1xf32>
    %54 = arith.maximumf %51, %53 : vector<8x1xf32>
    %55 = arith.subf %51, %54 : vector<8x1xf32>
    %56 = math.exp %55 : vector<8x1xf32>
    %57 = vector.broadcast %54 : vector<8x1xf32> to vector<8x8xf32>
    %58 = arith.subf %49, %57 : vector<8x8xf32>
    %59 = math.exp %58 : vector<8x8xf32>
    %c1_34 = arith.constant 1 : index
    %c0_35 = arith.constant 0 : index
    %c0_36 = arith.constant 0 : index
    %60 = vector.load %arg8[%c1_34, %c0_35, %c0_36] : memref<4x8x1xf32, #tpu.memory_space<vmem>>, vector<1x8x1xf32>
    %61 = vector.shape_cast %60 : vector<1x8x1xf32> to vector<8x1xf32>
    %62 = arith.mulf %56, %61 : vector<8x1xf32>
    %cst_37 = arith.constant dense<0.000000e+00> : vector<8xf32>
    %63 = vector.multi_reduction <add>, %59, %cst_37 [1] : vector<8x8xf32> to vector<8xf32>
    %64 = vector.shape_cast %63 : vector<8xf32> to vector<8x1xf32>
    %65 = arith.addf %62, %64 : vector<8x1xf32>
    %c1_38 = arith.constant 1 : index
    %c0_39 = arith.constant 0 : index
    %c0_40 = arith.constant 0 : index
    %66 = vector.load %arg8[%c1_38, %c0_39, %c0_40] : memref<4x8x1xf32, #tpu.memory_space<vmem>>, vector<1x8x1xf32>
    %67 = vector.shape_cast %66 : vector<1x8x1xf32> to vector<8x1xf32>
    %68 = vector.shape_cast %65 : vector<8x1xf32> to vector<1x8x1xf32>
    tpu.vector_store %arg8[%c1_38, %c0_39, %c0_40], %68 {strides = array<i32>} : memref<4x8x1xf32, #tpu.memory_space<vmem>>, vector<1x8x1xf32>,
    %c0_41 = arith.constant 0 : index
    %c32 = arith.constant 32 : index
    %69 = vector.load %arg9[%c0_41, %c32] : memref<8x128xf32, #tpu.memory_space<vmem>>, vector<8x32xf32>
    %70 = vector.broadcast %56 : vector<8x1xf32> to vector<8x32xf32>
    %71 = arith.mulf %70, %69 : vector<8x32xf32>
    %72 = arith.truncf %59 : vector<8x8xf32> to vector<8x8xbf16>
    %cst_42 = arith.constant dense<0.000000e+00> : vector<8x32xf32>
    %73 = tpu.matmul %72, %46, %cst_42 {dimension_numbers = #tpu.dot_dimension_numbers<[1], [0], [0], [1], [0, 0, 1, 1], [], []>} : vector<8x8xbf16>, vector<8x32xbf16>, vector<8x32xf32> -> vector<8x32xf32>
    %74 = arith.addf %71, %73 : vector<8x32xf32>
    %c0_43 = arith.constant 0 : index
    %c32_44 = arith.constant 32 : index
    %75 = vector.load %arg9[%c0_43, %c32_44] : memref<8x128xf32, #tpu.memory_space<vmem>>, vector<8x32xf32>
    tpu.vector_store %arg9[%c0_43, %c32_44], %74 {strides = array<i32>} : memref<8x128xf32, #tpu.memory_space<vmem>>, vector<8x32xf32>,
    %c1_45 = arith.constant 1 : index
    %c0_46 = arith.constant 0 : index
    %c0_47 = arith.constant 0 : index
    %76 = vector.load %arg7[%c1_45, %c0_46, %c0_47] : memref<4x8x1xf32, #tpu.memory_space<vmem>>, vector<1x8x1xf32>
    %77 = vector.shape_cast %76 : vector<1x8x1xf32> to vector<8x1xf32>
    %78 = vector.shape_cast %54 : vector<8x1xf32> to vector<1x8x1xf32>
    tpu.vector_store %arg7[%c1_45, %c0_46, %c0_47], %78 {strides = array<i32>} : memref<4x8x1xf32, #tpu.memory_space<vmem>>, vector<1x8x1xf32>,
    %79 = vector.extract_strided_slice %4 {offsets = [0, 64], sizes = [8, 32], strides = [1, 1]} : vector<8x128xbf16> to vector<8x32xbf16>
    %80 = vector.extract_strided_slice %6 {offsets = [0, 64], sizes = [8, 32], strides = [1, 1]} : vector<8x128xbf16> to vector<8x32xbf16>
    %81 = vector.extract_strided_slice %8 {offsets = [0, 64], sizes = [8, 32], strides = [1, 1]} : vector<8x128xbf16> to vector<8x32xbf16>
    %cst_48 = arith.constant dense<0.000000e+00> : vector<8x8xf32>
    %82 = tpu.matmul %79, %80, %cst_48 {dimension_numbers = #tpu.dot_dimension_numbers<[1], [1], [0], [0], [0, 0, 1, 0], [], []>} : vector<8x32xbf16>, vector<8x32xbf16>, vector<8x8xf32> -> vector<8x8xf32>
    %cst_49 = arith.constant 0.176776692 : f32
    %83 = vector.broadcast %cst_49 : f32 to vector<8x8xf32>
    %84 = arith.mulf %82, %83 : vector<8x8xf32>
    %c2 = arith.constant 2 : index
    %c0_50 = arith.constant 0 : index
    %c0_51 = arith.constant 0 : index
    %85 = vector.load %arg7[%c2, %c0_50, %c0_51] : memref<4x8x1xf32, #tpu.memory_space<vmem>>, vector<1x8x1xf32>
    %86 = vector.shape_cast %85 : vector<1x8x1xf32> to vector<8x1xf32>
    %cst_52 = arith.constant dense<0xFF800000> : vector<8xf32>
    %87 = vector.multi_reduction <maximumf>, %84, %cst_52 [1] : vector<8x8xf32> to vector<8xf32>
    %88 = vector.shape_cast %87 : vector<8xf32> to vector<8x1xf32>
    %89 = arith.maximumf %86, %88 : vector<8x1xf32>
    %90 = arith.subf %86, %89 : vector<8x1xf32>
    %91 = math.exp %90 : vector<8x1xf32>
    %92 = vector.broadcast %89 : vector<8x1xf32> to vector<8x8xf32>
    %93 = arith.subf %84, %92 : vector<8x8xf32>
    %94 = math.exp %93 : vector<8x8xf32>
    %c2_53 = arith.constant 2 : index
    %c0_54 = arith.constant 0 : index
    %c0_55 = arith.constant 0 : index
    %95 = vector.load %arg8[%c2_53, %c0_54, %c0_55] : memref<4x8x1xf32, #tpu.memory_space<vmem>>, vector<1x8x1xf32>
    %96 = vector.shape_cast %95 : vector<1x8x1xf32> to vector<8x1xf32>
    %97 = arith.mulf %91, %96 : vector<8x1xf32>
    %cst_56 = arith.constant dense<0.000000e+00> : vector<8xf32>
    %98 = vector.multi_reduction <add>, %94, %cst_56 [1] : vector<8x8xf32> to vector<8xf32>
    %99 = vector.shape_cast %98 : vector<8xf32> to vector<8x1xf32>
    %100 = arith.addf %97, %99 : vector<8x1xf32>
    %c2_57 = arith.constant 2 : index
    %c0_58 = arith.constant 0 : index
    %c0_59 = arith.constant 0 : index
    %101 = vector.load %arg8[%c2_57, %c0_58, %c0_59] : memref<4x8x1xf32, #tpu.memory_space<vmem>>, vector<1x8x1xf32>
    %102 = vector.shape_cast %101 : vector<1x8x1xf32> to vector<8x1xf32>
    %103 = vector.shape_cast %100 : vector<8x1xf32> to vector<1x8x1xf32>
    tpu.vector_store %arg8[%c2_57, %c0_58, %c0_59], %103 {strides = array<i32>} : memref<4x8x1xf32, #tpu.memory_space<vmem>>, vector<1x8x1xf32>,
    %c0_60 = arith.constant 0 : index
    %c64 = arith.constant 64 : index
    %104 = vector.load %arg9[%c0_60, %c64] : memref<8x128xf32, #tpu.memory_space<vmem>>, vector<8x32xf32>
    %105 = vector.broadcast %91 : vector<8x1xf32> to vector<8x32xf32>
    %106 = arith.mulf %105, %104 : vector<8x32xf32>
    %107 = arith.truncf %94 : vector<8x8xf32> to vector<8x8xbf16>
    %cst_61 = arith.constant dense<0.000000e+00> : vector<8x32xf32>
    %108 = tpu.matmul %107, %81, %cst_61 {dimension_numbers = #tpu.dot_dimension_numbers<[1], [0], [0], [1], [0, 0, 1, 1], [], []>} : vector<8x8xbf16>, vector<8x32xbf16>, vector<8x32xf32> -> vector<8x32xf32>
    %109 = arith.addf %106, %108 : vector<8x32xf32>
    %c0_62 = arith.constant 0 : index
    %c64_63 = arith.constant 64 : index
    %110 = vector.load %arg9[%c0_62, %c64_63] : memref<8x128xf32, #tpu.memory_space<vmem>>, vector<8x32xf32>
    tpu.vector_store %arg9[%c0_62, %c64_63], %109 {strides = array<i32>} : memref<8x128xf32, #tpu.memory_space<vmem>>, vector<8x32xf32>,
    %c2_64 = arith.constant 2 : index
    %c0_65 = arith.constant 0 : index
    %c0_66 = arith.constant 0 : index
    %111 = vector.load %arg7[%c2_64, %c0_65, %c0_66] : memref<4x8x1xf32, #tpu.memory_space<vmem>>, vector<1x8x1xf32>
    %112 = vector.shape_cast %111 : vector<1x8x1xf32> to vector<8x1xf32>
    %113 = vector.shape_cast %89 : vector<8x1xf32> to vector<1x8x1xf32>
    tpu.vector_store %arg7[%c2_64, %c0_65, %c0_66], %113 {strides = array<i32>} : memref<4x8x1xf32, #tpu.memory_space<vmem>>, vector<1x8x1xf32>,
    %114 = vector.extract_strided_slice %4 {offsets = [0, 96], sizes = [8, 32], strides = [1, 1]} : vector<8x128xbf16> to vector<8x32xbf16>
    %115 = vector.extract_strided_slice %6 {offsets = [0, 96], sizes = [8, 32], strides = [1, 1]} : vector<8x128xbf16> to vector<8x32xbf16>
    %116 = vector.extract_strided_slice %8 {offsets = [0, 96], sizes = [8, 32], strides = [1, 1]} : vector<8x128xbf16> to vector<8x32xbf16>
    %cst_67 = arith.constant dense<0.000000e+00> : vector<8x8xf32>
    %117 = tpu.matmul %114, %115, %cst_67 {dimension_numbers = #tpu.dot_dimension_numbers<[1], [1], [0], [0], [0, 0, 1, 0], [], []>} : vector<8x32xbf16>, vector<8x32xbf16>, vector<8x8xf32> -> vector<8x8xf32>
    %cst_68 = arith.constant 0.176776692 : f32
    %118 = vector.broadcast %cst_68 : f32 to vector<8x8xf32>
    %119 = arith.mulf %117, %118 : vector<8x8xf32>
    %c3 = arith.constant 3 : index
    %c0_69 = arith.constant 0 : index
    %c0_70 = arith.constant 0 : index
    %120 = vector.load %arg7[%c3, %c0_69, %c0_70] : memref<4x8x1xf32, #tpu.memory_space<vmem>>, vector<1x8x1xf32>
    %121 = vector.shape_cast %120 : vector<1x8x1xf32> to vector<8x1xf32>
    %cst_71 = arith.constant dense<0xFF800000> : vector<8xf32>
    %122 = vector.multi_reduction <maximumf>, %119, %cst_71 [1] : vector<8x8xf32> to vector<8xf32>
    %123 = vector.shape_cast %122 : vector<8xf32> to vector<8x1xf32>
    %124 = arith.maximumf %121, %123 : vector<8x1xf32>
    %125 = arith.subf %121, %124 : vector<8x1xf32>
    %126 = math.exp %125 : vector<8x1xf32>
    %127 = vector.broadcast %124 : vector<8x1xf32> to vector<8x8xf32>
    %128 = arith.subf %119, %127 : vector<8x8xf32>
    %129 = math.exp %128 : vector<8x8xf32>
    %c3_72 = arith.constant 3 : index
    %c0_73 = arith.constant 0 : index
    %c0_74 = arith.constant 0 : index
    %130 = vector.load %arg8[%c3_72, %c0_73, %c0_74] : memref<4x8x1xf32, #tpu.memory_space<vmem>>, vector<1x8x1xf32>
    %131 = vector.shape_cast %130 : vector<1x8x1xf32> to vector<8x1xf32>
    %132 = arith.mulf %126, %131 : vector<8x1xf32>
    %cst_75 = arith.constant dense<0.000000e+00> : vector<8xf32>
    %133 = vector.multi_reduction <add>, %129, %cst_75 [1] : vector<8x8xf32> to vector<8xf32>
    %134 = vector.shape_cast %133 : vector<8xf32> to vector<8x1xf32>
    %135 = arith.addf %132, %134 : vector<8x1xf32>
    %c3_76 = arith.constant 3 : index
    %c0_77 = arith.constant 0 : index
    %c0_78 = arith.constant 0 : index
    %136 = vector.load %arg8[%c3_76, %c0_77, %c0_78] : memref<4x8x1xf32, #tpu.memory_space<vmem>>, vector<1x8x1xf32>
    %137 = vector.shape_cast %136 : vector<1x8x1xf32> to vector<8x1xf32>
    %138 = vector.shape_cast %135 : vector<8x1xf32> to vector<1x8x1xf32>
    tpu.vector_store %arg8[%c3_76, %c0_77, %c0_78], %138 {strides = array<i32>} : memref<4x8x1xf32, #tpu.memory_space<vmem>>, vector<1x8x1xf32>,
    %c0_79 = arith.constant 0 : index
    %c96 = arith.constant 96 : index
    %139 = vector.load %arg9[%c0_79, %c96] : memref<8x128xf32, #tpu.memory_space<vmem>>, vector<8x32xf32>
    %140 = vector.broadcast %126 : vector<8x1xf32> to vector<8x32xf32>
    %141 = arith.mulf %140, %139 : vector<8x32xf32>
    %142 = arith.truncf %129 : vector<8x8xf32> to vector<8x8xbf16>
    %cst_80 = arith.constant dense<0.000000e+00> : vector<8x32xf32>
    %143 = tpu.matmul %142, %116, %cst_80 {dimension_numbers = #tpu.dot_dimension_numbers<[1], [0], [0], [1], [0, 0, 1, 1], [], []>} : vector<8x8xbf16>, vector<8x32xbf16>, vector<8x32xf32> -> vector<8x32xf32>
    %144 = arith.addf %141, %143 : vector<8x32xf32>
    %c0_81 = arith.constant 0 : index
    %c96_82 = arith.constant 96 : index
    %145 = vector.load %arg9[%c0_81, %c96_82] : memref<8x128xf32, #tpu.memory_space<vmem>>, vector<8x32xf32>
    tpu.vector_store %arg9[%c0_81, %c96_82], %144 {strides = array<i32>} : memref<8x128xf32, #tpu.memory_space<vmem>>, vector<8x32xf32>,
    %c3_83 = arith.constant 3 : index
    %c0_84 = arith.constant 0 : index
    %c0_85 = arith.constant 0 : index
    %146 = vector.load %arg7[%c3_83, %c0_84, %c0_85] : memref<4x8x1xf32, #tpu.memory_space<vmem>>, vector<1x8x1xf32>
    %147 = vector.shape_cast %146 : vector<1x8x1xf32> to vector<8x1xf32>
    %148 = vector.shape_cast %124 : vector<8x1xf32> to vector<1x8x1xf32>
    tpu.vector_store %arg7[%c3_83, %c0_84, %c0_85], %148 {strides = array<i32>} : memref<4x8x1xf32, #tpu.memory_space<vmem>>, vector<1x8x1xf32>,
    %c0_i32_86 = arith.constant 0 : i32
    %149 = arith.cmpi eq, %arg2, %c0_i32_86 : i32
    %150 = arith.extui %149 : i1 to i32
    %c0_i32_87 = arith.constant 0 : i32
    %151 = arith.cmpi ne, %150, %c0_i32_87 : i32
    scf.if %151 {
      %c0_88 = arith.constant 0 : index
      %c0_89 = arith.constant 0 : index
      %c0_90 = arith.constant 0 : index
      %152 = vector.load %arg8[%c0_88, %c0_89, %c0_90] : memref<4x8x1xf32, #tpu.memory_space<vmem>>, vector<1x8x1xf32>
      %153 = vector.shape_cast %152 : vector<1x8x1xf32> to vector<8x1xf32>
      %154 = tpu.reciprocal %153 {approx = true} : vector<8x1xf32> -> vector<8x1xf32>
      %c0_91 = arith.constant 0 : index
      %c0_92 = arith.constant 0 : index
      %155 = vector.load %arg9[%c0_91, %c0_92] : memref<8x128xf32, #tpu.memory_space<vmem>>, vector<8x32xf32>
      %156 = vector.broadcast %154 : vector<8x1xf32> to vector<8x32xf32>
      %157 = arith.mulf %155, %156 : vector<8x32xf32>
      %c1_93 = arith.constant 1 : index
      %c0_94 = arith.constant 0 : index
      %c0_95 = arith.constant 0 : index
      %158 = vector.load %arg8[%c1_93, %c0_94, %c0_95] : memref<4x8x1xf32, #tpu.memory_space<vmem>>, vector<1x8x1xf32>
      %159 = vector.shape_cast %158 : vector<1x8x1xf32> to vector<8x1xf32>
      %160 = tpu.reciprocal %159 {approx = true} : vector<8x1xf32> -> vector<8x1xf32>
      %c0_96 = arith.constant 0 : index
      %c32_97 = arith.constant 32 : index
      %161 = vector.load %arg9[%c0_96, %c32_97] : memref<8x128xf32, #tpu.memory_space<vmem>>, vector<8x32xf32>
      %162 = vector.broadcast %160 : vector<8x1xf32> to vector<8x32xf32>
      %163 = arith.mulf %161, %162 : vector<8x32xf32>
      %c2_98 = arith.constant 2 : index
      %c0_99 = arith.constant 0 : index
      %c0_100 = arith.constant 0 : index
      %164 = vector.load %arg8[%c2_98, %c0_99, %c0_100] : memref<4x8x1xf32, #tpu.memory_space<vmem>>, vector<1x8x1xf32>
      %165 = vector.shape_cast %164 : vector<1x8x1xf32> to vector<8x1xf32>
      %166 = tpu.reciprocal %165 {approx = true} : vector<8x1xf32> -> vector<8x1xf32>
      %c0_101 = arith.constant 0 : index
      %c64_102 = arith.constant 64 : index
      %167 = vector.load %arg9[%c0_101, %c64_102] : memref<8x128xf32, #tpu.memory_space<vmem>>, vector<8x32xf32>
      %168 = vector.broadcast %166 : vector<8x1xf32> to vector<8x32xf32>
      %169 = arith.mulf %167, %168 : vector<8x32xf32>
      %c3_103 = arith.constant 3 : index
      %c0_104 = arith.constant 0 : index
      %c0_105 = arith.constant 0 : index
      %170 = vector.load %arg8[%c3_103, %c0_104, %c0_105] : memref<4x8x1xf32, #tpu.memory_space<vmem>>, vector<1x8x1xf32>
      %171 = vector.shape_cast %170 : vector<1x8x1xf32> to vector<8x1xf32>
      %172 = tpu.reciprocal %171 {approx = true} : vector<8x1xf32> -> vector<8x1xf32>
      %c0_106 = arith.constant 0 : index
      %c96_107 = arith.constant 96 : index
      %173 = vector.load %arg9[%c0_106, %c96_107] : memref<8x128xf32, #tpu.memory_space<vmem>>, vector<8x32xf32>
      %174 = vector.broadcast %172 : vector<8x1xf32> to vector<8x32xf32>
      %175 = arith.mulf %173, %174 : vector<8x32xf32>
      %176 = tpu.concatenate %157, %163, %169, %175 in 1 : vector<8x32xf32>, vector<8x32xf32>, vector<8x32xf32>, vector<8x32xf32> -> vector<8x128xf32>
      %177 = arith.truncf %176 : vector<8x128xf32> to vector<8x128xbf16>
      %c0_108 = arith.constant 0 : index
      %c0_109 = arith.constant 0 : index
      %c0_110 = arith.constant 0 : index
      %178 = vector.load %arg6[%c0_108, %c0_109, %c0_110] : memref<1x8x128xbf16, #tpu.memory_space<vmem>>, vector<1x8x128xbf16>
      %179 = vector.shape_cast %178 : vector<1x8x128xbf16> to vector<8x128xbf16>
      %180 = vector.shape_cast %177 : vector<8x128xbf16> to vector<1x8x128xbf16>
      tpu.vector_store %arg6[%c0_108, %c0_109, %c0_110], %180 {strides = array<i32>} : memref<1x8x128xbf16, #tpu.memory_space<vmem>>, vector<1x8x128xbf16>,
    } else {
    }
    return
  }
  func.func @transform_0(%arg0: i32, %arg1: i32, %arg2: i32) -> (i32, i32, i32) {
    %c0_i32 = arith.constant 0 : i32
    %c0_i32_0 = arith.constant 0 : i32
    return %arg0, %arg1, %c0_i32 : i32, i32, i32
  }
  func.func @transform_1(%arg0: i32, %arg1: i32, %arg2: i32) -> (i32, i32, i32) {
    %c0_i32 = arith.constant 0 : i32
    %c0_i32_0 = arith.constant 0 : i32
    return %arg0, %arg2, %c0_i32 : i32, i32, i32
  }
  func.func @transform_2(%arg0: i32, %arg1: i32, %arg2: i32) -> (i32, i32, i32) {
    %c1_i32 = arith.constant 1 : i32
    %c0_i32 = arith.constant 0 : i32
    return %arg0, %arg2, %c1_i32 : i32, i32, i32
  }
  func.func @transform_3(%arg0: i32, %arg1: i32, %arg2: i32) -> (i32, i32, i32) {
    %c0_i32 = arith.constant 0 : i32
    %c0_i32_0 = arith.constant 0 : i32
    return %arg0, %arg1, %c0_i32 : i32, i32, i32
  }
}

module attributes {stable_mosaic.version = 11 : i64} {
  func.func @_matmul_bias_kernel(%arg0: i32, %arg1: i32, %arg2: i32, %arg3: memref<16x128xbf16, #tpu.memory_space<vmem>>, %arg4: memref<128x128xbf16, #tpu.memory_space<vmem>>, %arg5: memref<1x128xf32, #tpu.memory_space<vmem>>, %arg6: memref<16x128xbf16, #tpu.memory_space<vmem>>, %arg7: memref<16x128xf32, #tpu.memory_space<vmem>>) attributes {dimension_semantics = [#tpu.dimension_semantics<parallel>, #tpu.dimension_semantics<parallel>, #tpu.dimension_semantics<arbitrary>], iteration_bounds = array<i64: 1, 1, 1>, scalar_prefetch = 0 : i64, scratch_operands = 1 : i64, tpu.core_type = #tpu.core_type<tc>, window_params = [{transform_indices = @transform_0, window_bounds = array<i64: 16, 128>}, {transform_indices = @transform_1, window_bounds = array<i64: 128, 128>}, {transform_indices = @transform_2, window_bounds = array<i64: 1, 128>}, {transform_indices = @transform_3, window_bounds = array<i64: 16, 128>}]} {
    %c0_i32 = arith.constant 0 : i32
    %0 = arith.cmpi eq, %arg2, %c0_i32 : i32
    %1 = arith.extui %0 : i1 to i32
    %c0_i32_0 = arith.constant 0 : i32
    %2 = arith.cmpi ne, %1, %c0_i32_0 : i32
    scf.if %2 {
      %cst_10 = arith.constant 0.000000e+00 : f32
      %12 = vector.broadcast %cst_10 : f32 to vector<16x128xf32>
      %c0_11 = arith.constant 0 : index
      %c0_12 = arith.constant 0 : index
      %13 = vector.load %arg7[%c0_11, %c0_12] : memref<16x128xf32, #tpu.memory_space<vmem>>, vector<16x128xf32>
      tpu.vector_store %arg7[%c0_11, %c0_12], %12 {strides = array<i32>} : memref<16x128xf32, #tpu.memory_space<vmem>>, vector<16x128xf32>,
    } else {
    }
    %c0 = arith.constant 0 : index
    %c0_1 = arith.constant 0 : index
    %3 = vector.load %arg7[%c0, %c0_1] : memref<16x128xf32, #tpu.memory_space<vmem>>, vector<16x128xf32>
    %c0_2 = arith.constant 0 : index
    %c0_3 = arith.constant 0 : index
    %4 = vector.load %arg3[%c0_2, %c0_3] : memref<16x128xbf16, #tpu.memory_space<vmem>>, vector<16x128xbf16>
    %c0_4 = arith.constant 0 : index
    %c0_5 = arith.constant 0 : index
    %5 = vector.load %arg4[%c0_4, %c0_5] : memref<128x128xbf16, #tpu.memory_space<vmem>>, vector<128x128xbf16>
    %cst = arith.constant dense<0.000000e+00> : vector<16x128xf32>
    %6 = tpu.matmul %4, %5, %cst {dimension_numbers = #tpu.dot_dimension_numbers<[1], [0], [0], [1], [0, 0, 1, 1], [], []>} : vector<16x128xbf16>, vector<128x128xbf16>, vector<16x128xf32> -> vector<16x128xf32>
    %7 = arith.addf %3, %6 : vector<16x128xf32>
    %c0_6 = arith.constant 0 : index
    %c0_7 = arith.constant 0 : index
    %8 = vector.load %arg7[%c0_6, %c0_7] : memref<16x128xf32, #tpu.memory_space<vmem>>, vector<16x128xf32>
    tpu.vector_store %arg7[%c0_6, %c0_7], %7 {strides = array<i32>} : memref<16x128xf32, #tpu.memory_space<vmem>>, vector<16x128xf32>,
    %c0_i32_8 = arith.constant 0 : i32
    %9 = arith.cmpi eq, %arg2, %c0_i32_8 : i32
    %10 = arith.extui %9 : i1 to i32
    %c0_i32_9 = arith.constant 0 : i32
    %11 = arith.cmpi ne, %10, %c0_i32_9 : i32
    scf.if %11 {
      %c0_10 = arith.constant 0 : index
      %c0_11 = arith.constant 0 : index
      %12 = vector.load %arg7[%c0_10, %c0_11] : memref<16x128xf32, #tpu.memory_space<vmem>>, vector<16x128xf32>
      %c0_12 = arith.constant 0 : index
      %c0_13 = arith.constant 0 : index
      %13 = vector.load %arg5[%c0_12, %c0_13] : memref<1x128xf32, #tpu.memory_space<vmem>>, vector<1x128xf32>
      %14 = vector.broadcast %13 : vector<1x128xf32> to vector<16x128xf32>
      %15 = arith.addf %12, %14 : vector<16x128xf32>
      %16 = arith.truncf %15 : vector<16x128xf32> to vector<16x128xbf16>
      %c0_14 = arith.constant 0 : index
      %c0_15 = arith.constant 0 : index
      %17 = vector.load %arg6[%c0_14, %c0_15] : memref<16x128xbf16, #tpu.memory_space<vmem>>, vector<16x128xbf16>
      tpu.vector_store %arg6[%c0_14, %c0_15], %16 {strides = array<i32>} : memref<16x128xbf16, #tpu.memory_space<vmem>>, vector<16x128xbf16>,
    } else {
    }
    return
  }
  func.func @transform_0(%arg0: i32, %arg1: i32, %arg2: i32) -> (i32, i32) {
    %c0_i32 = arith.constant 0 : i32
    return %arg0, %arg2 : i32, i32
  }
  func.func @transform_1(%arg0: i32, %arg1: i32, %arg2: i32) -> (i32, i32) {
    %c0_i32 = arith.constant 0 : i32
    return %arg2, %arg1 : i32, i32
  }
  func.func @transform_2(%arg0: i32, %arg1: i32, %arg2: i32) -> (i32, i32) {
    %c0_i32 = arith.constant 0 : i32
    %c0_i32_0 = arith.constant 0 : i32
    return %c0_i32, %arg1 : i32, i32
  }
  func.func @transform_3(%arg0: i32, %arg1: i32, %arg2: i32) -> (i32, i32) {
    %c0_i32 = arith.constant 0 : i32
    return %arg0, %arg1 : i32, i32
  }
}

module attributes {stable_mosaic.version = 11 : i64} {
  func.func @_matmul_res_ln_kernel(%arg0: i32, %arg1: i32, %arg2: memref<16x128xbf16, #tpu.memory_space<vmem>>, %arg3: memref<128x128xbf16, #tpu.memory_space<vmem>>, %arg4: memref<1x128xf32, #tpu.memory_space<vmem>>, %arg5: memref<16x128xbf16, #tpu.memory_space<vmem>>, %arg6: memref<1x128xf32, #tpu.memory_space<vmem>>, %arg7: memref<1x128xf32, #tpu.memory_space<vmem>>, %arg8: memref<16x128xbf16, #tpu.memory_space<vmem>>, %arg9: memref<16x128xf32, #tpu.memory_space<vmem>>) attributes {dimension_semantics = [#tpu.dimension_semantics<parallel>, #tpu.dimension_semantics<arbitrary>], iteration_bounds = array<i64: 1, 1>, scalar_prefetch = 0 : i64, scratch_operands = 1 : i64, tpu.core_type = #tpu.core_type<tc>, window_params = [{transform_indices = @transform_0, window_bounds = array<i64: 16, 128>}, {transform_indices = @transform_1, window_bounds = array<i64: 128, 128>}, {pipeline_mode = #tpu.pipeline_mode<synchronous>, transform_indices = @transform_2, window_bounds = array<i64: 1, 128>}, {transform_indices = @transform_3, window_bounds = array<i64: 16, 128>}, {pipeline_mode = #tpu.pipeline_mode<synchronous>, transform_indices = @transform_4, window_bounds = array<i64: 1, 128>}, {pipeline_mode = #tpu.pipeline_mode<synchronous>, transform_indices = @transform_5, window_bounds = array<i64: 1, 128>}, {transform_indices = @transform_6, window_bounds = array<i64: 16, 128>}]} {
    %c0_i32 = arith.constant 0 : i32
    %0 = arith.cmpi eq, %arg1, %c0_i32 : i32
    %1 = arith.extui %0 : i1 to i32
    %c0_i32_0 = arith.constant 0 : i32
    %2 = arith.cmpi ne, %1, %c0_i32_0 : i32
    scf.if %2 {
      %cst_10 = arith.constant 0.000000e+00 : f32
      %12 = vector.broadcast %cst_10 : f32 to vector<16x128xf32>
      %c0_11 = arith.constant 0 : index
      %c0_12 = arith.constant 0 : index
      %13 = vector.load %arg9[%c0_11, %c0_12] : memref<16x128xf32, #tpu.memory_space<vmem>>, vector<16x128xf32>
      tpu.vector_store %arg9[%c0_11, %c0_12], %12 {strides = array<i32>} : memref<16x128xf32, #tpu.memory_space<vmem>>, vector<16x128xf32>,
    } else {
    }
    %c0 = arith.constant 0 : index
    %c0_1 = arith.constant 0 : index
    %3 = vector.load %arg9[%c0, %c0_1] : memref<16x128xf32, #tpu.memory_space<vmem>>, vector<16x128xf32>
    %c0_2 = arith.constant 0 : index
    %c0_3 = arith.constant 0 : index
    %4 = vector.load %arg2[%c0_2, %c0_3] : memref<16x128xbf16, #tpu.memory_space<vmem>>, vector<16x128xbf16>
    %c0_4 = arith.constant 0 : index
    %c0_5 = arith.constant 0 : index
    %5 = vector.load %arg3[%c0_4, %c0_5] : memref<128x128xbf16, #tpu.memory_space<vmem>>, vector<128x128xbf16>
    %cst = arith.constant dense<0.000000e+00> : vector<16x128xf32>
    %6 = tpu.matmul %4, %5, %cst {dimension_numbers = #tpu.dot_dimension_numbers<[1], [0], [0], [1], [0, 0, 1, 1], [], []>} : vector<16x128xbf16>, vector<128x128xbf16>, vector<16x128xf32> -> vector<16x128xf32>
    %7 = arith.addf %3, %6 : vector<16x128xf32>
    %c0_6 = arith.constant 0 : index
    %c0_7 = arith.constant 0 : index
    %8 = vector.load %arg9[%c0_6, %c0_7] : memref<16x128xf32, #tpu.memory_space<vmem>>, vector<16x128xf32>
    tpu.vector_store %arg9[%c0_6, %c0_7], %7 {strides = array<i32>} : memref<16x128xf32, #tpu.memory_space<vmem>>, vector<16x128xf32>,
    %c0_i32_8 = arith.constant 0 : i32
    %9 = arith.cmpi eq, %arg1, %c0_i32_8 : i32
    %10 = arith.extui %9 : i1 to i32
    %c0_i32_9 = arith.constant 0 : i32
    %11 = arith.cmpi ne, %10, %c0_i32_9 : i32
    scf.if %11 {
      %c0_10 = arith.constant 0 : index
      %c0_11 = arith.constant 0 : index
      %12 = vector.load %arg9[%c0_10, %c0_11] : memref<16x128xf32, #tpu.memory_space<vmem>>, vector<16x128xf32>
      %c0_12 = arith.constant 0 : index
      %c0_13 = arith.constant 0 : index
      %13 = vector.load %arg4[%c0_12, %c0_13] : memref<1x128xf32, #tpu.memory_space<vmem>>, vector<1x128xf32>
      %14 = vector.broadcast %13 : vector<1x128xf32> to vector<16x128xf32>
      %15 = arith.addf %12, %14 : vector<16x128xf32>
      %c0_14 = arith.constant 0 : index
      %c0_15 = arith.constant 0 : index
      %16 = vector.load %arg5[%c0_14, %c0_15] : memref<16x128xbf16, #tpu.memory_space<vmem>>, vector<16x128xbf16>
      %17 = arith.extf %16 : vector<16x128xbf16> to vector<16x128xf32>
      %18 = arith.addf %15, %17 : vector<16x128xf32>
      %cst_16 = arith.constant dense<0.000000e+00> : vector<16xf32>
      %19 = vector.multi_reduction <add>, %18, %cst_16 [1] : vector<16x128xf32> to vector<16xf32>
      %20 = vector.shape_cast %19 : vector<16xf32> to vector<16x1xf32>
      %cst_17 = arith.constant 1.280000e+02 : f32
      %21 = vector.broadcast %cst_17 : f32 to vector<16x1xf32>
      %22 = arith.divf %20, %21 : vector<16x1xf32>
      %23 = vector.broadcast %22 : vector<16x1xf32> to vector<16x128xf32>
      %24 = arith.subf %18, %23 : vector<16x128xf32>
      %25 = arith.mulf %24, %24 : vector<16x128xf32>
      %cst_18 = arith.constant dense<0.000000e+00> : vector<16xf32>
      %26 = vector.multi_reduction <add>, %25, %cst_18 [1] : vector<16x128xf32> to vector<16xf32>
      %27 = vector.shape_cast %26 : vector<16xf32> to vector<16x1xf32>
      %cst_19 = arith.constant 1.280000e+02 : f32
      %28 = vector.broadcast %cst_19 : f32 to vector<16x1xf32>
      %29 = arith.divf %27, %28 : vector<16x1xf32>
      %30 = vector.broadcast %22 : vector<16x1xf32> to vector<16x128xf32>
      %31 = arith.subf %18, %30 : vector<16x128xf32>
      %cst_20 = arith.constant 9.99999974E-6 : f32
      %32 = vector.broadcast %cst_20 : f32 to vector<16x1xf32>
      %33 = arith.addf %29, %32 : vector<16x1xf32>
      %34 = math.rsqrt %33 : vector<16x1xf32>
      %35 = vector.broadcast %34 : vector<16x1xf32> to vector<16x128xf32>
      %36 = arith.mulf %31, %35 : vector<16x128xf32>
      %c0_21 = arith.constant 0 : index
      %c0_22 = arith.constant 0 : index
      %37 = vector.load %arg6[%c0_21, %c0_22] : memref<1x128xf32, #tpu.memory_space<vmem>>, vector<1x128xf32>
      %38 = vector.broadcast %37 : vector<1x128xf32> to vector<16x128xf32>
      %39 = arith.mulf %36, %38 : vector<16x128xf32>
      %c0_23 = arith.constant 0 : index
      %c0_24 = arith.constant 0 : index
      %40 = vector.load %arg7[%c0_23, %c0_24] : memref<1x128xf32, #tpu.memory_space<vmem>>, vector<1x128xf32>
      %41 = vector.broadcast %40 : vector<1x128xf32> to vector<16x128xf32>
      %42 = arith.addf %39, %41 : vector<16x128xf32>
      %43 = arith.truncf %42 : vector<16x128xf32> to vector<16x128xbf16>
      %c0_25 = arith.constant 0 : index
      %c0_26 = arith.constant 0 : index
      %44 = vector.load %arg8[%c0_25, %c0_26] : memref<16x128xbf16, #tpu.memory_space<vmem>>, vector<16x128xbf16>
      tpu.vector_store %arg8[%c0_25, %c0_26], %43 {strides = array<i32>} : memref<16x128xbf16, #tpu.memory_space<vmem>>, vector<16x128xbf16>,
    } else {
    }
    return
  }
  func.func @transform_0(%arg0: i32, %arg1: i32) -> (i32, i32) {
    %c0_i32 = arith.constant 0 : i32
    return %arg0, %arg1 : i32, i32
  }
  func.func @transform_1(%arg0: i32, %arg1: i32) -> (i32, i32) {
    %c0_i32 = arith.constant 0 : i32
    %c0_i32_0 = arith.constant 0 : i32
    return %arg1, %c0_i32 : i32, i32
  }
  func.func @transform_2(%arg0: i32, %arg1: i32) -> (i32, i32) {
    %c0_i32 = arith.constant 0 : i32
    %c0_i32_0 = arith.constant 0 : i32
    %c0_i32_1 = arith.constant 0 : i32
    return %c0_i32, %c0_i32_0 : i32, i32
  }
  func.func @transform_3(%arg0: i32, %arg1: i32) -> (i32, i32) {
    %c0_i32 = arith.constant 0 : i32
    %c0_i32_0 = arith.constant 0 : i32
    return %arg0, %c0_i32 : i32, i32
  }
  func.func @transform_4(%arg0: i32, %arg1: i32) -> (i32, i32) {
    %c0_i32 = arith.constant 0 : i32
    %c0_i32_0 = arith.constant 0 : i32
    %c0_i32_1 = arith.constant 0 : i32
    return %c0_i32, %c0_i32_0 : i32, i32
  }
  func.func @transform_5(%arg0: i32, %arg1: i32) -> (i32, i32) {
    %c0_i32 = arith.constant 0 : i32
    %c0_i32_0 = arith.constant 0 : i32
    %c0_i32_1 = arith.constant 0 : i32
    return %c0_i32, %c0_i32_0 : i32, i32
  }
  func.func @transform_6(%arg0: i32, %arg1: i32) -> (i32, i32) {
    %c0_i32 = arith.constant 0 : i32
    %c0_i32_0 = arith.constant 0 : i32
    return %arg0, %c0_i32 : i32, i32
  }
}

module attributes {stable_mosaic.version = 11 : i64} {
  func.func @_ffn_res_ln_kernel(%arg0: i32, %arg1: i32, %arg2: memref<16x128xbf16, #tpu.memory_space<vmem>>, %arg3: memref<128x256xbf16, #tpu.memory_space<vmem>>, %arg4: memref<1x256xf32, #tpu.memory_space<vmem>>, %arg5: memref<256x128xbf16, #tpu.memory_space<vmem>>, %arg6: memref<1x128xf32, #tpu.memory_space<vmem>>, %arg7: memref<1x128xf32, #tpu.memory_space<vmem>>, %arg8: memref<1x128xf32, #tpu.memory_space<vmem>>, %arg9: memref<16x128xbf16, #tpu.memory_space<vmem>>, %arg10: memref<16x128xf32, #tpu.memory_space<vmem>>) attributes {dimension_semantics = [#tpu.dimension_semantics<parallel>, #tpu.dimension_semantics<arbitrary>], iteration_bounds = array<i64: 1, 1>, scalar_prefetch = 0 : i64, scratch_operands = 1 : i64, tpu.core_type = #tpu.core_type<tc>, window_params = [{transform_indices = @transform_0, window_bounds = array<i64: 16, 128>}, {transform_indices = @transform_1, window_bounds = array<i64: 128, 256>}, {transform_indices = @transform_2, window_bounds = array<i64: 1, 256>}, {transform_indices = @transform_3, window_bounds = array<i64: 256, 128>}, {pipeline_mode = #tpu.pipeline_mode<synchronous>, transform_indices = @transform_4, window_bounds = array<i64: 1, 128>}, {pipeline_mode = #tpu.pipeline_mode<synchronous>, transform_indices = @transform_5, window_bounds = array<i64: 1, 128>}, {pipeline_mode = #tpu.pipeline_mode<synchronous>, transform_indices = @transform_6, window_bounds = array<i64: 1, 128>}, {transform_indices = @transform_7, window_bounds = array<i64: 16, 128>}]} {
    %c0_i32 = arith.constant 0 : i32
    %0 = arith.cmpi eq, %arg1, %c0_i32 : i32
    %1 = arith.extui %0 : i1 to i32
    %c0_i32_0 = arith.constant 0 : i32
    %2 = arith.cmpi ne, %1, %c0_i32_0 : i32
    scf.if %2 {
      %cst_16 = arith.constant 0.000000e+00 : f32
      %20 = vector.broadcast %cst_16 : f32 to vector<16x128xf32>
      %c0_17 = arith.constant 0 : index
      %c0_18 = arith.constant 0 : index
      %21 = vector.load %arg10[%c0_17, %c0_18] : memref<16x128xf32, #tpu.memory_space<vmem>>, vector<16x128xf32>
      tpu.vector_store %arg10[%c0_17, %c0_18], %20 {strides = array<i32>} : memref<16x128xf32, #tpu.memory_space<vmem>>, vector<16x128xf32>,
    } else {
    }
    %c0 = arith.constant 0 : index
    %c0_1 = arith.constant 0 : index
    %3 = vector.load %arg2[%c0, %c0_1] : memref<16x128xbf16, #tpu.memory_space<vmem>>, vector<16x128xbf16>
    %c0_2 = arith.constant 0 : index
    %c0_3 = arith.constant 0 : index
    %4 = vector.load %arg3[%c0_2, %c0_3] : memref<128x256xbf16, #tpu.memory_space<vmem>>, vector<128x256xbf16>
    %cst = arith.constant dense<0.000000e+00> : vector<16x256xf32>
    %5 = tpu.matmul %3, %4, %cst {dimension_numbers = #tpu.dot_dimension_numbers<[1], [0], [0], [1], [0, 0, 1, 1], [], []>} : vector<16x128xbf16>, vector<128x256xbf16>, vector<16x256xf32> -> vector<16x256xf32>
    %c0_4 = arith.constant 0 : index
    %c0_5 = arith.constant 0 : index
    %6 = vector.load %arg4[%c0_4, %c0_5] : memref<1x256xf32, #tpu.memory_space<vmem>>, vector<1x256xf32>
    %7 = vector.broadcast %6 : vector<1x256xf32> to vector<16x256xf32>
    %8 = arith.addf %5, %7 : vector<16x256xf32>
    %cst_6 = arith.constant 0.000000e+00 : f32
    %9 = vector.broadcast %cst_6 : f32 to vector<16x256xf32>
    %10 = arith.maximumf %8, %9 : vector<16x256xf32>
    %c0_7 = arith.constant 0 : index
    %c0_8 = arith.constant 0 : index
    %11 = vector.load %arg10[%c0_7, %c0_8] : memref<16x128xf32, #tpu.memory_space<vmem>>, vector<16x128xf32>
    %12 = arith.truncf %10 : vector<16x256xf32> to vector<16x256xbf16>
    %c0_9 = arith.constant 0 : index
    %c0_10 = arith.constant 0 : index
    %13 = vector.load %arg5[%c0_9, %c0_10] : memref<256x128xbf16, #tpu.memory_space<vmem>>, vector<256x128xbf16>
    %cst_11 = arith.constant dense<0.000000e+00> : vector<16x128xf32>
    %14 = tpu.matmul %12, %13, %cst_11 {dimension_numbers = #tpu.dot_dimension_numbers<[1], [0], [0], [1], [0, 0, 1, 1], [], []>} : vector<16x256xbf16>, vector<256x128xbf16>, vector<16x128xf32> -> vector<16x128xf32>
    %15 = arith.addf %11, %14 : vector<16x128xf32>
    %c0_12 = arith.constant 0 : index
    %c0_13 = arith.constant 0 : index
    %16 = vector.load %arg10[%c0_12, %c0_13] : memref<16x128xf32, #tpu.memory_space<vmem>>, vector<16x128xf32>
    tpu.vector_store %arg10[%c0_12, %c0_13], %15 {strides = array<i32>} : memref<16x128xf32, #tpu.memory_space<vmem>>, vector<16x128xf32>,
    %c0_i32_14 = arith.constant 0 : i32
    %17 = arith.cmpi eq, %arg1, %c0_i32_14 : i32
    %18 = arith.extui %17 : i1 to i32
    %c0_i32_15 = arith.constant 0 : i32
    %19 = arith.cmpi ne, %18, %c0_i32_15 : i32
    scf.if %19 {
      %c0_16 = arith.constant 0 : index
      %c0_17 = arith.constant 0 : index
      %20 = vector.load %arg10[%c0_16, %c0_17] : memref<16x128xf32, #tpu.memory_space<vmem>>, vector<16x128xf32>
      %c0_18 = arith.constant 0 : index
      %c0_19 = arith.constant 0 : index
      %21 = vector.load %arg6[%c0_18, %c0_19] : memref<1x128xf32, #tpu.memory_space<vmem>>, vector<1x128xf32>
      %22 = vector.broadcast %21 : vector<1x128xf32> to vector<16x128xf32>
      %23 = arith.addf %20, %22 : vector<16x128xf32>
      %c0_20 = arith.constant 0 : index
      %c0_21 = arith.constant 0 : index
      %24 = vector.load %arg2[%c0_20, %c0_21] : memref<16x128xbf16, #tpu.memory_space<vmem>>, vector<16x128xbf16>
      %25 = arith.extf %24 : vector<16x128xbf16> to vector<16x128xf32>
      %26 = arith.addf %23, %25 : vector<16x128xf32>
      %cst_22 = arith.constant dense<0.000000e+00> : vector<16xf32>
      %27 = vector.multi_reduction <add>, %26, %cst_22 [1] : vector<16x128xf32> to vector<16xf32>
      %28 = vector.shape_cast %27 : vector<16xf32> to vector<16x1xf32>
      %cst_23 = arith.constant 1.280000e+02 : f32
      %29 = vector.broadcast %cst_23 : f32 to vector<16x1xf32>
      %30 = arith.divf %28, %29 : vector<16x1xf32>
      %31 = vector.broadcast %30 : vector<16x1xf32> to vector<16x128xf32>
      %32 = arith.subf %26, %31 : vector<16x128xf32>
      %33 = arith.mulf %32, %32 : vector<16x128xf32>
      %cst_24 = arith.constant dense<0.000000e+00> : vector<16xf32>
      %34 = vector.multi_reduction <add>, %33, %cst_24 [1] : vector<16x128xf32> to vector<16xf32>
      %35 = vector.shape_cast %34 : vector<16xf32> to vector<16x1xf32>
      %cst_25 = arith.constant 1.280000e+02 : f32
      %36 = vector.broadcast %cst_25 : f32 to vector<16x1xf32>
      %37 = arith.divf %35, %36 : vector<16x1xf32>
      %38 = vector.broadcast %30 : vector<16x1xf32> to vector<16x128xf32>
      %39 = arith.subf %26, %38 : vector<16x128xf32>
      %cst_26 = arith.constant 9.99999974E-6 : f32
      %40 = vector.broadcast %cst_26 : f32 to vector<16x1xf32>
      %41 = arith.addf %37, %40 : vector<16x1xf32>
      %42 = math.rsqrt %41 : vector<16x1xf32>
      %43 = vector.broadcast %42 : vector<16x1xf32> to vector<16x128xf32>
      %44 = arith.mulf %39, %43 : vector<16x128xf32>
      %c0_27 = arith.constant 0 : index
      %c0_28 = arith.constant 0 : index
      %45 = vector.load %arg7[%c0_27, %c0_28] : memref<1x128xf32, #tpu.memory_space<vmem>>, vector<1x128xf32>
      %46 = vector.broadcast %45 : vector<1x128xf32> to vector<16x128xf32>
      %47 = arith.mulf %44, %46 : vector<16x128xf32>
      %c0_29 = arith.constant 0 : index
      %c0_30 = arith.constant 0 : index
      %48 = vector.load %arg8[%c0_29, %c0_30] : memref<1x128xf32, #tpu.memory_space<vmem>>, vector<1x128xf32>
      %49 = vector.broadcast %48 : vector<1x128xf32> to vector<16x128xf32>
      %50 = arith.addf %47, %49 : vector<16x128xf32>
      %51 = arith.truncf %50 : vector<16x128xf32> to vector<16x128xbf16>
      %c0_31 = arith.constant 0 : index
      %c0_32 = arith.constant 0 : index
      %52 = vector.load %arg9[%c0_31, %c0_32] : memref<16x128xbf16, #tpu.memory_space<vmem>>, vector<16x128xbf16>
      tpu.vector_store %arg9[%c0_31, %c0_32], %51 {strides = array<i32>} : memref<16x128xbf16, #tpu.memory_space<vmem>>, vector<16x128xbf16>,
    } else {
    }
    return
  }
  func.func @transform_0(%arg0: i32, %arg1: i32) -> (i32, i32) {
    %c0_i32 = arith.constant 0 : i32
    %c0_i32_0 = arith.constant 0 : i32
    return %arg0, %c0_i32 : i32, i32
  }
  func.func @transform_1(%arg0: i32, %arg1: i32) -> (i32, i32) {
    %c0_i32 = arith.constant 0 : i32
    %c0_i32_0 = arith.constant 0 : i32
    return %c0_i32, %arg1 : i32, i32
  }
  func.func @transform_2(%arg0: i32, %arg1: i32) -> (i32, i32) {
    %c0_i32 = arith.constant 0 : i32
    %c0_i32_0 = arith.constant 0 : i32
    return %c0_i32, %arg1 : i32, i32
  }
  func.func @transform_3(%arg0: i32, %arg1: i32) -> (i32, i32) {
    %c0_i32 = arith.constant 0 : i32
    %c0_i32_0 = arith.constant 0 : i32
    return %arg1, %c0_i32 : i32, i32
  }
  func.func @transform_4(%arg0: i32, %arg1: i32) -> (i32, i32) {
    %c0_i32 = arith.constant 0 : i32
    %c0_i32_0 = arith.constant 0 : i32
    %c0_i32_1 = arith.constant 0 : i32
    return %c0_i32, %c0_i32_0 : i32, i32
  }
  func.func @transform_5(%arg0: i32, %arg1: i32) -> (i32, i32) {
    %c0_i32 = arith.constant 0 : i32
    %c0_i32_0 = arith.constant 0 : i32
    %c0_i32_1 = arith.constant 0 : i32
    return %c0_i32, %c0_i32_0 : i32, i32
  }
  func.func @transform_6(%arg0: i32, %arg1: i32) -> (i32, i32) {
    %c0_i32 = arith.constant 0 : i32
    %c0_i32_0 = arith.constant 0 : i32
    %c0_i32_1 = arith.constant 0 : i32
    return %c0_i32, %c0_i32_0 : i32, i32
  }
  func.func @transform_7(%arg0: i32, %arg1: i32) -> (i32, i32) {
    %c0_i32 = arith.constant 0 : i32
    %c0_i32_0 = arith.constant 0 : i32
    return %arg0, %c0_i32 : i32, i32
  }
}

module attributes {stable_mosaic.version = 11 : i64} {
  func.func @_matmul_bias_kernel(%arg0: i32, %arg1: i32, %arg2: i32, %arg3: memref<16x128xbf16, #tpu.memory_space<vmem>>, %arg4: memref<128x512xbf16, #tpu.memory_space<vmem>>, %arg5: memref<1x512xf32, #tpu.memory_space<vmem>>, %arg6: memref<16x512xf32, #tpu.memory_space<vmem>>, %arg7: memref<16x512xf32, #tpu.memory_space<vmem>>) attributes {dimension_semantics = [#tpu.dimension_semantics<parallel>, #tpu.dimension_semantics<parallel>, #tpu.dimension_semantics<arbitrary>], iteration_bounds = array<i64: 1, 1, 1>, scalar_prefetch = 0 : i64, scratch_operands = 1 : i64, tpu.core_type = #tpu.core_type<tc>, window_params = [{transform_indices = @transform_0, window_bounds = array<i64: 16, 128>}, {transform_indices = @transform_1, window_bounds = array<i64: 128, 512>}, {transform_indices = @transform_2, window_bounds = array<i64: 1, 512>}, {transform_indices = @transform_3, window_bounds = array<i64: 16, 512>}]} {
    %c0_i32 = arith.constant 0 : i32
    %0 = arith.cmpi eq, %arg2, %c0_i32 : i32
    %1 = arith.extui %0 : i1 to i32
    %c0_i32_0 = arith.constant 0 : i32
    %2 = arith.cmpi ne, %1, %c0_i32_0 : i32
    scf.if %2 {
      %cst_10 = arith.constant 0.000000e+00 : f32
      %12 = vector.broadcast %cst_10 : f32 to vector<16x512xf32>
      %c0_11 = arith.constant 0 : index
      %c0_12 = arith.constant 0 : index
      %13 = vector.load %arg7[%c0_11, %c0_12] : memref<16x512xf32, #tpu.memory_space<vmem>>, vector<16x512xf32>
      tpu.vector_store %arg7[%c0_11, %c0_12], %12 {strides = array<i32>} : memref<16x512xf32, #tpu.memory_space<vmem>>, vector<16x512xf32>,
    } else {
    }
    %c0 = arith.constant 0 : index
    %c0_1 = arith.constant 0 : index
    %3 = vector.load %arg7[%c0, %c0_1] : memref<16x512xf32, #tpu.memory_space<vmem>>, vector<16x512xf32>
    %c0_2 = arith.constant 0 : index
    %c0_3 = arith.constant 0 : index
    %4 = vector.load %arg3[%c0_2, %c0_3] : memref<16x128xbf16, #tpu.memory_space<vmem>>, vector<16x128xbf16>
    %c0_4 = arith.constant 0 : index
    %c0_5 = arith.constant 0 : index
    %5 = vector.load %arg4[%c0_4, %c0_5] : memref<128x512xbf16, #tpu.memory_space<vmem>>, vector<128x512xbf16>
    %cst = arith.constant dense<0.000000e+00> : vector<16x512xf32>
    %6 = tpu.matmul %4, %5, %cst {dimension_numbers = #tpu.dot_dimension_numbers<[1], [0], [0], [1], [0, 0, 1, 1], [], []>} : vector<16x128xbf16>, vector<128x512xbf16>, vector<16x512xf32> -> vector<16x512xf32>
    %7 = arith.addf %3, %6 : vector<16x512xf32>
    %c0_6 = arith.constant 0 : index
    %c0_7 = arith.constant 0 : index
    %8 = vector.load %arg7[%c0_6, %c0_7] : memref<16x512xf32, #tpu.memory_space<vmem>>, vector<16x512xf32>
    tpu.vector_store %arg7[%c0_6, %c0_7], %7 {strides = array<i32>} : memref<16x512xf32, #tpu.memory_space<vmem>>, vector<16x512xf32>,
    %c0_i32_8 = arith.constant 0 : i32
    %9 = arith.cmpi eq, %arg2, %c0_i32_8 : i32
    %10 = arith.extui %9 : i1 to i32
    %c0_i32_9 = arith.constant 0 : i32
    %11 = arith.cmpi ne, %10, %c0_i32_9 : i32
    scf.if %11 {
      %c0_10 = arith.constant 0 : index
      %c0_11 = arith.constant 0 : index
      %12 = vector.load %arg7[%c0_10, %c0_11] : memref<16x512xf32, #tpu.memory_space<vmem>>, vector<16x512xf32>
      %c0_12 = arith.constant 0 : index
      %c0_13 = arith.constant 0 : index
      %13 = vector.load %arg5[%c0_12, %c0_13] : memref<1x512xf32, #tpu.memory_space<vmem>>, vector<1x512xf32>
      %14 = vector.broadcast %13 : vector<1x512xf32> to vector<16x512xf32>
      %15 = arith.addf %12, %14 : vector<16x512xf32>
      %c0_14 = arith.constant 0 : index
      %c0_15 = arith.constant 0 : index
      %16 = vector.load %arg6[%c0_14, %c0_15] : memref<16x512xf32, #tpu.memory_space<vmem>>, vector<16x512xf32>
      tpu.vector_store %arg6[%c0_14, %c0_15], %15 {strides = array<i32>} : memref<16x512xf32, #tpu.memory_space<vmem>>, vector<16x512xf32>,
    } else {
    }
    return
  }
  func.func @transform_0(%arg0: i32, %arg1: i32, %arg2: i32) -> (i32, i32) {
    %c0_i32 = arith.constant 0 : i32
    return %arg0, %arg2 : i32, i32
  }
  func.func @transform_1(%arg0: i32, %arg1: i32, %arg2: i32) -> (i32, i32) {
    %c0_i32 = arith.constant 0 : i32
    return %arg2, %arg1 : i32, i32
  }
  func.func @transform_2(%arg0: i32, %arg1: i32, %arg2: i32) -> (i32, i32) {
    %c0_i32 = arith.constant 0 : i32
    %c0_i32_0 = arith.constant 0 : i32
    return %c0_i32, %arg1 : i32, i32
  }
  func.func @transform_3(%arg0: i32, %arg1: i32, %arg2: i32) -> (i32, i32) {
    %c0_i32 = arith.constant 0 : i32
    return %arg0, %arg1 : i32, i32
  }
}

</mosaic_0001>

<llo_original>
// kernel: transformer_forward.25
$region0: #{transformer_forward.25}
  #allocation0 [shape = 'u32[]', space=smem, size = 0x4, offset = 0x4, fixed_abs, tag = 'smem constant byte address 0x4 - core index']
  #allocation1 [shape = 'u32[72,128]{1,0:T(1,128)}', space=vmem, size = 0x9000, scoped, tag = 'internal scratch']
  #allocation2 [shape = 'f32[16,384]{1,0:T(8,128)}', space=vmem, size = 0x6000, scoped, tag = 'scratch operand']
  %s0 = inlined_call_operand.vmem [shape: bf16[16,128], index: 0, kind: input, shape index: {}]
  %s1 = inlined_call_operand.vmem [shape: bf16[128,384], index: 1, kind: input, shape index: {}]
  %s2 = inlined_call_operand.vmem [shape: f32[1,384], index: 2, kind: input, shape index: {}]
  %s3 = inlined_call_operand.vmem [shape: bf16[16,384], index: 3, kind: output, shape index: {}]
  %s4 = sld [smem:[#allocation0]]
  $region30: #{transformer_forward.25} parent=0
    _
  %s6 = ssub.s32 1, %s4
  %s7 = scalar_select 0, %s6, %s4
  // Predicated region
  $region2: #{transformer_forward.25} parent=0 // pred_check
    _
  $region3: #{transformer_forward.25} parent=0 // pred_check_branch
    %9 = sbr.rel (0) target = $region5
  $region4: #{transformer_forward.25} parent=0 // pred_region
    _
  $region5: #{transformer_forward.25} parent=0 // pred_fallthru
    _
  // Predicated region
  $region6: #{transformer_forward.25} parent=0 // pred_check
    _
  $region7: #{transformer_forward.25} parent=0 // pred_check_branch
    %11 = sbr.rel (0) target = $region9
  $region8: #{transformer_forward.25} parent=0 // pred_region
    _
  $region9: #{transformer_forward.25} parent=0 // pred_fallthru
    _
  // Predicated region
  $region10: #{transformer_forward.25} parent=0 // pred_check
    _
  $region11: #{transformer_forward.25} parent=0 // pred_check_branch
    %13 = sbr.rel (0) target = $region13
  $region12: #{transformer_forward.25} parent=0 // pred_region
    _
  $region13: #{transformer_forward.25} parent=0 // pred_fallthru
    _
  %p14 = scmp.eq.s32.totalorder 0, 0
  // Predicated region
  $region14: #{transformer_forward.25} parent=0 // pred_check
    %p15 = pneg %p14
  $region15: #{transformer_forward.25} parent=0 // pred_check_branch
    %17 = sbr.rel (%p15) target = $region17
  $region16: #{transformer_forward.25} parent=0 // pred_region
    %18 = vst [vmem:[#allocation2] sm:$0xff] 0.0
    %19 = vst [vmem:[#allocation2 + $0x8] sm:$0xff] 0.0
    %20 = vst [vmem:[#allocation2 + $0x10] sm:$0xff] 0.0
    %21 = vst [vmem:[#allocation2 + $0x18] sm:$0xff] 0.0
    %22 = vst [vmem:[#allocation2 + $0x20] sm:$0xff] 0.0
    %23 = vst [vmem:[#allocation2 + $0x28] sm:$0xff] 0.0
  $region17: #{transformer_forward.25} parent=0 // pred_fallthru
    _
  %v24 = vld [vmem:[#allocation2] sm:$0xff]
  %v25 = vld [vmem:[#allocation2 + $0x8] sm:$0xff]
  %v26 = vld [vmem:[#allocation2 + $0x10] sm:$0xff]
  %v27 = vld [vmem:[#allocation2 + $0x18] sm:$0xff]
  %v28 = vld [vmem:[#allocation2 + $0x20] sm:$0xff]
  %v29 = vld [vmem:[#allocation2 + $0x28] sm:$0xff]
  %v30 = vld [vmem:[%s0] sm:$0xf]
  %v31 = vld [vmem:[%s0 + $0x4] sm:$0xf]
  %v32 = vld [vmem:[%s1] sm:$0xff]
  %v33 = vld [vmem:[%s1 + $0x8] sm:$0xf]
  %v34 = vld [vmem:[%s1 + $0xc] sm:$0xff]
  %v35 = vld [vmem:[%s1 + $0x14] sm:$0xf]
  %v36 = vld [vmem:[%s1 + $0x18] sm:$0xff]
  %v37 = vld [vmem:[%s1 + $0x20] sm:$0xf]
  %v38 = vld [vmem:[%s1 + $0x24] sm:$0xff]
  %v39 = vld [vmem:[%s1 + $0x2c] sm:$0xf]
  %v40 = vld [vmem:[%s1 + $0x30] sm:$0xff]
  %v41 = vld [vmem:[%s1 + $0x38] sm:$0xf]
  %v42 = vld [vmem:[%s1 + $0x3c] sm:$0xff]
  %v43 = vld [vmem:[%s1 + $0x44] sm:$0xf]
  %v44 = vld [vmem:[%s1 + $0x48] sm:$0xff]
  %v45 = vld [vmem:[%s1 + $0x50] sm:$0xf]
  %v46 = vld [vmem:[%s1 + $0x54] sm:$0xff]
  %v47 = vld [vmem:[%s1 + $0x5c] sm:$0xf]
  %v48 = vld [vmem:[%s1 + $0x60] sm:$0xff]
  %v49 = vld [vmem:[%s1 + $0x68] sm:$0xf]
  %v50 = vld [vmem:[%s1 + $0x6c] sm:$0xff]
  %v51 = vld [vmem:[%s1 + $0x74] sm:$0xf]
  %v52 = vld [vmem:[%s1 + $0x78] sm:$0xff]
  %v53 = vld [vmem:[%s1 + $0x80] sm:$0xf]
  %v54 = vld [vmem:[%s1 + $0x84] sm:$0xff]
  %v55 = vld [vmem:[%s1 + $0x8c] sm:$0xf]
  %v56 = vld [vmem:[%s1 + $0x90] sm:$0xff]
  %v57 = vld [vmem:[%s1 + $0x98] sm:$0xf]
  %v58 = vld [vmem:[%s1 + $0x9c] sm:$0xff]
  %v59 = vld [vmem:[%s1 + $0xa4] sm:$0xf]
  %v60 = vld [vmem:[%s1 + $0xa8] sm:$0xff]
  %v61 = vld [vmem:[%s1 + $0xb0] sm:$0xf]
  %v62 = vld [vmem:[%s1 + $0xb4] sm:$0xff]
  %v63 = vld [vmem:[%s1 + $0xbc] sm:$0xf]
  %v66 = vunpack.c.l.b16 %v30
  %v67 = vunpack.c.l.b16 %v31
  %v68 = vpack.c.b16 %v67, %v66
  %v102 = vunpack.c.l.b16 %v32
  %v103 = vunpack.c.h.b16 %v32
  %v104 = vunpack.c.l.b16 %v33
  %v105 = vunpack.c.l.b16 %v34
  %v106 = vunpack.c.h.b16 %v34
  %v107 = vunpack.c.l.b16 %v35
  %v108 = vunpack.c.l.b16 %v36
  %v109 = vunpack.c.h.b16 %v36
  %v110 = vunpack.c.l.b16 %v37
  %v111 = vunpack.c.l.b16 %v38
  %v112 = vunpack.c.h.b16 %v38
  %v113 = vunpack.c.l.b16 %v39
  %v114 = vunpack.c.l.b16 %v40
  %v115 = vunpack.c.h.b16 %v40
  %v116 = vunpack.c.l.b16 %v41
  %v117 = vunpack.c.l.b16 %v42
  %v118 = vunpack.c.h.b16 %v42
  %v119 = vunpack.c.l.b16 %v43
  %v120 = vunpack.c.l.b16 %v44
  %v121 = vunpack.c.h.b16 %v44
  %v122 = vunpack.c.l.b16 %v45
  %v123 = vunpack.c.l.b16 %v46
  %v124 = vunpack.c.h.b16 %v46
  %v125 = vunpack.c.l.b16 %v47
  %v126 = vunpack.c.l.b16 %v48
  %v127 = vunpack.c.h.b16 %v48
  %v128 = vunpack.c.l.b16 %v49
  %v129 = vunpack.c.l.b16 %v50
  %v130 = vunpack.c.h.b16 %v50
  %v131 = vunpack.c.l.b16 %v51
  %v132 = vunpack.c.l.b16 %v52
  %v133 = vunpack.c.h.b16 %v52
  %v134 = vunpack.c.l.b16 %v53
  %v135 = vunpack.c.l.b16 %v54
  %v136 = vunpack.c.h.b16 %v54
  %v137 = vunpack.c.l.b16 %v55
  %v138 = vunpack.c.l.b16 %v56
  %v139 = vunpack.c.h.b16 %v56
  %v140 = vunpack.c.l.b16 %v57
  %v141 = vunpack.c.l.b16 %v58
  %v142 = vunpack.c.h.b16 %v58
  %v143 = vunpack.c.l.b16 %v59
  %v144 = vunpack.c.l.b16 %v60
  %v145 = vunpack.c.h.b16 %v60
  %v146 = vunpack.c.l.b16 %v61
  %v147 = vunpack.c.l.b16 %v62
  %v148 = vunpack.c.h.b16 %v62
  %v149 = vunpack.c.l.b16 %v63
  %v150 = vpack.c.b16 %v105, %v102
  %v151 = vpack.c.b16 %v106, %v103
  %v152 = vpack.c.b16 %v107, %v104
  %v153 = vpack.c.b16 %v111, %v108
  %v154 = vpack.c.b16 %v112, %v109
  %v155 = vpack.c.b16 %v113, %v110
  %v156 = vpack.c.b16 %v117, %v114
  %v157 = vpack.c.b16 %v118, %v115
  %v158 = vpack.c.b16 %v119, %v116
  %v159 = vpack.c.b16 %v123, %v120
  %v160 = vpack.c.b16 %v124, %v121
  %v161 = vpack.c.b16 %v125, %v122
  %v162 = vpack.c.b16 %v129, %v126
  %v163 = vpack.c.b16 %v130, %v127
  %v164 = vpack.c.b16 %v131, %v128
  %v165 = vpack.c.b16 %v135, %v132
  %v166 = vpack.c.b16 %v136, %v133
  %v167 = vpack.c.b16 %v137, %v134
  %v168 = vpack.c.b16 %v141, %v138
  %v169 = vpack.c.b16 %v142, %v139
  %v170 = vpack.c.b16 %v143, %v140
  %v171 = vpack.c.b16 %v147, %v144
  %v172 = vpack.c.b16 %v148, %v145
  %v173 = vpack.c.b16 %v149, %v146
  %198 = vmatpush.bf16.msra.mxu0 %v171
  %199 = vmatpush.bf16.msra.mxu0 %v168
  %200 = vmatpush.bf16.msra.mxu0 %v165
  %201 = vmatpush.bf16.msra.mxu0 %v162
  %202 = vmatpush.bf16.msra.mxu0 %v159
  %203 = vmatpush.bf16.msra.mxu0 %v156
  %204 = vmatpush.bf16.msra.mxu0 %v153
  %205 = vmatpush.bf16.msra.mxu0 %v150
  %206 = vmatmul.bf16.gmra.mxu0 %v68
  %v207 = vpop.f32.mrf.mxu0
  %v208 = vadd.f32 0.0, %v207
  %v209 = vpop.f32.mrf.mxu0
  %v210 = vadd.f32 0.0, %v209
  %211 = vdwg.mxu0
  %212 = vmatpush.bf16.msra.mxu0 %v172
  %213 = vmatpush.bf16.msra.mxu0 %v169
  %214 = vmatpush.bf16.msra.mxu0 %v166
  %215 = vmatpush.bf16.msra.mxu0 %v163
  %216 = vmatpush.bf16.msra.mxu0 %v160
  %217 = vmatpush.bf16.msra.mxu0 %v157
  %218 = vmatpush.bf16.msra.mxu0 %v154
  %219 = vmatpush.bf16.msra.mxu0 %v151
  %220 = vmatmul.bf16.gmra.mxu0 %v68
  %v221 = vpop.f32.mrf.mxu0
  %v222 = vadd.f32 0.0, %v221
  %v223 = vpop.f32.mrf.mxu0
  %v224 = vadd.f32 0.0, %v223
  %225 = vdwg.mxu0
  %226 = vmatpush.bf16.msra.mxu0 %v173
  %227 = vmatpush.bf16.msra.mxu0 %v170
  %228 = vmatpush.bf16.msra.mxu0 %v167
  %229 = vmatpush.bf16.msra.mxu0 %v164
  %230 = vmatpush.bf16.msra.mxu0 %v161
  %231 = vmatpush.bf16.msra.mxu0 %v158
  %232 = vmatpush.bf16.msra.mxu0 %v155
  %233 = vmatpush.bf16.msra.mxu0 %v152
  %234 = vmatmul.bf16.gmra.mxu0 %v68
  %v235 = vpop.f32.mrf.mxu0
  %v236 = vadd.f32 0.0, %v235
  %v237 = vpop.f32.mrf.mxu0
  %v238 = vadd.f32 0.0, %v237
  %239 = vdwg.mxu0
  %v240 = vadd.f32 %v24, %v208
  %v241 = vadd.f32 %v25, %v222
  %v242 = vadd.f32 %v26, %v236
  %v243 = vadd.f32 %v27, %v210
  %v244 = vadd.f32 %v28, %v224
  %v245 = vadd.f32 %v29, %v238
  %246 = vst [vmem:[#allocation2] sm:$0xff] %v240
  %247 = vst [vmem:[#allocation2 + $0x8] sm:$0xff] %v241
  %248 = vst [vmem:[#allocation2 + $0x10] sm:$0xff] %v242
  %249 = vst [vmem:[#allocation2 + $0x18] sm:$0xff] %v243
  %250 = vst [vmem:[#allocation2 + $0x20] sm:$0xff] %v244
  %251 = vst [vmem:[#allocation2 + $0x28] sm:$0xff] %v245
  // Predicated region
  $region18: #{transformer_forward.25} parent=0 // pred_check
    %p252 = pneg %p14
  $region19: #{transformer_forward.25} parent=0 // pred_check_branch
    %254 = sbr.rel (%p252) target = $region21
  $region20: #{transformer_forward.25} parent=0 // pred_region
    %v255 = vld [vmem:[#allocation2] sm:$0xff]
    %v256 = vld [vmem:[#allocation2 + $0x8] sm:$0xff]
    %v257 = vld [vmem:[#allocation2 + $0x10] sm:$0xff]
    %v258 = vld [vmem:[#allocation2 + $0x18] sm:$0xff]
    %v259 = vld [vmem:[#allocation2 + $0x20] sm:$0xff]
    %v260 = vld [vmem:[#allocation2 + $0x28] sm:$0xff]
    %v261 = vld [vmem:[%s2] sm:$0x7]
    %v263 = vperm.slane %v261, 0
    %v264 = vperm.slane %v261, 1
    %v265 = vperm.slane %v261, 2
    %v269 = vadd.f32 %v255, %v263
    %v270 = vadd.f32 %v256, %v264
    %v271 = vadd.f32 %v257, %v265
    %v272 = vadd.f32 %v258, %v263
    %v273 = vadd.f32 %v259, %v264
    %v274 = vadd.f32 %v260, %v265
    %v275 = vpack.c.bf16 %v270, %v269
    %v276 = vpack.c.bf16 %v271, %v271
    %v277 = vpack.c.bf16 %v273, %v272
    %v278 = vpack.c.bf16 %v274, %v274
    %279 = vst [vmem:[%s3] sm:$0xff] %v275
    %280 = vst [vmem:[%s3 + $0x8] sm:$0xf] %v276
    %281 = vst [vmem:[%s3 + $0xc] sm:$0xff] %v277
    %282 = vst [vmem:[%s3 + $0x14] sm:$0xf] %v278
  $region21: #{transformer_forward.25} parent=0 // pred_fallthru
    _
  // Predicated region
  $region22: #{transformer_forward.25} parent=0 // pred_check
    _
  $region23: #{transformer_forward.25} parent=0 // pred_check_branch
    %284 = sbr.rel (0) target = $region25
  $region24: #{transformer_forward.25} parent=0 // pred_region
    _
  $region25: #{transformer_forward.25} parent=0 // pred_fallthru
    _
  // Predicated region
  $region26: #{transformer_forward.25} parent=0 // pred_check
    _
  $region27: #{transformer_forward.25} parent=0 // pred_check_branch
    %286 = sbr.rel (0) target = $region29
  $region28: #{transformer_forward.25} parent=0 // pred_region
    _
  $region29: #{transformer_forward.25} parent=0 // pred_fallthru
    _

// kernel: transformer_forward.27
$region0: #{transformer_forward.27}
  #allocation0 [shape = 'u32[]', space=smem, size = 0x4, offset = 0x4, fixed_abs, tag = 'smem constant byte address 0x4 - core index']
  #allocation1 [shape = 'u32[72,128]{1,0:T(1,128)}', space=vmem, size = 0x9000, scoped, tag = 'internal scratch']
  #allocation2 [shape = 'f32[16,128]{1,0:T(8,128)}', space=vmem, size = 0x2000, scoped, tag = 'scratch operand']
  %s0 = inlined_call_operand.vmem [shape: bf16[16,128], index: 0, kind: input, shape index: {}]
  %s1 = inlined_call_operand.vmem [shape: bf16[128,128], index: 1, kind: input, shape index: {}]
  %s2 = inlined_call_operand.vmem [shape: f32[1,128], index: 2, kind: input, shape index: {}]
  %s3 = inlined_call_operand.vmem [shape: bf16[16,128], index: 3, kind: input, shape index: {}]
  %s4 = inlined_call_operand.vmem [shape: f32[1,128], index: 4, kind: input, shape index: {}]
  %s5 = inlined_call_operand.vmem [shape: f32[1,128], index: 5, kind: input, shape index: {}]
  %s6 = inlined_call_operand.vmem [shape: bf16[16,128], index: 6, kind: output, shape index: {}]
  %s7 = sld [smem:[#allocation0]]
  $region42: #{transformer_forward.27} parent=0
    _
  %s9 = ssub.s32 1, %s7
  %s10 = scalar_select 0, %s9, %s7
  // Predicated region
  $region2: #{transformer_forward.27} parent=0 // pred_check
    _
  $region3: #{transformer_forward.27} parent=0 // pred_check_branch
    %12 = sbr.rel (0) target = $region5
  $region4: #{transformer_forward.27} parent=0 // pred_region
    _
  $region5: #{transformer_forward.27} parent=0 // pred_fallthru
    _
  // Predicated region
  $region6: #{transformer_forward.27} parent=0 // pred_check
    _
  $region7: #{transformer_forward.27} parent=0 // pred_check_branch
    %14 = sbr.rel (0) target = $region9
  $region8: #{transformer_forward.27} parent=0 // pred_region
    _
  $region9: #{transformer_forward.27} parent=0 // pred_fallthru
    _
  // Predicated region
  $region10: #{transformer_forward.27} parent=0 // pred_check
    _
  $region11: #{transformer_forward.27} parent=0 // pred_check_branch
    %16 = sbr.rel (0) target = $region13
  $region12: #{transformer_forward.27} parent=0 // pred_region
    _
  $region13: #{transformer_forward.27} parent=0 // pred_fallthru
    _
  // Predicated region
  $region14: #{transformer_forward.27} parent=0 // pred_check
    _
  $region15: #{transformer_forward.27} parent=0 // pred_check_branch
    %18 = sbr.rel (0) target = $region17
  $region16: #{transformer_forward.27} parent=0 // pred_region
    _
  $region17: #{transformer_forward.27} parent=0 // pred_fallthru
    _
  // Predicated region
  $region18: #{transformer_forward.27} parent=0 // pred_check
    _
  $region19: #{transformer_forward.27} parent=0 // pred_check_branch
    %20 = sbr.rel (0) target = $region21
  $region20: #{transformer_forward.27} parent=0 // pred_region
    _
  $region21: #{transformer_forward.27} parent=0 // pred_fallthru
    _
  // Predicated region
  $region22: #{transformer_forward.27} parent=0 // pred_check
    _
  $region23: #{transformer_forward.27} parent=0 // pred_check_branch
    %22 = sbr.rel (0) target = $region25
  $region24: #{transformer_forward.27} parent=0 // pred_region
    _
  $region25: #{transformer_forward.27} parent=0 // pred_fallthru
    _
  %p23 = scmp.eq.s32.totalorder 0, 0
  // Predicated region
  $region26: #{transformer_forward.27} parent=0 // pred_check
    %p24 = pneg %p23
  $region27: #{transformer_forward.27} parent=0 // pred_check_branch
    %26 = sbr.rel (%p24) target = $region29
  $region28: #{transformer_forward.27} parent=0 // pred_region
    %27 = vst [vmem:[#allocation2] sm:$0xff] 0.0
    %28 = vst [vmem:[#allocation2 + $0x8] sm:$0xff] 0.0
  $region29: #{transformer_forward.27} parent=0 // pred_fallthru
    _
  %v29 = vld [vmem:[#allocation2] sm:$0xff]
  %v30 = vld [vmem:[#allocation2 + $0x8] sm:$0xff]
  %v31 = vld [vmem:[%s0] sm:$0xf]
  %v32 = vld [vmem:[%s0 + $0x4] sm:$0xf]
  %v33 = vld [vmem:[%s1] sm:$0xf]
  %v34 = vld [vmem:[%s1 + $0x4] sm:$0xf]
  %v35 = vld [vmem:[%s1 + $0x8] sm:$0xf]
  %v36 = vld [vmem:[%s1 + $0xc] sm:$0xf]
  %v37 = vld [vmem:[%s1 + $0x10] sm:$0xf]
  %v38 = vld [vmem:[%s1 + $0x14] sm:$0xf]
  %v39 = vld [vmem:[%s1 + $0x18] sm:$0xf]
  %v40 = vld [vmem:[%s1 + $0x1c] sm:$0xf]
  %v41 = vld [vmem:[%s1 + $0x20] sm:$0xf]
  %v42 = vld [vmem:[%s1 + $0x24] sm:$0xf]
  %v43 = vld [vmem:[%s1 + $0x28] sm:$0xf]
  %v44 = vld [vmem:[%s1 + $0x2c] sm:$0xf]
  %v45 = vld [vmem:[%s1 + $0x30] sm:$0xf]
  %v46 = vld [vmem:[%s1 + $0x34] sm:$0xf]
  %v47 = vld [vmem:[%s1 + $0x38] sm:$0xf]
  %v48 = vld [vmem:[%s1 + $0x3c] sm:$0xf]
  %v51 = vunpack.c.l.b16 %v31
  %v52 = vunpack.c.l.b16 %v32
  %v53 = vpack.c.b16 %v52, %v51
  %v71 = vunpack.c.l.b16 %v33
  %v72 = vunpack.c.l.b16 %v34
  %v73 = vunpack.c.l.b16 %v35
  %v74 = vunpack.c.l.b16 %v36
  %v75 = vunpack.c.l.b16 %v37
  %v76 = vunpack.c.l.b16 %v38
  %v77 = vunpack.c.l.b16 %v39
  %v78 = vunpack.c.l.b16 %v40
  %v79 = vunpack.c.l.b16 %v41
  %v80 = vunpack.c.l.b16 %v42
  %v81 = vunpack.c.l.b16 %v43
  %v82 = vunpack.c.l.b16 %v44
  %v83 = vunpack.c.l.b16 %v45
  %v84 = vunpack.c.l.b16 %v46
  %v85 = vunpack.c.l.b16 %v47
  %v86 = vunpack.c.l.b16 %v48
  %v87 = vpack.c.b16 %v72, %v71
  %v88 = vpack.c.b16 %v74, %v73
  %v89 = vpack.c.b16 %v76, %v75
  %v90 = vpack.c.b16 %v78, %v77
  %v91 = vpack.c.b16 %v80, %v79
  %v92 = vpack.c.b16 %v82, %v81
  %v93 = vpack.c.b16 %v84, %v83
  %v94 = vpack.c.b16 %v86, %v85
  %103 = vmatpush.bf16.msra.mxu0 %v94
  %104 = vmatpush.bf16.msra.mxu0 %v93
  %105 = vmatpush.bf16.msra.mxu0 %v92
  %106 = vmatpush.bf16.msra.mxu0 %v91
  %107 = vmatpush.bf16.msra.mxu0 %v90
  %108 = vmatpush.bf16.msra.mxu0 %v89
  %109 = vmatpush.bf16.msra.mxu0 %v88
  %110 = vmatpush.bf16.msra.mxu0 %v87
  %111 = vmatmul.bf16.gmra.mxu0 %v53
  %v112 = vpop.f32.mrf.mxu0
  %v113 = vadd.f32 0.0, %v112
  %v114 = vpop.f32.mrf.mxu0
  %v115 = vadd.f32 0.0, %v114
  %116 = vdwg.mxu0
  %v117 = vadd.f32 %v29, %v113
  %v118 = vadd.f32 %v30, %v115
  %119 = vst [vmem:[#allocation2] sm:$0xff] %v117
  %120 = vst [vmem:[#allocation2 + $0x8] sm:$0xff] %v118
  // Predicated region
  $region30: #{transformer_forward.27} parent=0 // pred_check
    %p121 = pneg %p23
  $region31: #{transformer_forward.27} parent=0 // pred_check_branch
    %123 = sbr.rel (%p121) target = $region33
  $region32: #{transformer_forward.27} parent=0 // pred_region
    %v124 = vld [vmem:[#allocation2] sm:$0xff]
    %v125 = vld [vmem:[#allocation2 + $0x8] sm:$0xff]
    %v126 = vld [vmem:[%s2] sm:$0x1]
    %v128 = vperm.slane %v126, 0
    %v130 = vadd.f32 %v124, %v128
    %v131 = vadd.f32 %v125, %v128
    %v132 = vld [vmem:[%s3] sm:$0xf]
    %v133 = vld [vmem:[%s3 + $0x4] sm:$0xf]
    %v134 = vunpack.c.l.bf16 %v132
    %v135 = vunpack.c.l.bf16 %v133
    %v136 = vadd.f32 %v130, %v134
    %v137 = vadd.f32 %v131, %v135
    %138 = vadd.xlane.f32.xlu0 %v136
    %v139 = vpop.xlane.xlu0 %138
    %140 = vadd.xlane.f32.xlu0 %v137
    %v141 = vpop.xlane.xlu0 %140
    %v142 = vrcp.pop 128.0
    %v143 = vmul.f32 128.0, %v142
    %v144 = vsub.f32 1.0, %v143
    %v145 = vmul.f32 %v142, %v144
    %v146 = vadd.f32 %v142, %v145
    %vm147 = vweird.f32 %v142
    %v148 = vsel %vm147, %v142, %v146
    %v149 = vmul.f32 %v139, %v148
    %v150 = vmul.f32 %v141, %v148
    %v151 = vsub.f32 %v136, %v149
    %v152 = vsub.f32 %v137, %v150
    %v153 = vmul.f32 %v151, %v151
    %v154 = vmul.f32 %v152, %v152
    %155 = vadd.xlane.f32.xlu0 %v153
    %v156 = vpop.xlane.xlu0 %155
    %157 = vadd.xlane.f32.xlu0 %v154
    %v158 = vpop.xlane.xlu0 %157
    %v159 = vmul.f32 %v156, %v148
    %v160 = vmul.f32 %v158, %v148
    %v161 = vadd.f32 %v159, 1e-05
    %v162 = vadd.f32 %v160, 1e-05
    %v163 = vrsqrt.pop %v161
    %v164 = vmul.f32 %v163, %v161
    %v165 = vmul.f32 %v164, %v163
    %v166 = vmul.f32 0.5, %v165
    %v167 = vsub.f32 1.5, %v166
    %v168 = vmul.f32 %v163, %v167
    %vm169 = vweird.f32 %v161
    %vm170 = vweird.f32 %v163
    %vm171 = vmor %vm169, %vm170
    %v172 = vsel %vm171, %v163, %v168
    %v173 = vrsqrt.pop %v162
    %v174 = vmul.f32 %v173, %v162
    %v175 = vmul.f32 %v174, %v173
    %v176 = vmul.f32 0.5, %v175
    %v177 = vsub.f32 1.5, %v176
    %v178 = vmul.f32 %v173, %v177
    %vm179 = vweird.f32 %v162
    %vm180 = vweird.f32 %v173
    %vm181 = vmor %vm179, %vm180
    %v182 = vsel %vm181, %v173, %v178
    %v183 = vmul.f32 %v151, %v172
    %v184 = vmul.f32 %v152, %v182
    %v185 = vld [vmem:[%s4] sm:$0x1]
    %v187 = vperm.slane %v185, 0
    %v189 = vmul.f32 %v183, %v187
    %v190 = vmul.f32 %v184, %v187
    %v191 = vld [vmem:[%s5] sm:$0x1]
    %v193 = vperm.slane %v191, 0
    %v195 = vadd.f32 %v189, %v193
    %v196 = vadd.f32 %v190, %v193
    %v197 = vpack.c.bf16 %v195, %v195
    %v198 = vpack.c.bf16 %v196, %v196
    %199 = vst [vmem:[%s6] sm:$0xf] %v197
    %200 = vst [vmem:[%s6 + $0x4] sm:$0xf] %v198
  $region33: #{transformer_forward.27} parent=0 // pred_fallthru
    _
  // Predicated region
  $region34: #{transformer_forward.27} parent=0 // pred_check
    _
  $region35: #{transformer_forward.27} parent=0 // pred_check_branch
    %202 = sbr.rel (0) target = $region37
  $region36: #{transformer_forward.27} parent=0 // pred_region
    _
  $region37: #{transformer_forward.27} parent=0 // pred_fallthru
    _
  // Predicated region
  $region38: #{transformer_forward.27} parent=0 // pred_check
    _
  $region39: #{transformer_forward.27} parent=0 // pred_check_branch
    %204 = sbr.rel (0) target = $region41
  $region40: #{transformer_forward.27} parent=0 // pred_region
    _
  $region41: #{transformer_forward.27} parent=0 // pred_fallthru
    _

// kernel: transformer_forward.26
$region0: #{transformer_forward.26}
  #allocation0 [shape = 'u32[]', space=smem, size = 0x4, offset = 0x4, fixed_abs, tag = 'smem constant byte address 0x4 - core index']
  #allocation1 [shape = 'u32[72,128]{1,0:T(1,128)}', space=vmem, size = 0x9000, scoped, tag = 'internal scratch']
  #allocation2 [shape = 'f32[4,8,1]{2,1,0:T(8,128)}', space=vmem, size = 0x4000, scoped, tag = 'scratch operand']
  #allocation3 [shape = 'f32[4,8,1]{2,1,0:T(8,128)}', space=vmem, size = 0x4000, scoped, tag = 'scratch operand']
  #allocation4 [shape = 'f32[8,128]{1,0:T(8,128)}', space=vmem, size = 0x1000, scoped, tag = 'scratch operand']
  %s0 = inlined_call_operand.vmem [shape: bf16[2,8,384], index: 0, kind: input, shape index: {}, may-alias: {0,1,2}]
  %s1 = inlined_call_operand.vmem [shape: bf16[2,8,384], index: 1, kind: input, shape index: {}, may-alias: {0,1,2}]
  %s2 = inlined_call_operand.vmem [shape: bf16[2,8,384], index: 2, kind: input, shape index: {}, may-alias: {0,1,2}]
  %s3 = inlined_call_operand.vmem [shape: bf16[2,8,128], index: 3, kind: output, shape index: {}]
  %s4 = sld [smem:[#allocation0]]
  $region53: #{transformer_forward.26} parent=0
    _
  %s6 = ssub.s32 1, %s4
  %s7 = scalar_select 0, %s6, %s4
  loop: start=0, step=1, limit=4
  $region2: #{transformer_forward.26} parent=0 // loop_pre_header
    _
  $region3: #{transformer_forward.26} parent=0 // loop_header
    %s9 = sphi 0, %s13
    %p10 = scmp.ge.s32.totalorder %s9, 4
    %s16 = sphi 0, %s35
    %s17 = sphi 0, %s31
    %s18 = sphi 0, %s27
    %s19 = sphi 0, %s16
    %s20 = sphi 0, %s17
    %s21 = sphi 0, %s18
    %s22 = sphi 0, %s19
    %s23 = sphi 0, %s20
    %s24 = sphi 0, %s21
    %s40 = sphi 0, %s42
    %s43 = sphi 0, %s40
    %s44 = sphi 0, %s43
    %s60 = sphi 0, %s44
    %s68 = sphi 0, %s70
    %s71 = sphi 0, %s68
    %s72 = sphi 0, %s71
    %s88 = sphi 0, %s72
    %s96 = sphi 0, %s98
    %s99 = sphi 0, %s96
    %s100 = sphi 0, %s99
    %s116 = sphi 0, %s100
    %s124 = sphi 0, %s126
    %s127 = sphi 0, %s124
    %s128 = sphi 0, %s127
    %s144 = sphi 0, %s128
  $region4: #{transformer_forward.26} parent=0 // loop_header_branch
    %12 = sbr.rel (%p10) target = $region8
  $region5: #{transformer_forward.26} parent=0 // loop_body
    %s14 = ssub.s32 %s9, 1
    %s15 = ssub.s32 %s9, 2
    %s25 = sadd.s32 1, %s18
    %p26 = scmp.ge.s32.totalorder %s25, 1
    %s27 = scalar_select %p26, 0, %s25
    %s28 = sadd.s32 1, %s17
    %s29 = scalar_select %p26, %s28, %s17
    %p30 = scmp.ge.s32.totalorder %s29, 1
    %s31 = scalar_select %p30, 0, %s29
    %s32 = sadd.s32 1, %s16
    %s33 = scalar_select %p30, %s32, %s16
    %p34 = scmp.ge.s32.totalorder %s33, 2
    %s35 = scalar_select %p34, 0, %s33
    %s36 = ssub.s32 %s16, %s35
    %s37 = ssub.s32 %s17, %s31
    %s38 = sor.u32 %s36, %s37
    %p39 = scmp.eq.s32.totalorder %s38, 0
    %s41 = sadd.s32 %s40, 1
    %s42 = scalar_select %p39, %s40, %s41
    %p45 = pneg %p39
    %p46 = scmp.eq.s32.totalorder %s9, 1
    %p47 = por %p45, %p46
    %p48 = scmp.ne.s32.totalorder %s40, %s43
    %p49 = scmp.eq.s32.totalorder %s9, 0
    %p50 = por %p48, %p49
    %p51 = scmp.ne.s32.totalorder %s40, %s43
    %p52 = scmp.eq.s32.totalorder %s14, 1
    %p53 = por %p51, %p52
    %p54 = scmp.ne.s32.totalorder %s43, %s44
    %p55 = scmp.eq.s32.totalorder %s14, 0
    %p56 = por %p54, %p55
    %p57 = scmp.ne.s32.totalorder %s43, %s44
    %p58 = scmp.eq.s32.totalorder %s15, 1
    %p59 = por %p57, %p58
    %p61 = scmp.ne.s32.totalorder %s44, %s60
    %p62 = scmp.eq.s32.totalorder %s15, 0
    %p63 = por %p61, %p62
    %s64 = ssub.s32 %s16, %s35
    %s65 = ssub.s32 %s18, %s27
    %s66 = sor.u32 %s64, %s65
    %p67 = scmp.eq.s32.totalorder %s66, 0
    %s69 = sadd.s32 %s68, 1
    %s70 = scalar_select %p67, %s68, %s69
    %p73 = pneg %p67
    %p74 = scmp.eq.s32.totalorder %s9, 1
    %p75 = por %p73, %p74
    %p76 = scmp.ne.s32.totalorder %s68, %s71
    %p77 = scmp.eq.s32.totalorder %s9, 0
    %p78 = por %p76, %p77
    %p79 = scmp.ne.s32.totalorder %s68, %s71
    %p80 = scmp.eq.s32.totalorder %s14, 1
    %p81 = por %p79, %p80
    %p82 = scmp.ne.s32.totalorder %s71, %s72
    %p83 = scmp.eq.s32.totalorder %s14, 0
    %p84 = por %p82, %p83
    %p85 = scmp.ne.s32.totalorder %s71, %s72
    %p86 = scmp.eq.s32.totalorder %s15, 1
    %p87 = por %p85, %p86
    %p89 = scmp.ne.s32.totalorder %s72, %s88
    %p90 = scmp.eq.s32.totalorder %s15, 0
    %p91 = por %p89, %p90
    %s92 = ssub.s32 %s16, %s35
    %s93 = ssub.s32 %s18, %s27
    %s94 = sor.u32 %s92, %s93
    %p95 = scmp.eq.s32.totalorder %s94, 0
    %s97 = sadd.s32 %s96, 1
    %s98 = scalar_select %p95, %s96, %s97
    %p101 = pneg %p95
    %p102 = scmp.eq.s32.totalorder %s9, 1
    %p103 = por %p101, %p102
    %p104 = scmp.ne.s32.totalorder %s96, %s99
    %p105 = scmp.eq.s32.totalorder %s9, 0
    %p106 = por %p104, %p105
    %p107 = scmp.ne.s32.totalorder %s96, %s99
    %p108 = scmp.eq.s32.totalorder %s14, 1
    %p109 = por %p107, %p108
    %p110 = scmp.ne.s32.totalorder %s99, %s100
    %p111 = scmp.eq.s32.totalorder %s14, 0
    %p112 = por %p110, %p111
    %p113 = scmp.ne.s32.totalorder %s99, %s100
    %p114 = scmp.eq.s32.totalorder %s15, 1
    %p115 = por %p113, %p114
    %p117 = scmp.ne.s32.totalorder %s100, %s116
    %p118 = scmp.eq.s32.totalorder %s15, 0
    %p119 = por %p117, %p118
    %s120 = ssub.s32 %s16, %s35
    %s121 = ssub.s32 %s17, %s31
    %s122 = sor.u32 %s120, %s121
    %p123 = scmp.eq.s32.totalorder %s122, 0
    %s125 = sadd.s32 %s124, 1
    %s126 = scalar_select %p123, %s124, %s125
    %p129 = pneg %p123
    %p130 = scmp.eq.s32.totalorder %s9, 1
    %p131 = por %p129, %p130
    %p132 = scmp.ne.s32.totalorder %s124, %s127
    %p133 = scmp.eq.s32.totalorder %s9, 0
    %p134 = por %p132, %p133
    %p135 = scmp.ne.s32.totalorder %s124, %s127
    %p136 = scmp.eq.s32.totalorder %s14, 1
    %p137 = por %p135, %p136
    %p138 = scmp.ne.s32.totalorder %s127, %s128
    %p139 = scmp.eq.s32.totalorder %s14, 0
    %p140 = por %p138, %p139
    %p141 = scmp.ne.s32.totalorder %s127, %s128
    %p142 = scmp.eq.s32.totalorder %s15, 1
    %p143 = por %p141, %p142
    %p145 = scmp.ne.s32.totalorder %s128, %s144
    %p146 = scmp.eq.s32.totalorder %s15, 0
    %p147 = por %p145, %p146
    %p148 = scmp.le.s32.totalorder 1, %s9
    %p149 = scmp.lt.s32.totalorder %s9, 3
    %p150 = pnand %p148, %p149
    %p151 = pneg %p150
    // Predicated region
    $region9: #{transformer_forward.26} parent=5 // pred_check
      _
    $region10: #{transformer_forward.26} parent=5 // pred_check_branch
      %153 = sbr.rel (%p150) target = $region12
    $region11: #{transformer_forward.26} parent=5 // pred_region
      %s154 = ssub.s32 %s9, 1
    $region12: #{transformer_forward.26} parent=5 // pred_fallthru
      _
    %p155 = scmp.lt.s32.totalorder %s9, 2
    // Predicated region
    $region13: #{transformer_forward.26} parent=5 // pred_check
      %p156 = pneg %p155
    $region14: #{transformer_forward.26} parent=5 // pred_check_branch
      %158 = sbr.rel (%p156) target = $region16
    $region15: #{transformer_forward.26} parent=5 // pred_region
      // Predicated region
      $region17: #{transformer_forward.26} parent=15 // pred_check
        %p159 = pneg %p50
      $region18: #{transformer_forward.26} parent=15 // pred_check_branch
        %161 = sbr.rel (%p159) target = $region20
      $region19: #{transformer_forward.26} parent=15 // pred_region
        %p162 = scmp.lt.s32.totalorder %s16, 1
        %s163 = scalar_select %p162, %s16, 1
        %p164 = scmp.lt.s32.totalorder %s17, 0
        %s165 = scalar_select %p164, %s17, 0
        %s166 = smul.addr %s165, 3
        %s167 = smul.addr %s163, 3
        %s168 = sadd.s32 %s166, %s167
        %s169 = smul.addr %s168, 4
        %s170 = scalar_lea.vmem %s0, %s169
      $region20: #{transformer_forward.26} parent=15 // pred_fallthru
        _
      // Predicated region
      $region21: #{transformer_forward.26} parent=15 // pred_check
        %p171 = pneg %p78
      $region22: #{transformer_forward.26} parent=15 // pred_check_branch
        %173 = sbr.rel (%p171) target = $region24
      $region23: #{transformer_forward.26} parent=15 // pred_region
        %p174 = scmp.lt.s32.totalorder %s16, 1
        %s175 = scalar_select %p174, %s16, 1
        %p176 = scmp.lt.s32.totalorder %s18, 0
        %s177 = scalar_select %p176, %s18, 0
        %s178 = smul.addr %s177, 3
        %s179 = sadd.s32 1, %s178
        %s180 = smul.addr %s175, 3
        %s181 = sadd.s32 %s179, %s180
        %s182 = smul.addr %s181, 4
        %s183 = scalar_lea.vmem %s1, %s182
      $region24: #{transformer_forward.26} parent=15 // pred_fallthru
        _
      // Predicated region
      $region25: #{transformer_forward.26} parent=15 // pred_check
        %p184 = pneg %p106
      $region26: #{transformer_forward.26} parent=15 // pred_check_branch
        %186 = sbr.rel (%p184) target = $region28
      $region27: #{transformer_forward.26} parent=15 // pred_region
        %p187 = scmp.lt.s32.totalorder %s16, 1
        %s188 = scalar_select %p187, %s16, 1
        %p189 = scmp.lt.s32.totalorder %s18, 0
        %s190 = scalar_select %p189, %s18, 0
        %s191 = smul.addr %s190, 3
        %s192 = sadd.s32 2, %s191
        %s193 = smul.addr %s188, 3
        %s194 = sadd.s32 %s192, %s193
        %s195 = smul.addr %s194, 4
        %s196 = scalar_lea.vmem %s2, %s195
      $region28: #{transformer_forward.26} parent=15 // pred_fallthru
        _
    $region16: #{transformer_forward.26} parent=5 // pred_fallthru
      _
    %p197 = scmp.le.s32.totalorder 1, %s9
    %p198 = scmp.lt.s32.totalorder %s9, 3
    %p199 = pnand %p197, %p198
    %p200 = pneg %p199
    // Predicated region
    $region29: #{transformer_forward.26} parent=5 // pred_check
      _
    $region30: #{transformer_forward.26} parent=5 // pred_check_branch
      %202 = sbr.rel (%p199) target = $region32
    $region31: #{transformer_forward.26} parent=5 // pred_region
      %s203 = ssub.s32 %s9, 1
      %p204 = scmp.lt.s32.totalorder %s19, 1
      %s205 = scalar_select %p204, %s19, 1
      %p206 = scmp.lt.s32.totalorder %s20, 0
      %s207 = scalar_select %p206, %s20, 0
      %s208 = smul.addr %s207, 3
      %s209 = smul.addr %s205, 3
      %s210 = sadd.s32 %s208, %s209
      %s211 = smul.addr %s210, 4
      %s212 = scalar_lea.vmem %s0, %s211
      %p213 = pneg %p56
      %p214 = pneg %p53
      %p215 = scmp.lt.s32.totalorder %s19, 1
      %s216 = scalar_select %p215, %s19, 1
      %p217 = scmp.lt.s32.totalorder %s21, 0
      %s218 = scalar_select %p217, %s21, 0
      %s219 = smul.addr %s218, 3
      %s220 = sadd.s32 1, %s219
      %s221 = smul.addr %s216, 3
      %s222 = sadd.s32 %s220, %s221
      %s223 = smul.addr %s222, 4
      %s224 = scalar_lea.vmem %s1, %s223
      %p225 = pneg %p84
      %p226 = pneg %p81
      %p227 = scmp.lt.s32.totalorder %s19, 1
      %s228 = scalar_select %p227, %s19, 1
      %p229 = scmp.lt.s32.totalorder %s21, 0
      %s230 = scalar_select %p229, %s21, 0
      %s231 = smul.addr %s230, 3
      %s232 = sadd.s32 2, %s231
      %s233 = smul.addr %s228, 3
      %s234 = sadd.s32 %s232, %s233
      %s235 = smul.addr %s234, 4
      %s236 = scalar_lea.vmem %s2, %s235
      %p237 = pneg %p112
      %p238 = pneg %p109
      %p239 = pneg %p140
      %p240 = pneg %p137
      %p241 = scmp.lt.s32.totalorder %s19, 1
      %s242 = scalar_select %p241, %s19, 1
      %p243 = scmp.lt.s32.totalorder %s20, 0
      %s244 = scalar_select %p243, %s20, 0
      %s245 = sadd.s32 %s244, %s242
      %s246 = smul.addr %s245, 4
      %s247 = scalar_lea.vmem %s3, %s246
      %p248 = scmp.lt.s32.totalorder %s19, 1
      %s249 = scalar_select %p248, %s19, 1
      %p250 = scmp.lt.s32.totalorder %s20, 0
      %s251 = scalar_select %p250, %s20, 0
      %s252 = smul.addr %s251, 3
      %s253 = smul.addr %s249, 3
      %s254 = sadd.s32 %s252, %s253
      %s255 = smul.addr %s254, 4
      %s256 = scalar_lea.vmem %s0, %s255
      %p257 = scmp.lt.s32.totalorder %s19, 1
      %s258 = scalar_select %p257, %s19, 1
      %p259 = scmp.lt.s32.totalorder %s21, 0
      %s260 = scalar_select %p259, %s21, 0
      %s261 = smul.addr %s260, 3
      %s262 = sadd.s32 1, %s261
      %s263 = smul.addr %s258, 3
      %s264 = sadd.s32 %s262, %s263
      %s265 = smul.addr %s264, 4
      %s266 = scalar_lea.vmem %s1, %s265
      %p267 = scmp.lt.s32.totalorder %s19, 1
      %s268 = scalar_select %p267, %s19, 1
      %p269 = scmp.lt.s32.totalorder %s21, 0
      %s270 = scalar_select %p269, %s21, 0
      %s271 = smul.addr %s270, 3
      %s272 = sadd.s32 2, %s271
      %s273 = smul.addr %s268, 3
      %s274 = sadd.s32 %s272, %s273
      %s275 = smul.addr %s274, 4
      %s276 = scalar_lea.vmem %s2, %s275
      %p277 = scmp.lt.s32.totalorder %s19, 1
      %s278 = scalar_select %p277, %s19, 1
      %p279 = scmp.lt.s32.totalorder %s20, 0
      %s280 = scalar_select %p279, %s20, 0
      %s281 = sadd.s32 %s280, %s278
      %s282 = smul.addr %s281, 4
      %s283 = scalar_lea.vmem %s3, %s282
      %p285 = scmp.eq.s32.totalorder %s21, 0
      // Predicated region
      $region33: #{transformer_forward.26} parent=31 // pred_check
        %p286 = pneg %p285
      $region34: #{transformer_forward.26} parent=31 // pred_check_branch
        %288 = sbr.rel (%p286) target = $region36
      $region35: #{transformer_forward.26} parent=31 // pred_region
        %vm289 = vcmask 7168
        %290 = vst.msk [vmem:[#allocation2] sm:$0xff] %vm289, -1e+30
        %291 = vst.msk [vmem:[#allocation2 + $0x8] sm:$0xff] %vm289, -1e+30
        %292 = vst.msk [vmem:[#allocation2 + $0x10] sm:$0xff] %vm289, -1e+30
        %293 = vst.msk [vmem:[#allocation2 + $0x18] sm:$0xff] %vm289, -1e+30
        %294 = vst.msk [vmem:[#allocation3] sm:$0xff] %vm289, 0.0
        %295 = vst.msk [vmem:[#allocation3 + $0x8] sm:$0xff] %vm289, 0.0
        %296 = vst.msk [vmem:[#allocation3 + $0x10] sm:$0xff] %vm289, 0.0
        %297 = vst.msk [vmem:[#allocation3 + $0x18] sm:$0xff] %vm289, 0.0
        %298 = vst [vmem:[#allocation4] sm:$0xff] 0.0
      $region36: #{transformer_forward.26} parent=31 // pred_fallthru
        _
      %v299 = vld [vmem:[%s256] sm:$0xf]
      %v300 = vld [vmem:[%s266] sm:$0xf]
      %v301 = vld [vmem:[%s276] sm:$0xf]
      %vm302 = vcmask 261120
      %v304 = vsel %vm302, %v299, 0
      %v307 = vsel %vm302, %v300, 0
      %309 = vmatpush.bf16.xpose.msra.mxu0 0
      %310 = vmatpush.bf16.xpose.msra.mxu0 0
      %311 = vmatpush.bf16.xpose.msra.mxu0 0
      %312 = vmatpush.bf16.xpose.msra.mxu0 0
      %313 = vmatpush.bf16.xpose.msra.mxu0 0
      %314 = vmatpush.bf16.xpose.msra.mxu0 0
      %315 = vmatpush.bf16.xpose.msra.mxu0 0
      %316 = vmatpush.bf16.xpose.msra.mxu0 %v307
      %317 = vmatmul.bf16.gmra.mxu0 %v304
      %v318 = vpop.f32.mrf.mxu0
      %v319 = vadd.f32 0.0, %v318
      %v320 = vpop.f32.mrf.mxu0
      %321 = vdwg.mxu0
      %v322 = vmul.f32 %v319, 0.17677669
      %v323 = vld [vmem:[#allocation2] sm:$0xff]
      %vm324 = vcmask 64512
      %v325 = vsel %vm324, %v322, -inf
      %326 = vmax.xlane.f32.xlu0 %v325
      %v327 = vpop.xlane.xlu0 %326
      %v328 = vmax.f32 %v323, %v327
      %v329 = vsub.f32 %v323, %v328
      %v330 = vmul.f32 %v329, 1.442695
      %v331 = vpow.pop %v330
      %333 = vset.pattern.permute.xlu0 0
      %334 = vperm.xlu0 %333, %v328
      %v335 = vpop.permute.xlu0 %334
      %v337 = vsub.f32 %v322, %v335
      %v338 = vmul.f32 %v337, 1.442695
      %v339 = vpow.pop %v338
      %v340 = vld [vmem:[#allocation3] sm:$0xff]
      %v341 = vmul.f32 %v331, %v340
      %v342 = vsel %vm324, %v339, 0.0
      %343 = vadd.xlane.f32.xlu0 %v342
      %v344 = vpop.xlane.xlu0 %343
      %v345 = vadd.f32 %v341, %v344
      %vm346 = vcmask 7168
      %347 = vst.msk [vmem:[#allocation3] sm:$0xff] %vm346, %v345
      %v348 = vld [vmem:[#allocation4] sm:$0xff]
      %350 = vset.pattern.permute.xlu0 0
      %351 = vperm.xlu0 %350, %v331
      %v352 = vpop.permute.xlu0 %351
      %v354 = vmul.f32 %v352, %v348
      %v355 = vpack.c.bf16 %v339, %v339
      %v357 = vsel %vm324, %v355, 0
      %vm359 = vcmask 1043456
      %v361 = vsel %vm359, %v301, 0
      %363 = vmatpush.bf16.msra.mxu0 0
      %364 = vmatpush.bf16.msra.mxu0 0
      %365 = vmatpush.bf16.msra.mxu0 0
      %366 = vmatpush.bf16.msra.mxu0 0
      %367 = vmatpush.bf16.msra.mxu0 0
      %368 = vmatpush.bf16.msra.mxu0 0
      %369 = vmatpush.bf16.msra.mxu0 0
      %370 = vmatpush.bf16.msra.mxu0 %v361
      %371 = vmatmul.bf16.gmra.mxu0 %v357
      %v372 = vpop.f32.mrf.mxu0
      %v373 = vadd.f32 0.0, %v372
      %v374 = vpop.f32.mrf.mxu0
      %375 = vdwg.mxu0
      %v376 = vadd.f32 %v354, %v373
      %377 = vst.msk [vmem:[#allocation4] sm:$0xff] %vm302, %v376
      %378 = vst.msk [vmem:[#allocation2] sm:$0xff] %vm346, %v328
      %v380 = vunpack.c.l.b16 %v299
      %v381 = vpack.c.b16 %v380, %v380
      %382 = vrot.lane.b32.xlu0 %v381, 96
      %v383 = vpop.permute.xlu0 %382
      %v385 = vunpack.c.l.b16 %v300
      %v386 = vpack.c.b16 %v385, %v385
      %387 = vrot.lane.b32.xlu0 %v386, 96
      %v388 = vpop.permute.xlu0 %387
      %v390 = vsel %vm302, %v383, 0
      %v393 = vsel %vm302, %v388, 0
      %395 = vmatpush.bf16.xpose.msra.mxu0 0
      %396 = vmatpush.bf16.xpose.msra.mxu0 0
      %397 = vmatpush.bf16.xpose.msra.mxu0 0
      %398 = vmatpush.bf16.xpose.msra.mxu0 0
      %399 = vmatpush.bf16.xpose.msra.mxu0 0
      %400 = vmatpush.bf16.xpose.msra.mxu0 0
      %401 = vmatpush.bf16.xpose.msra.mxu0 0
      %402 = vmatpush.bf16.xpose.msra.mxu0 %v393
      %403 = vmatmul.bf16.gmra.mxu0 %v390
      %v404 = vpop.f32.mrf.mxu0
      %v405 = vadd.f32 0.0, %v404
      %v406 = vpop.f32.mrf.mxu0
      %407 = vdwg.mxu0
      %v408 = vmul.f32 %v405, 0.17677669
      %s409 = scalar_lea.vmem [#allocation2], 8
      %v410 = vld [vmem:[%s409] sm:$0xff]
      %v411 = vsel %vm324, %v408, -inf
      %412 = vmax.xlane.f32.xlu0 %v411
      %v413 = vpop.xlane.xlu0 %412
      %v414 = vmax.f32 %v410, %v413
      %v415 = vsub.f32 %v410, %v414
      %v416 = vmul.f32 %v415, 1.442695
      %v417 = vpow.pop %v416
      %419 = vset.pattern.permute.xlu0 0
      %420 = vperm.xlu0 %419, %v414
      %v421 = vpop.permute.xlu0 %420
      %v423 = vsub.f32 %v408, %v421
      %v424 = vmul.f32 %v423, 1.442695
      %v425 = vpow.pop %v424
      %s426 = scalar_lea.vmem [#allocation3], 8
      %v427 = vld [vmem:[%s426] sm:$0xff]
      %v428 = vmul.f32 %v417, %v427
      %v429 = vsel %vm324, %v425, 0.0
      %430 = vadd.xlane.f32.xlu0 %v429
      %v431 = vpop.xlane.xlu0 %430
      %v432 = vadd.f32 %v428, %v431
      %433 = vst.msk [vmem:[%s426] sm:$0xff] %vm346, %v432
      %v434 = vld [vmem:[#allocation4] sm:$0xff]
      %436 = vset.pattern.permute.xlu0 0
      %437 = vperm.xlu0 %436, %v417
      %v438 = vpop.permute.xlu0 %437
      %v440 = vmul.f32 %v438, %v434
      %v441 = vpack.c.bf16 %v425, %v425
      %v443 = vunpack.c.l.b16 %v301
      %v444 = vpack.c.b16 %v443, %v443
      %445 = vrot.lane.b32.xlu0 %v444, 96
      %v446 = vpop.permute.xlu0 %445
      %v448 = vsel %vm324, %v441, 0
      %v451 = vsel %vm359, %v446, 0
      %453 = vmatpush.bf16.msra.mxu0 0
      %454 = vmatpush.bf16.msra.mxu0 0
      %455 = vmatpush.bf16.msra.mxu0 0
      %456 = vmatpush.bf16.msra.mxu0 0
      %457 = vmatpush.bf16.msra.mxu0 0
      %458 = vmatpush.bf16.msra.mxu0 0
      %459 = vmatpush.bf16.msra.mxu0 0
      %460 = vmatpush.bf16.msra.mxu0 %v451
      %461 = vmatmul.bf16.gmra.mxu0 %v448
      %v462 = vpop.f32.mrf.mxu0
      %v463 = vadd.f32 0.0, %v462
      %v464 = vpop.f32.mrf.mxu0
      %465 = vdwg.mxu0
      %467 = vrot.lane.b32.xlu0 %v463, 32
      %v468 = vpop.permute.xlu0 %467
      %v470 = vadd.f32 %v440, %v468
      %vm471 = vcmask 523520
      %472 = vst.msk [vmem:[#allocation4] sm:$0xff] %vm471, %v470
      %473 = vst.msk [vmem:[%s409] sm:$0xff] %vm346, %v414
      %474 = vrot.lane.b32.xlu0 %v381, 64
      %v475 = vpop.permute.xlu0 %474
      %476 = vrot.lane.b32.xlu0 %v386, 64
      %v477 = vpop.permute.xlu0 %476
      %v479 = vsel %vm302, %v475, 0
      %v482 = vsel %vm302, %v477, 0
      %484 = vmatpush.bf16.xpose.msra.mxu0 0
      %485 = vmatpush.bf16.xpose.msra.mxu0 0
      %486 = vmatpush.bf16.xpose.msra.mxu0 0
      %487 = vmatpush.bf16.xpose.msra.mxu0 0
      %488 = vmatpush.bf16.xpose.msra.mxu0 0
      %489 = vmatpush.bf16.xpose.msra.mxu0 0
      %490 = vmatpush.bf16.xpose.msra.mxu0 0
      %491 = vmatpush.bf16.xpose.msra.mxu0 %v482
      %492 = vmatmul.bf16.gmra.mxu0 %v479
      %v493 = vpop.f32.mrf.mxu0
      %v494 = vadd.f32 0.0, %v493
      %v495 = vpop.f32.mrf.mxu0
      %496 = vdwg.mxu0
      %v497 = vmul.f32 %v494, 0.17677669
      %s498 = scalar_lea.vmem [#allocation2], 16
      %v499 = vld [vmem:[%s498] sm:$0xff]
      %v500 = vsel %vm324, %v497, -inf
      %501 = vmax.xlane.f32.xlu0 %v500
      %v502 = vpop.xlane.xlu0 %501
      %v503 = vmax.f32 %v499, %v502
      %v504 = vsub.f32 %v499, %v503
      %v505 = vmul.f32 %v504, 1.442695
      %v506 = vpow.pop %v505
      %508 = vset.pattern.permute.xlu0 0
      %509 = vperm.xlu0 %508, %v503
      %v510 = vpop.permute.xlu0 %509
      %v512 = vsub.f32 %v497, %v510
      %v513 = vmul.f32 %v512, 1.442695
      %v514 = vpow.pop %v513
      %s515 = scalar_lea.vmem [#allocation3], 16
      %v516 = vld [vmem:[%s515] sm:$0xff]
      %v517 = vmul.f32 %v506, %v516
      %v518 = vsel %vm324, %v514, 0.0
      %519 = vadd.xlane.f32.xlu0 %v518
      %v520 = vpop.xlane.xlu0 %519
      %v521 = vadd.f32 %v517, %v520
      %522 = vst.msk [vmem:[%s515] sm:$0xff] %vm346, %v521
      %v523 = vld [vmem:[#allocation4] sm:$0xff]
      %525 = vset.pattern.permute.xlu0 0
      %526 = vperm.xlu0 %525, %v506
      %v527 = vpop.permute.xlu0 %526
      %v529 = vmul.f32 %v527, %v523
      %v530 = vpack.c.bf16 %v514, %v514
      %531 = vrot.lane.b32.xlu0 %v444, 64
      %v532 = vpop.permute.xlu0 %531
      %v534 = vsel %vm324, %v530, 0
      %v537 = vsel %vm359, %v532, 0
      %539 = vmatpush.bf16.msra.mxu0 0
      %540 = vmatpush.bf16.msra.mxu0 0
      %541 = vmatpush.bf16.msra.mxu0 0
      %542 = vmatpush.bf16.msra.mxu0 0
      %543 = vmatpush.bf16.msra.mxu0 0
      %544 = vmatpush.bf16.msra.mxu0 0
      %545 = vmatpush.bf16.msra.mxu0 0
      %546 = vmatpush.bf16.msra.mxu0 %v537
      %547 = vmatmul.bf16.gmra.mxu0 %v534
      %v548 = vpop.f32.mrf.mxu0
      %v549 = vadd.f32 0.0, %v548
      %v550 = vpop.f32.mrf.mxu0
      %551 = vdwg.mxu0
      %553 = vrot.lane.b32.xlu0 %v549, 64
      %v554 = vpop.permute.xlu0 %553
      %v556 = vadd.f32 %v529, %v554
      %vm557 = vcmask 785920
      %558 = vst.msk [vmem:[#allocation4] sm:$0xff] %vm557, %v556
      %559 = vst.msk [vmem:[%s498] sm:$0xff] %vm346, %v503
      %560 = vrot.lane.b32.xlu0 %v381, 32
      %v561 = vpop.permute.xlu0 %560
      %562 = vrot.lane.b32.xlu0 %v386, 32
      %v563 = vpop.permute.xlu0 %562
      %v565 = vsel %vm302, %v561, 0
      %v568 = vsel %vm302, %v563, 0
      %570 = vmatpush.bf16.xpose.msra.mxu0 0
      %571 = vmatpush.bf16.xpose.msra.mxu0 0
      %572 = vmatpush.bf16.xpose.msra.mxu0 0
      %573 = vmatpush.bf16.xpose.msra.mxu0 0
      %574 = vmatpush.bf16.xpose.msra.mxu0 0
      %575 = vmatpush.bf16.xpose.msra.mxu0 0
      %576 = vmatpush.bf16.xpose.msra.mxu0 0
      %577 = vmatpush.bf16.xpose.msra.mxu0 %v568
      %578 = vmatmul.bf16.gmra.mxu0 %v565
      %v579 = vpop.f32.mrf.mxu0
      %v580 = vadd.f32 0.0, %v579
      %v581 = vpop.f32.mrf.mxu0
      %582 = vdwg.mxu0
      %v583 = vmul.f32 %v580, 0.17677669
      %s584 = scalar_lea.vmem [#allocation2], 24
      %v585 = vld [vmem:[%s584] sm:$0xff]
      %v586 = vsel %vm324, %v583, -inf
      %587 = vmax.xlane.f32.xlu0 %v586
      %v588 = vpop.xlane.xlu0 %587
      %v589 = vmax.f32 %v585, %v588
      %v590 = vsub.f32 %v585, %v589
      %v591 = vmul.f32 %v590, 1.442695
      %v592 = vpow.pop %v591
      %594 = vset.pattern.permute.xlu0 0
      %595 = vperm.xlu0 %594, %v589
      %v596 = vpop.permute.xlu0 %595
      %v598 = vsub.f32 %v583, %v596
      %v599 = vmul.f32 %v598, 1.442695
      %v600 = vpow.pop %v599
      %s601 = scalar_lea.vmem [#allocation3], 24
      %v602 = vld [vmem:[%s601] sm:$0xff]
      %v603 = vmul.f32 %v592, %v602
      %v604 = vsel %vm324, %v600, 0.0
      %605 = vadd.xlane.f32.xlu0 %v604
      %v606 = vpop.xlane.xlu0 %605
      %v607 = vadd.f32 %v603, %v606
      %608 = vst.msk [vmem:[%s601] sm:$0xff] %vm346, %v607
      %v609 = vld [vmem:[#allocation4] sm:$0xff]
      %611 = vset.pattern.permute.xlu0 0
      %612 = vperm.xlu0 %611, %v592
      %v613 = vpop.permute.xlu0 %612
      %v615 = vmul.f32 %v613, %v609
      %v616 = vpack.c.bf16 %v600, %v600
      %617 = vrot.lane.b32.xlu0 %v444, 32
      %v618 = vpop.permute.xlu0 %617
      %v620 = vsel %vm324, %v616, 0
      %v623 = vsel %vm359, %v618, 0
      %625 = vmatpush.bf16.msra.mxu0 0
      %626 = vmatpush.bf16.msra.mxu0 0
      %627 = vmatpush.bf16.msra.mxu0 0
      %628 = vmatpush.bf16.msra.mxu0 0
      %629 = vmatpush.bf16.msra.mxu0 0
      %630 = vmatpush.bf16.msra.mxu0 0
      %631 = vmatpush.bf16.msra.mxu0 0
      %632 = vmatpush.bf16.msra.mxu0 %v623
      %633 = vmatmul.bf16.gmra.mxu0 %v620
      %v634 = vpop.f32.mrf.mxu0
      %v635 = vadd.f32 0.0, %v634
      %v636 = vpop.f32.mrf.mxu0
      %637 = vdwg.mxu0
      %639 = vrot.lane.b32.xlu0 %v635, 96
      %v640 = vpop.permute.xlu0 %639
      %v642 = vadd.f32 %v615, %v640
      %vm643 = vcmask 1048320
      %644 = vst.msk [vmem:[#allocation4] sm:$0xff] %vm643, %v642
      %645 = vst.msk [vmem:[%s584] sm:$0xff] %vm346, %v589
      // Predicated region
      $region37: #{transformer_forward.26} parent=31 // pred_check
        %p646 = pneg %p285
      $region38: #{transformer_forward.26} parent=31 // pred_check_branch
        %648 = sbr.rel (%p646) target = $region40
      $region39: #{transformer_forward.26} parent=31 // pred_region
        %v649 = vld [vmem:[#allocation3] sm:$0xff]
        %v650 = vrcp.pop %v649
        %v651 = vld [vmem:[#allocation4] sm:$0xff]
        %653 = vset.pattern.permute.xlu0 0
        %654 = vperm.xlu0 %653, %v650
        %v655 = vpop.permute.xlu0 %654
        %v657 = vmul.f32 %v651, %v655
        %v658 = vld [vmem:[%s426] sm:$0xff]
        %v659 = vrcp.pop %v658
        %661 = vset.pattern.permute.xlu0 0
        %662 = vperm.xlu0 %661, %v659
        %v663 = vpop.permute.xlu0 %662
        %v665 = vmul.f32 %v651, %v663
        %v666 = vld [vmem:[%s515] sm:$0xff]
        %v667 = vrcp.pop %v666
        %669 = vset.pattern.permute.xlu0 0
        %670 = vperm.xlu0 %669, %v667
        %v671 = vpop.permute.xlu0 %670
        %v673 = vmul.f32 %v651, %v671
        %v674 = vld [vmem:[%s601] sm:$0xff]
        %v675 = vrcp.pop %v674
        %677 = vset.pattern.permute.xlu0 0
        %678 = vperm.xlu0 %677, %v675
        %v679 = vpop.permute.xlu0 %678
        %v681 = vmul.f32 %v651, %v679
        %v682 = vsel %vm302, %v657, %v665
        %vm683 = vcmask 523264
        %v684 = vsel %vm683, %v682, %v673
        %vm685 = vcmask 785408
        %v686 = vsel %vm685, %v684, %v681
        %v687 = vpack.c.bf16 %v686, %v686
        %688 = vst [vmem:[%s283] sm:$0xf] %v687
      $region40: #{transformer_forward.26} parent=31 // pred_fallthru
        _
      %p689 = scmp.lt.s32.totalorder %s19, 1
      %s690 = scalar_select %p689, %s19, 1
      %p691 = scmp.lt.s32.totalorder %s20, 0
      %s692 = scalar_select %p691, %s20, 0
      %s693 = sadd.s32 %s692, %s690
      %s694 = smul.addr %s693, 4
      %s695 = scalar_lea.vmem %s3, %s694
      // Predicated region
      $region41: #{transformer_forward.26} parent=31 // pred_check
        %p696 = pneg %p137
      $region42: #{transformer_forward.26} parent=31 // pred_check_branch
        %698 = sbr.rel (%p696) target = $region44
      $region43: #{transformer_forward.26} parent=31 // pred_region
        _
      $region44: #{transformer_forward.26} parent=31 // pred_fallthru
        _
    $region32: #{transformer_forward.26} parent=5 // pred_fallthru
      _
    %p699 = scmp.le.s32.totalorder 2, %s9
    // Predicated region
    $region45: #{transformer_forward.26} parent=5 // pred_check
      %p700 = pneg %p699
    $region46: #{transformer_forward.26} parent=5 // pred_check_branch
      %702 = sbr.rel (%p700) target = $region48
    $region47: #{transformer_forward.26} parent=5 // pred_region
      %s703 = ssub.s32 %s9, 2
      // Predicated region
      $region49: #{transformer_forward.26} parent=47 // pred_check
        %p704 = pneg %p143
      $region50: #{transformer_forward.26} parent=47 // pred_check_branch
        %706 = sbr.rel (%p704) target = $region52
      $region51: #{transformer_forward.26} parent=47 // pred_region
        %p707 = scmp.lt.s32.totalorder %s22, 1
        %s708 = scalar_select %p707, %s22, 1
        %p709 = scmp.lt.s32.totalorder %s23, 0
        %s710 = scalar_select %p709, %s23, 0
        %s711 = sadd.s32 %s710, %s708
        %s712 = smul.addr %s711, 4
        %s713 = scalar_lea.vmem %s3, %s712
      $region52: #{transformer_forward.26} parent=47 // pred_fallthru
        _
    $region48: #{transformer_forward.26} parent=5 // pred_fallthru
      _
  $region6: #{transformer_forward.26} parent=0 // loop_footer
    %s13 = sadd.s32 1, %s9
  $region7: #{transformer_forward.26} parent=0 // loop_footer_branch
    %8 = sbr.rel target = $region3
  $region8: #{transformer_forward.26} parent=0 // loop_exit
    _

// kernel: transformer_forward.28
$region0: #{transformer_forward.28}
  #allocation0 [shape = 'u32[]', space=smem, size = 0x4, offset = 0x4, fixed_abs, tag = 'smem constant byte address 0x4 - core index']
  #allocation1 [shape = 'u32[72,128]{1,0:T(1,128)}', space=vmem, size = 0x9000, scoped, tag = 'internal scratch']
  #allocation2 [shape = 'f32[16,128]{1,0:T(8,128)}', space=vmem, size = 0x2000, scoped, tag = 'scratch operand']
  %s0 = inlined_call_operand.vmem [shape: bf16[16,128], index: 0, kind: input, shape index: {}]
  %s1 = inlined_call_operand.vmem [shape: bf16[128,256], index: 1, kind: input, shape index: {}]
  %s2 = inlined_call_operand.vmem [shape: f32[1,256], index: 2, kind: input, shape index: {}]
  %s3 = inlined_call_operand.hbm [shape: bf16[256,128], index: 3, kind: input, shape index: {}]
  %s4 = inlined_call_operand.vmem [shape: f32[1,128], index: 4, kind: input, shape index: {}]
  %s5 = inlined_call_operand.vmem [shape: f32[1,128], index: 5, kind: input, shape index: {}]
  %s6 = inlined_call_operand.vmem [shape: f32[1,128], index: 6, kind: input, shape index: {}]
  %s7 = inlined_call_operand.vmem [shape: bf16[16,128], index: 7, kind: output, shape index: {}]
  %s8 = sld [smem:[#allocation0]]
  $region50: #{transformer_forward.28} parent=0
    _
  %s10 = ssub.s32 1, %s8
  %s11 = scalar_select 0, %s10, %s8
  $region1: #{transformer_forward.28} parent=0
    #allocation3 [shape = 'u8[65536]{0}', space=vmem, size = 0x10000, scoped, tag = 'input window, operand 3, single buffered']
    #allocation4 [shape = 's32[1]{0}', space=sflag, size = 0x4, scoped, tag = 'scoped memory for transformer_forward.28']
    %12 = vsyncpa [#allocation4], 0
    // Predicated region
    $region2: #{transformer_forward.28} parent=1 // pred_check
      _
    $region3: #{transformer_forward.28} parent=1 // pred_check_branch
      %14 = sbr.rel (0) target = $region5
    $region4: #{transformer_forward.28} parent=1 // pred_region
      _
    $region5: #{transformer_forward.28} parent=1 // pred_fallthru
      _
    // Predicated region
    $region6: #{transformer_forward.28} parent=1 // pred_check
      _
    $region7: #{transformer_forward.28} parent=1 // pred_check_branch
      %16 = sbr.rel (0) target = $region9
    $region8: #{transformer_forward.28} parent=1 // pred_region
      _
    $region9: #{transformer_forward.28} parent=1 // pred_fallthru
      _
    // Predicated region
    $region10: #{transformer_forward.28} parent=1 // pred_check
      _
    $region11: #{transformer_forward.28} parent=1 // pred_check_branch
      %18 = sbr.rel (0) target = $region13
    $region12: #{transformer_forward.28} parent=1 // pred_region
      _
    $region13: #{transformer_forward.28} parent=1 // pred_fallthru
      _
    // Predicated region
    $region14: #{transformer_forward.28} parent=1 // pred_check
      _
    $region15: #{transformer_forward.28} parent=1 // pred_check_branch
      %20 = sbr.rel (0) target = $region17
    $region16: #{transformer_forward.28} parent=1 // pred_region
      %22 = vsyncadd [#allocation4], 0
      %s23 = sshll.u32 %s3, 4
      %s24 = int_to_ptr.hbm [resolvable:$true] %s23
      %s25 = sshll.u32 [#allocation3], 4
      %s26 = int_to_ptr.vmem [resolvable:$true] %s25
      %31 = dma.hbm_to_vmem [thread:$0]  %s24, 2048, %s26, [#allocation4], 64, 64, 4
    $region17: #{transformer_forward.28} parent=1 // pred_fallthru
      _
    // Predicated region
    $region18: #{transformer_forward.28} parent=1 // pred_check
      _
    $region19: #{transformer_forward.28} parent=1 // pred_check_branch
      %33 = sbr.rel (0) target = $region21
    $region20: #{transformer_forward.28} parent=1 // pred_region
      _
    $region21: #{transformer_forward.28} parent=1 // pred_fallthru
      _
    // Predicated region
    $region22: #{transformer_forward.28} parent=1 // pred_check
      _
    $region23: #{transformer_forward.28} parent=1 // pred_check_branch
      %35 = sbr.rel (0) target = $region25
    $region24: #{transformer_forward.28} parent=1 // pred_region
      _
    $region25: #{transformer_forward.28} parent=1 // pred_fallthru
      _
    // Predicated region
    $region26: #{transformer_forward.28} parent=1 // pred_check
      _
    $region27: #{transformer_forward.28} parent=1 // pred_check_branch
      %37 = sbr.rel (0) target = $region29
    $region28: #{transformer_forward.28} parent=1 // pred_region
      _
    $region29: #{transformer_forward.28} parent=1 // pred_fallthru
      _
    // Predicated region
    $region30: #{transformer_forward.28} parent=1 // pred_check
      _
    $region31: #{transformer_forward.28} parent=1 // pred_check_branch
      %39 = sbr.rel (0) target = $region33
    $region32: #{transformer_forward.28} parent=1 // pred_region
      %41 = dma.done [#allocation4], 2048
    $region33: #{transformer_forward.28} parent=1 // pred_fallthru
      _
    %p42 = scmp.eq.s32.totalorder 0, 0
    // Predicated region
    $region34: #{transformer_forward.28} parent=1 // pred_check
      %p43 = pneg %p42
    $region35: #{transformer_forward.28} parent=1 // pred_check_branch
      %45 = sbr.rel (%p43) target = $region37
    $region36: #{transformer_forward.28} parent=1 // pred_region
      %46 = vst [vmem:[#allocation2] sm:$0xff] 0.0
      %47 = vst [vmem:[#allocation2 + $0x8] sm:$0xff] 0.0
    $region37: #{transformer_forward.28} parent=1 // pred_fallthru
      _
    %v48 = vld [vmem:[%s0] sm:$0xf]
    %v49 = vld [vmem:[%s0 + $0x4] sm:$0xf]
    %v50 = vld [vmem:[%s1] sm:$0xff]
    %v51 = vld [vmem:[%s1 + $0x8] sm:$0xff]
    %v52 = vld [vmem:[%s1 + $0x10] sm:$0xff]
    %v53 = vld [vmem:[%s1 + $0x18] sm:$0xff]
    %v54 = vld [vmem:[%s1 + $0x20] sm:$0xff]
    %v55 = vld [vmem:[%s1 + $0x28] sm:$0xff]
    %v56 = vld [vmem:[%s1 + $0x30] sm:$0xff]
    %v57 = vld [vmem:[%s1 + $0x38] sm:$0xff]
    %v58 = vld [vmem:[%s1 + $0x40] sm:$0xff]
    %v59 = vld [vmem:[%s1 + $0x48] sm:$0xff]
    %v60 = vld [vmem:[%s1 + $0x50] sm:$0xff]
    %v61 = vld [vmem:[%s1 + $0x58] sm:$0xff]
    %v62 = vld [vmem:[%s1 + $0x60] sm:$0xff]
    %v63 = vld [vmem:[%s1 + $0x68] sm:$0xff]
    %v64 = vld [vmem:[%s1 + $0x70] sm:$0xff]
    %v65 = vld [vmem:[%s1 + $0x78] sm:$0xff]
    %v66 = vld [vmem:[%s2] sm:$0x3]
    %v68 = vperm.slane %v66, 0
    %v69 = vperm.slane %v66, 1
    %v74 = vunpack.c.l.b16 %v48
    %v75 = vunpack.c.l.b16 %v49
    %v76 = vpack.c.b16 %v75, %v74
    %v94 = vunpack.c.l.b16 %v50
    %v95 = vunpack.c.h.b16 %v50
    %v96 = vunpack.c.l.b16 %v51
    %v97 = vunpack.c.h.b16 %v51
    %v98 = vunpack.c.l.b16 %v52
    %v99 = vunpack.c.h.b16 %v52
    %v100 = vunpack.c.l.b16 %v53
    %v101 = vunpack.c.h.b16 %v53
    %v102 = vunpack.c.l.b16 %v54
    %v103 = vunpack.c.h.b16 %v54
    %v104 = vunpack.c.l.b16 %v55
    %v105 = vunpack.c.h.b16 %v55
    %v106 = vunpack.c.l.b16 %v56
    %v107 = vunpack.c.h.b16 %v56
    %v108 = vunpack.c.l.b16 %v57
    %v109 = vunpack.c.h.b16 %v57
    %v110 = vunpack.c.l.b16 %v58
    %v111 = vunpack.c.h.b16 %v58
    %v112 = vunpack.c.l.b16 %v59
    %v113 = vunpack.c.h.b16 %v59
    %v114 = vunpack.c.l.b16 %v60
    %v115 = vunpack.c.h.b16 %v60
    %v116 = vunpack.c.l.b16 %v61
    %v117 = vunpack.c.h.b16 %v61
    %v118 = vunpack.c.l.b16 %v62
    %v119 = vunpack.c.h.b16 %v62
    %v120 = vunpack.c.l.b16 %v63
    %v121 = vunpack.c.h.b16 %v63
    %v122 = vunpack.c.l.b16 %v64
    %v123 = vunpack.c.h.b16 %v64
    %v124 = vunpack.c.l.b16 %v65
    %v125 = vunpack.c.h.b16 %v65
    %v126 = vpack.c.b16 %v96, %v94
    %v127 = vpack.c.b16 %v97, %v95
    %v128 = vpack.c.b16 %v100, %v98
    %v129 = vpack.c.b16 %v101, %v99
    %v130 = vpack.c.b16 %v104, %v102
    %v131 = vpack.c.b16 %v105, %v103
    %v132 = vpack.c.b16 %v108, %v106
    %v133 = vpack.c.b16 %v109, %v107
    %v134 = vpack.c.b16 %v112, %v110
    %v135 = vpack.c.b16 %v113, %v111
    %v136 = vpack.c.b16 %v116, %v114
    %v137 = vpack.c.b16 %v117, %v115
    %v138 = vpack.c.b16 %v120, %v118
    %v139 = vpack.c.b16 %v121, %v119
    %v140 = vpack.c.b16 %v124, %v122
    %v141 = vpack.c.b16 %v125, %v123
    %158 = vmatpush.bf16.msra.mxu0 %v140
    %159 = vmatpush.bf16.msra.mxu0 %v138
    %160 = vmatpush.bf16.msra.mxu0 %v136
    %161 = vmatpush.bf16.msra.mxu0 %v134
    %162 = vmatpush.bf16.msra.mxu0 %v132
    %163 = vmatpush.bf16.msra.mxu0 %v130
    %164 = vmatpush.bf16.msra.mxu0 %v128
    %165 = vmatpush.bf16.msra.mxu0 %v126
    %166 = vmatmul.bf16.gmra.mxu0 %v76
    %v167 = vpop.f32.mrf.mxu0
    %v168 = vadd.f32 %v68, %v167
    %v169 = vpop.f32.mrf.mxu0
    %v170 = vadd.f32 %v68, %v169
    %171 = vdwg.mxu0
    %172 = vmatpush.bf16.msra.mxu0 %v141
    %173 = vmatpush.bf16.msra.mxu0 %v139
    %174 = vmatpush.bf16.msra.mxu0 %v137
    %175 = vmatpush.bf16.msra.mxu0 %v135
    %176 = vmatpush.bf16.msra.mxu0 %v133
    %177 = vmatpush.bf16.msra.mxu0 %v131
    %178 = vmatpush.bf16.msra.mxu0 %v129
    %179 = vmatpush.bf16.msra.mxu0 %v127
    %180 = vmatmul.bf16.gmra.mxu0 %v76
    %v181 = vpop.f32.mrf.mxu0
    %v182 = vadd.f32 %v69, %v181
    %v183 = vpop.f32.mrf.mxu0
    %v184 = vadd.f32 %v69, %v183
    %185 = vdwg.mxu0
    %v186 = vmax.f32 %v168, 0.0
    %v187 = vmax.f32 %v182, 0.0
    %v188 = vmax.f32 %v170, 0.0
    %v189 = vmax.f32 %v184, 0.0
    %v190 = vld [vmem:[#allocation2] sm:$0xff]
    %v191 = vld [vmem:[#allocation2 + $0x8] sm:$0xff]
    %v192 = vpack.c.bf16 %v188, %v186
    %v193 = vpack.c.bf16 %v189, %v187
    %v194 = vld [vmem:[#allocation3] sm:$0xf]
    %v195 = vld [vmem:[#allocation3 + $0x4] sm:$0xf]
    %v196 = vld [vmem:[#allocation3 + $0x8] sm:$0xf]
    %v197 = vld [vmem:[#allocation3 + $0xc] sm:$0xf]
    %v198 = vld [vmem:[#allocation3 + $0x10] sm:$0xf]
    %v199 = vld [vmem:[#allocation3 + $0x14] sm:$0xf]
    %v200 = vld [vmem:[#allocation3 + $0x18] sm:$0xf]
    %v201 = vld [vmem:[#allocation3 + $0x1c] sm:$0xf]
    %v202 = vld [vmem:[#allocation3 + $0x20] sm:$0xf]
    %v203 = vld [vmem:[#allocation3 + $0x24] sm:$0xf]
    %v204 = vld [vmem:[#allocation3 + $0x28] sm:$0xf]
    %v205 = vld [vmem:[#allocation3 + $0x2c] sm:$0xf]
    %v206 = vld [vmem:[#allocation3 + $0x30] sm:$0xf]
    %v207 = vld [vmem:[#allocation3 + $0x34] sm:$0xf]
    %v208 = vld [vmem:[#allocation3 + $0x38] sm:$0xf]
    %v209 = vld [vmem:[#allocation3 + $0x3c] sm:$0xf]
    %v210 = vld [vmem:[#allocation3 + $0x40] sm:$0xf]
    %v211 = vld [vmem:[#allocation3 + $0x44] sm:$0xf]
    %v212 = vld [vmem:[#allocation3 + $0x48] sm:$0xf]
    %v213 = vld [vmem:[#allocation3 + $0x4c] sm:$0xf]
    %v214 = vld [vmem:[#allocation3 + $0x50] sm:$0xf]
    %v215 = vld [vmem:[#allocation3 + $0x54] sm:$0xf]
    %v216 = vld [vmem:[#allocation3 + $0x58] sm:$0xf]
    %v217 = vld [vmem:[#allocation3 + $0x5c] sm:$0xf]
    %v218 = vld [vmem:[#allocation3 + $0x60] sm:$0xf]
    %v219 = vld [vmem:[#allocation3 + $0x64] sm:$0xf]
    %v220 = vld [vmem:[#allocation3 + $0x68] sm:$0xf]
    %v221 = vld [vmem:[#allocation3 + $0x6c] sm:$0xf]
    %v222 = vld [vmem:[#allocation3 + $0x70] sm:$0xf]
    %v223 = vld [vmem:[#allocation3 + $0x74] sm:$0xf]
    %v224 = vld [vmem:[#allocation3 + $0x78] sm:$0xf]
    %v225 = vld [vmem:[#allocation3 + $0x7c] sm:$0xf]
    %v258 = vunpack.c.l.b16 %v194
    %v259 = vunpack.c.l.b16 %v195
    %v260 = vunpack.c.l.b16 %v196
    %v261 = vunpack.c.l.b16 %v197
    %v262 = vunpack.c.l.b16 %v198
    %v263 = vunpack.c.l.b16 %v199
    %v264 = vunpack.c.l.b16 %v200
    %v265 = vunpack.c.l.b16 %v201
    %v266 = vunpack.c.l.b16 %v202
    %v267 = vunpack.c.l.b16 %v203
    %v268 = vunpack.c.l.b16 %v204
    %v269 = vunpack.c.l.b16 %v205
    %v270 = vunpack.c.l.b16 %v206
    %v271 = vunpack.c.l.b16 %v207
    %v272 = vunpack.c.l.b16 %v208
    %v273 = vunpack.c.l.b16 %v209
    %v274 = vunpack.c.l.b16 %v210
    %v275 = vunpack.c.l.b16 %v211
    %v276 = vunpack.c.l.b16 %v212
    %v277 = vunpack.c.l.b16 %v213
    %v278 = vunpack.c.l.b16 %v214
    %v279 = vunpack.c.l.b16 %v215
    %v280 = vunpack.c.l.b16 %v216
    %v281 = vunpack.c.l.b16 %v217
    %v282 = vunpack.c.l.b16 %v218
    %v283 = vunpack.c.l.b16 %v219
    %v284 = vunpack.c.l.b16 %v220
    %v285 = vunpack.c.l.b16 %v221
    %v286 = vunpack.c.l.b16 %v222
    %v287 = vunpack.c.l.b16 %v223
    %v288 = vunpack.c.l.b16 %v224
    %v289 = vunpack.c.l.b16 %v225
    %v290 = vpack.c.b16 %v259, %v258
    %v291 = vpack.c.b16 %v261, %v260
    %v292 = vpack.c.b16 %v263, %v262
    %v293 = vpack.c.b16 %v265, %v264
    %v294 = vpack.c.b16 %v267, %v266
    %v295 = vpack.c.b16 %v269, %v268
    %v296 = vpack.c.b16 %v271, %v270
    %v297 = vpack.c.b16 %v273, %v272
    %v298 = vpack.c.b16 %v275, %v274
    %v299 = vpack.c.b16 %v277, %v276
    %v300 = vpack.c.b16 %v279, %v278
    %v301 = vpack.c.b16 %v281, %v280
    %v302 = vpack.c.b16 %v283, %v282
    %v303 = vpack.c.b16 %v285, %v284
    %v304 = vpack.c.b16 %v287, %v286
    %v305 = vpack.c.b16 %v289, %v288
    %322 = vmatpush.bf16.msra.mxu0 %v297
    %323 = vmatpush.bf16.msra.mxu0 %v296
    %324 = vmatpush.bf16.msra.mxu0 %v295
    %325 = vmatpush.bf16.msra.mxu0 %v294
    %326 = vmatpush.bf16.msra.mxu0 %v293
    %327 = vmatpush.bf16.msra.mxu0 %v292
    %328 = vmatpush.bf16.msra.mxu0 %v291
    %329 = vmatpush.bf16.msra.mxu0 %v290
    %330 = vmatmul.bf16.gmra.mxu0 %v192
    %v331 = vpop.f32.mrf.mxu0
    %v332 = vadd.f32 0.0, %v331
    %v333 = vpop.f32.mrf.mxu0
    %v334 = vadd.f32 0.0, %v333
    %335 = vdwg.mxu0
    %336 = vmatpush.bf16.msra.mxu0 %v305
    %337 = vmatpush.bf16.msra.mxu0 %v304
    %338 = vmatpush.bf16.msra.mxu0 %v303
    %339 = vmatpush.bf16.msra.mxu0 %v302
    %340 = vmatpush.bf16.msra.mxu0 %v301
    %341 = vmatpush.bf16.msra.mxu0 %v300
    %342 = vmatpush.bf16.msra.mxu0 %v299
    %343 = vmatpush.bf16.msra.mxu0 %v298
    %344 = vmatmul.bf16.gmra.mxu0 %v193
    %v345 = vpop.f32.mrf.mxu0
    %v346 = vadd.f32 %v332, %v345
    %v347 = vpop.f32.mrf.mxu0
    %v348 = vadd.f32 %v334, %v347
    %349 = vdwg.mxu0
    %v350 = vadd.f32 %v190, %v346
    %v351 = vadd.f32 %v191, %v348
    %352 = vst [vmem:[#allocation2] sm:$0xff] %v350
    %353 = vst [vmem:[#allocation2 + $0x8] sm:$0xff] %v351
    // Predicated region
    $region38: #{transformer_forward.28} parent=1 // pred_check
      %p354 = pneg %p42
    $region39: #{transformer_forward.28} parent=1 // pred_check_branch
      %356 = sbr.rel (%p354) target = $region41
    $region40: #{transformer_forward.28} parent=1 // pred_region
      %v357 = vld [vmem:[#allocation2] sm:$0xff]
      %v358 = vld [vmem:[#allocation2 + $0x8] sm:$0xff]
      %v359 = vld [vmem:[%s4] sm:$0x1]
      %v361 = vperm.slane %v359, 0
      %v363 = vadd.f32 %v357, %v361
      %v364 = vadd.f32 %v358, %v361
      %v365 = vld [vmem:[%s0] sm:$0xf]
      %v366 = vld [vmem:[%s0 + $0x4] sm:$0xf]
      %v367 = vunpack.c.l.bf16 %v365
      %v368 = vunpack.c.l.bf16 %v366
      %v369 = vadd.f32 %v363, %v367
      %v370 = vadd.f32 %v364, %v368
      %371 = vadd.xlane.f32.xlu0 %v369
      %v372 = vpop.xlane.xlu0 %371
      %373 = vadd.xlane.f32.xlu0 %v370
      %v374 = vpop.xlane.xlu0 %373
      %v375 = vrcp.pop 128.0
      %v376 = vmul.f32 128.0, %v375
      %v377 = vsub.f32 1.0, %v376
      %v378 = vmul.f32 %v375, %v377
      %v379 = vadd.f32 %v375, %v378
      %vm380 = vweird.f32 %v375
      %v381 = vsel %vm380, %v375, %v379
      %v382 = vmul.f32 %v372, %v381
      %v383 = vmul.f32 %v374, %v381
      %v384 = vsub.f32 %v369, %v382
      %v385 = vsub.f32 %v370, %v383
      %v386 = vmul.f32 %v384, %v384
      %v387 = vmul.f32 %v385, %v385
      %388 = vadd.xlane.f32.xlu0 %v386
      %v389 = vpop.xlane.xlu0 %388
      %390 = vadd.xlane.f32.xlu0 %v387
      %v391 = vpop.xlane.xlu0 %390
      %v392 = vmul.f32 %v389, %v381
      %v393 = vmul.f32 %v391, %v381
      %v394 = vadd.f32 %v392, 1e-05
      %v395 = vadd.f32 %v393, 1e-05
      %v396 = vrsqrt.pop %v394
      %v397 = vmul.f32 %v396, %v394
      %v398 = vmul.f32 %v397, %v396
      %v399 = vmul.f32 0.5, %v398
      %v400 = vsub.f32 1.5, %v399
      %v401 = vmul.f32 %v396, %v400
      %vm402 = vweird.f32 %v394
      %vm403 = vweird.f32 %v396
      %vm404 = vmor %vm402, %vm403
      %v405 = vsel %vm404, %v396, %v401
      %v406 = vrsqrt.pop %v395
      %v407 = vmul.f32 %v406, %v395
      %v408 = vmul.f32 %v407, %v406
      %v409 = vmul.f32 0.5, %v408
      %v410 = vsub.f32 1.5, %v409
      %v411 = vmul.f32 %v406, %v410
      %vm412 = vweird.f32 %v395
      %vm413 = vweird.f32 %v406
      %vm414 = vmor %vm412, %vm413
      %v415 = vsel %vm414, %v406, %v411
      %v416 = vmul.f32 %v384, %v405
      %v417 = vmul.f32 %v385, %v415
      %v418 = vld [vmem:[%s5] sm:$0x1]
      %v420 = vperm.slane %v418, 0
      %v422 = vmul.f32 %v416, %v420
      %v423 = vmul.f32 %v417, %v420
      %v424 = vld [vmem:[%s6] sm:$0x1]
      %v426 = vperm.slane %v424, 0
      %v428 = vadd.f32 %v422, %v426
      %v429 = vadd.f32 %v423, %v426
      %v430 = vpack.c.bf16 %v428, %v428
      %v431 = vpack.c.bf16 %v429, %v429
      %432 = vst [vmem:[%s7] sm:$0xf] %v430
      %433 = vst [vmem:[%s7 + $0x4] sm:$0xf] %v431
    $region41: #{transformer_forward.28} parent=1 // pred_fallthru
      _
    // Predicated region
    $region42: #{transformer_forward.28} parent=1 // pred_check
      _
    $region43: #{transformer_forward.28} parent=1 // pred_check_branch
      %435 = sbr.rel (0) target = $region45
    $region44: #{transformer_forward.28} parent=1 // pred_region
      _
    $region45: #{transformer_forward.28} parent=1 // pred_fallthru
      _
    // Predicated region
    $region46: #{transformer_forward.28} parent=1 // pred_check
      _
    $region47: #{transformer_forward.28} parent=1 // pred_check_branch
      %437 = sbr.rel (0) target = $region49
    $region48: #{transformer_forward.28} parent=1 // pred_region
      _
    $region49: #{transformer_forward.28} parent=1 // pred_fallthru
      _
    %438 = vsyncpa [#allocation4], 1

// kernel: transformer_forward.31
$region0: #{transformer_forward.31}
  #allocation0 [shape = 'u32[]', space=smem, size = 0x4, offset = 0x4, fixed_abs, tag = 'smem constant byte address 0x4 - core index']
  #allocation1 [shape = 'u32[72,128]{1,0:T(1,128)}', space=vmem, size = 0x9000, scoped, tag = 'internal scratch']
  #allocation2 [shape = 'f32[16,128]{1,0:T(8,128)}', space=vmem, size = 0x2000, scoped, tag = 'scratch operand']
  %s0 = inlined_call_operand.vmem [shape: bf16[16,128], index: 0, kind: input, shape index: {}]
  %s1 = inlined_call_operand.hbm [shape: bf16[128,128], index: 1, kind: input, shape index: {}]
  %s2 = inlined_call_operand.vmem [shape: f32[1,128], index: 2, kind: input, shape index: {}]
  %s3 = inlined_call_operand.vmem [shape: bf16[16,128], index: 3, kind: input, shape index: {}]
  %s4 = inlined_call_operand.vmem [shape: f32[1,128], index: 4, kind: input, shape index: {}]
  %s5 = inlined_call_operand.vmem [shape: f32[1,128], index: 5, kind: input, shape index: {}]
  %s6 = inlined_call_operand.vmem [shape: bf16[16,128], index: 6, kind: output, shape index: {}]
  %s7 = sld [smem:[#allocation0]]
  $region46: #{transformer_forward.31} parent=0
    _
  %s9 = ssub.s32 1, %s7
  %s10 = scalar_select 0, %s9, %s7
  $region1: #{transformer_forward.31} parent=0
    #allocation3 [shape = 'u8[32768]{0}', space=vmem, size = 0x8000, scoped, tag = 'input window, operand 1, single buffered']
    #allocation4 [shape = 's32[1]{0}', space=sflag, size = 0x4, scoped, tag = 'scoped memory for transformer_forward.31']
    %11 = vsyncpa [#allocation4], 0
    // Predicated region
    $region2: #{transformer_forward.31} parent=1 // pred_check
      _
    $region3: #{transformer_forward.31} parent=1 // pred_check_branch
      %13 = sbr.rel (0) target = $region5
    $region4: #{transformer_forward.31} parent=1 // pred_region
      _
    $region5: #{transformer_forward.31} parent=1 // pred_fallthru
      _
    // Predicated region
    $region6: #{transformer_forward.31} parent=1 // pred_check
      _
    $region7: #{transformer_forward.31} parent=1 // pred_check_branch
      %15 = sbr.rel (0) target = $region9
    $region8: #{transformer_forward.31} parent=1 // pred_region
      %17 = vsyncadd [#allocation4], 0
      %s18 = sshll.u32 %s1, 4
      %s19 = int_to_ptr.hbm [resolvable:$true] %s18
      %s20 = sshll.u32 [#allocation3], 4
      %s21 = int_to_ptr.vmem [resolvable:$true] %s20
      %26 = dma.hbm_to_vmem [thread:$0]  %s19, 1024, %s21, [#allocation4], 64, 64, 4
    $region9: #{transformer_forward.31} parent=1 // pred_fallthru
      _
    // Predicated region
    $region10: #{transformer_forward.31} parent=1 // pred_check
      _
    $region11: #{transformer_forward.31} parent=1 // pred_check_branch
      %28 = sbr.rel (0) target = $region13
    $region12: #{transformer_forward.31} parent=1 // pred_region
      _
    $region13: #{transformer_forward.31} parent=1 // pred_fallthru
      _
    // Predicated region
    $region14: #{transformer_forward.31} parent=1 // pred_check
      _
    $region15: #{transformer_forward.31} parent=1 // pred_check_branch
      %30 = sbr.rel (0) target = $region17
    $region16: #{transformer_forward.31} parent=1 // pred_region
      _
    $region17: #{transformer_forward.31} parent=1 // pred_fallthru
      _
    // Predicated region
    $region18: #{transformer_forward.31} parent=1 // pred_check
      _
    $region19: #{transformer_forward.31} parent=1 // pred_check_branch
      %32 = sbr.rel (0) target = $region21
    $region20: #{transformer_forward.31} parent=1 // pred_region
      _
    $region21: #{transformer_forward.31} parent=1 // pred_fallthru
      _
    // Predicated region
    $region22: #{transformer_forward.31} parent=1 // pred_check
      _
    $region23: #{transformer_forward.31} parent=1 // pred_check_branch
      %34 = sbr.rel (0) target = $region25
    $region24: #{transformer_forward.31} parent=1 // pred_region
      _
    $region25: #{transformer_forward.31} parent=1 // pred_fallthru
      _
    // Predicated region
    $region26: #{transformer_forward.31} parent=1 // pred_check
      _
    $region27: #{transformer_forward.31} parent=1 // pred_check_branch
      %36 = sbr.rel (0) target = $region29
    $region28: #{transformer_forward.31} parent=1 // pred_region
      %38 = dma.done [#allocation4], 1024
    $region29: #{transformer_forward.31} parent=1 // pred_fallthru
      _
    %p39 = scmp.eq.s32.totalorder 0, 0
    // Predicated region
    $region30: #{transformer_forward.31} parent=1 // pred_check
      %p40 = pneg %p39
    $region31: #{transformer_forward.31} parent=1 // pred_check_branch
      %42 = sbr.rel (%p40) target = $region33
    $region32: #{transformer_forward.31} parent=1 // pred_region
      %43 = vst [vmem:[#allocation2] sm:$0xff] 0.0
      %44 = vst [vmem:[#allocation2 + $0x8] sm:$0xff] 0.0
    $region33: #{transformer_forward.31} parent=1 // pred_fallthru
      _
    %v45 = vld [vmem:[#allocation2] sm:$0xff]
    %v46 = vld [vmem:[#allocation2 + $0x8] sm:$0xff]
    %v47 = vld [vmem:[%s0] sm:$0xf]
    %v48 = vld [vmem:[%s0 + $0x4] sm:$0xf]
    %v49 = vld [vmem:[#allocation3] sm:$0xf]
    %v50 = vld [vmem:[#allocation3 + $0x4] sm:$0xf]
    %v51 = vld [vmem:[#allocation3 + $0x8] sm:$0xf]
    %v52 = vld [vmem:[#allocation3 + $0xc] sm:$0xf]
    %v53 = vld [vmem:[#allocation3 + $0x10] sm:$0xf]
    %v54 = vld [vmem:[#allocation3 + $0x14] sm:$0xf]
    %v55 = vld [vmem:[#allocation3 + $0x18] sm:$0xf]
    %v56 = vld [vmem:[#allocation3 + $0x1c] sm:$0xf]
    %v57 = vld [vmem:[#allocation3 + $0x20] sm:$0xf]
    %v58 = vld [vmem:[#allocation3 + $0x24] sm:$0xf]
    %v59 = vld [vmem:[#allocation3 + $0x28] sm:$0xf]
    %v60 = vld [vmem:[#allocation3 + $0x2c] sm:$0xf]
    %v61 = vld [vmem:[#allocation3 + $0x30] sm:$0xf]
    %v62 = vld [vmem:[#allocation3 + $0x34] sm:$0xf]
    %v63 = vld [vmem:[#allocation3 + $0x38] sm:$0xf]
    %v64 = vld [vmem:[#allocation3 + $0x3c] sm:$0xf]
    %v67 = vunpack.c.l.b16 %v47
    %v68 = vunpack.c.l.b16 %v48
    %v69 = vpack.c.b16 %v68, %v67
    %v87 = vunpack.c.l.b16 %v49
    %v88 = vunpack.c.l.b16 %v50
    %v89 = vunpack.c.l.b16 %v51
    %v90 = vunpack.c.l.b16 %v52
    %v91 = vunpack.c.l.b16 %v53
    %v92 = vunpack.c.l.b16 %v54
    %v93 = vunpack.c.l.b16 %v55
    %v94 = vunpack.c.l.b16 %v56
    %v95 = vunpack.c.l.b16 %v57
    %v96 = vunpack.c.l.b16 %v58
    %v97 = vunpack.c.l.b16 %v59
    %v98 = vunpack.c.l.b16 %v60
    %v99 = vunpack.c.l.b16 %v61
    %v100 = vunpack.c.l.b16 %v62
    %v101 = vunpack.c.l.b16 %v63
    %v102 = vunpack.c.l.b16 %v64
    %v103 = vpack.c.b16 %v88, %v87
    %v104 = vpack.c.b16 %v90, %v89
    %v105 = vpack.c.b16 %v92, %v91
    %v106 = vpack.c.b16 %v94, %v93
    %v107 = vpack.c.b16 %v96, %v95
    %v108 = vpack.c.b16 %v98, %v97
    %v109 = vpack.c.b16 %v100, %v99
    %v110 = vpack.c.b16 %v102, %v101
    %119 = vmatpush.bf16.msra.mxu0 %v110
    %120 = vmatpush.bf16.msra.mxu0 %v109
    %121 = vmatpush.bf16.msra.mxu0 %v108
    %122 = vmatpush.bf16.msra.mxu0 %v107
    %123 = vmatpush.bf16.msra.mxu0 %v106
    %124 = vmatpush.bf16.msra.mxu0 %v105
    %125 = vmatpush.bf16.msra.mxu0 %v104
    %126 = vmatpush.bf16.msra.mxu0 %v103
    %127 = vmatmul.bf16.gmra.mxu0 %v69
    %v128 = vpop.f32.mrf.mxu0
    %v129 = vadd.f32 0.0, %v128
    %v130 = vpop.f32.mrf.mxu0
    %v131 = vadd.f32 0.0, %v130
    %132 = vdwg.mxu0
    %v133 = vadd.f32 %v45, %v129
    %v134 = vadd.f32 %v46, %v131
    %135 = vst [vmem:[#allocation2] sm:$0xff] %v133
    %136 = vst [vmem:[#allocation2 + $0x8] sm:$0xff] %v134
    // Predicated region
    $region34: #{transformer_forward.31} parent=1 // pred_check
      %p137 = pneg %p39
    $region35: #{transformer_forward.31} parent=1 // pred_check_branch
      %139 = sbr.rel (%p137) target = $region37
    $region36: #{transformer_forward.31} parent=1 // pred_region
      %v140 = vld [vmem:[#allocation2] sm:$0xff]
      %v141 = vld [vmem:[#allocation2 + $0x8] sm:$0xff]
      %v142 = vld [vmem:[%s2] sm:$0x1]
      %v144 = vperm.slane %v142, 0
      %v146 = vadd.f32 %v140, %v144
      %v147 = vadd.f32 %v141, %v144
      %v148 = vld [vmem:[%s3] sm:$0xf]
      %v149 = vld [vmem:[%s3 + $0x4] sm:$0xf]
      %v150 = vunpack.c.l.bf16 %v148
      %v151 = vunpack.c.l.bf16 %v149
      %v152 = vadd.f32 %v146, %v150
      %v153 = vadd.f32 %v147, %v151
      %154 = vadd.xlane.f32.xlu0 %v152
      %v155 = vpop.xlane.xlu0 %154
      %156 = vadd.xlane.f32.xlu0 %v153
      %v157 = vpop.xlane.xlu0 %156
      %v158 = vrcp.pop 128.0
      %v159 = vmul.f32 128.0, %v158
      %v160 = vsub.f32 1.0, %v159
      %v161 = vmul.f32 %v158, %v160
      %v162 = vadd.f32 %v158, %v161
      %vm163 = vweird.f32 %v158
      %v164 = vsel %vm163, %v158, %v162
      %v165 = vmul.f32 %v155, %v164
      %v166 = vmul.f32 %v157, %v164
      %v167 = vsub.f32 %v152, %v165
      %v168 = vsub.f32 %v153, %v166
      %v169 = vmul.f32 %v167, %v167
      %v170 = vmul.f32 %v168, %v168
      %171 = vadd.xlane.f32.xlu0 %v169
      %v172 = vpop.xlane.xlu0 %171
      %173 = vadd.xlane.f32.xlu0 %v170
      %v174 = vpop.xlane.xlu0 %173
      %v175 = vmul.f32 %v172, %v164
      %v176 = vmul.f32 %v174, %v164
      %v177 = vadd.f32 %v175, 1e-05
      %v178 = vadd.f32 %v176, 1e-05
      %v179 = vrsqrt.pop %v177
      %v180 = vmul.f32 %v179, %v177
      %v181 = vmul.f32 %v180, %v179
      %v182 = vmul.f32 0.5, %v181
      %v183 = vsub.f32 1.5, %v182
      %v184 = vmul.f32 %v179, %v183
      %vm185 = vweird.f32 %v177
      %vm186 = vweird.f32 %v179
      %vm187 = vmor %vm185, %vm186
      %v188 = vsel %vm187, %v179, %v184
      %v189 = vrsqrt.pop %v178
      %v190 = vmul.f32 %v189, %v178
      %v191 = vmul.f32 %v190, %v189
      %v192 = vmul.f32 0.5, %v191
      %v193 = vsub.f32 1.5, %v192
      %v194 = vmul.f32 %v189, %v193
      %vm195 = vweird.f32 %v178
      %vm196 = vweird.f32 %v189
      %vm197 = vmor %vm195, %vm196
      %v198 = vsel %vm197, %v189, %v194
      %v199 = vmul.f32 %v167, %v188
      %v200 = vmul.f32 %v168, %v198
      %v201 = vld [vmem:[%s4] sm:$0x1]
      %v203 = vperm.slane %v201, 0
      %v205 = vmul.f32 %v199, %v203
      %v206 = vmul.f32 %v200, %v203
      %v207 = vld [vmem:[%s5] sm:$0x1]
      %v209 = vperm.slane %v207, 0
      %v211 = vadd.f32 %v205, %v209
      %v212 = vadd.f32 %v206, %v209
      %v213 = vpack.c.bf16 %v211, %v211
      %v214 = vpack.c.bf16 %v212, %v212
      %215 = vst [vmem:[%s6] sm:$0xf] %v213
      %216 = vst [vmem:[%s6 + $0x4] sm:$0xf] %v214
    $region37: #{transformer_forward.31} parent=1 // pred_fallthru
      _
    // Predicated region
    $region38: #{transformer_forward.31} parent=1 // pred_check
      _
    $region39: #{transformer_forward.31} parent=1 // pred_check_branch
      %218 = sbr.rel (0) target = $region41
    $region40: #{transformer_forward.31} parent=1 // pred_region
      _
    $region41: #{transformer_forward.31} parent=1 // pred_fallthru
      _
    // Predicated region
    $region42: #{transformer_forward.31} parent=1 // pred_check
      _
    $region43: #{transformer_forward.31} parent=1 // pred_check_branch
      %220 = sbr.rel (0) target = $region45
    $region44: #{transformer_forward.31} parent=1 // pred_region
      _
    $region45: #{transformer_forward.31} parent=1 // pred_fallthru
      _
    %221 = vsyncpa [#allocation4], 1

// kernel: transformer_forward.37
$region0: #{transformer_forward.37}
  #allocation0 [shape = 'u32[]', space=smem, size = 0x4, offset = 0x4, fixed_abs, tag = 'smem constant byte address 0x4 - core index']
  #allocation1 [shape = 'u32[72,128]{1,0:T(1,128)}', space=vmem, size = 0x9000, scoped, tag = 'internal scratch']
  #allocation2 [shape = 'f32[16,256]{1,0:T(8,128)}', space=vmem, size = 0x4000, scoped, tag = 'scratch operand']
  %s0 = inlined_call_operand.vmem [shape: bf16[16,128], index: 0, kind: input, shape index: {}]
  %s1 = inlined_call_operand.vmem [shape: bf16[128,256], index: 1, kind: input, shape index: {}]
  %s2 = inlined_call_operand.vmem [shape: f32[1,256], index: 2, kind: input, shape index: {}]
  %s3 = inlined_call_operand.vmem [shape: bf16[16,256], index: 3, kind: output, shape index: {}]
  %s4 = sld [smem:[#allocation0]]
  $region30: #{transformer_forward.37} parent=0
    _
  %s6 = ssub.s32 1, %s4
  %s7 = scalar_select 0, %s6, %s4
  // Predicated region
  $region2: #{transformer_forward.37} parent=0 // pred_check
    _
  $region3: #{transformer_forward.37} parent=0 // pred_check_branch
    %9 = sbr.rel (0) target = $region5
  $region4: #{transformer_forward.37} parent=0 // pred_region
    _
  $region5: #{transformer_forward.37} parent=0 // pred_fallthru
    _
  // Predicated region
  $region6: #{transformer_forward.37} parent=0 // pred_check
    _
  $region7: #{transformer_forward.37} parent=0 // pred_check_branch
    %11 = sbr.rel (0) target = $region9
  $region8: #{transformer_forward.37} parent=0 // pred_region
    _
  $region9: #{transformer_forward.37} parent=0 // pred_fallthru
    _
  // Predicated region
  $region10: #{transformer_forward.37} parent=0 // pred_check
    _
  $region11: #{transformer_forward.37} parent=0 // pred_check_branch
    %13 = sbr.rel (0) target = $region13
  $region12: #{transformer_forward.37} parent=0 // pred_region
    _
  $region13: #{transformer_forward.37} parent=0 // pred_fallthru
    _
  %p14 = scmp.eq.s32.totalorder 0, 0
  // Predicated region
  $region14: #{transformer_forward.37} parent=0 // pred_check
    %p15 = pneg %p14
  $region15: #{transformer_forward.37} parent=0 // pred_check_branch
    %17 = sbr.rel (%p15) target = $region17
  $region16: #{transformer_forward.37} parent=0 // pred_region
    %18 = vst [vmem:[#allocation2] sm:$0xff] 0.0
    %19 = vst [vmem:[#allocation2 + $0x8] sm:$0xff] 0.0
    %20 = vst [vmem:[#allocation2 + $0x10] sm:$0xff] 0.0
    %21 = vst [vmem:[#allocation2 + $0x18] sm:$0xff] 0.0
  $region17: #{transformer_forward.37} parent=0 // pred_fallthru
    _
  %v22 = vld [vmem:[#allocation2] sm:$0xff]
  %v23 = vld [vmem:[#allocation2 + $0x8] sm:$0xff]
  %v24 = vld [vmem:[#allocation2 + $0x10] sm:$0xff]
  %v25 = vld [vmem:[#allocation2 + $0x18] sm:$0xff]
  %v26 = vld [vmem:[%s0] sm:$0xf]
  %v27 = vld [vmem:[%s0 + $0x4] sm:$0xf]
  %v28 = vld [vmem:[%s1] sm:$0xff]
  %v29 = vld [vmem:[%s1 + $0x8] sm:$0xff]
  %v30 = vld [vmem:[%s1 + $0x10] sm:$0xff]
  %v31 = vld [vmem:[%s1 + $0x18] sm:$0xff]
  %v32 = vld [vmem:[%s1 + $0x20] sm:$0xff]
  %v33 = vld [vmem:[%s1 + $0x28] sm:$0xff]
  %v34 = vld [vmem:[%s1 + $0x30] sm:$0xff]
  %v35 = vld [vmem:[%s1 + $0x38] sm:$0xff]
  %v36 = vld [vmem:[%s1 + $0x40] sm:$0xff]
  %v37 = vld [vmem:[%s1 + $0x48] sm:$0xff]
  %v38 = vld [vmem:[%s1 + $0x50] sm:$0xff]
  %v39 = vld [vmem:[%s1 + $0x58] sm:$0xff]
  %v40 = vld [vmem:[%s1 + $0x60] sm:$0xff]
  %v41 = vld [vmem:[%s1 + $0x68] sm:$0xff]
  %v42 = vld [vmem:[%s1 + $0x70] sm:$0xff]
  %v43 = vld [vmem:[%s1 + $0x78] sm:$0xff]
  %v46 = vunpack.c.l.b16 %v26
  %v47 = vunpack.c.l.b16 %v27
  %v48 = vpack.c.b16 %v47, %v46
  %v66 = vunpack.c.l.b16 %v28
  %v67 = vunpack.c.h.b16 %v28
  %v68 = vunpack.c.l.b16 %v29
  %v69 = vunpack.c.h.b16 %v29
  %v70 = vunpack.c.l.b16 %v30
  %v71 = vunpack.c.h.b16 %v30
  %v72 = vunpack.c.l.b16 %v31
  %v73 = vunpack.c.h.b16 %v31
  %v74 = vunpack.c.l.b16 %v32
  %v75 = vunpack.c.h.b16 %v32
  %v76 = vunpack.c.l.b16 %v33
  %v77 = vunpack.c.h.b16 %v33
  %v78 = vunpack.c.l.b16 %v34
  %v79 = vunpack.c.h.b16 %v34
  %v80 = vunpack.c.l.b16 %v35
  %v81 = vunpack.c.h.b16 %v35
  %v82 = vunpack.c.l.b16 %v36
  %v83 = vunpack.c.h.b16 %v36
  %v84 = vunpack.c.l.b16 %v37
  %v85 = vunpack.c.h.b16 %v37
  %v86 = vunpack.c.l.b16 %v38
  %v87 = vunpack.c.h.b16 %v38
  %v88 = vunpack.c.l.b16 %v39
  %v89 = vunpack.c.h.b16 %v39
  %v90 = vunpack.c.l.b16 %v40
  %v91 = vunpack.c.h.b16 %v40
  %v92 = vunpack.c.l.b16 %v41
  %v93 = vunpack.c.h.b16 %v41
  %v94 = vunpack.c.l.b16 %v42
  %v95 = vunpack.c.h.b16 %v42
  %v96 = vunpack.c.l.b16 %v43
  %v97 = vunpack.c.h.b16 %v43
  %v98 = vpack.c.b16 %v68, %v66
  %v99 = vpack.c.b16 %v69, %v67
  %v100 = vpack.c.b16 %v72, %v70
  %v101 = vpack.c.b16 %v73, %v71
  %v102 = vpack.c.b16 %v76, %v74
  %v103 = vpack.c.b16 %v77, %v75
  %v104 = vpack.c.b16 %v80, %v78
  %v105 = vpack.c.b16 %v81, %v79
  %v106 = vpack.c.b16 %v84, %v82
  %v107 = vpack.c.b16 %v85, %v83
  %v108 = vpack.c.b16 %v88, %v86
  %v109 = vpack.c.b16 %v89, %v87
  %v110 = vpack.c.b16 %v92, %v90
  %v111 = vpack.c.b16 %v93, %v91
  %v112 = vpack.c.b16 %v96, %v94
  %v113 = vpack.c.b16 %v97, %v95
  %130 = vmatpush.bf16.msra.mxu0 %v112
  %131 = vmatpush.bf16.msra.mxu0 %v110
  %132 = vmatpush.bf16.msra.mxu0 %v108
  %133 = vmatpush.bf16.msra.mxu0 %v106
  %134 = vmatpush.bf16.msra.mxu0 %v104
  %135 = vmatpush.bf16.msra.mxu0 %v102
  %136 = vmatpush.bf16.msra.mxu0 %v100
  %137 = vmatpush.bf16.msra.mxu0 %v98
  %138 = vmatmul.bf16.gmra.mxu0 %v48
  %v139 = vpop.f32.mrf.mxu0
  %v140 = vadd.f32 0.0, %v139
  %v141 = vpop.f32.mrf.mxu0
  %v142 = vadd.f32 0.0, %v141
  %143 = vdwg.mxu0
  %144 = vmatpush.bf16.msra.mxu0 %v113
  %145 = vmatpush.bf16.msra.mxu0 %v111
  %146 = vmatpush.bf16.msra.mxu0 %v109
  %147 = vmatpush.bf16.msra.mxu0 %v107
  %148 = vmatpush.bf16.msra.mxu0 %v105
  %149 = vmatpush.bf16.msra.mxu0 %v103
  %150 = vmatpush.bf16.msra.mxu0 %v101
  %151 = vmatpush.bf16.msra.mxu0 %v99
  %152 = vmatmul.bf16.gmra.mxu0 %v48
  %v153 = vpop.f32.mrf.mxu0
  %v154 = vadd.f32 0.0, %v153
  %v155 = vpop.f32.mrf.mxu0
  %v156 = vadd.f32 0.0, %v155
  %157 = vdwg.mxu0
  %v158 = vadd.f32 %v22, %v140
  %v159 = vadd.f32 %v23, %v154
  %v160 = vadd.f32 %v24, %v142
  %v161 = vadd.f32 %v25, %v156
  %162 = vst [vmem:[#allocation2] sm:$0xff] %v158
  %163 = vst [vmem:[#allocation2 + $0x8] sm:$0xff] %v159
  %164 = vst [vmem:[#allocation2 + $0x10] sm:$0xff] %v160
  %165 = vst [vmem:[#allocation2 + $0x18] sm:$0xff] %v161
  // Predicated region
  $region18: #{transformer_forward.37} parent=0 // pred_check
    %p166 = pneg %p14
  $region19: #{transformer_forward.37} parent=0 // pred_check_branch
    %168 = sbr.rel (%p166) target = $region21
  $region20: #{transformer_forward.37} parent=0 // pred_region
    %v169 = vld [vmem:[#allocation2] sm:$0xff]
    %v170 = vld [vmem:[#allocation2 + $0x8] sm:$0xff]
    %v171 = vld [vmem:[#allocation2 + $0x10] sm:$0xff]
    %v172 = vld [vmem:[#allocation2 + $0x18] sm:$0xff]
    %v173 = vld [vmem:[%s2] sm:$0x3]
    %v175 = vperm.slane %v173, 0
    %v176 = vperm.slane %v173, 1
    %v179 = vadd.f32 %v169, %v175
    %v180 = vadd.f32 %v170, %v176
    %v181 = vadd.f32 %v171, %v175
    %v182 = vadd.f32 %v172, %v176
    %v183 = vpack.c.bf16 %v180, %v179
    %v184 = vpack.c.bf16 %v182, %v181
    %185 = vst [vmem:[%s3] sm:$0xff] %v183
    %186 = vst [vmem:[%s3 + $0x8] sm:$0xff] %v184
  $region21: #{transformer_forward.37} parent=0 // pred_fallthru
    _
  // Predicated region
  $region22: #{transformer_forward.37} parent=0 // pred_check
    _
  $region23: #{transformer_forward.37} parent=0 // pred_check_branch
    %188 = sbr.rel (0) target = $region25
  $region24: #{transformer_forward.37} parent=0 // pred_region
    _
  $region25: #{transformer_forward.37} parent=0 // pred_fallthru
    _
  // Predicated region
  $region26: #{transformer_forward.37} parent=0 // pred_check
    _
  $region27: #{transformer_forward.37} parent=0 // pred_check_branch
    %190 = sbr.rel (0) target = $region29
  $region28: #{transformer_forward.37} parent=0 // pred_region
    _
  $region29: #{transformer_forward.37} parent=0 // pred_fallthru
    _

// kernel: transformer_forward.32
$region0: #{transformer_forward.32}
  #allocation0 [shape = 'u32[]', space=smem, size = 0x4, offset = 0x4, fixed_abs, tag = 'smem constant byte address 0x4 - core index']
  #allocation1 [shape = 'u32[72,128]{1,0:T(1,128)}', space=vmem, size = 0x9000, scoped, tag = 'internal scratch']
  #allocation2 [shape = 'f32[16,128]{1,0:T(8,128)}', space=vmem, size = 0x2000, scoped, tag = 'scratch operand']
  %s0 = inlined_call_operand.vmem [shape: bf16[16,128], index: 0, kind: input, shape index: {}]
  %s1 = inlined_call_operand.hbm [shape: bf16[128,256], index: 1, kind: input, shape index: {}]
  %s2 = inlined_call_operand.vmem [shape: f32[1,256], index: 2, kind: input, shape index: {}]
  %s3 = inlined_call_operand.hbm [shape: bf16[256,128], index: 3, kind: input, shape index: {}]
  %s4 = inlined_call_operand.vmem [shape: f32[1,128], index: 4, kind: input, shape index: {}]
  %s5 = inlined_call_operand.vmem [shape: f32[1,128], index: 5, kind: input, shape index: {}]
  %s6 = inlined_call_operand.vmem [shape: f32[1,128], index: 6, kind: input, shape index: {}]
  %s7 = inlined_call_operand.vmem [shape: bf16[16,128], index: 7, kind: output, shape index: {}]
  %s8 = sld [smem:[#allocation0]]
  $region54: #{transformer_forward.32} parent=0
    _
  %s10 = ssub.s32 1, %s8
  %s11 = scalar_select 0, %s10, %s8
  $region1: #{transformer_forward.32} parent=0
    #allocation3 [shape = 'u8[65536]{0}', space=vmem, size = 0x10000, scoped, tag = 'input window, operand 1, single buffered']
    #allocation4 [shape = 's32[1]{0}', space=sflag, size = 0x4, scoped, tag = 'scoped memory for transformer_forward.32']
    #allocation5 [shape = 'u8[65536]{0}', space=vmem, size = 0x10000, scoped, tag = 'input window, operand 3, single buffered']
    #allocation6 [shape = 's32[1]{0}', space=sflag, size = 0x4, scoped, tag = 'scoped memory for transformer_forward.32']
    %12 = vsyncpa [#allocation4], 0
    %13 = vsyncpa [#allocation6], 0
    // Predicated region
    $region2: #{transformer_forward.32} parent=1 // pred_check
      _
    $region3: #{transformer_forward.32} parent=1 // pred_check_branch
      %15 = sbr.rel (0) target = $region5
    $region4: #{transformer_forward.32} parent=1 // pred_region
      _
    $region5: #{transformer_forward.32} parent=1 // pred_fallthru
      _
    // Predicated region
    $region6: #{transformer_forward.32} parent=1 // pred_check
      _
    $region7: #{transformer_forward.32} parent=1 // pred_check_branch
      %17 = sbr.rel (0) target = $region9
    $region8: #{transformer_forward.32} parent=1 // pred_region
      %19 = vsyncadd [#allocation4], 0
      %s20 = sshll.u32 %s1, 4
      %s21 = int_to_ptr.hbm [resolvable:$true] %s20
      %s22 = sshll.u32 [#allocation3], 4
      %s23 = int_to_ptr.vmem [resolvable:$true] %s22
      %28 = dma.hbm_to_vmem [thread:$0]  %s21, 2048, %s23, [#allocation4], 128, 128, 8
    $region9: #{transformer_forward.32} parent=1 // pred_fallthru
      _
    // Predicated region
    $region10: #{transformer_forward.32} parent=1 // pred_check
      _
    $region11: #{transformer_forward.32} parent=1 // pred_check_branch
      %30 = sbr.rel (0) target = $region13
    $region12: #{transformer_forward.32} parent=1 // pred_region
      _
    $region13: #{transformer_forward.32} parent=1 // pred_fallthru
      _
    // Predicated region
    $region14: #{transformer_forward.32} parent=1 // pred_check
      _
    $region15: #{transformer_forward.32} parent=1 // pred_check_branch
      %32 = sbr.rel (0) target = $region17
    $region16: #{transformer_forward.32} parent=1 // pred_region
      %34 = vsyncadd [#allocation6], 0
      %s35 = sshll.u32 %s3, 4
      %s36 = int_to_ptr.hbm [resolvable:$true] %s35
      %s37 = sshll.u32 [#allocation5], 4
      %s38 = int_to_ptr.vmem [resolvable:$true] %s37
      %43 = dma.hbm_to_vmem [thread:$0]  %s36, 2048, %s38, [#allocation6], 64, 64, 4
    $region17: #{transformer_forward.32} parent=1 // pred_fallthru
      _
    // Predicated region
    $region18: #{transformer_forward.32} parent=1 // pred_check
      _
    $region19: #{transformer_forward.32} parent=1 // pred_check_branch
      %45 = sbr.rel (0) target = $region21
    $region20: #{transformer_forward.32} parent=1 // pred_region
      _
    $region21: #{transformer_forward.32} parent=1 // pred_fallthru
      _
    // Predicated region
    $region22: #{transformer_forward.32} parent=1 // pred_check
      _
    $region23: #{transformer_forward.32} parent=1 // pred_check_branch
      %47 = sbr.rel (0) target = $region25
    $region24: #{transformer_forward.32} parent=1 // pred_region
      _
    $region25: #{transformer_forward.32} parent=1 // pred_fallthru
      _
    // Predicated region
    $region26: #{transformer_forward.32} parent=1 // pred_check
      _
    $region27: #{transformer_forward.32} parent=1 // pred_check_branch
      %49 = sbr.rel (0) target = $region29
    $region28: #{transformer_forward.32} parent=1 // pred_region
      _
    $region29: #{transformer_forward.32} parent=1 // pred_fallthru
      _
    // Predicated region
    $region30: #{transformer_forward.32} parent=1 // pred_check
      _
    $region31: #{transformer_forward.32} parent=1 // pred_check_branch
      %51 = sbr.rel (0) target = $region33
    $region32: #{transformer_forward.32} parent=1 // pred_region
      %53 = dma.done [#allocation4], 2048
    $region33: #{transformer_forward.32} parent=1 // pred_fallthru
      _
    // Predicated region
    $region34: #{transformer_forward.32} parent=1 // pred_check
      _
    $region35: #{transformer_forward.32} parent=1 // pred_check_branch
      %55 = sbr.rel (0) target = $region37
    $region36: #{transformer_forward.32} parent=1 // pred_region
      %57 = dma.done [#allocation6], 2048
    $region37: #{transformer_forward.32} parent=1 // pred_fallthru
      _
    %p58 = scmp.eq.s32.totalorder 0, 0
    // Predicated region
    $region38: #{transformer_forward.32} parent=1 // pred_check
      %p59 = pneg %p58
    $region39: #{transformer_forward.32} parent=1 // pred_check_branch
      %61 = sbr.rel (%p59) target = $region41
    $region40: #{transformer_forward.32} parent=1 // pred_region
      %62 = vst [vmem:[#allocation2] sm:$0xff] 0.0
      %63 = vst [vmem:[#allocation2 + $0x8] sm:$0xff] 0.0
    $region41: #{transformer_forward.32} parent=1 // pred_fallthru
      _
    %v64 = vld [vmem:[%s0] sm:$0xf]
    %v65 = vld [vmem:[%s0 + $0x4] sm:$0xf]
    %v66 = vld [vmem:[#allocation3] sm:$0xff]
    %v67 = vld [vmem:[#allocation3 + $0x8] sm:$0xff]
    %v68 = vld [vmem:[#allocation3 + $0x10] sm:$0xff]
    %v69 = vld [vmem:[#allocation3 + $0x18] sm:$0xff]
    %v70 = vld [vmem:[#allocation3 + $0x20] sm:$0xff]
    %v71 = vld [vmem:[#allocation3 + $0x28] sm:$0xff]
    %v72 = vld [vmem:[#allocation3 + $0x30] sm:$0xff]
    %v73 = vld [vmem:[#allocation3 + $0x38] sm:$0xff]
    %v74 = vld [vmem:[#allocation3 + $0x40] sm:$0xff]
    %v75 = vld [vmem:[#allocation3 + $0x48] sm:$0xff]
    %v76 = vld [vmem:[#allocation3 + $0x50] sm:$0xff]
    %v77 = vld [vmem:[#allocation3 + $0x58] sm:$0xff]
    %v78 = vld [vmem:[#allocation3 + $0x60] sm:$0xff]
    %v79 = vld [vmem:[#allocation3 + $0x68] sm:$0xff]
    %v80 = vld [vmem:[#allocation3 + $0x70] sm:$0xff]
    %v81 = vld [vmem:[#allocation3 + $0x78] sm:$0xff]
    %v82 = vld [vmem:[%s2] sm:$0x3]
    %v84 = vperm.slane %v82, 0
    %v85 = vperm.slane %v82, 1
    %v90 = vunpack.c.l.b16 %v64
    %v91 = vunpack.c.l.b16 %v65
    %v92 = vpack.c.b16 %v91, %v90
    %v110 = vunpack.c.l.b16 %v66
    %v111 = vunpack.c.h.b16 %v66
    %v112 = vunpack.c.l.b16 %v67
    %v113 = vunpack.c.h.b16 %v67
    %v114 = vunpack.c.l.b16 %v68
    %v115 = vunpack.c.h.b16 %v68
    %v116 = vunpack.c.l.b16 %v69
    %v117 = vunpack.c.h.b16 %v69
    %v118 = vunpack.c.l.b16 %v70
    %v119 = vunpack.c.h.b16 %v70
    %v120 = vunpack.c.l.b16 %v71
    %v121 = vunpack.c.h.b16 %v71
    %v122 = vunpack.c.l.b16 %v72
    %v123 = vunpack.c.h.b16 %v72
    %v124 = vunpack.c.l.b16 %v73
    %v125 = vunpack.c.h.b16 %v73
    %v126 = vunpack.c.l.b16 %v74
    %v127 = vunpack.c.h.b16 %v74
    %v128 = vunpack.c.l.b16 %v75
    %v129 = vunpack.c.h.b16 %v75
    %v130 = vunpack.c.l.b16 %v76
    %v131 = vunpack.c.h.b16 %v76
    %v132 = vunpack.c.l.b16 %v77
    %v133 = vunpack.c.h.b16 %v77
    %v134 = vunpack.c.l.b16 %v78
    %v135 = vunpack.c.h.b16 %v78
    %v136 = vunpack.c.l.b16 %v79
    %v137 = vunpack.c.h.b16 %v79
    %v138 = vunpack.c.l.b16 %v80
    %v139 = vunpack.c.h.b16 %v80
    %v140 = vunpack.c.l.b16 %v81
    %v141 = vunpack.c.h.b16 %v81
    %v142 = vpack.c.b16 %v112, %v110
    %v143 = vpack.c.b16 %v113, %v111
    %v144 = vpack.c.b16 %v116, %v114
    %v145 = vpack.c.b16 %v117, %v115
    %v146 = vpack.c.b16 %v120, %v118
    %v147 = vpack.c.b16 %v121, %v119
    %v148 = vpack.c.b16 %v124, %v122
    %v149 = vpack.c.b16 %v125, %v123
    %v150 = vpack.c.b16 %v128, %v126
    %v151 = vpack.c.b16 %v129, %v127
    %v152 = vpack.c.b16 %v132, %v130
    %v153 = vpack.c.b16 %v133, %v131
    %v154 = vpack.c.b16 %v136, %v134
    %v155 = vpack.c.b16 %v137, %v135
    %v156 = vpack.c.b16 %v140, %v138
    %v157 = vpack.c.b16 %v141, %v139
    %174 = vmatpush.bf16.msra.mxu0 %v156
    %175 = vmatpush.bf16.msra.mxu0 %v154
    %176 = vmatpush.bf16.msra.mxu0 %v152
    %177 = vmatpush.bf16.msra.mxu0 %v150
    %178 = vmatpush.bf16.msra.mxu0 %v148
    %179 = vmatpush.bf16.msra.mxu0 %v146
    %180 = vmatpush.bf16.msra.mxu0 %v144
    %181 = vmatpush.bf16.msra.mxu0 %v142
    %182 = vmatmul.bf16.gmra.mxu0 %v92
    %v183 = vpop.f32.mrf.mxu0
    %v184 = vadd.f32 %v84, %v183
    %v185 = vpop.f32.mrf.mxu0
    %v186 = vadd.f32 %v84, %v185
    %187 = vdwg.mxu0
    %188 = vmatpush.bf16.msra.mxu0 %v157
    %189 = vmatpush.bf16.msra.mxu0 %v155
    %190 = vmatpush.bf16.msra.mxu0 %v153
    %191 = vmatpush.bf16.msra.mxu0 %v151
    %192 = vmatpush.bf16.msra.mxu0 %v149
    %193 = vmatpush.bf16.msra.mxu0 %v147
    %194 = vmatpush.bf16.msra.mxu0 %v145
    %195 = vmatpush.bf16.msra.mxu0 %v143
    %196 = vmatmul.bf16.gmra.mxu0 %v92
    %v197 = vpop.f32.mrf.mxu0
    %v198 = vadd.f32 %v85, %v197
    %v199 = vpop.f32.mrf.mxu0
    %v200 = vadd.f32 %v85, %v199
    %201 = vdwg.mxu0
    %v202 = vmax.f32 %v184, 0.0
    %v203 = vmax.f32 %v198, 0.0
    %v204 = vmax.f32 %v186, 0.0
    %v205 = vmax.f32 %v200, 0.0
    %v206 = vld [vmem:[#allocation2] sm:$0xff]
    %v207 = vld [vmem:[#allocation2 + $0x8] sm:$0xff]
    %v208 = vpack.c.bf16 %v204, %v202
    %v209 = vpack.c.bf16 %v205, %v203
    %v210 = vld [vmem:[#allocation5] sm:$0xf]
    %v211 = vld [vmem:[#allocation5 + $0x4] sm:$0xf]
    %v212 = vld [vmem:[#allocation5 + $0x8] sm:$0xf]
    %v213 = vld [vmem:[#allocation5 + $0xc] sm:$0xf]
    %v214 = vld [vmem:[#allocation5 + $0x10] sm:$0xf]
    %v215 = vld [vmem:[#allocation5 + $0x14] sm:$0xf]
    %v216 = vld [vmem:[#allocation5 + $0x18] sm:$0xf]
    %v217 = vld [vmem:[#allocation5 + $0x1c] sm:$0xf]
    %v218 = vld [vmem:[#allocation5 + $0x20] sm:$0xf]
    %v219 = vld [vmem:[#allocation5 + $0x24] sm:$0xf]
    %v220 = vld [vmem:[#allocation5 + $0x28] sm:$0xf]
    %v221 = vld [vmem:[#allocation5 + $0x2c] sm:$0xf]
    %v222 = vld [vmem:[#allocation5 + $0x30] sm:$0xf]
    %v223 = vld [vmem:[#allocation5 + $0x34] sm:$0xf]
    %v224 = vld [vmem:[#allocation5 + $0x38] sm:$0xf]
    %v225 = vld [vmem:[#allocation5 + $0x3c] sm:$0xf]
    %v226 = vld [vmem:[#allocation5 + $0x40] sm:$0xf]
    %v227 = vld [vmem:[#allocation5 + $0x44] sm:$0xf]
    %v228 = vld [vmem:[#allocation5 + $0x48] sm:$0xf]
    %v229 = vld [vmem:[#allocation5 + $0x4c] sm:$0xf]
    %v230 = vld [vmem:[#allocation5 + $0x50] sm:$0xf]
    %v231 = vld [vmem:[#allocation5 + $0x54] sm:$0xf]
    %v232 = vld [vmem:[#allocation5 + $0x58] sm:$0xf]
    %v233 = vld [vmem:[#allocation5 + $0x5c] sm:$0xf]
    %v234 = vld [vmem:[#allocation5 + $0x60] sm:$0xf]
    %v235 = vld [vmem:[#allocation5 + $0x64] sm:$0xf]
    %v236 = vld [vmem:[#allocation5 + $0x68] sm:$0xf]
    %v237 = vld [vmem:[#allocation5 + $0x6c] sm:$0xf]
    %v238 = vld [vmem:[#allocation5 + $0x70] sm:$0xf]
    %v239 = vld [vmem:[#allocation5 + $0x74] sm:$0xf]
    %v240 = vld [vmem:[#allocation5 + $0x78] sm:$0xf]
    %v241 = vld [vmem:[#allocation5 + $0x7c] sm:$0xf]
    %v274 = vunpack.c.l.b16 %v210
    %v275 = vunpack.c.l.b16 %v211
    %v276 = vunpack.c.l.b16 %v212
    %v277 = vunpack.c.l.b16 %v213
    %v278 = vunpack.c.l.b16 %v214
    %v279 = vunpack.c.l.b16 %v215
    %v280 = vunpack.c.l.b16 %v216
    %v281 = vunpack.c.l.b16 %v217
    %v282 = vunpack.c.l.b16 %v218
    %v283 = vunpack.c.l.b16 %v219
    %v284 = vunpack.c.l.b16 %v220
    %v285 = vunpack.c.l.b16 %v221
    %v286 = vunpack.c.l.b16 %v222
    %v287 = vunpack.c.l.b16 %v223
    %v288 = vunpack.c.l.b16 %v224
    %v289 = vunpack.c.l.b16 %v225
    %v290 = vunpack.c.l.b16 %v226
    %v291 = vunpack.c.l.b16 %v227
    %v292 = vunpack.c.l.b16 %v228
    %v293 = vunpack.c.l.b16 %v229
    %v294 = vunpack.c.l.b16 %v230
    %v295 = vunpack.c.l.b16 %v231
    %v296 = vunpack.c.l.b16 %v232
    %v297 = vunpack.c.l.b16 %v233
    %v298 = vunpack.c.l.b16 %v234
    %v299 = vunpack.c.l.b16 %v235
    %v300 = vunpack.c.l.b16 %v236
    %v301 = vunpack.c.l.b16 %v237
    %v302 = vunpack.c.l.b16 %v238
    %v303 = vunpack.c.l.b16 %v239
    %v304 = vunpack.c.l.b16 %v240
    %v305 = vunpack.c.l.b16 %v241
    %v306 = vpack.c.b16 %v275, %v274
    %v307 = vpack.c.b16 %v277, %v276
    %v308 = vpack.c.b16 %v279, %v278
    %v309 = vpack.c.b16 %v281, %v280
    %v310 = vpack.c.b16 %v283, %v282
    %v311 = vpack.c.b16 %v285, %v284
    %v312 = vpack.c.b16 %v287, %v286
    %v313 = vpack.c.b16 %v289, %v288
    %v314 = vpack.c.b16 %v291, %v290
    %v315 = vpack.c.b16 %v293, %v292
    %v316 = vpack.c.b16 %v295, %v294
    %v317 = vpack.c.b16 %v297, %v296
    %v318 = vpack.c.b16 %v299, %v298
    %v319 = vpack.c.b16 %v301, %v300
    %v320 = vpack.c.b16 %v303, %v302
    %v321 = vpack.c.b16 %v305, %v304
    %338 = vmatpush.bf16.msra.mxu0 %v313
    %339 = vmatpush.bf16.msra.mxu0 %v312
    %340 = vmatpush.bf16.msra.mxu0 %v311
    %341 = vmatpush.bf16.msra.mxu0 %v310
    %342 = vmatpush.bf16.msra.mxu0 %v309
    %343 = vmatpush.bf16.msra.mxu0 %v308
    %344 = vmatpush.bf16.msra.mxu0 %v307
    %345 = vmatpush.bf16.msra.mxu0 %v306
    %346 = vmatmul.bf16.gmra.mxu0 %v208
    %v347 = vpop.f32.mrf.mxu0
    %v348 = vadd.f32 0.0, %v347
    %v349 = vpop.f32.mrf.mxu0
    %v350 = vadd.f32 0.0, %v349
    %351 = vdwg.mxu0
    %352 = vmatpush.bf16.msra.mxu0 %v321
    %353 = vmatpush.bf16.msra.mxu0 %v320
    %354 = vmatpush.bf16.msra.mxu0 %v319
    %355 = vmatpush.bf16.msra.mxu0 %v318
    %356 = vmatpush.bf16.msra.mxu0 %v317
    %357 = vmatpush.bf16.msra.mxu0 %v316
    %358 = vmatpush.bf16.msra.mxu0 %v315
    %359 = vmatpush.bf16.msra.mxu0 %v314
    %360 = vmatmul.bf16.gmra.mxu0 %v209
    %v361 = vpop.f32.mrf.mxu0
    %v362 = vadd.f32 %v348, %v361
    %v363 = vpop.f32.mrf.mxu0
    %v364 = vadd.f32 %v350, %v363
    %365 = vdwg.mxu0
    %v366 = vadd.f32 %v206, %v362
    %v367 = vadd.f32 %v207, %v364
    %368 = vst [vmem:[#allocation2] sm:$0xff] %v366
    %369 = vst [vmem:[#allocation2 + $0x8] sm:$0xff] %v367
    // Predicated region
    $region42: #{transformer_forward.32} parent=1 // pred_check
      %p370 = pneg %p58
    $region43: #{transformer_forward.32} parent=1 // pred_check_branch
      %372 = sbr.rel (%p370) target = $region45
    $region44: #{transformer_forward.32} parent=1 // pred_region
      %v373 = vld [vmem:[#allocation2] sm:$0xff]
      %v374 = vld [vmem:[#allocation2 + $0x8] sm:$0xff]
      %v375 = vld [vmem:[%s4] sm:$0x1]
      %v377 = vperm.slane %v375, 0
      %v379 = vadd.f32 %v373, %v377
      %v380 = vadd.f32 %v374, %v377
      %v381 = vld [vmem:[%s0] sm:$0xf]
      %v382 = vld [vmem:[%s0 + $0x4] sm:$0xf]
      %v383 = vunpack.c.l.bf16 %v381
      %v384 = vunpack.c.l.bf16 %v382
      %v385 = vadd.f32 %v379, %v383
      %v386 = vadd.f32 %v380, %v384
      %387 = vadd.xlane.f32.xlu0 %v385
      %v388 = vpop.xlane.xlu0 %387
      %389 = vadd.xlane.f32.xlu0 %v386
      %v390 = vpop.xlane.xlu0 %389
      %v391 = vrcp.pop 128.0
      %v392 = vmul.f32 128.0, %v391
      %v393 = vsub.f32 1.0, %v392
      %v394 = vmul.f32 %v391, %v393
      %v395 = vadd.f32 %v391, %v394
      %vm396 = vweird.f32 %v391
      %v397 = vsel %vm396, %v391, %v395
      %v398 = vmul.f32 %v388, %v397
      %v399 = vmul.f32 %v390, %v397
      %v400 = vsub.f32 %v385, %v398
      %v401 = vsub.f32 %v386, %v399
      %v402 = vmul.f32 %v400, %v400
      %v403 = vmul.f32 %v401, %v401
      %404 = vadd.xlane.f32.xlu0 %v402
      %v405 = vpop.xlane.xlu0 %404
      %406 = vadd.xlane.f32.xlu0 %v403
      %v407 = vpop.xlane.xlu0 %406
      %v408 = vmul.f32 %v405, %v397
      %v409 = vmul.f32 %v407, %v397
      %v410 = vadd.f32 %v408, 1e-05
      %v411 = vadd.f32 %v409, 1e-05
      %v412 = vrsqrt.pop %v410
      %v413 = vmul.f32 %v412, %v410
      %v414 = vmul.f32 %v413, %v412
      %v415 = vmul.f32 0.5, %v414
      %v416 = vsub.f32 1.5, %v415
      %v417 = vmul.f32 %v412, %v416
      %vm418 = vweird.f32 %v410
      %vm419 = vweird.f32 %v412
      %vm420 = vmor %vm418, %vm419
      %v421 = vsel %vm420, %v412, %v417
      %v422 = vrsqrt.pop %v411
      %v423 = vmul.f32 %v422, %v411
      %v424 = vmul.f32 %v423, %v422
      %v425 = vmul.f32 0.5, %v424
      %v426 = vsub.f32 1.5, %v425
      %v427 = vmul.f32 %v422, %v426
      %vm428 = vweird.f32 %v411
      %vm429 = vweird.f32 %v422
      %vm430 = vmor %vm428, %vm429
      %v431 = vsel %vm430, %v422, %v427
      %v432 = vmul.f32 %v400, %v421
      %v433 = vmul.f32 %v401, %v431
      %v434 = vld [vmem:[%s5] sm:$0x1]
      %v436 = vperm.slane %v434, 0
      %v438 = vmul.f32 %v432, %v436
      %v439 = vmul.f32 %v433, %v436
      %v440 = vld [vmem:[%s6] sm:$0x1]
      %v442 = vperm.slane %v440, 0
      %v444 = vadd.f32 %v438, %v442
      %v445 = vadd.f32 %v439, %v442
      %v446 = vpack.c.bf16 %v444, %v444
      %v447 = vpack.c.bf16 %v445, %v445
      %448 = vst [vmem:[%s7] sm:$0xf] %v446
      %449 = vst [vmem:[%s7 + $0x4] sm:$0xf] %v447
    $region45: #{transformer_forward.32} parent=1 // pred_fallthru
      _
    // Predicated region
    $region46: #{transformer_forward.32} parent=1 // pred_check
      _
    $region47: #{transformer_forward.32} parent=1 // pred_check_branch
      %451 = sbr.rel (0) target = $region49
    $region48: #{transformer_forward.32} parent=1 // pred_region
      _
    $region49: #{transformer_forward.32} parent=1 // pred_fallthru
      _
    // Predicated region
    $region50: #{transformer_forward.32} parent=1 // pred_check
      _
    $region51: #{transformer_forward.32} parent=1 // pred_check_branch
      %453 = sbr.rel (0) target = $region53
    $region52: #{transformer_forward.32} parent=1 // pred_region
      _
    $region53: #{transformer_forward.32} parent=1 // pred_fallthru
      _
    %454 = vsyncpa [#allocation4], 1
    %455 = vsyncpa [#allocation6], 1

// kernel: transformer_forward.34
$region0: #{transformer_forward.34}
  #allocation0 [shape = 'u32[]', space=smem, size = 0x4, offset = 0x4, fixed_abs, tag = 'smem constant byte address 0x4 - core index']
  #allocation1 [shape = 'u32[72,128]{1,0:T(1,128)}', space=vmem, size = 0x9000, scoped, tag = 'internal scratch']
  #allocation2 [shape = 'f32[4,8,1]{2,1,0:T(8,128)}', space=vmem, size = 0x4000, scoped, tag = 'scratch operand']
  #allocation3 [shape = 'f32[4,8,1]{2,1,0:T(8,128)}', space=vmem, size = 0x4000, scoped, tag = 'scratch operand']
  #allocation4 [shape = 'f32[8,128]{1,0:T(8,128)}', space=vmem, size = 0x1000, scoped, tag = 'scratch operand']
  %s0 = inlined_call_operand.vmem [shape: bf16[2,8,384], index: 0, kind: input, shape index: {}, may-alias: {0,1,2}]
  %s1 = inlined_call_operand.vmem [shape: bf16[2,8,384], index: 1, kind: input, shape index: {}, may-alias: {0,1,2}]
  %s2 = inlined_call_operand.vmem [shape: bf16[2,8,384], index: 2, kind: input, shape index: {}, may-alias: {0,1,2}]
  %s3 = inlined_call_operand.vmem [shape: bf16[2,8,128], index: 3, kind: output, shape index: {}]
  %s4 = sld [smem:[#allocation0]]
  $region53: #{transformer_forward.34} parent=0
    _
  %s6 = ssub.s32 1, %s4
  %s7 = scalar_select 0, %s6, %s4
  loop: start=0, step=1, limit=4
  $region2: #{transformer_forward.34} parent=0 // loop_pre_header
    _
  $region3: #{transformer_forward.34} parent=0 // loop_header
    %s9 = sphi 0, %s13
    %p10 = scmp.ge.s32.totalorder %s9, 4
    %s16 = sphi 0, %s35
    %s17 = sphi 0, %s31
    %s18 = sphi 0, %s27
    %s19 = sphi 0, %s16
    %s20 = sphi 0, %s17
    %s21 = sphi 0, %s18
    %s22 = sphi 0, %s19
    %s23 = sphi 0, %s20
    %s24 = sphi 0, %s21
    %s40 = sphi 0, %s42
    %s43 = sphi 0, %s40
    %s44 = sphi 0, %s43
    %s60 = sphi 0, %s44
    %s68 = sphi 0, %s70
    %s71 = sphi 0, %s68
    %s72 = sphi 0, %s71
    %s88 = sphi 0, %s72
    %s96 = sphi 0, %s98
    %s99 = sphi 0, %s96
    %s100 = sphi 0, %s99
    %s116 = sphi 0, %s100
    %s124 = sphi 0, %s126
    %s127 = sphi 0, %s124
    %s128 = sphi 0, %s127
    %s144 = sphi 0, %s128
  $region4: #{transformer_forward.34} parent=0 // loop_header_branch
    %12 = sbr.rel (%p10) target = $region8
  $region5: #{transformer_forward.34} parent=0 // loop_body
    %s14 = ssub.s32 %s9, 1
    %s15 = ssub.s32 %s9, 2
    %s25 = sadd.s32 1, %s18
    %p26 = scmp.ge.s32.totalorder %s25, 1
    %s27 = scalar_select %p26, 0, %s25
    %s28 = sadd.s32 1, %s17
    %s29 = scalar_select %p26, %s28, %s17
    %p30 = scmp.ge.s32.totalorder %s29, 1
    %s31 = scalar_select %p30, 0, %s29
    %s32 = sadd.s32 1, %s16
    %s33 = scalar_select %p30, %s32, %s16
    %p34 = scmp.ge.s32.totalorder %s33, 2
    %s35 = scalar_select %p34, 0, %s33
    %s36 = ssub.s32 %s16, %s35
    %s37 = ssub.s32 %s17, %s31
    %s38 = sor.u32 %s36, %s37
    %p39 = scmp.eq.s32.totalorder %s38, 0
    %s41 = sadd.s32 %s40, 1
    %s42 = scalar_select %p39, %s40, %s41
    %p45 = pneg %p39
    %p46 = scmp.eq.s32.totalorder %s9, 1
    %p47 = por %p45, %p46
    %p48 = scmp.ne.s32.totalorder %s40, %s43
    %p49 = scmp.eq.s32.totalorder %s9, 0
    %p50 = por %p48, %p49
    %p51 = scmp.ne.s32.totalorder %s40, %s43
    %p52 = scmp.eq.s32.totalorder %s14, 1
    %p53 = por %p51, %p52
    %p54 = scmp.ne.s32.totalorder %s43, %s44
    %p55 = scmp.eq.s32.totalorder %s14, 0
    %p56 = por %p54, %p55
    %p57 = scmp.ne.s32.totalorder %s43, %s44
    %p58 = scmp.eq.s32.totalorder %s15, 1
    %p59 = por %p57, %p58
    %p61 = scmp.ne.s32.totalorder %s44, %s60
    %p62 = scmp.eq.s32.totalorder %s15, 0
    %p63 = por %p61, %p62
    %s64 = ssub.s32 %s16, %s35
    %s65 = ssub.s32 %s18, %s27
    %s66 = sor.u32 %s64, %s65
    %p67 = scmp.eq.s32.totalorder %s66, 0
    %s69 = sadd.s32 %s68, 1
    %s70 = scalar_select %p67, %s68, %s69
    %p73 = pneg %p67
    %p74 = scmp.eq.s32.totalorder %s9, 1
    %p75 = por %p73, %p74
    %p76 = scmp.ne.s32.totalorder %s68, %s71
    %p77 = scmp.eq.s32.totalorder %s9, 0
    %p78 = por %p76, %p77
    %p79 = scmp.ne.s32.totalorder %s68, %s71
    %p80 = scmp.eq.s32.totalorder %s14, 1
    %p81 = por %p79, %p80
    %p82 = scmp.ne.s32.totalorder %s71, %s72
    %p83 = scmp.eq.s32.totalorder %s14, 0
    %p84 = por %p82, %p83
    %p85 = scmp.ne.s32.totalorder %s71, %s72
    %p86 = scmp.eq.s32.totalorder %s15, 1
    %p87 = por %p85, %p86
    %p89 = scmp.ne.s32.totalorder %s72, %s88
    %p90 = scmp.eq.s32.totalorder %s15, 0
    %p91 = por %p89, %p90
    %s92 = ssub.s32 %s16, %s35
    %s93 = ssub.s32 %s18, %s27
    %s94 = sor.u32 %s92, %s93
    %p95 = scmp.eq.s32.totalorder %s94, 0
    %s97 = sadd.s32 %s96, 1
    %s98 = scalar_select %p95, %s96, %s97
    %p101 = pneg %p95
    %p102 = scmp.eq.s32.totalorder %s9, 1
    %p103 = por %p101, %p102
    %p104 = scmp.ne.s32.totalorder %s96, %s99
    %p105 = scmp.eq.s32.totalorder %s9, 0
    %p106 = por %p104, %p105
    %p107 = scmp.ne.s32.totalorder %s96, %s99
    %p108 = scmp.eq.s32.totalorder %s14, 1
    %p109 = por %p107, %p108
    %p110 = scmp.ne.s32.totalorder %s99, %s100
    %p111 = scmp.eq.s32.totalorder %s14, 0
    %p112 = por %p110, %p111
    %p113 = scmp.ne.s32.totalorder %s99, %s100
    %p114 = scmp.eq.s32.totalorder %s15, 1
    %p115 = por %p113, %p114
    %p117 = scmp.ne.s32.totalorder %s100, %s116
    %p118 = scmp.eq.s32.totalorder %s15, 0
    %p119 = por %p117, %p118
    %s120 = ssub.s32 %s16, %s35
    %s121 = ssub.s32 %s17, %s31
    %s122 = sor.u32 %s120, %s121
    %p123 = scmp.eq.s32.totalorder %s122, 0
    %s125 = sadd.s32 %s124, 1
    %s126 = scalar_select %p123, %s124, %s125
    %p129 = pneg %p123
    %p130 = scmp.eq.s32.totalorder %s9, 1
    %p131 = por %p129, %p130
    %p132 = scmp.ne.s32.totalorder %s124, %s127
    %p133 = scmp.eq.s32.totalorder %s9, 0
    %p134 = por %p132, %p133
    %p135 = scmp.ne.s32.totalorder %s124, %s127
    %p136 = scmp.eq.s32.totalorder %s14, 1
    %p137 = por %p135, %p136
    %p138 = scmp.ne.s32.totalorder %s127, %s128
    %p139 = scmp.eq.s32.totalorder %s14, 0
    %p140 = por %p138, %p139
    %p141 = scmp.ne.s32.totalorder %s127, %s128
    %p142 = scmp.eq.s32.totalorder %s15, 1
    %p143 = por %p141, %p142
    %p145 = scmp.ne.s32.totalorder %s128, %s144
    %p146 = scmp.eq.s32.totalorder %s15, 0
    %p147 = por %p145, %p146
    %p148 = scmp.le.s32.totalorder 1, %s9
    %p149 = scmp.lt.s32.totalorder %s9, 3
    %p150 = pnand %p148, %p149
    %p151 = pneg %p150
    // Predicated region
    $region9: #{transformer_forward.34} parent=5 // pred_check
      _
    $region10: #{transformer_forward.34} parent=5 // pred_check_branch
      %153 = sbr.rel (%p150) target = $region12
    $region11: #{transformer_forward.34} parent=5 // pred_region
      %s154 = ssub.s32 %s9, 1
    $region12: #{transformer_forward.34} parent=5 // pred_fallthru
      _
    %p155 = scmp.lt.s32.totalorder %s9, 2
    // Predicated region
    $region13: #{transformer_forward.34} parent=5 // pred_check
      %p156 = pneg %p155
    $region14: #{transformer_forward.34} parent=5 // pred_check_branch
      %158 = sbr.rel (%p156) target = $region16
    $region15: #{transformer_forward.34} parent=5 // pred_region
      // Predicated region
      $region17: #{transformer_forward.34} parent=15 // pred_check
        %p159 = pneg %p50
      $region18: #{transformer_forward.34} parent=15 // pred_check_branch
        %161 = sbr.rel (%p159) target = $region20
      $region19: #{transformer_forward.34} parent=15 // pred_region
        %p162 = scmp.lt.s32.totalorder %s16, 1
        %s163 = scalar_select %p162, %s16, 1
        %p164 = scmp.lt.s32.totalorder %s17, 0
        %s165 = scalar_select %p164, %s17, 0
        %s166 = smul.addr %s165, 3
        %s167 = smul.addr %s163, 3
        %s168 = sadd.s32 %s166, %s167
        %s169 = smul.addr %s168, 4
        %s170 = scalar_lea.vmem %s0, %s169
      $region20: #{transformer_forward.34} parent=15 // pred_fallthru
        _
      // Predicated region
      $region21: #{transformer_forward.34} parent=15 // pred_check
        %p171 = pneg %p78
      $region22: #{transformer_forward.34} parent=15 // pred_check_branch
        %173 = sbr.rel (%p171) target = $region24
      $region23: #{transformer_forward.34} parent=15 // pred_region
        %p174 = scmp.lt.s32.totalorder %s16, 1
        %s175 = scalar_select %p174, %s16, 1
        %p176 = scmp.lt.s32.totalorder %s18, 0
        %s177 = scalar_select %p176, %s18, 0
        %s178 = smul.addr %s177, 3
        %s179 = sadd.s32 1, %s178
        %s180 = smul.addr %s175, 3
        %s181 = sadd.s32 %s179, %s180
        %s182 = smul.addr %s181, 4
        %s183 = scalar_lea.vmem %s1, %s182
      $region24: #{transformer_forward.34} parent=15 // pred_fallthru
        _
      // Predicated region
      $region25: #{transformer_forward.34} parent=15 // pred_check
        %p184 = pneg %p106
      $region26: #{transformer_forward.34} parent=15 // pred_check_branch
        %186 = sbr.rel (%p184) target = $region28
      $region27: #{transformer_forward.34} parent=15 // pred_region
        %p187 = scmp.lt.s32.totalorder %s16, 1
        %s188 = scalar_select %p187, %s16, 1
        %p189 = scmp.lt.s32.totalorder %s18, 0
        %s190 = scalar_select %p189, %s18, 0
        %s191 = smul.addr %s190, 3
        %s192 = sadd.s32 2, %s191
        %s193 = smul.addr %s188, 3
        %s194 = sadd.s32 %s192, %s193
        %s195 = smul.addr %s194, 4
        %s196 = scalar_lea.vmem %s2, %s195
      $region28: #{transformer_forward.34} parent=15 // pred_fallthru
        _
    $region16: #{transformer_forward.34} parent=5 // pred_fallthru
      _
    %p197 = scmp.le.s32.totalorder 1, %s9
    %p198 = scmp.lt.s32.totalorder %s9, 3
    %p199 = pnand %p197, %p198
    %p200 = pneg %p199
    // Predicated region
    $region29: #{transformer_forward.34} parent=5 // pred_check
      _
    $region30: #{transformer_forward.34} parent=5 // pred_check_branch
      %202 = sbr.rel (%p199) target = $region32
    $region31: #{transformer_forward.34} parent=5 // pred_region
      %s203 = ssub.s32 %s9, 1
      %p204 = scmp.lt.s32.totalorder %s19, 1
      %s205 = scalar_select %p204, %s19, 1
      %p206 = scmp.lt.s32.totalorder %s20, 0
      %s207 = scalar_select %p206, %s20, 0
      %s208 = smul.addr %s207, 3
      %s209 = smul.addr %s205, 3
      %s210 = sadd.s32 %s208, %s209
      %s211 = smul.addr %s210, 4
      %s212 = scalar_lea.vmem %s0, %s211
      %p213 = pneg %p56
      %p214 = pneg %p53
      %p215 = scmp.lt.s32.totalorder %s19, 1
      %s216 = scalar_select %p215, %s19, 1
      %p217 = scmp.lt.s32.totalorder %s21, 0
      %s218 = scalar_select %p217, %s21, 0
      %s219 = smul.addr %s218, 3
      %s220 = sadd.s32 1, %s219
      %s221 = smul.addr %s216, 3
      %s222 = sadd.s32 %s220, %s221
      %s223 = smul.addr %s222, 4
      %s224 = scalar_lea.vmem %s1, %s223
      %p225 = pneg %p84
      %p226 = pneg %p81
      %p227 = scmp.lt.s32.totalorder %s19, 1
      %s228 = scalar_select %p227, %s19, 1
      %p229 = scmp.lt.s32.totalorder %s21, 0
      %s230 = scalar_select %p229, %s21, 0
      %s231 = smul.addr %s230, 3
      %s232 = sadd.s32 2, %s231
      %s233 = smul.addr %s228, 3
      %s234 = sadd.s32 %s232, %s233
      %s235 = smul.addr %s234, 4
      %s236 = scalar_lea.vmem %s2, %s235
      %p237 = pneg %p112
      %p238 = pneg %p109
      %p239 = pneg %p140
      %p240 = pneg %p137
      %p241 = scmp.lt.s32.totalorder %s19, 1
      %s242 = scalar_select %p241, %s19, 1
      %p243 = scmp.lt.s32.totalorder %s20, 0
      %s244 = scalar_select %p243, %s20, 0
      %s245 = sadd.s32 %s244, %s242
      %s246 = smul.addr %s245, 4
      %s247 = scalar_lea.vmem %s3, %s246
      %p248 = scmp.lt.s32.totalorder %s19, 1
      %s249 = scalar_select %p248, %s19, 1
      %p250 = scmp.lt.s32.totalorder %s20, 0
      %s251 = scalar_select %p250, %s20, 0
      %s252 = smul.addr %s251, 3
      %s253 = smul.addr %s249, 3
      %s254 = sadd.s32 %s252, %s253
      %s255 = smul.addr %s254, 4
      %s256 = scalar_lea.vmem %s0, %s255
      %p257 = scmp.lt.s32.totalorder %s19, 1
      %s258 = scalar_select %p257, %s19, 1
      %p259 = scmp.lt.s32.totalorder %s21, 0
      %s260 = scalar_select %p259, %s21, 0
      %s261 = smul.addr %s260, 3
      %s262 = sadd.s32 1, %s261
      %s263 = smul.addr %s258, 3
      %s264 = sadd.s32 %s262, %s263
      %s265 = smul.addr %s264, 4
      %s266 = scalar_lea.vmem %s1, %s265
      %p267 = scmp.lt.s32.totalorder %s19, 1
      %s268 = scalar_select %p267, %s19, 1
      %p269 = scmp.lt.s32.totalorder %s21, 0
      %s270 = scalar_select %p269, %s21, 0
      %s271 = smul.addr %s270, 3
      %s272 = sadd.s32 2, %s271
      %s273 = smul.addr %s268, 3
      %s274 = sadd.s32 %s272, %s273
      %s275 = smul.addr %s274, 4
      %s276 = scalar_lea.vmem %s2, %s275
      %p277 = scmp.lt.s32.totalorder %s19, 1
      %s278 = scalar_select %p277, %s19, 1
      %p279 = scmp.lt.s32.totalorder %s20, 0
      %s280 = scalar_select %p279, %s20, 0
      %s281 = sadd.s32 %s280, %s278
      %s282 = smul.addr %s281, 4
      %s283 = scalar_lea.vmem %s3, %s282
      %p285 = scmp.eq.s32.totalorder %s21, 0
      // Predicated region
      $region33: #{transformer_forward.34} parent=31 // pred_check
        %p286 = pneg %p285
      $region34: #{transformer_forward.34} parent=31 // pred_check_branch
        %288 = sbr.rel (%p286) target = $region36
      $region35: #{transformer_forward.34} parent=31 // pred_region
        %vm289 = vcmask 7168
        %290 = vst.msk [vmem:[#allocation2] sm:$0xff] %vm289, -1e+30
        %291 = vst.msk [vmem:[#allocation2 + $0x8] sm:$0xff] %vm289, -1e+30
        %292 = vst.msk [vmem:[#allocation2 + $0x10] sm:$0xff] %vm289, -1e+30
        %293 = vst.msk [vmem:[#allocation2 + $0x18] sm:$0xff] %vm289, -1e+30
        %294 = vst.msk [vmem:[#allocation3] sm:$0xff] %vm289, 0.0
        %295 = vst.msk [vmem:[#allocation3 + $0x8] sm:$0xff] %vm289, 0.0
        %296 = vst.msk [vmem:[#allocation3 + $0x10] sm:$0xff] %vm289, 0.0
        %297 = vst.msk [vmem:[#allocation3 + $0x18] sm:$0xff] %vm289, 0.0
        %298 = vst [vmem:[#allocation4] sm:$0xff] 0.0
      $region36: #{transformer_forward.34} parent=31 // pred_fallthru
        _
      %v299 = vld [vmem:[%s256] sm:$0xf]
      %v300 = vld [vmem:[%s266] sm:$0xf]
      %v301 = vld [vmem:[%s276] sm:$0xf]
      %s302 = smul.u32 %s20, 8
      %s303 = smul.u32 %s21, 8
      %v304 = vlaneseq
      %v305 = vshrl.u32 %v304, 7
      %v306 = vstv %s302
      %v307 = vadd.s32 %v306, %v305
      %v308 = vlaneseq
      %v309 = vand.u32 %v308, 127
      %v310 = vstv %s303
      %v311 = vadd.s32 %v310, %v309
      %vm312 = vcmp.le.s32.totalorder %v311, %v307
      %v313 = vsel %vm312, 0.0, -1e+09
      %vm314 = vcmask 261120
      %v316 = vsel %vm314, %v299, 0
      %v319 = vsel %vm314, %v300, 0
      %321 = vmatpush.bf16.xpose.msra.mxu0 0
      %322 = vmatpush.bf16.xpose.msra.mxu0 0
      %323 = vmatpush.bf16.xpose.msra.mxu0 0
      %324 = vmatpush.bf16.xpose.msra.mxu0 0
      %325 = vmatpush.bf16.xpose.msra.mxu0 0
      %326 = vmatpush.bf16.xpose.msra.mxu0 0
      %327 = vmatpush.bf16.xpose.msra.mxu0 0
      %328 = vmatpush.bf16.xpose.msra.mxu0 %v319
      %329 = vmatmul.bf16.gmra.mxu0 %v316
      %v330 = vpop.f32.mrf.mxu0
      %v331 = vadd.f32 0.0, %v330
      %v332 = vpop.f32.mrf.mxu0
      %333 = vdwg.mxu0
      %v334 = vmul.f32 %v331, 0.17677669
      %v335 = vadd.f32 %v334, %v313
      %v336 = vld [vmem:[#allocation2] sm:$0xff]
      %vm337 = vcmask 64512
      %v338 = vsel %vm337, %v335, -inf
      %339 = vmax.xlane.f32.xlu0 %v338
      %v340 = vpop.xlane.xlu0 %339
      %v341 = vmax.f32 %v336, %v340
      %v342 = vsub.f32 %v336, %v341
      %v343 = vmul.f32 %v342, 1.442695
      %v344 = vpow.pop %v343
      %346 = vset.pattern.permute.xlu0 0
      %347 = vperm.xlu0 %346, %v341
      %v348 = vpop.permute.xlu0 %347
      %v350 = vsub.f32 %v335, %v348
      %v351 = vmul.f32 %v350, 1.442695
      %v352 = vpow.pop %v351
      %v353 = vld [vmem:[#allocation3] sm:$0xff]
      %v354 = vmul.f32 %v344, %v353
      %v355 = vsel %vm337, %v352, 0.0
      %356 = vadd.xlane.f32.xlu0 %v355
      %v357 = vpop.xlane.xlu0 %356
      %v358 = vadd.f32 %v354, %v357
      %vm359 = vcmask 7168
      %360 = vst.msk [vmem:[#allocation3] sm:$0xff] %vm359, %v358
      %v361 = vld [vmem:[#allocation4] sm:$0xff]
      %363 = vset.pattern.permute.xlu0 0
      %364 = vperm.xlu0 %363, %v344
      %v365 = vpop.permute.xlu0 %364
      %v367 = vmul.f32 %v365, %v361
      %v368 = vpack.c.bf16 %v352, %v352
      %v370 = vsel %vm337, %v368, 0
      %vm372 = vcmask 1043456
      %v374 = vsel %vm372, %v301, 0
      %376 = vmatpush.bf16.msra.mxu0 0
      %377 = vmatpush.bf16.msra.mxu0 0
      %378 = vmatpush.bf16.msra.mxu0 0
      %379 = vmatpush.bf16.msra.mxu0 0
      %380 = vmatpush.bf16.msra.mxu0 0
      %381 = vmatpush.bf16.msra.mxu0 0
      %382 = vmatpush.bf16.msra.mxu0 0
      %383 = vmatpush.bf16.msra.mxu0 %v374
      %384 = vmatmul.bf16.gmra.mxu0 %v370
      %v385 = vpop.f32.mrf.mxu0
      %v386 = vadd.f32 0.0, %v385
      %v387 = vpop.f32.mrf.mxu0
      %388 = vdwg.mxu0
      %v389 = vadd.f32 %v367, %v386
      %390 = vst.msk [vmem:[#allocation4] sm:$0xff] %vm314, %v389
      %391 = vst.msk [vmem:[#allocation2] sm:$0xff] %vm359, %v341
      %v393 = vunpack.c.l.b16 %v299
      %v394 = vpack.c.b16 %v393, %v393
      %395 = vrot.lane.b32.xlu0 %v394, 96
      %v396 = vpop.permute.xlu0 %395
      %v398 = vunpack.c.l.b16 %v300
      %v399 = vpack.c.b16 %v398, %v398
      %400 = vrot.lane.b32.xlu0 %v399, 96
      %v401 = vpop.permute.xlu0 %400
      %v403 = vsel %vm314, %v396, 0
      %v406 = vsel %vm314, %v401, 0
      %408 = vmatpush.bf16.xpose.msra.mxu0 0
      %409 = vmatpush.bf16.xpose.msra.mxu0 0
      %410 = vmatpush.bf16.xpose.msra.mxu0 0
      %411 = vmatpush.bf16.xpose.msra.mxu0 0
      %412 = vmatpush.bf16.xpose.msra.mxu0 0
      %413 = vmatpush.bf16.xpose.msra.mxu0 0
      %414 = vmatpush.bf16.xpose.msra.mxu0 0
      %415 = vmatpush.bf16.xpose.msra.mxu0 %v406
      %416 = vmatmul.bf16.gmra.mxu0 %v403
      %v417 = vpop.f32.mrf.mxu0
      %v418 = vadd.f32 0.0, %v417
      %v419 = vpop.f32.mrf.mxu0
      %420 = vdwg.mxu0
      %v421 = vmul.f32 %v418, 0.17677669
      %v422 = vadd.f32 %v421, %v313
      %s423 = scalar_lea.vmem [#allocation2], 8
      %v424 = vld [vmem:[%s423] sm:$0xff]
      %v425 = vsel %vm337, %v422, -inf
      %426 = vmax.xlane.f32.xlu0 %v425
      %v427 = vpop.xlane.xlu0 %426
      %v428 = vmax.f32 %v424, %v427
      %v429 = vsub.f32 %v424, %v428
      %v430 = vmul.f32 %v429, 1.442695
      %v431 = vpow.pop %v430
      %433 = vset.pattern.permute.xlu0 0
      %434 = vperm.xlu0 %433, %v428
      %v435 = vpop.permute.xlu0 %434
      %v437 = vsub.f32 %v422, %v435
      %v438 = vmul.f32 %v437, 1.442695
      %v439 = vpow.pop %v438
      %s440 = scalar_lea.vmem [#allocation3], 8
      %v441 = vld [vmem:[%s440] sm:$0xff]
      %v442 = vmul.f32 %v431, %v441
      %v443 = vsel %vm337, %v439, 0.0
      %444 = vadd.xlane.f32.xlu0 %v443
      %v445 = vpop.xlane.xlu0 %444
      %v446 = vadd.f32 %v442, %v445
      %447 = vst.msk [vmem:[%s440] sm:$0xff] %vm359, %v446
      %v448 = vld [vmem:[#allocation4] sm:$0xff]
      %450 = vset.pattern.permute.xlu0 0
      %451 = vperm.xlu0 %450, %v431
      %v452 = vpop.permute.xlu0 %451
      %v454 = vmul.f32 %v452, %v448
      %v455 = vpack.c.bf16 %v439, %v439
      %v457 = vunpack.c.l.b16 %v301
      %v458 = vpack.c.b16 %v457, %v457
      %459 = vrot.lane.b32.xlu0 %v458, 96
      %v460 = vpop.permute.xlu0 %459
      %v462 = vsel %vm337, %v455, 0
      %v465 = vsel %vm372, %v460, 0
      %467 = vmatpush.bf16.msra.mxu0 0
      %468 = vmatpush.bf16.msra.mxu0 0
      %469 = vmatpush.bf16.msra.mxu0 0
      %470 = vmatpush.bf16.msra.mxu0 0
      %471 = vmatpush.bf16.msra.mxu0 0
      %472 = vmatpush.bf16.msra.mxu0 0
      %473 = vmatpush.bf16.msra.mxu0 0
      %474 = vmatpush.bf16.msra.mxu0 %v465
      %475 = vmatmul.bf16.gmra.mxu0 %v462
      %v476 = vpop.f32.mrf.mxu0
      %v477 = vadd.f32 0.0, %v476
      %v478 = vpop.f32.mrf.mxu0
      %479 = vdwg.mxu0
      %481 = vrot.lane.b32.xlu0 %v477, 32
      %v482 = vpop.permute.xlu0 %481
      %v484 = vadd.f32 %v454, %v482
      %vm485 = vcmask 523520
      %486 = vst.msk [vmem:[#allocation4] sm:$0xff] %vm485, %v484
      %487 = vst.msk [vmem:[%s423] sm:$0xff] %vm359, %v428
      %488 = vrot.lane.b32.xlu0 %v394, 64
      %v489 = vpop.permute.xlu0 %488
      %490 = vrot.lane.b32.xlu0 %v399, 64
      %v491 = vpop.permute.xlu0 %490
      %v493 = vsel %vm314, %v489, 0
      %v496 = vsel %vm314, %v491, 0
      %498 = vmatpush.bf16.xpose.msra.mxu0 0
      %499 = vmatpush.bf16.xpose.msra.mxu0 0
      %500 = vmatpush.bf16.xpose.msra.mxu0 0
      %501 = vmatpush.bf16.xpose.msra.mxu0 0
      %502 = vmatpush.bf16.xpose.msra.mxu0 0
      %503 = vmatpush.bf16.xpose.msra.mxu0 0
      %504 = vmatpush.bf16.xpose.msra.mxu0 0
      %505 = vmatpush.bf16.xpose.msra.mxu0 %v496
      %506 = vmatmul.bf16.gmra.mxu0 %v493
      %v507 = vpop.f32.mrf.mxu0
      %v508 = vadd.f32 0.0, %v507
      %v509 = vpop.f32.mrf.mxu0
      %510 = vdwg.mxu0
      %v511 = vmul.f32 %v508, 0.17677669
      %v512 = vadd.f32 %v511, %v313
      %s513 = scalar_lea.vmem [#allocation2], 16
      %v514 = vld [vmem:[%s513] sm:$0xff]
      %v515 = vsel %vm337, %v512, -inf
      %516 = vmax.xlane.f32.xlu0 %v515
      %v517 = vpop.xlane.xlu0 %516
      %v518 = vmax.f32 %v514, %v517
      %v519 = vsub.f32 %v514, %v518
      %v520 = vmul.f32 %v519, 1.442695
      %v521 = vpow.pop %v520
      %523 = vset.pattern.permute.xlu0 0
      %524 = vperm.xlu0 %523, %v518
      %v525 = vpop.permute.xlu0 %524
      %v527 = vsub.f32 %v512, %v525
      %v528 = vmul.f32 %v527, 1.442695
      %v529 = vpow.pop %v528
      %s530 = scalar_lea.vmem [#allocation3], 16
      %v531 = vld [vmem:[%s530] sm:$0xff]
      %v532 = vmul.f32 %v521, %v531
      %v533 = vsel %vm337, %v529, 0.0
      %534 = vadd.xlane.f32.xlu0 %v533
      %v535 = vpop.xlane.xlu0 %534
      %v536 = vadd.f32 %v532, %v535
      %537 = vst.msk [vmem:[%s530] sm:$0xff] %vm359, %v536
      %v538 = vld [vmem:[#allocation4] sm:$0xff]
      %540 = vset.pattern.permute.xlu0 0
      %541 = vperm.xlu0 %540, %v521
      %v542 = vpop.permute.xlu0 %541
      %v544 = vmul.f32 %v542, %v538
      %v545 = vpack.c.bf16 %v529, %v529
      %546 = vrot.lane.b32.xlu0 %v458, 64
      %v547 = vpop.permute.xlu0 %546
      %v549 = vsel %vm337, %v545, 0
      %v552 = vsel %vm372, %v547, 0
      %554 = vmatpush.bf16.msra.mxu0 0
      %555 = vmatpush.bf16.msra.mxu0 0
      %556 = vmatpush.bf16.msra.mxu0 0
      %557 = vmatpush.bf16.msra.mxu0 0
      %558 = vmatpush.bf16.msra.mxu0 0
      %559 = vmatpush.bf16.msra.mxu0 0
      %560 = vmatpush.bf16.msra.mxu0 0
      %561 = vmatpush.bf16.msra.mxu0 %v552
      %562 = vmatmul.bf16.gmra.mxu0 %v549
      %v563 = vpop.f32.mrf.mxu0
      %v564 = vadd.f32 0.0, %v563
      %v565 = vpop.f32.mrf.mxu0
      %566 = vdwg.mxu0
      %568 = vrot.lane.b32.xlu0 %v564, 64
      %v569 = vpop.permute.xlu0 %568
      %v571 = vadd.f32 %v544, %v569
      %vm572 = vcmask 785920
      %573 = vst.msk [vmem:[#allocation4] sm:$0xff] %vm572, %v571
      %574 = vst.msk [vmem:[%s513] sm:$0xff] %vm359, %v518
      %575 = vrot.lane.b32.xlu0 %v394, 32
      %v576 = vpop.permute.xlu0 %575
      %577 = vrot.lane.b32.xlu0 %v399, 32
      %v578 = vpop.permute.xlu0 %577
      %v580 = vsel %vm314, %v576, 0
      %v583 = vsel %vm314, %v578, 0
      %585 = vmatpush.bf16.xpose.msra.mxu0 0
      %586 = vmatpush.bf16.xpose.msra.mxu0 0
      %587 = vmatpush.bf16.xpose.msra.mxu0 0
      %588 = vmatpush.bf16.xpose.msra.mxu0 0
      %589 = vmatpush.bf16.xpose.msra.mxu0 0
      %590 = vmatpush.bf16.xpose.msra.mxu0 0
      %591 = vmatpush.bf16.xpose.msra.mxu0 0
      %592 = vmatpush.bf16.xpose.msra.mxu0 %v583
      %593 = vmatmul.bf16.gmra.mxu0 %v580
      %v594 = vpop.f32.mrf.mxu0
      %v595 = vadd.f32 0.0, %v594
      %v596 = vpop.f32.mrf.mxu0
      %597 = vdwg.mxu0
      %v598 = vmul.f32 %v595, 0.17677669
      %v599 = vadd.f32 %v598, %v313
      %s600 = scalar_lea.vmem [#allocation2], 24
      %v601 = vld [vmem:[%s600] sm:$0xff]
      %v602 = vsel %vm337, %v599, -inf
      %603 = vmax.xlane.f32.xlu0 %v602
      %v604 = vpop.xlane.xlu0 %603
      %v605 = vmax.f32 %v601, %v604
      %v606 = vsub.f32 %v601, %v605
      %v607 = vmul.f32 %v606, 1.442695
      %v608 = vpow.pop %v607
      %610 = vset.pattern.permute.xlu0 0
      %611 = vperm.xlu0 %610, %v605
      %v612 = vpop.permute.xlu0 %611
      %v614 = vsub.f32 %v599, %v612
      %v615 = vmul.f32 %v614, 1.442695
      %v616 = vpow.pop %v615
      %s617 = scalar_lea.vmem [#allocation3], 24
      %v618 = vld [vmem:[%s617] sm:$0xff]
      %v619 = vmul.f32 %v608, %v618
      %v620 = vsel %vm337, %v616, 0.0
      %621 = vadd.xlane.f32.xlu0 %v620
      %v622 = vpop.xlane.xlu0 %621
      %v623 = vadd.f32 %v619, %v622
      %624 = vst.msk [vmem:[%s617] sm:$0xff] %vm359, %v623
      %v625 = vld [vmem:[#allocation4] sm:$0xff]
      %627 = vset.pattern.permute.xlu0 0
      %628 = vperm.xlu0 %627, %v608
      %v629 = vpop.permute.xlu0 %628
      %v631 = vmul.f32 %v629, %v625
      %v632 = vpack.c.bf16 %v616, %v616
      %633 = vrot.lane.b32.xlu0 %v458, 32
      %v634 = vpop.permute.xlu0 %633
      %v636 = vsel %vm337, %v632, 0
      %v639 = vsel %vm372, %v634, 0
      %641 = vmatpush.bf16.msra.mxu0 0
      %642 = vmatpush.bf16.msra.mxu0 0
      %643 = vmatpush.bf16.msra.mxu0 0
      %644 = vmatpush.bf16.msra.mxu0 0
      %645 = vmatpush.bf16.msra.mxu0 0
      %646 = vmatpush.bf16.msra.mxu0 0
      %647 = vmatpush.bf16.msra.mxu0 0
      %648 = vmatpush.bf16.msra.mxu0 %v639
      %649 = vmatmul.bf16.gmra.mxu0 %v636
      %v650 = vpop.f32.mrf.mxu0
      %v651 = vadd.f32 0.0, %v650
      %v652 = vpop.f32.mrf.mxu0
      %653 = vdwg.mxu0
      %655 = vrot.lane.b32.xlu0 %v651, 96
      %v656 = vpop.permute.xlu0 %655
      %v658 = vadd.f32 %v631, %v656
      %vm659 = vcmask 1048320
      %660 = vst.msk [vmem:[#allocation4] sm:$0xff] %vm659, %v658
      %661 = vst.msk [vmem:[%s600] sm:$0xff] %vm359, %v605
      // Predicated region
      $region37: #{transformer_forward.34} parent=31 // pred_check
        %p662 = pneg %p285
      $region38: #{transformer_forward.34} parent=31 // pred_check_branch
        %664 = sbr.rel (%p662) target = $region40
      $region39: #{transformer_forward.34} parent=31 // pred_region
        %v665 = vld [vmem:[#allocation3] sm:$0xff]
        %v666 = vrcp.pop %v665
        %v667 = vld [vmem:[#allocation4] sm:$0xff]
        %669 = vset.pattern.permute.xlu0 0
        %670 = vperm.xlu0 %669, %v666
        %v671 = vpop.permute.xlu0 %670
        %v673 = vmul.f32 %v667, %v671
        %v674 = vld [vmem:[%s440] sm:$0xff]
        %v675 = vrcp.pop %v674
        %677 = vset.pattern.permute.xlu0 0
        %678 = vperm.xlu0 %677, %v675
        %v679 = vpop.permute.xlu0 %678
        %v681 = vmul.f32 %v667, %v679
        %v682 = vld [vmem:[%s530] sm:$0xff]
        %v683 = vrcp.pop %v682
        %685 = vset.pattern.permute.xlu0 0
        %686 = vperm.xlu0 %685, %v683
        %v687 = vpop.permute.xlu0 %686
        %v689 = vmul.f32 %v667, %v687
        %v690 = vld [vmem:[%s617] sm:$0xff]
        %v691 = vrcp.pop %v690
        %693 = vset.pattern.permute.xlu0 0
        %694 = vperm.xlu0 %693, %v691
        %v695 = vpop.permute.xlu0 %694
        %v697 = vmul.f32 %v667, %v695
        %v698 = vsel %vm314, %v673, %v681
        %vm699 = vcmask 523264
        %v700 = vsel %vm699, %v698, %v689
        %vm701 = vcmask 785408
        %v702 = vsel %vm701, %v700, %v697
        %v703 = vpack.c.bf16 %v702, %v702
        %704 = vst [vmem:[%s283] sm:$0xf] %v703
      $region40: #{transformer_forward.34} parent=31 // pred_fallthru
        _
      %p705 = scmp.lt.s32.totalorder %s19, 1
      %s706 = scalar_select %p705, %s19, 1
      %p707 = scmp.lt.s32.totalorder %s20, 0
      %s708 = scalar_select %p707, %s20, 0
      %s709 = sadd.s32 %s708, %s706
      %s710 = smul.addr %s709, 4
      %s711 = scalar_lea.vmem %s3, %s710
      // Predicated region
      $region41: #{transformer_forward.34} parent=31 // pred_check
        %p712 = pneg %p137
      $region42: #{transformer_forward.34} parent=31 // pred_check_branch
        %714 = sbr.rel (%p712) target = $region44
      $region43: #{transformer_forward.34} parent=31 // pred_region
        _
      $region44: #{transformer_forward.34} parent=31 // pred_fallthru
        _
    $region32: #{transformer_forward.34} parent=5 // pred_fallthru
      _
    %p715 = scmp.le.s32.totalorder 2, %s9
    // Predicated region
    $region45: #{transformer_forward.34} parent=5 // pred_check
      %p716 = pneg %p715
    $region46: #{transformer_forward.34} parent=5 // pred_check_branch
      %718 = sbr.rel (%p716) target = $region48
    $region47: #{transformer_forward.34} parent=5 // pred_region
      %s719 = ssub.s32 %s9, 2
      // Predicated region
      $region49: #{transformer_forward.34} parent=47 // pred_check
        %p720 = pneg %p143
      $region50: #{transformer_forward.34} parent=47 // pred_check_branch
        %722 = sbr.rel (%p720) target = $region52
      $region51: #{transformer_forward.34} parent=47 // pred_region
        %p723 = scmp.lt.s32.totalorder %s22, 1
        %s724 = scalar_select %p723, %s22, 1
        %p725 = scmp.lt.s32.totalorder %s23, 0
        %s726 = scalar_select %p725, %s23, 0
        %s727 = sadd.s32 %s726, %s724
        %s728 = smul.addr %s727, 4
        %s729 = scalar_lea.vmem %s3, %s728
      $region52: #{transformer_forward.34} parent=47 // pred_fallthru
        _
    $region48: #{transformer_forward.34} parent=5 // pred_fallthru
      _
  $region6: #{transformer_forward.34} parent=0 // loop_footer
    %s13 = sadd.s32 1, %s9
  $region7: #{transformer_forward.34} parent=0 // loop_footer_branch
    %8 = sbr.rel target = $region3
  $region8: #{transformer_forward.34} parent=0 // loop_exit
    _

// kernel: transformer_forward.36
$region0: #{transformer_forward.36}
  #allocation0 [shape = 'u32[]', space=smem, size = 0x4, offset = 0x4, fixed_abs, tag = 'smem constant byte address 0x4 - core index']
  #allocation1 [shape = 'u32[72,128]{1,0:T(1,128)}', space=vmem, size = 0x9000, scoped, tag = 'internal scratch']
  #allocation2 [shape = 'f32[16,128]{1,0:T(8,128)}', space=vmem, size = 0x2000, scoped, tag = 'scratch operand']
  %s0 = inlined_call_operand.vmem [shape: bf16[16,128], index: 0, kind: input, shape index: {}]
  %s1 = inlined_call_operand.vmem [shape: bf16[128,128], index: 1, kind: input, shape index: {}]
  %s2 = inlined_call_operand.vmem [shape: f32[1,128], index: 2, kind: input, shape index: {}]
  %s3 = inlined_call_operand.vmem [shape: bf16[16,128], index: 3, kind: output, shape index: {}]
  %s4 = sld [smem:[#allocation0]]
  $region30: #{transformer_forward.36} parent=0
    _
  %s6 = ssub.s32 1, %s4
  %s7 = scalar_select 0, %s6, %s4
  // Predicated region
  $region2: #{transformer_forward.36} parent=0 // pred_check
    _
  $region3: #{transformer_forward.36} parent=0 // pred_check_branch
    %9 = sbr.rel (0) target = $region5
  $region4: #{transformer_forward.36} parent=0 // pred_region
    _
  $region5: #{transformer_forward.36} parent=0 // pred_fallthru
    _
  // Predicated region
  $region6: #{transformer_forward.36} parent=0 // pred_check
    _
  $region7: #{transformer_forward.36} parent=0 // pred_check_branch
    %11 = sbr.rel (0) target = $region9
  $region8: #{transformer_forward.36} parent=0 // pred_region
    _
  $region9: #{transformer_forward.36} parent=0 // pred_fallthru
    _
  // Predicated region
  $region10: #{transformer_forward.36} parent=0 // pred_check
    _
  $region11: #{transformer_forward.36} parent=0 // pred_check_branch
    %13 = sbr.rel (0) target = $region13
  $region12: #{transformer_forward.36} parent=0 // pred_region
    _
  $region13: #{transformer_forward.36} parent=0 // pred_fallthru
    _
  %p14 = scmp.eq.s32.totalorder 0, 0
  // Predicated region
  $region14: #{transformer_forward.36} parent=0 // pred_check
    %p15 = pneg %p14
  $region15: #{transformer_forward.36} parent=0 // pred_check_branch
    %17 = sbr.rel (%p15) target = $region17
  $region16: #{transformer_forward.36} parent=0 // pred_region
    %18 = vst [vmem:[#allocation2] sm:$0xff] 0.0
    %19 = vst [vmem:[#allocation2 + $0x8] sm:$0xff] 0.0
  $region17: #{transformer_forward.36} parent=0 // pred_fallthru
    _
  %v20 = vld [vmem:[#allocation2] sm:$0xff]
  %v21 = vld [vmem:[#allocation2 + $0x8] sm:$0xff]
  %v22 = vld [vmem:[%s0] sm:$0xf]
  %v23 = vld [vmem:[%s0 + $0x4] sm:$0xf]
  %v24 = vld [vmem:[%s1] sm:$0xf]
  %v25 = vld [vmem:[%s1 + $0x4] sm:$0xf]
  %v26 = vld [vmem:[%s1 + $0x8] sm:$0xf]
  %v27 = vld [vmem:[%s1 + $0xc] sm:$0xf]
  %v28 = vld [vmem:[%s1 + $0x10] sm:$0xf]
  %v29 = vld [vmem:[%s1 + $0x14] sm:$0xf]
  %v30 = vld [vmem:[%s1 + $0x18] sm:$0xf]
  %v31 = vld [vmem:[%s1 + $0x1c] sm:$0xf]
  %v32 = vld [vmem:[%s1 + $0x20] sm:$0xf]
  %v33 = vld [vmem:[%s1 + $0x24] sm:$0xf]
  %v34 = vld [vmem:[%s1 + $0x28] sm:$0xf]
  %v35 = vld [vmem:[%s1 + $0x2c] sm:$0xf]
  %v36 = vld [vmem:[%s1 + $0x30] sm:$0xf]
  %v37 = vld [vmem:[%s1 + $0x34] sm:$0xf]
  %v38 = vld [vmem:[%s1 + $0x38] sm:$0xf]
  %v39 = vld [vmem:[%s1 + $0x3c] sm:$0xf]
  %v42 = vunpack.c.l.b16 %v22
  %v43 = vunpack.c.l.b16 %v23
  %v44 = vpack.c.b16 %v43, %v42
  %v62 = vunpack.c.l.b16 %v24
  %v63 = vunpack.c.l.b16 %v25
  %v64 = vunpack.c.l.b16 %v26
  %v65 = vunpack.c.l.b16 %v27
  %v66 = vunpack.c.l.b16 %v28
  %v67 = vunpack.c.l.b16 %v29
  %v68 = vunpack.c.l.b16 %v30
  %v69 = vunpack.c.l.b16 %v31
  %v70 = vunpack.c.l.b16 %v32
  %v71 = vunpack.c.l.b16 %v33
  %v72 = vunpack.c.l.b16 %v34
  %v73 = vunpack.c.l.b16 %v35
  %v74 = vunpack.c.l.b16 %v36
  %v75 = vunpack.c.l.b16 %v37
  %v76 = vunpack.c.l.b16 %v38
  %v77 = vunpack.c.l.b16 %v39
  %v78 = vpack.c.b16 %v63, %v62
  %v79 = vpack.c.b16 %v65, %v64
  %v80 = vpack.c.b16 %v67, %v66
  %v81 = vpack.c.b16 %v69, %v68
  %v82 = vpack.c.b16 %v71, %v70
  %v83 = vpack.c.b16 %v73, %v72
  %v84 = vpack.c.b16 %v75, %v74
  %v85 = vpack.c.b16 %v77, %v76
  %94 = vmatpush.bf16.msra.mxu0 %v85
  %95 = vmatpush.bf16.msra.mxu0 %v84
  %96 = vmatpush.bf16.msra.mxu0 %v83
  %97 = vmatpush.bf16.msra.mxu0 %v82
  %98 = vmatpush.bf16.msra.mxu0 %v81
  %99 = vmatpush.bf16.msra.mxu0 %v80
  %100 = vmatpush.bf16.msra.mxu0 %v79
  %101 = vmatpush.bf16.msra.mxu0 %v78
  %102 = vmatmul.bf16.gmra.mxu0 %v44
  %v103 = vpop.f32.mrf.mxu0
  %v104 = vadd.f32 0.0, %v103
  %v105 = vpop.f32.mrf.mxu0
  %v106 = vadd.f32 0.0, %v105
  %107 = vdwg.mxu0
  %v108 = vadd.f32 %v20, %v104
  %v109 = vadd.f32 %v21, %v106
  %110 = vst [vmem:[#allocation2] sm:$0xff] %v108
  %111 = vst [vmem:[#allocation2 + $0x8] sm:$0xff] %v109
  // Predicated region
  $region18: #{transformer_forward.36} parent=0 // pred_check
    %p112 = pneg %p14
  $region19: #{transformer_forward.36} parent=0 // pred_check_branch
    %114 = sbr.rel (%p112) target = $region21
  $region20: #{transformer_forward.36} parent=0 // pred_region
    %v115 = vld [vmem:[#allocation2] sm:$0xff]
    %v116 = vld [vmem:[#allocation2 + $0x8] sm:$0xff]
    %v117 = vld [vmem:[%s2] sm:$0x1]
    %v119 = vperm.slane %v117, 0
    %v121 = vadd.f32 %v115, %v119
    %v122 = vadd.f32 %v116, %v119
    %v123 = vpack.c.bf16 %v121, %v121
    %v124 = vpack.c.bf16 %v122, %v122
    %125 = vst [vmem:[%s3] sm:$0xf] %v123
    %126 = vst [vmem:[%s3 + $0x4] sm:$0xf] %v124
  $region21: #{transformer_forward.36} parent=0 // pred_fallthru
    _
  // Predicated region
  $region22: #{transformer_forward.36} parent=0 // pred_check
    _
  $region23: #{transformer_forward.36} parent=0 // pred_check_branch
    %128 = sbr.rel (0) target = $region25
  $region24: #{transformer_forward.36} parent=0 // pred_region
    _
  $region25: #{transformer_forward.36} parent=0 // pred_fallthru
    _
  // Predicated region
  $region26: #{transformer_forward.36} parent=0 // pred_check
    _
  $region27: #{transformer_forward.36} parent=0 // pred_check_branch
    %130 = sbr.rel (0) target = $region29
  $region28: #{transformer_forward.36} parent=0 // pred_region
    _
  $region29: #{transformer_forward.36} parent=0 // pred_fallthru
    _

// kernel: transformer_forward.39
$region0: #{transformer_forward.39}
  #allocation0 [shape = 'u32[]', space=smem, size = 0x4, offset = 0x4, fixed_abs, tag = 'smem constant byte address 0x4 - core index']
  #allocation1 [shape = 'u32[72,128]{1,0:T(1,128)}', space=vmem, size = 0x9000, scoped, tag = 'internal scratch']
  #allocation2 [shape = 'f32[16,128]{1,0:T(8,128)}', space=vmem, size = 0x2000, scoped, tag = 'scratch operand']
  %s0 = inlined_call_operand.vmem [shape: bf16[16,128], index: 0, kind: input, shape index: {}]
  %s1 = inlined_call_operand.vmem [shape: bf16[128,128], index: 1, kind: input, shape index: {}]
  %s2 = inlined_call_operand.vmem [shape: f32[1,128], index: 2, kind: input, shape index: {}]
  %s3 = inlined_call_operand.vmem [shape: bf16[16,128], index: 3, kind: input, shape index: {}]
  %s4 = inlined_call_operand.hbm [shape: f32[1,128], index: 4, kind: input, shape index: {}]
  %s5 = inlined_call_operand.hbm [shape: f32[1,128], index: 5, kind: input, shape index: {}]
  %s6 = inlined_call_operand.vmem [shape: bf16[16,128], index: 6, kind: output, shape index: {}]
  %s7 = sld [smem:[#allocation0]]
  $region50: #{transformer_forward.39} parent=0
    _
  %s9 = ssub.s32 1, %s7
  %s10 = scalar_select 0, %s9, %s7
  $region1: #{transformer_forward.39} parent=0
    #allocation3 [shape = 'u8[512]{0}', space=vmem, size = 0x400, scoped, tag = 'input window, operand 4, single buffered']
    #allocation4 [shape = 's32[1]{0}', space=sflag, size = 0x4, scoped, tag = 'scoped memory for transformer_forward.39']
    #allocation5 [shape = 'u8[512]{0}', space=vmem, size = 0x400, scoped, tag = 'input window, operand 5, single buffered']
    #allocation6 [shape = 's32[1]{0}', space=sflag, size = 0x4, scoped, tag = 'scoped memory for transformer_forward.39']
    %11 = vsyncpa [#allocation4], 0
    %12 = vsyncpa [#allocation6], 0
    // Predicated region
    $region2: #{transformer_forward.39} parent=1 // pred_check
      _
    $region3: #{transformer_forward.39} parent=1 // pred_check_branch
      %14 = sbr.rel (0) target = $region5
    $region4: #{transformer_forward.39} parent=1 // pred_region
      _
    $region5: #{transformer_forward.39} parent=1 // pred_fallthru
      _
    // Predicated region
    $region6: #{transformer_forward.39} parent=1 // pred_check
      _
    $region7: #{transformer_forward.39} parent=1 // pred_check_branch
      %16 = sbr.rel (0) target = $region9
    $region8: #{transformer_forward.39} parent=1 // pred_region
      _
    $region9: #{transformer_forward.39} parent=1 // pred_fallthru
      _
    // Predicated region
    $region10: #{transformer_forward.39} parent=1 // pred_check
      _
    $region11: #{transformer_forward.39} parent=1 // pred_check_branch
      %18 = sbr.rel (0) target = $region13
    $region12: #{transformer_forward.39} parent=1 // pred_region
      _
    $region13: #{transformer_forward.39} parent=1 // pred_fallthru
      _
    // Predicated region
    $region14: #{transformer_forward.39} parent=1 // pred_check
      _
    $region15: #{transformer_forward.39} parent=1 // pred_check_branch
      %20 = sbr.rel (0) target = $region17
    $region16: #{transformer_forward.39} parent=1 // pred_region
      _
    $region17: #{transformer_forward.39} parent=1 // pred_fallthru
      _
    // Predicated region
    $region18: #{transformer_forward.39} parent=1 // pred_check
      _
    $region19: #{transformer_forward.39} parent=1 // pred_check_branch
      %22 = sbr.rel (0) target = $region21
    $region20: #{transformer_forward.39} parent=1 // pred_region
      %24 = vsyncadd [#allocation4], 0
      %s26 = sshll.u32 %s4, 4
      %s27 = int_to_ptr.hbm [resolvable:$true] %s26
      %s28 = sshll.u32 [#allocation3], 4
      %s29 = int_to_ptr.vmem [resolvable:$true] %s28
      %31 = dma.hbm_to_vmem [thread:$0]  %s27, 16, %s29, [#allocation4]
    $region21: #{transformer_forward.39} parent=1 // pred_fallthru
      _
    // Predicated region
    $region22: #{transformer_forward.39} parent=1 // pred_check
      _
    $region23: #{transformer_forward.39} parent=1 // pred_check_branch
      %33 = sbr.rel (0) target = $region25
    $region24: #{transformer_forward.39} parent=1 // pred_region
      %35 = vsyncadd [#allocation6], 0
      %s37 = sshll.u32 %s5, 4
      %s38 = int_to_ptr.hbm [resolvable:$true] %s37
      %s39 = sshll.u32 [#allocation5], 4
      %s40 = int_to_ptr.vmem [resolvable:$true] %s39
      %42 = dma.hbm_to_vmem [thread:$0]  %s38, 16, %s40, [#allocation6]
    $region25: #{transformer_forward.39} parent=1 // pred_fallthru
      _
    // Predicated region
    $region26: #{transformer_forward.39} parent=1 // pred_check
      _
    $region27: #{transformer_forward.39} parent=1 // pred_check_branch
      %44 = sbr.rel (0) target = $region29
    $region28: #{transformer_forward.39} parent=1 // pred_region
      %46 = dma.done [#allocation4], 16
    $region29: #{transformer_forward.39} parent=1 // pred_fallthru
      _
    // Predicated region
    $region30: #{transformer_forward.39} parent=1 // pred_check
      _
    $region31: #{transformer_forward.39} parent=1 // pred_check_branch
      %48 = sbr.rel (0) target = $region33
    $region32: #{transformer_forward.39} parent=1 // pred_region
      %50 = dma.done [#allocation6], 16
    $region33: #{transformer_forward.39} parent=1 // pred_fallthru
      _
    %p51 = scmp.eq.s32.totalorder 0, 0
    // Predicated region
    $region34: #{transformer_forward.39} parent=1 // pred_check
      %p52 = pneg %p51
    $region35: #{transformer_forward.39} parent=1 // pred_check_branch
      %54 = sbr.rel (%p52) target = $region37
    $region36: #{transformer_forward.39} parent=1 // pred_region
      %55 = vst [vmem:[#allocation2] sm:$0xff] 0.0
      %56 = vst [vmem:[#allocation2 + $0x8] sm:$0xff] 0.0
    $region37: #{transformer_forward.39} parent=1 // pred_fallthru
      _
    %v57 = vld [vmem:[#allocation2] sm:$0xff]
    %v58 = vld [vmem:[#allocation2 + $0x8] sm:$0xff]
    %v59 = vld [vmem:[%s0] sm:$0xf]
    %v60 = vld [vmem:[%s0 + $0x4] sm:$0xf]
    %v61 = vld [vmem:[%s1] sm:$0xf]
    %v62 = vld [vmem:[%s1 + $0x4] sm:$0xf]
    %v63 = vld [vmem:[%s1 + $0x8] sm:$0xf]
    %v64 = vld [vmem:[%s1 + $0xc] sm:$0xf]
    %v65 = vld [vmem:[%s1 + $0x10] sm:$0xf]
    %v66 = vld [vmem:[%s1 + $0x14] sm:$0xf]
    %v67 = vld [vmem:[%s1 + $0x18] sm:$0xf]
    %v68 = vld [vmem:[%s1 + $0x1c] sm:$0xf]
    %v69 = vld [vmem:[%s1 + $0x20] sm:$0xf]
    %v70 = vld [vmem:[%s1 + $0x24] sm:$0xf]
    %v71 = vld [vmem:[%s1 + $0x28] sm:$0xf]
    %v72 = vld [vmem:[%s1 + $0x2c] sm:$0xf]
    %v73 = vld [vmem:[%s1 + $0x30] sm:$0xf]
    %v74 = vld [vmem:[%s1 + $0x34] sm:$0xf]
    %v75 = vld [vmem:[%s1 + $0x38] sm:$0xf]
    %v76 = vld [vmem:[%s1 + $0x3c] sm:$0xf]
    %v79 = vunpack.c.l.b16 %v59
    %v80 = vunpack.c.l.b16 %v60
    %v81 = vpack.c.b16 %v80, %v79
    %v99 = vunpack.c.l.b16 %v61
    %v100 = vunpack.c.l.b16 %v62
    %v101 = vunpack.c.l.b16 %v63
    %v102 = vunpack.c.l.b16 %v64
    %v103 = vunpack.c.l.b16 %v65
    %v104 = vunpack.c.l.b16 %v66
    %v105 = vunpack.c.l.b16 %v67
    %v106 = vunpack.c.l.b16 %v68
    %v107 = vunpack.c.l.b16 %v69
    %v108 = vunpack.c.l.b16 %v70
    %v109 = vunpack.c.l.b16 %v71
    %v110 = vunpack.c.l.b16 %v72
    %v111 = vunpack.c.l.b16 %v73
    %v112 = vunpack.c.l.b16 %v74
    %v113 = vunpack.c.l.b16 %v75
    %v114 = vunpack.c.l.b16 %v76
    %v115 = vpack.c.b16 %v100, %v99
    %v116 = vpack.c.b16 %v102, %v101
    %v117 = vpack.c.b16 %v104, %v103
    %v118 = vpack.c.b16 %v106, %v105
    %v119 = vpack.c.b16 %v108, %v107
    %v120 = vpack.c.b16 %v110, %v109
    %v121 = vpack.c.b16 %v112, %v111
    %v122 = vpack.c.b16 %v114, %v113
    %131 = vmatpush.bf16.msra.mxu0 %v122
    %132 = vmatpush.bf16.msra.mxu0 %v121
    %133 = vmatpush.bf16.msra.mxu0 %v120
    %134 = vmatpush.bf16.msra.mxu0 %v119
    %135 = vmatpush.bf16.msra.mxu0 %v118
    %136 = vmatpush.bf16.msra.mxu0 %v117
    %137 = vmatpush.bf16.msra.mxu0 %v116
    %138 = vmatpush.bf16.msra.mxu0 %v115
    %139 = vmatmul.bf16.gmra.mxu0 %v81
    %v140 = vpop.f32.mrf.mxu0
    %v141 = vadd.f32 0.0, %v140
    %v142 = vpop.f32.mrf.mxu0
    %v143 = vadd.f32 0.0, %v142
    %144 = vdwg.mxu0
    %v145 = vadd.f32 %v57, %v141
    %v146 = vadd.f32 %v58, %v143
    %147 = vst [vmem:[#allocation2] sm:$0xff] %v145
    %148 = vst [vmem:[#allocation2 + $0x8] sm:$0xff] %v146
    // Predicated region
    $region38: #{transformer_forward.39} parent=1 // pred_check
      %p149 = pneg %p51
    $region39: #{transformer_forward.39} parent=1 // pred_check_branch
      %151 = sbr.rel (%p149) target = $region41
    $region40: #{transformer_forward.39} parent=1 // pred_region
      %v152 = vld [vmem:[#allocation2] sm:$0xff]
      %v153 = vld [vmem:[#allocation2 + $0x8] sm:$0xff]
      %v154 = vld [vmem:[%s2] sm:$0x1]
      %v156 = vperm.slane %v154, 0
      %v158 = vadd.f32 %v152, %v156
      %v159 = vadd.f32 %v153, %v156
      %v160 = vld [vmem:[%s3] sm:$0xf]
      %v161 = vld [vmem:[%s3 + $0x4] sm:$0xf]
      %v162 = vunpack.c.l.bf16 %v160
      %v163 = vunpack.c.l.bf16 %v161
      %v164 = vadd.f32 %v158, %v162
      %v165 = vadd.f32 %v159, %v163
      %166 = vadd.xlane.f32.xlu0 %v164
      %v167 = vpop.xlane.xlu0 %166
      %168 = vadd.xlane.f32.xlu0 %v165
      %v169 = vpop.xlane.xlu0 %168
      %v170 = vrcp.pop 128.0
      %v171 = vmul.f32 128.0, %v170
      %v172 = vsub.f32 1.0, %v171
      %v173 = vmul.f32 %v170, %v172
      %v174 = vadd.f32 %v170, %v173
      %vm175 = vweird.f32 %v170
      %v176 = vsel %vm175, %v170, %v174
      %v177 = vmul.f32 %v167, %v176
      %v178 = vmul.f32 %v169, %v176
      %v179 = vsub.f32 %v164, %v177
      %v180 = vsub.f32 %v165, %v178
      %v181 = vmul.f32 %v179, %v179
      %v182 = vmul.f32 %v180, %v180
      %183 = vadd.xlane.f32.xlu0 %v181
      %v184 = vpop.xlane.xlu0 %183
      %185 = vadd.xlane.f32.xlu0 %v182
      %v186 = vpop.xlane.xlu0 %185
      %v187 = vmul.f32 %v184, %v176
      %v188 = vmul.f32 %v186, %v176
      %v189 = vadd.f32 %v187, 1e-05
      %v190 = vadd.f32 %v188, 1e-05
      %v191 = vrsqrt.pop %v189
      %v192 = vmul.f32 %v191, %v189
      %v193 = vmul.f32 %v192, %v191
      %v194 = vmul.f32 0.5, %v193
      %v195 = vsub.f32 1.5, %v194
      %v196 = vmul.f32 %v191, %v195
      %vm197 = vweird.f32 %v189
      %vm198 = vweird.f32 %v191
      %vm199 = vmor %vm197, %vm198
      %v200 = vsel %vm199, %v191, %v196
      %v201 = vrsqrt.pop %v190
      %v202 = vmul.f32 %v201, %v190
      %v203 = vmul.f32 %v202, %v201
      %v204 = vmul.f32 0.5, %v203
      %v205 = vsub.f32 1.5, %v204
      %v206 = vmul.f32 %v201, %v205
      %vm207 = vweird.f32 %v190
      %vm208 = vweird.f32 %v201
      %vm209 = vmor %vm207, %vm208
      %v210 = vsel %vm209, %v201, %v206
      %v211 = vmul.f32 %v179, %v200
      %v212 = vmul.f32 %v180, %v210
      %v213 = vld [vmem:[#allocation3] sm:$0x1]
      %v215 = vperm.slane %v213, 0
      %v217 = vmul.f32 %v211, %v215
      %v218 = vmul.f32 %v212, %v215
      %v219 = vld [vmem:[#allocation5] sm:$0x1]
      %v221 = vperm.slane %v219, 0
      %v223 = vadd.f32 %v217, %v221
      %v224 = vadd.f32 %v218, %v221
      %v225 = vpack.c.bf16 %v223, %v223
      %v226 = vpack.c.bf16 %v224, %v224
      %227 = vst [vmem:[%s6] sm:$0xf] %v225
      %228 = vst [vmem:[%s6 + $0x4] sm:$0xf] %v226
    $region41: #{transformer_forward.39} parent=1 // pred_fallthru
      _
    // Predicated region
    $region42: #{transformer_forward.39} parent=1 // pred_check
      _
    $region43: #{transformer_forward.39} parent=1 // pred_check_branch
      %230 = sbr.rel (0) target = $region45
    $region44: #{transformer_forward.39} parent=1 // pred_region
      _
    $region45: #{transformer_forward.39} parent=1 // pred_fallthru
      _
    // Predicated region
    $region46: #{transformer_forward.39} parent=1 // pred_check
      _
    $region47: #{transformer_forward.39} parent=1 // pred_check_branch
      %232 = sbr.rel (0) target = $region49
    $region48: #{transformer_forward.39} parent=1 // pred_region
      _
    $region49: #{transformer_forward.39} parent=1 // pred_fallthru
      _
    %233 = vsyncpa [#allocation4], 1
    %234 = vsyncpa [#allocation6], 1

// kernel: transformer_forward.38
$region0: #{transformer_forward.38}
  #allocation0 [shape = 'u32[]', space=smem, size = 0x4, offset = 0x4, fixed_abs, tag = 'smem constant byte address 0x4 - core index']
  #allocation1 [shape = 'u32[72,128]{1,0:T(1,128)}', space=vmem, size = 0x9000, scoped, tag = 'internal scratch']
  #allocation2 [shape = 'f32[4,8,1]{2,1,0:T(8,128)}', space=vmem, size = 0x4000, scoped, tag = 'scratch operand']
  #allocation3 [shape = 'f32[4,8,1]{2,1,0:T(8,128)}', space=vmem, size = 0x4000, scoped, tag = 'scratch operand']
  #allocation4 [shape = 'f32[8,128]{1,0:T(8,128)}', space=vmem, size = 0x1000, scoped, tag = 'scratch operand']
  %s0 = inlined_call_operand.vmem [shape: bf16[2,8,128], index: 0, kind: input, shape index: {}]
  %s1 = inlined_call_operand.vmem [shape: bf16[2,8,256], index: 1, kind: input, shape index: {}, may-alias: {1,2}]
  %s2 = inlined_call_operand.vmem [shape: bf16[2,8,256], index: 2, kind: input, shape index: {}, may-alias: {1,2}]
  %s3 = inlined_call_operand.vmem [shape: bf16[2,8,128], index: 3, kind: output, shape index: {}]
  %s4 = sld [smem:[#allocation0]]
  $region53: #{transformer_forward.38} parent=0
    _
  %s6 = ssub.s32 1, %s4
  %s7 = scalar_select 0, %s6, %s4
  loop: start=0, step=1, limit=4
  $region2: #{transformer_forward.38} parent=0 // loop_pre_header
    _
  $region3: #{transformer_forward.38} parent=0 // loop_header
    %s9 = sphi 0, %s13
    %p10 = scmp.ge.s32.totalorder %s9, 4
    %s16 = sphi 0, %s35
    %s17 = sphi 0, %s31
    %s18 = sphi 0, %s27
    %s19 = sphi 0, %s16
    %s20 = sphi 0, %s17
    %s21 = sphi 0, %s18
    %s22 = sphi 0, %s19
    %s23 = sphi 0, %s20
    %s24 = sphi 0, %s21
    %s40 = sphi 0, %s42
    %s43 = sphi 0, %s40
    %s44 = sphi 0, %s43
    %s60 = sphi 0, %s44
    %s68 = sphi 0, %s70
    %s71 = sphi 0, %s68
    %s72 = sphi 0, %s71
    %s88 = sphi 0, %s72
    %s96 = sphi 0, %s98
    %s99 = sphi 0, %s96
    %s100 = sphi 0, %s99
    %s116 = sphi 0, %s100
    %s124 = sphi 0, %s126
    %s127 = sphi 0, %s124
    %s128 = sphi 0, %s127
    %s144 = sphi 0, %s128
  $region4: #{transformer_forward.38} parent=0 // loop_header_branch
    %12 = sbr.rel (%p10) target = $region8
  $region5: #{transformer_forward.38} parent=0 // loop_body
    %s14 = ssub.s32 %s9, 1
    %s15 = ssub.s32 %s9, 2
    %s25 = sadd.s32 1, %s18
    %p26 = scmp.ge.s32.totalorder %s25, 1
    %s27 = scalar_select %p26, 0, %s25
    %s28 = sadd.s32 1, %s17
    %s29 = scalar_select %p26, %s28, %s17
    %p30 = scmp.ge.s32.totalorder %s29, 1
    %s31 = scalar_select %p30, 0, %s29
    %s32 = sadd.s32 1, %s16
    %s33 = scalar_select %p30, %s32, %s16
    %p34 = scmp.ge.s32.totalorder %s33, 2
    %s35 = scalar_select %p34, 0, %s33
    %s36 = ssub.s32 %s16, %s35
    %s37 = ssub.s32 %s17, %s31
    %s38 = sor.u32 %s36, %s37
    %p39 = scmp.eq.s32.totalorder %s38, 0
    %s41 = sadd.s32 %s40, 1
    %s42 = scalar_select %p39, %s40, %s41
    %p45 = pneg %p39
    %p46 = scmp.eq.s32.totalorder %s9, 1
    %p47 = por %p45, %p46
    %p48 = scmp.ne.s32.totalorder %s40, %s43
    %p49 = scmp.eq.s32.totalorder %s9, 0
    %p50 = por %p48, %p49
    %p51 = scmp.ne.s32.totalorder %s40, %s43
    %p52 = scmp.eq.s32.totalorder %s14, 1
    %p53 = por %p51, %p52
    %p54 = scmp.ne.s32.totalorder %s43, %s44
    %p55 = scmp.eq.s32.totalorder %s14, 0
    %p56 = por %p54, %p55
    %p57 = scmp.ne.s32.totalorder %s43, %s44
    %p58 = scmp.eq.s32.totalorder %s15, 1
    %p59 = por %p57, %p58
    %p61 = scmp.ne.s32.totalorder %s44, %s60
    %p62 = scmp.eq.s32.totalorder %s15, 0
    %p63 = por %p61, %p62
    %s64 = ssub.s32 %s16, %s35
    %s65 = ssub.s32 %s18, %s27
    %s66 = sor.u32 %s64, %s65
    %p67 = scmp.eq.s32.totalorder %s66, 0
    %s69 = sadd.s32 %s68, 1
    %s70 = scalar_select %p67, %s68, %s69
    %p73 = pneg %p67
    %p74 = scmp.eq.s32.totalorder %s9, 1
    %p75 = por %p73, %p74
    %p76 = scmp.ne.s32.totalorder %s68, %s71
    %p77 = scmp.eq.s32.totalorder %s9, 0
    %p78 = por %p76, %p77
    %p79 = scmp.ne.s32.totalorder %s68, %s71
    %p80 = scmp.eq.s32.totalorder %s14, 1
    %p81 = por %p79, %p80
    %p82 = scmp.ne.s32.totalorder %s71, %s72
    %p83 = scmp.eq.s32.totalorder %s14, 0
    %p84 = por %p82, %p83
    %p85 = scmp.ne.s32.totalorder %s71, %s72
    %p86 = scmp.eq.s32.totalorder %s15, 1
    %p87 = por %p85, %p86
    %p89 = scmp.ne.s32.totalorder %s72, %s88
    %p90 = scmp.eq.s32.totalorder %s15, 0
    %p91 = por %p89, %p90
    %s92 = ssub.s32 %s16, %s35
    %s93 = ssub.s32 %s18, %s27
    %s94 = sor.u32 %s92, %s93
    %p95 = scmp.eq.s32.totalorder %s94, 0
    %s97 = sadd.s32 %s96, 1
    %s98 = scalar_select %p95, %s96, %s97
    %p101 = pneg %p95
    %p102 = scmp.eq.s32.totalorder %s9, 1
    %p103 = por %p101, %p102
    %p104 = scmp.ne.s32.totalorder %s96, %s99
    %p105 = scmp.eq.s32.totalorder %s9, 0
    %p106 = por %p104, %p105
    %p107 = scmp.ne.s32.totalorder %s96, %s99
    %p108 = scmp.eq.s32.totalorder %s14, 1
    %p109 = por %p107, %p108
    %p110 = scmp.ne.s32.totalorder %s99, %s100
    %p111 = scmp.eq.s32.totalorder %s14, 0
    %p112 = por %p110, %p111
    %p113 = scmp.ne.s32.totalorder %s99, %s100
    %p114 = scmp.eq.s32.totalorder %s15, 1
    %p115 = por %p113, %p114
    %p117 = scmp.ne.s32.totalorder %s100, %s116
    %p118 = scmp.eq.s32.totalorder %s15, 0
    %p119 = por %p117, %p118
    %s120 = ssub.s32 %s16, %s35
    %s121 = ssub.s32 %s17, %s31
    %s122 = sor.u32 %s120, %s121
    %p123 = scmp.eq.s32.totalorder %s122, 0
    %s125 = sadd.s32 %s124, 1
    %s126 = scalar_select %p123, %s124, %s125
    %p129 = pneg %p123
    %p130 = scmp.eq.s32.totalorder %s9, 1
    %p131 = por %p129, %p130
    %p132 = scmp.ne.s32.totalorder %s124, %s127
    %p133 = scmp.eq.s32.totalorder %s9, 0
    %p134 = por %p132, %p133
    %p135 = scmp.ne.s32.totalorder %s124, %s127
    %p136 = scmp.eq.s32.totalorder %s14, 1
    %p137 = por %p135, %p136
    %p138 = scmp.ne.s32.totalorder %s127, %s128
    %p139 = scmp.eq.s32.totalorder %s14, 0
    %p140 = por %p138, %p139
    %p141 = scmp.ne.s32.totalorder %s127, %s128
    %p142 = scmp.eq.s32.totalorder %s15, 1
    %p143 = por %p141, %p142
    %p145 = scmp.ne.s32.totalorder %s128, %s144
    %p146 = scmp.eq.s32.totalorder %s15, 0
    %p147 = por %p145, %p146
    %p148 = scmp.le.s32.totalorder 1, %s9
    %p149 = scmp.lt.s32.totalorder %s9, 3
    %p150 = pnand %p148, %p149
    %p151 = pneg %p150
    // Predicated region
    $region9: #{transformer_forward.38} parent=5 // pred_check
      _
    $region10: #{transformer_forward.38} parent=5 // pred_check_branch
      %153 = sbr.rel (%p150) target = $region12
    $region11: #{transformer_forward.38} parent=5 // pred_region
      %s154 = ssub.s32 %s9, 1
    $region12: #{transformer_forward.38} parent=5 // pred_fallthru
      _
    %p155 = scmp.lt.s32.totalorder %s9, 2
    // Predicated region
    $region13: #{transformer_forward.38} parent=5 // pred_check
      %p156 = pneg %p155
    $region14: #{transformer_forward.38} parent=5 // pred_check_branch
      %158 = sbr.rel (%p156) target = $region16
    $region15: #{transformer_forward.38} parent=5 // pred_region
      // Predicated region
      $region17: #{transformer_forward.38} parent=15 // pred_check
        %p159 = pneg %p50
      $region18: #{transformer_forward.38} parent=15 // pred_check_branch
        %161 = sbr.rel (%p159) target = $region20
      $region19: #{transformer_forward.38} parent=15 // pred_region
        %p162 = scmp.lt.s32.totalorder %s16, 1
        %s163 = scalar_select %p162, %s16, 1
        %p164 = scmp.lt.s32.totalorder %s17, 0
        %s165 = scalar_select %p164, %s17, 0
        %s166 = sadd.s32 %s165, %s163
        %s167 = smul.addr %s166, 4
        %s168 = scalar_lea.vmem %s0, %s167
      $region20: #{transformer_forward.38} parent=15 // pred_fallthru
        _
      // Predicated region
      $region21: #{transformer_forward.38} parent=15 // pred_check
        %p169 = pneg %p78
      $region22: #{transformer_forward.38} parent=15 // pred_check_branch
        %171 = sbr.rel (%p169) target = $region24
      $region23: #{transformer_forward.38} parent=15 // pred_region
        %p172 = scmp.lt.s32.totalorder %s16, 1
        %s173 = scalar_select %p172, %s16, 1
        %p174 = scmp.lt.s32.totalorder %s18, 0
        %s175 = scalar_select %p174, %s18, 0
        %s176 = smul.addr %s175, 2
        %s177 = smul.addr %s173, 2
        %s178 = sadd.s32 %s176, %s177
        %s179 = smul.addr %s178, 4
        %s180 = scalar_lea.vmem %s1, %s179
      $region24: #{transformer_forward.38} parent=15 // pred_fallthru
        _
      // Predicated region
      $region25: #{transformer_forward.38} parent=15 // pred_check
        %p181 = pneg %p106
      $region26: #{transformer_forward.38} parent=15 // pred_check_branch
        %183 = sbr.rel (%p181) target = $region28
      $region27: #{transformer_forward.38} parent=15 // pred_region
        %p184 = scmp.lt.s32.totalorder %s16, 1
        %s185 = scalar_select %p184, %s16, 1
        %p186 = scmp.lt.s32.totalorder %s18, 0
        %s187 = scalar_select %p186, %s18, 0
        %s188 = smul.addr %s187, 2
        %s189 = sadd.s32 1, %s188
        %s190 = smul.addr %s185, 2
        %s191 = sadd.s32 %s189, %s190
        %s192 = smul.addr %s191, 4
        %s193 = scalar_lea.vmem %s2, %s192
      $region28: #{transformer_forward.38} parent=15 // pred_fallthru
        _
    $region16: #{transformer_forward.38} parent=5 // pred_fallthru
      _
    %p194 = scmp.le.s32.totalorder 1, %s9
    %p195 = scmp.lt.s32.totalorder %s9, 3
    %p196 = pnand %p194, %p195
    %p197 = pneg %p196
    // Predicated region
    $region29: #{transformer_forward.38} parent=5 // pred_check
      _
    $region30: #{transformer_forward.38} parent=5 // pred_check_branch
      %199 = sbr.rel (%p196) target = $region32
    $region31: #{transformer_forward.38} parent=5 // pred_region
      %s200 = ssub.s32 %s9, 1
      %p201 = scmp.lt.s32.totalorder %s19, 1
      %s202 = scalar_select %p201, %s19, 1
      %p203 = scmp.lt.s32.totalorder %s20, 0
      %s204 = scalar_select %p203, %s20, 0
      %s205 = sadd.s32 %s204, %s202
      %s206 = smul.addr %s205, 4
      %s207 = scalar_lea.vmem %s0, %s206
      %p208 = pneg %p56
      %p209 = pneg %p53
      %p210 = scmp.lt.s32.totalorder %s19, 1
      %s211 = scalar_select %p210, %s19, 1
      %p212 = scmp.lt.s32.totalorder %s21, 0
      %s213 = scalar_select %p212, %s21, 0
      %s214 = smul.addr %s213, 2
      %s215 = smul.addr %s211, 2
      %s216 = sadd.s32 %s214, %s215
      %s217 = smul.addr %s216, 4
      %s218 = scalar_lea.vmem %s1, %s217
      %p219 = pneg %p84
      %p220 = pneg %p81
      %p221 = scmp.lt.s32.totalorder %s19, 1
      %s222 = scalar_select %p221, %s19, 1
      %p223 = scmp.lt.s32.totalorder %s21, 0
      %s224 = scalar_select %p223, %s21, 0
      %s225 = smul.addr %s224, 2
      %s226 = sadd.s32 1, %s225
      %s227 = smul.addr %s222, 2
      %s228 = sadd.s32 %s226, %s227
      %s229 = smul.addr %s228, 4
      %s230 = scalar_lea.vmem %s2, %s229
      %p231 = pneg %p112
      %p232 = pneg %p109
      %p233 = pneg %p140
      %p234 = pneg %p137
      %p235 = scmp.lt.s32.totalorder %s19, 1
      %s236 = scalar_select %p235, %s19, 1
      %p237 = scmp.lt.s32.totalorder %s20, 0
      %s238 = scalar_select %p237, %s20, 0
      %s239 = sadd.s32 %s238, %s236
      %s240 = smul.addr %s239, 4
      %s241 = scalar_lea.vmem %s3, %s240
      %p242 = scmp.lt.s32.totalorder %s19, 1
      %s243 = scalar_select %p242, %s19, 1
      %p244 = scmp.lt.s32.totalorder %s20, 0
      %s245 = scalar_select %p244, %s20, 0
      %s246 = sadd.s32 %s245, %s243
      %s247 = smul.addr %s246, 4
      %s248 = scalar_lea.vmem %s0, %s247
      %p249 = scmp.lt.s32.totalorder %s19, 1
      %s250 = scalar_select %p249, %s19, 1
      %p251 = scmp.lt.s32.totalorder %s21, 0
      %s252 = scalar_select %p251, %s21, 0
      %s253 = smul.addr %s252, 2
      %s254 = smul.addr %s250, 2
      %s255 = sadd.s32 %s253, %s254
      %s256 = smul.addr %s255, 4
      %s257 = scalar_lea.vmem %s1, %s256
      %p258 = scmp.lt.s32.totalorder %s19, 1
      %s259 = scalar_select %p258, %s19, 1
      %p260 = scmp.lt.s32.totalorder %s21, 0
      %s261 = scalar_select %p260, %s21, 0
      %s262 = smul.addr %s261, 2
      %s263 = sadd.s32 1, %s262
      %s264 = smul.addr %s259, 2
      %s265 = sadd.s32 %s263, %s264
      %s266 = smul.addr %s265, 4
      %s267 = scalar_lea.vmem %s2, %s266
      %p268 = scmp.lt.s32.totalorder %s19, 1
      %s269 = scalar_select %p268, %s19, 1
      %p270 = scmp.lt.s32.totalorder %s20, 0
      %s271 = scalar_select %p270, %s20, 0
      %s272 = sadd.s32 %s271, %s269
      %s273 = smul.addr %s272, 4
      %s274 = scalar_lea.vmem %s3, %s273
      %p276 = scmp.eq.s32.totalorder %s21, 0
      // Predicated region
      $region33: #{transformer_forward.38} parent=31 // pred_check
        %p277 = pneg %p276
      $region34: #{transformer_forward.38} parent=31 // pred_check_branch
        %279 = sbr.rel (%p277) target = $region36
      $region35: #{transformer_forward.38} parent=31 // pred_region
        %vm280 = vcmask 7168
        %281 = vst.msk [vmem:[#allocation2] sm:$0xff] %vm280, -1e+30
        %282 = vst.msk [vmem:[#allocation2 + $0x8] sm:$0xff] %vm280, -1e+30
        %283 = vst.msk [vmem:[#allocation2 + $0x10] sm:$0xff] %vm280, -1e+30
        %284 = vst.msk [vmem:[#allocation2 + $0x18] sm:$0xff] %vm280, -1e+30
        %285 = vst.msk [vmem:[#allocation3] sm:$0xff] %vm280, 0.0
        %286 = vst.msk [vmem:[#allocation3 + $0x8] sm:$0xff] %vm280, 0.0
        %287 = vst.msk [vmem:[#allocation3 + $0x10] sm:$0xff] %vm280, 0.0
        %288 = vst.msk [vmem:[#allocation3 + $0x18] sm:$0xff] %vm280, 0.0
        %289 = vst [vmem:[#allocation4] sm:$0xff] 0.0
      $region36: #{transformer_forward.38} parent=31 // pred_fallthru
        _
      %v290 = vld [vmem:[%s248] sm:$0xf]
      %v291 = vld [vmem:[%s257] sm:$0xf]
      %v292 = vld [vmem:[%s267] sm:$0xf]
      %vm293 = vcmask 261120
      %v295 = vsel %vm293, %v290, 0
      %v298 = vsel %vm293, %v291, 0
      %300 = vmatpush.bf16.xpose.msra.mxu0 0
      %301 = vmatpush.bf16.xpose.msra.mxu0 0
      %302 = vmatpush.bf16.xpose.msra.mxu0 0
      %303 = vmatpush.bf16.xpose.msra.mxu0 0
      %304 = vmatpush.bf16.xpose.msra.mxu0 0
      %305 = vmatpush.bf16.xpose.msra.mxu0 0
      %306 = vmatpush.bf16.xpose.msra.mxu0 0
      %307 = vmatpush.bf16.xpose.msra.mxu0 %v298
      %308 = vmatmul.bf16.gmra.mxu0 %v295
      %v309 = vpop.f32.mrf.mxu0
      %v310 = vadd.f32 0.0, %v309
      %v311 = vpop.f32.mrf.mxu0
      %312 = vdwg.mxu0
      %v313 = vmul.f32 %v310, 0.17677669
      %v314 = vld [vmem:[#allocation2] sm:$0xff]
      %vm315 = vcmask 64512
      %v316 = vsel %vm315, %v313, -inf
      %317 = vmax.xlane.f32.xlu0 %v316
      %v318 = vpop.xlane.xlu0 %317
      %v319 = vmax.f32 %v314, %v318
      %v320 = vsub.f32 %v314, %v319
      %v321 = vmul.f32 %v320, 1.442695
      %v322 = vpow.pop %v321
      %324 = vset.pattern.permute.xlu0 0
      %325 = vperm.xlu0 %324, %v319
      %v326 = vpop.permute.xlu0 %325
      %v328 = vsub.f32 %v313, %v326
      %v329 = vmul.f32 %v328, 1.442695
      %v330 = vpow.pop %v329
      %v331 = vld [vmem:[#allocation3] sm:$0xff]
      %v332 = vmul.f32 %v322, %v331
      %v333 = vsel %vm315, %v330, 0.0
      %334 = vadd.xlane.f32.xlu0 %v333
      %v335 = vpop.xlane.xlu0 %334
      %v336 = vadd.f32 %v332, %v335
      %vm337 = vcmask 7168
      %338 = vst.msk [vmem:[#allocation3] sm:$0xff] %vm337, %v336
      %v339 = vld [vmem:[#allocation4] sm:$0xff]
      %341 = vset.pattern.permute.xlu0 0
      %342 = vperm.xlu0 %341, %v322
      %v343 = vpop.permute.xlu0 %342
      %v345 = vmul.f32 %v343, %v339
      %v346 = vpack.c.bf16 %v330, %v330
      %v348 = vsel %vm315, %v346, 0
      %vm350 = vcmask 1043456
      %v352 = vsel %vm350, %v292, 0
      %354 = vmatpush.bf16.msra.mxu0 0
      %355 = vmatpush.bf16.msra.mxu0 0
      %356 = vmatpush.bf16.msra.mxu0 0
      %357 = vmatpush.bf16.msra.mxu0 0
      %358 = vmatpush.bf16.msra.mxu0 0
      %359 = vmatpush.bf16.msra.mxu0 0
      %360 = vmatpush.bf16.msra.mxu0 0
      %361 = vmatpush.bf16.msra.mxu0 %v352
      %362 = vmatmul.bf16.gmra.mxu0 %v348
      %v363 = vpop.f32.mrf.mxu0
      %v364 = vadd.f32 0.0, %v363
      %v365 = vpop.f32.mrf.mxu0
      %366 = vdwg.mxu0
      %v367 = vadd.f32 %v345, %v364
      %368 = vst.msk [vmem:[#allocation4] sm:$0xff] %vm293, %v367
      %369 = vst.msk [vmem:[#allocation2] sm:$0xff] %vm337, %v319
      %v371 = vunpack.c.l.b16 %v290
      %v372 = vpack.c.b16 %v371, %v371
      %373 = vrot.lane.b32.xlu0 %v372, 96
      %v374 = vpop.permute.xlu0 %373
      %v376 = vunpack.c.l.b16 %v291
      %v377 = vpack.c.b16 %v376, %v376
      %378 = vrot.lane.b32.xlu0 %v377, 96
      %v379 = vpop.permute.xlu0 %378
      %v381 = vsel %vm293, %v374, 0
      %v384 = vsel %vm293, %v379, 0
      %386 = vmatpush.bf16.xpose.msra.mxu0 0
      %387 = vmatpush.bf16.xpose.msra.mxu0 0
      %388 = vmatpush.bf16.xpose.msra.mxu0 0
      %389 = vmatpush.bf16.xpose.msra.mxu0 0
      %390 = vmatpush.bf16.xpose.msra.mxu0 0
      %391 = vmatpush.bf16.xpose.msra.mxu0 0
      %392 = vmatpush.bf16.xpose.msra.mxu0 0
      %393 = vmatpush.bf16.xpose.msra.mxu0 %v384
      %394 = vmatmul.bf16.gmra.mxu0 %v381
      %v395 = vpop.f32.mrf.mxu0
      %v396 = vadd.f32 0.0, %v395
      %v397 = vpop.f32.mrf.mxu0
      %398 = vdwg.mxu0
      %v399 = vmul.f32 %v396, 0.17677669
      %s400 = scalar_lea.vmem [#allocation2], 8
      %v401 = vld [vmem:[%s400] sm:$0xff]
      %v402 = vsel %vm315, %v399, -inf
      %403 = vmax.xlane.f32.xlu0 %v402
      %v404 = vpop.xlane.xlu0 %403
      %v405 = vmax.f32 %v401, %v404
      %v406 = vsub.f32 %v401, %v405
      %v407 = vmul.f32 %v406, 1.442695
      %v408 = vpow.pop %v407
      %410 = vset.pattern.permute.xlu0 0
      %411 = vperm.xlu0 %410, %v405
      %v412 = vpop.permute.xlu0 %411
      %v414 = vsub.f32 %v399, %v412
      %v415 = vmul.f32 %v414, 1.442695
      %v416 = vpow.pop %v415
      %s417 = scalar_lea.vmem [#allocation3], 8
      %v418 = vld [vmem:[%s417] sm:$0xff]
      %v419 = vmul.f32 %v408, %v418
      %v420 = vsel %vm315, %v416, 0.0
      %421 = vadd.xlane.f32.xlu0 %v420
      %v422 = vpop.xlane.xlu0 %421
      %v423 = vadd.f32 %v419, %v422
      %424 = vst.msk [vmem:[%s417] sm:$0xff] %vm337, %v423
      %v425 = vld [vmem:[#allocation4] sm:$0xff]
      %427 = vset.pattern.permute.xlu0 0
      %428 = vperm.xlu0 %427, %v408
      %v429 = vpop.permute.xlu0 %428
      %v431 = vmul.f32 %v429, %v425
      %v432 = vpack.c.bf16 %v416, %v416
      %v434 = vunpack.c.l.b16 %v292
      %v435 = vpack.c.b16 %v434, %v434
      %436 = vrot.lane.b32.xlu0 %v435, 96
      %v437 = vpop.permute.xlu0 %436
      %v439 = vsel %vm315, %v432, 0
      %v442 = vsel %vm350, %v437, 0
      %444 = vmatpush.bf16.msra.mxu0 0
      %445 = vmatpush.bf16.msra.mxu0 0
      %446 = vmatpush.bf16.msra.mxu0 0
      %447 = vmatpush.bf16.msra.mxu0 0
      %448 = vmatpush.bf16.msra.mxu0 0
      %449 = vmatpush.bf16.msra.mxu0 0
      %450 = vmatpush.bf16.msra.mxu0 0
      %451 = vmatpush.bf16.msra.mxu0 %v442
      %452 = vmatmul.bf16.gmra.mxu0 %v439
      %v453 = vpop.f32.mrf.mxu0
      %v454 = vadd.f32 0.0, %v453
      %v455 = vpop.f32.mrf.mxu0
      %456 = vdwg.mxu0
      %458 = vrot.lane.b32.xlu0 %v454, 32
      %v459 = vpop.permute.xlu0 %458
      %v461 = vadd.f32 %v431, %v459
      %vm462 = vcmask 523520
      %463 = vst.msk [vmem:[#allocation4] sm:$0xff] %vm462, %v461
      %464 = vst.msk [vmem:[%s400] sm:$0xff] %vm337, %v405
      %465 = vrot.lane.b32.xlu0 %v372, 64
      %v466 = vpop.permute.xlu0 %465
      %467 = vrot.lane.b32.xlu0 %v377, 64
      %v468 = vpop.permute.xlu0 %467
      %v470 = vsel %vm293, %v466, 0
      %v473 = vsel %vm293, %v468, 0
      %475 = vmatpush.bf16.xpose.msra.mxu0 0
      %476 = vmatpush.bf16.xpose.msra.mxu0 0
      %477 = vmatpush.bf16.xpose.msra.mxu0 0
      %478 = vmatpush.bf16.xpose.msra.mxu0 0
      %479 = vmatpush.bf16.xpose.msra.mxu0 0
      %480 = vmatpush.bf16.xpose.msra.mxu0 0
      %481 = vmatpush.bf16.xpose.msra.mxu0 0
      %482 = vmatpush.bf16.xpose.msra.mxu0 %v473
      %483 = vmatmul.bf16.gmra.mxu0 %v470
      %v484 = vpop.f32.mrf.mxu0
      %v485 = vadd.f32 0.0, %v484
      %v486 = vpop.f32.mrf.mxu0
      %487 = vdwg.mxu0
      %v488 = vmul.f32 %v485, 0.17677669
      %s489 = scalar_lea.vmem [#allocation2], 16
      %v490 = vld [vmem:[%s489] sm:$0xff]
      %v491 = vsel %vm315, %v488, -inf
      %492 = vmax.xlane.f32.xlu0 %v491
      %v493 = vpop.xlane.xlu0 %492
      %v494 = vmax.f32 %v490, %v493
      %v495 = vsub.f32 %v490, %v494
      %v496 = vmul.f32 %v495, 1.442695
      %v497 = vpow.pop %v496
      %499 = vset.pattern.permute.xlu0 0
      %500 = vperm.xlu0 %499, %v494
      %v501 = vpop.permute.xlu0 %500
      %v503 = vsub.f32 %v488, %v501
      %v504 = vmul.f32 %v503, 1.442695
      %v505 = vpow.pop %v504
      %s506 = scalar_lea.vmem [#allocation3], 16
      %v507 = vld [vmem:[%s506] sm:$0xff]
      %v508 = vmul.f32 %v497, %v507
      %v509 = vsel %vm315, %v505, 0.0
      %510 = vadd.xlane.f32.xlu0 %v509
      %v511 = vpop.xlane.xlu0 %510
      %v512 = vadd.f32 %v508, %v511
      %513 = vst.msk [vmem:[%s506] sm:$0xff] %vm337, %v512
      %v514 = vld [vmem:[#allocation4] sm:$0xff]
      %516 = vset.pattern.permute.xlu0 0
      %517 = vperm.xlu0 %516, %v497
      %v518 = vpop.permute.xlu0 %517
      %v520 = vmul.f32 %v518, %v514
      %v521 = vpack.c.bf16 %v505, %v505
      %522 = vrot.lane.b32.xlu0 %v435, 64
      %v523 = vpop.permute.xlu0 %522
      %v525 = vsel %vm315, %v521, 0
      %v528 = vsel %vm350, %v523, 0
      %530 = vmatpush.bf16.msra.mxu0 0
      %531 = vmatpush.bf16.msra.mxu0 0
      %532 = vmatpush.bf16.msra.mxu0 0
      %533 = vmatpush.bf16.msra.mxu0 0
      %534 = vmatpush.bf16.msra.mxu0 0
      %535 = vmatpush.bf16.msra.mxu0 0
      %536 = vmatpush.bf16.msra.mxu0 0
      %537 = vmatpush.bf16.msra.mxu0 %v528
      %538 = vmatmul.bf16.gmra.mxu0 %v525
      %v539 = vpop.f32.mrf.mxu0
      %v540 = vadd.f32 0.0, %v539
      %v541 = vpop.f32.mrf.mxu0
      %542 = vdwg.mxu0
      %544 = vrot.lane.b32.xlu0 %v540, 64
      %v545 = vpop.permute.xlu0 %544
      %v547 = vadd.f32 %v520, %v545
      %vm548 = vcmask 785920
      %549 = vst.msk [vmem:[#allocation4] sm:$0xff] %vm548, %v547
      %550 = vst.msk [vmem:[%s489] sm:$0xff] %vm337, %v494
      %551 = vrot.lane.b32.xlu0 %v372, 32
      %v552 = vpop.permute.xlu0 %551
      %553 = vrot.lane.b32.xlu0 %v377, 32
      %v554 = vpop.permute.xlu0 %553
      %v556 = vsel %vm293, %v552, 0
      %v559 = vsel %vm293, %v554, 0
      %561 = vmatpush.bf16.xpose.msra.mxu0 0
      %562 = vmatpush.bf16.xpose.msra.mxu0 0
      %563 = vmatpush.bf16.xpose.msra.mxu0 0
      %564 = vmatpush.bf16.xpose.msra.mxu0 0
      %565 = vmatpush.bf16.xpose.msra.mxu0 0
      %566 = vmatpush.bf16.xpose.msra.mxu0 0
      %567 = vmatpush.bf16.xpose.msra.mxu0 0
      %568 = vmatpush.bf16.xpose.msra.mxu0 %v559
      %569 = vmatmul.bf16.gmra.mxu0 %v556
      %v570 = vpop.f32.mrf.mxu0
      %v571 = vadd.f32 0.0, %v570
      %v572 = vpop.f32.mrf.mxu0
      %573 = vdwg.mxu0
      %v574 = vmul.f32 %v571, 0.17677669
      %s575 = scalar_lea.vmem [#allocation2], 24
      %v576 = vld [vmem:[%s575] sm:$0xff]
      %v577 = vsel %vm315, %v574, -inf
      %578 = vmax.xlane.f32.xlu0 %v577
      %v579 = vpop.xlane.xlu0 %578
      %v580 = vmax.f32 %v576, %v579
      %v581 = vsub.f32 %v576, %v580
      %v582 = vmul.f32 %v581, 1.442695
      %v583 = vpow.pop %v582
      %585 = vset.pattern.permute.xlu0 0
      %586 = vperm.xlu0 %585, %v580
      %v587 = vpop.permute.xlu0 %586
      %v589 = vsub.f32 %v574, %v587
      %v590 = vmul.f32 %v589, 1.442695
      %v591 = vpow.pop %v590
      %s592 = scalar_lea.vmem [#allocation3], 24
      %v593 = vld [vmem:[%s592] sm:$0xff]
      %v594 = vmul.f32 %v583, %v593
      %v595 = vsel %vm315, %v591, 0.0
      %596 = vadd.xlane.f32.xlu0 %v595
      %v597 = vpop.xlane.xlu0 %596
      %v598 = vadd.f32 %v594, %v597
      %599 = vst.msk [vmem:[%s592] sm:$0xff] %vm337, %v598
      %v600 = vld [vmem:[#allocation4] sm:$0xff]
      %602 = vset.pattern.permute.xlu0 0
      %603 = vperm.xlu0 %602, %v583
      %v604 = vpop.permute.xlu0 %603
      %v606 = vmul.f32 %v604, %v600
      %v607 = vpack.c.bf16 %v591, %v591
      %608 = vrot.lane.b32.xlu0 %v435, 32
      %v609 = vpop.permute.xlu0 %608
      %v611 = vsel %vm315, %v607, 0
      %v614 = vsel %vm350, %v609, 0
      %616 = vmatpush.bf16.msra.mxu0 0
      %617 = vmatpush.bf16.msra.mxu0 0
      %618 = vmatpush.bf16.msra.mxu0 0
      %619 = vmatpush.bf16.msra.mxu0 0
      %620 = vmatpush.bf16.msra.mxu0 0
      %621 = vmatpush.bf16.msra.mxu0 0
      %622 = vmatpush.bf16.msra.mxu0 0
      %623 = vmatpush.bf16.msra.mxu0 %v614
      %624 = vmatmul.bf16.gmra.mxu0 %v611
      %v625 = vpop.f32.mrf.mxu0
      %v626 = vadd.f32 0.0, %v625
      %v627 = vpop.f32.mrf.mxu0
      %628 = vdwg.mxu0
      %630 = vrot.lane.b32.xlu0 %v626, 96
      %v631 = vpop.permute.xlu0 %630
      %v633 = vadd.f32 %v606, %v631
      %vm634 = vcmask 1048320
      %635 = vst.msk [vmem:[#allocation4] sm:$0xff] %vm634, %v633
      %636 = vst.msk [vmem:[%s575] sm:$0xff] %vm337, %v580
      // Predicated region
      $region37: #{transformer_forward.38} parent=31 // pred_check
        %p637 = pneg %p276
      $region38: #{transformer_forward.38} parent=31 // pred_check_branch
        %639 = sbr.rel (%p637) target = $region40
      $region39: #{transformer_forward.38} parent=31 // pred_region
        %v640 = vld [vmem:[#allocation3] sm:$0xff]
        %v641 = vrcp.pop %v640
        %v642 = vld [vmem:[#allocation4] sm:$0xff]
        %644 = vset.pattern.permute.xlu0 0
        %645 = vperm.xlu0 %644, %v641
        %v646 = vpop.permute.xlu0 %645
        %v648 = vmul.f32 %v642, %v646
        %v649 = vld [vmem:[%s417] sm:$0xff]
        %v650 = vrcp.pop %v649
        %652 = vset.pattern.permute.xlu0 0
        %653 = vperm.xlu0 %652, %v650
        %v654 = vpop.permute.xlu0 %653
        %v656 = vmul.f32 %v642, %v654
        %v657 = vld [vmem:[%s506] sm:$0xff]
        %v658 = vrcp.pop %v657
        %660 = vset.pattern.permute.xlu0 0
        %661 = vperm.xlu0 %660, %v658
        %v662 = vpop.permute.xlu0 %661
        %v664 = vmul.f32 %v642, %v662
        %v665 = vld [vmem:[%s592] sm:$0xff]
        %v666 = vrcp.pop %v665
        %668 = vset.pattern.permute.xlu0 0
        %669 = vperm.xlu0 %668, %v666
        %v670 = vpop.permute.xlu0 %669
        %v672 = vmul.f32 %v642, %v670
        %v673 = vsel %vm293, %v648, %v656
        %vm674 = vcmask 523264
        %v675 = vsel %vm674, %v673, %v664
        %vm676 = vcmask 785408
        %v677 = vsel %vm676, %v675, %v672
        %v678 = vpack.c.bf16 %v677, %v677
        %679 = vst [vmem:[%s274] sm:$0xf] %v678
      $region40: #{transformer_forward.38} parent=31 // pred_fallthru
        _
      %p680 = scmp.lt.s32.totalorder %s19, 1
      %s681 = scalar_select %p680, %s19, 1
      %p682 = scmp.lt.s32.totalorder %s20, 0
      %s683 = scalar_select %p682, %s20, 0
      %s684 = sadd.s32 %s683, %s681
      %s685 = smul.addr %s684, 4
      %s686 = scalar_lea.vmem %s3, %s685
      // Predicated region
      $region41: #{transformer_forward.38} parent=31 // pred_check
        %p687 = pneg %p137
      $region42: #{transformer_forward.38} parent=31 // pred_check_branch
        %689 = sbr.rel (%p687) target = $region44
      $region43: #{transformer_forward.38} parent=31 // pred_region
        _
      $region44: #{transformer_forward.38} parent=31 // pred_fallthru
        _
    $region32: #{transformer_forward.38} parent=5 // pred_fallthru
      _
    %p690 = scmp.le.s32.totalorder 2, %s9
    // Predicated region
    $region45: #{transformer_forward.38} parent=5 // pred_check
      %p691 = pneg %p690
    $region46: #{transformer_forward.38} parent=5 // pred_check_branch
      %693 = sbr.rel (%p691) target = $region48
    $region47: #{transformer_forward.38} parent=5 // pred_region
      %s694 = ssub.s32 %s9, 2
      // Predicated region
      $region49: #{transformer_forward.38} parent=47 // pred_check
        %p695 = pneg %p143
      $region50: #{transformer_forward.38} parent=47 // pred_check_branch
        %697 = sbr.rel (%p695) target = $region52
      $region51: #{transformer_forward.38} parent=47 // pred_region
        %p698 = scmp.lt.s32.totalorder %s22, 1
        %s699 = scalar_select %p698, %s22, 1
        %p700 = scmp.lt.s32.totalorder %s23, 0
        %s701 = scalar_select %p700, %s23, 0
        %s702 = sadd.s32 %s701, %s699
        %s703 = smul.addr %s702, 4
        %s704 = scalar_lea.vmem %s3, %s703
      $region52: #{transformer_forward.38} parent=47 // pred_fallthru
        _
    $region48: #{transformer_forward.38} parent=5 // pred_fallthru
      _
  $region6: #{transformer_forward.38} parent=0 // loop_footer
    %s13 = sadd.s32 1, %s9
  $region7: #{transformer_forward.38} parent=0 // loop_footer_branch
    %8 = sbr.rel target = $region3
  $region8: #{transformer_forward.38} parent=0 // loop_exit
    _

// kernel: transformer_forward.40
$region0: #{transformer_forward.40}
  #allocation0 [shape = 'u32[]', space=smem, size = 0x4, offset = 0x4, fixed_abs, tag = 'smem constant byte address 0x4 - core index']
  #allocation1 [shape = 'u32[72,128]{1,0:T(1,128)}', space=vmem, size = 0x9000, scoped, tag = 'internal scratch']
  #allocation2 [shape = 'f32[16,128]{1,0:T(8,128)}', space=vmem, size = 0x2000, scoped, tag = 'scratch operand']
  %s0 = inlined_call_operand.vmem [shape: bf16[16,128], index: 0, kind: input, shape index: {}]
  %s1 = inlined_call_operand.hbm [shape: bf16[128,256], index: 1, kind: input, shape index: {}]
  %s2 = inlined_call_operand.vmem [shape: f32[1,256], index: 2, kind: input, shape index: {}]
  %s3 = inlined_call_operand.hbm [shape: bf16[256,128], index: 3, kind: input, shape index: {}]
  %s4 = inlined_call_operand.hbm [shape: f32[1,128], index: 4, kind: input, shape index: {}]
  %s5 = inlined_call_operand.hbm [shape: f32[1,128], index: 5, kind: input, shape index: {}]
  %s6 = inlined_call_operand.hbm [shape: f32[1,128], index: 6, kind: input, shape index: {}]
  %s7 = inlined_call_operand.vmem [shape: bf16[16,128], index: 7, kind: output, shape index: {}]
  %s8 = sld [smem:[#allocation0]]
  $region66: #{transformer_forward.40} parent=0
    _
  %s10 = ssub.s32 1, %s8
  %s11 = scalar_select 0, %s10, %s8
  $region1: #{transformer_forward.40} parent=0
    #allocation3 [shape = 'u8[65536]{0}', space=vmem, size = 0x10000, scoped, tag = 'input window, operand 1, single buffered']
    #allocation4 [shape = 's32[1]{0}', space=sflag, size = 0x4, scoped, tag = 'scoped memory for transformer_forward.40']
    #allocation5 [shape = 'u8[65536]{0}', space=vmem, size = 0x10000, scoped, tag = 'input window, operand 3, single buffered']
    #allocation6 [shape = 's32[1]{0}', space=sflag, size = 0x4, scoped, tag = 'scoped memory for transformer_forward.40']
    #allocation7 [shape = 'u8[512]{0}', space=vmem, size = 0x400, scoped, tag = 'input window, operand 4, single buffered']
    #allocation8 [shape = 'u8[512]{0}', space=vmem, size = 0x400, scoped, tag = 'input window, operand 5, single buffered']
    #allocation9 [shape = 's32[1]{0}', space=sflag, size = 0x4, scoped, tag = 'scoped memory for transformer_forward.40']
    #allocation10 [shape = 'u8[512]{0}', space=vmem, size = 0x400, scoped, tag = 'input window, operand 6, single buffered']
    %12 = vsyncpa [#allocation4], 0
    %13 = vsyncpa [#allocation6], 0
    %14 = vsyncpa [#allocation9], 0
    // Predicated region
    $region2: #{transformer_forward.40} parent=1 // pred_check
      _
    $region3: #{transformer_forward.40} parent=1 // pred_check_branch
      %16 = sbr.rel (0) target = $region5
    $region4: #{transformer_forward.40} parent=1 // pred_region
      _
    $region5: #{transformer_forward.40} parent=1 // pred_fallthru
      _
    // Predicated region
    $region6: #{transformer_forward.40} parent=1 // pred_check
      _
    $region7: #{transformer_forward.40} parent=1 // pred_check_branch
      %18 = sbr.rel (0) target = $region9
    $region8: #{transformer_forward.40} parent=1 // pred_region
      %20 = vsyncadd [#allocation4], 0
      %s21 = sshll.u32 %s1, 4
      %s22 = int_to_ptr.hbm [resolvable:$true] %s21
      %s23 = sshll.u32 [#allocation3], 4
      %s24 = int_to_ptr.vmem [resolvable:$true] %s23
      %29 = dma.hbm_to_vmem [thread:$0]  %s22, 2048, %s24, [#allocation4], 128, 128, 8
    $region9: #{transformer_forward.40} parent=1 // pred_fallthru
      _
    // Predicated region
    $region10: #{transformer_forward.40} parent=1 // pred_check
      _
    $region11: #{transformer_forward.40} parent=1 // pred_check_branch
      %31 = sbr.rel (0) target = $region13
    $region12: #{transformer_forward.40} parent=1 // pred_region
      _
    $region13: #{transformer_forward.40} parent=1 // pred_fallthru
      _
    // Predicated region
    $region14: #{transformer_forward.40} parent=1 // pred_check
      _
    $region15: #{transformer_forward.40} parent=1 // pred_check_branch
      %33 = sbr.rel (0) target = $region17
    $region16: #{transformer_forward.40} parent=1 // pred_region
      %35 = vsyncadd [#allocation6], 0
      %s36 = sshll.u32 %s3, 4
      %s37 = int_to_ptr.hbm [resolvable:$true] %s36
      %s38 = sshll.u32 [#allocation5], 4
      %s39 = int_to_ptr.vmem [resolvable:$true] %s38
      %44 = dma.hbm_to_vmem [thread:$0]  %s37, 2048, %s39, [#allocation6], 64, 64, 4
    $region17: #{transformer_forward.40} parent=1 // pred_fallthru
      _
    // Predicated region
    $region18: #{transformer_forward.40} parent=1 // pred_check
      _
    $region19: #{transformer_forward.40} parent=1 // pred_check_branch
      %46 = sbr.rel (0) target = $region21
    $region20: #{transformer_forward.40} parent=1 // pred_region
      %48 = vsyncadd [#allocation6], 0
      %s50 = sshll.u32 %s4, 4
      %s51 = int_to_ptr.hbm [resolvable:$true] %s50
      %s52 = sshll.u32 [#allocation7], 4
      %s53 = int_to_ptr.vmem [resolvable:$true] %s52
      %55 = dma.hbm_to_vmem [thread:$0]  %s51, 16, %s53, [#allocation6]
    $region21: #{transformer_forward.40} parent=1 // pred_fallthru
      _
    // Predicated region
    $region22: #{transformer_forward.40} parent=1 // pred_check
      _
    $region23: #{transformer_forward.40} parent=1 // pred_check_branch
      %57 = sbr.rel (0) target = $region25
    $region24: #{transformer_forward.40} parent=1 // pred_region
      %59 = vsyncadd [#allocation9], 0
      %s61 = sshll.u32 %s5, 4
      %s62 = int_to_ptr.hbm [resolvable:$true] %s61
      %s63 = sshll.u32 [#allocation8], 4
      %s64 = int_to_ptr.vmem [resolvable:$true] %s63
      %66 = dma.hbm_to_vmem [thread:$0]  %s62, 16, %s64, [#allocation9]
    $region25: #{transformer_forward.40} parent=1 // pred_fallthru
      _
    // Predicated region
    $region26: #{transformer_forward.40} parent=1 // pred_check
      _
    $region27: #{transformer_forward.40} parent=1 // pred_check_branch
      %68 = sbr.rel (0) target = $region29
    $region28: #{transformer_forward.40} parent=1 // pred_region
      %70 = vsyncadd [#allocation9], 0
      %s72 = sshll.u32 %s6, 4
      %s73 = int_to_ptr.hbm [resolvable:$true] %s72
      %s74 = sshll.u32 [#allocation10], 4
      %s75 = int_to_ptr.vmem [resolvable:$true] %s74
      %77 = dma.hbm_to_vmem [thread:$0]  %s73, 16, %s75, [#allocation9]
    $region29: #{transformer_forward.40} parent=1 // pred_fallthru
      _
    // Predicated region
    $region30: #{transformer_forward.40} parent=1 // pred_check
      _
    $region31: #{transformer_forward.40} parent=1 // pred_check_branch
      %79 = sbr.rel (0) target = $region33
    $region32: #{transformer_forward.40} parent=1 // pred_region
      %81 = dma.done [#allocation4], 2048
    $region33: #{transformer_forward.40} parent=1 // pred_fallthru
      _
    // Predicated region
    $region34: #{transformer_forward.40} parent=1 // pred_check
      _
    $region35: #{transformer_forward.40} parent=1 // pred_check_branch
      %83 = sbr.rel (0) target = $region37
    $region36: #{transformer_forward.40} parent=1 // pred_region
      %85 = dma.done [#allocation6], 2048
    $region37: #{transformer_forward.40} parent=1 // pred_fallthru
      _
    // Predicated region
    $region38: #{transformer_forward.40} parent=1 // pred_check
      _
    $region39: #{transformer_forward.40} parent=1 // pred_check_branch
      %87 = sbr.rel (0) target = $region41
    $region40: #{transformer_forward.40} parent=1 // pred_region
      %89 = dma.done [#allocation6], 16
    $region41: #{transformer_forward.40} parent=1 // pred_fallthru
      _
    // Predicated region
    $region42: #{transformer_forward.40} parent=1 // pred_check
      _
    $region43: #{transformer_forward.40} parent=1 // pred_check_branch
      %91 = sbr.rel (0) target = $region45
    $region44: #{transformer_forward.40} parent=1 // pred_region
      %93 = dma.done [#allocation9], 16
    $region45: #{transformer_forward.40} parent=1 // pred_fallthru
      _
    // Predicated region
    $region46: #{transformer_forward.40} parent=1 // pred_check
      _
    $region47: #{transformer_forward.40} parent=1 // pred_check_branch
      %95 = sbr.rel (0) target = $region49
    $region48: #{transformer_forward.40} parent=1 // pred_region
      %97 = dma.done [#allocation9], 16
    $region49: #{transformer_forward.40} parent=1 // pred_fallthru
      _
    %p98 = scmp.eq.s32.totalorder 0, 0
    // Predicated region
    $region50: #{transformer_forward.40} parent=1 // pred_check
      %p99 = pneg %p98
    $region51: #{transformer_forward.40} parent=1 // pred_check_branch
      %101 = sbr.rel (%p99) target = $region53
    $region52: #{transformer_forward.40} parent=1 // pred_region
      %102 = vst [vmem:[#allocation2] sm:$0xff] 0.0
      %103 = vst [vmem:[#allocation2 + $0x8] sm:$0xff] 0.0
    $region53: #{transformer_forward.40} parent=1 // pred_fallthru
      _
    %v104 = vld [vmem:[%s0] sm:$0xf]
    %v105 = vld [vmem:[%s0 + $0x4] sm:$0xf]
    %v106 = vld [vmem:[#allocation3] sm:$0xff]
    %v107 = vld [vmem:[#allocation3 + $0x8] sm:$0xff]
    %v108 = vld [vmem:[#allocation3 + $0x10] sm:$0xff]
    %v109 = vld [vmem:[#allocation3 + $0x18] sm:$0xff]
    %v110 = vld [vmem:[#allocation3 + $0x20] sm:$0xff]
    %v111 = vld [vmem:[#allocation3 + $0x28] sm:$0xff]
    %v112 = vld [vmem:[#allocation3 + $0x30] sm:$0xff]
    %v113 = vld [vmem:[#allocation3 + $0x38] sm:$0xff]
    %v114 = vld [vmem:[#allocation3 + $0x40] sm:$0xff]
    %v115 = vld [vmem:[#allocation3 + $0x48] sm:$0xff]
    %v116 = vld [vmem:[#allocation3 + $0x50] sm:$0xff]
    %v117 = vld [vmem:[#allocation3 + $0x58] sm:$0xff]
    %v118 = vld [vmem:[#allocation3 + $0x60] sm:$0xff]
    %v119 = vld [vmem:[#allocation3 + $0x68] sm:$0xff]
    %v120 = vld [vmem:[#allocation3 + $0x70] sm:$0xff]
    %v121 = vld [vmem:[#allocation3 + $0x78] sm:$0xff]
    %v122 = vld [vmem:[%s2] sm:$0x3]
    %v124 = vperm.slane %v122, 0
    %v125 = vperm.slane %v122, 1
    %v130 = vunpack.c.l.b16 %v104
    %v131 = vunpack.c.l.b16 %v105
    %v132 = vpack.c.b16 %v131, %v130
    %v150 = vunpack.c.l.b16 %v106
    %v151 = vunpack.c.h.b16 %v106
    %v152 = vunpack.c.l.b16 %v107
    %v153 = vunpack.c.h.b16 %v107
    %v154 = vunpack.c.l.b16 %v108
    %v155 = vunpack.c.h.b16 %v108
    %v156 = vunpack.c.l.b16 %v109
    %v157 = vunpack.c.h.b16 %v109
    %v158 = vunpack.c.l.b16 %v110
    %v159 = vunpack.c.h.b16 %v110
    %v160 = vunpack.c.l.b16 %v111
    %v161 = vunpack.c.h.b16 %v111
    %v162 = vunpack.c.l.b16 %v112
    %v163 = vunpack.c.h.b16 %v112
    %v164 = vunpack.c.l.b16 %v113
    %v165 = vunpack.c.h.b16 %v113
    %v166 = vunpack.c.l.b16 %v114
    %v167 = vunpack.c.h.b16 %v114
    %v168 = vunpack.c.l.b16 %v115
    %v169 = vunpack.c.h.b16 %v115
    %v170 = vunpack.c.l.b16 %v116
    %v171 = vunpack.c.h.b16 %v116
    %v172 = vunpack.c.l.b16 %v117
    %v173 = vunpack.c.h.b16 %v117
    %v174 = vunpack.c.l.b16 %v118
    %v175 = vunpack.c.h.b16 %v118
    %v176 = vunpack.c.l.b16 %v119
    %v177 = vunpack.c.h.b16 %v119
    %v178 = vunpack.c.l.b16 %v120
    %v179 = vunpack.c.h.b16 %v120
    %v180 = vunpack.c.l.b16 %v121
    %v181 = vunpack.c.h.b16 %v121
    %v182 = vpack.c.b16 %v152, %v150
    %v183 = vpack.c.b16 %v153, %v151
    %v184 = vpack.c.b16 %v156, %v154
    %v185 = vpack.c.b16 %v157, %v155
    %v186 = vpack.c.b16 %v160, %v158
    %v187 = vpack.c.b16 %v161, %v159
    %v188 = vpack.c.b16 %v164, %v162
    %v189 = vpack.c.b16 %v165, %v163
    %v190 = vpack.c.b16 %v168, %v166
    %v191 = vpack.c.b16 %v169, %v167
    %v192 = vpack.c.b16 %v172, %v170
    %v193 = vpack.c.b16 %v173, %v171
    %v194 = vpack.c.b16 %v176, %v174
    %v195 = vpack.c.b16 %v177, %v175
    %v196 = vpack.c.b16 %v180, %v178
    %v197 = vpack.c.b16 %v181, %v179
    %214 = vmatpush.bf16.msra.mxu0 %v196
    %215 = vmatpush.bf16.msra.mxu0 %v194
    %216 = vmatpush.bf16.msra.mxu0 %v192
    %217 = vmatpush.bf16.msra.mxu0 %v190
    %218 = vmatpush.bf16.msra.mxu0 %v188
    %219 = vmatpush.bf16.msra.mxu0 %v186
    %220 = vmatpush.bf16.msra.mxu0 %v184
    %221 = vmatpush.bf16.msra.mxu0 %v182
    %222 = vmatmul.bf16.gmra.mxu0 %v132
    %v223 = vpop.f32.mrf.mxu0
    %v224 = vadd.f32 %v124, %v223
    %v225 = vpop.f32.mrf.mxu0
    %v226 = vadd.f32 %v124, %v225
    %227 = vdwg.mxu0
    %228 = vmatpush.bf16.msra.mxu0 %v197
    %229 = vmatpush.bf16.msra.mxu0 %v195
    %230 = vmatpush.bf16.msra.mxu0 %v193
    %231 = vmatpush.bf16.msra.mxu0 %v191
    %232 = vmatpush.bf16.msra.mxu0 %v189
    %233 = vmatpush.bf16.msra.mxu0 %v187
    %234 = vmatpush.bf16.msra.mxu0 %v185
    %235 = vmatpush.bf16.msra.mxu0 %v183
    %236 = vmatmul.bf16.gmra.mxu0 %v132
    %v237 = vpop.f32.mrf.mxu0
    %v238 = vadd.f32 %v125, %v237
    %v239 = vpop.f32.mrf.mxu0
    %v240 = vadd.f32 %v125, %v239
    %241 = vdwg.mxu0
    %v242 = vmax.f32 %v224, 0.0
    %v243 = vmax.f32 %v238, 0.0
    %v244 = vmax.f32 %v226, 0.0
    %v245 = vmax.f32 %v240, 0.0
    %v246 = vld [vmem:[#allocation2] sm:$0xff]
    %v247 = vld [vmem:[#allocation2 + $0x8] sm:$0xff]
    %v248 = vpack.c.bf16 %v244, %v242
    %v249 = vpack.c.bf16 %v245, %v243
    %v250 = vld [vmem:[#allocation5] sm:$0xf]
    %v251 = vld [vmem:[#allocation5 + $0x4] sm:$0xf]
    %v252 = vld [vmem:[#allocation5 + $0x8] sm:$0xf]
    %v253 = vld [vmem:[#allocation5 + $0xc] sm:$0xf]
    %v254 = vld [vmem:[#allocation5 + $0x10] sm:$0xf]
    %v255 = vld [vmem:[#allocation5 + $0x14] sm:$0xf]
    %v256 = vld [vmem:[#allocation5 + $0x18] sm:$0xf]
    %v257 = vld [vmem:[#allocation5 + $0x1c] sm:$0xf]
    %v258 = vld [vmem:[#allocation5 + $0x20] sm:$0xf]
    %v259 = vld [vmem:[#allocation5 + $0x24] sm:$0xf]
    %v260 = vld [vmem:[#allocation5 + $0x28] sm:$0xf]
    %v261 = vld [vmem:[#allocation5 + $0x2c] sm:$0xf]
    %v262 = vld [vmem:[#allocation5 + $0x30] sm:$0xf]
    %v263 = vld [vmem:[#allocation5 + $0x34] sm:$0xf]
    %v264 = vld [vmem:[#allocation5 + $0x38] sm:$0xf]
    %v265 = vld [vmem:[#allocation5 + $0x3c] sm:$0xf]
    %v266 = vld [vmem:[#allocation5 + $0x40] sm:$0xf]
    %v267 = vld [vmem:[#allocation5 + $0x44] sm:$0xf]
    %v268 = vld [vmem:[#allocation5 + $0x48] sm:$0xf]
    %v269 = vld [vmem:[#allocation5 + $0x4c] sm:$0xf]
    %v270 = vld [vmem:[#allocation5 + $0x50] sm:$0xf]
    %v271 = vld [vmem:[#allocation5 + $0x54] sm:$0xf]
    %v272 = vld [vmem:[#allocation5 + $0x58] sm:$0xf]
    %v273 = vld [vmem:[#allocation5 + $0x5c] sm:$0xf]
    %v274 = vld [vmem:[#allocation5 + $0x60] sm:$0xf]
    %v275 = vld [vmem:[#allocation5 + $0x64] sm:$0xf]
    %v276 = vld [vmem:[#allocation5 + $0x68] sm:$0xf]
    %v277 = vld [vmem:[#allocation5 + $0x6c] sm:$0xf]
    %v278 = vld [vmem:[#allocation5 + $0x70] sm:$0xf]
    %v279 = vld [vmem:[#allocation5 + $0x74] sm:$0xf]
    %v280 = vld [vmem:[#allocation5 + $0x78] sm:$0xf]
    %v281 = vld [vmem:[#allocation5 + $0x7c] sm:$0xf]
    %v314 = vunpack.c.l.b16 %v250
    %v315 = vunpack.c.l.b16 %v251
    %v316 = vunpack.c.l.b16 %v252
    %v317 = vunpack.c.l.b16 %v253
    %v318 = vunpack.c.l.b16 %v254
    %v319 = vunpack.c.l.b16 %v255
    %v320 = vunpack.c.l.b16 %v256
    %v321 = vunpack.c.l.b16 %v257
    %v322 = vunpack.c.l.b16 %v258
    %v323 = vunpack.c.l.b16 %v259
    %v324 = vunpack.c.l.b16 %v260
    %v325 = vunpack.c.l.b16 %v261
    %v326 = vunpack.c.l.b16 %v262
    %v327 = vunpack.c.l.b16 %v263
    %v328 = vunpack.c.l.b16 %v264
    %v329 = vunpack.c.l.b16 %v265
    %v330 = vunpack.c.l.b16 %v266
    %v331 = vunpack.c.l.b16 %v267
    %v332 = vunpack.c.l.b16 %v268
    %v333 = vunpack.c.l.b16 %v269
    %v334 = vunpack.c.l.b16 %v270
    %v335 = vunpack.c.l.b16 %v271
    %v336 = vunpack.c.l.b16 %v272
    %v337 = vunpack.c.l.b16 %v273
    %v338 = vunpack.c.l.b16 %v274
    %v339 = vunpack.c.l.b16 %v275
    %v340 = vunpack.c.l.b16 %v276
    %v341 = vunpack.c.l.b16 %v277
    %v342 = vunpack.c.l.b16 %v278
    %v343 = vunpack.c.l.b16 %v279
    %v344 = vunpack.c.l.b16 %v280
    %v345 = vunpack.c.l.b16 %v281
    %v346 = vpack.c.b16 %v315, %v314
    %v347 = vpack.c.b16 %v317, %v316
    %v348 = vpack.c.b16 %v319, %v318
    %v349 = vpack.c.b16 %v321, %v320
    %v350 = vpack.c.b16 %v323, %v322
    %v351 = vpack.c.b16 %v325, %v324
    %v352 = vpack.c.b16 %v327, %v326
    %v353 = vpack.c.b16 %v329, %v328
    %v354 = vpack.c.b16 %v331, %v330
    %v355 = vpack.c.b16 %v333, %v332
    %v356 = vpack.c.b16 %v335, %v334
    %v357 = vpack.c.b16 %v337, %v336
    %v358 = vpack.c.b16 %v339, %v338
    %v359 = vpack.c.b16 %v341, %v340
    %v360 = vpack.c.b16 %v343, %v342
    %v361 = vpack.c.b16 %v345, %v344
    %378 = vmatpush.bf16.msra.mxu0 %v353
    %379 = vmatpush.bf16.msra.mxu0 %v352
    %380 = vmatpush.bf16.msra.mxu0 %v351
    %381 = vmatpush.bf16.msra.mxu0 %v350
    %382 = vmatpush.bf16.msra.mxu0 %v349
    %383 = vmatpush.bf16.msra.mxu0 %v348
    %384 = vmatpush.bf16.msra.mxu0 %v347
    %385 = vmatpush.bf16.msra.mxu0 %v346
    %386 = vmatmul.bf16.gmra.mxu0 %v248
    %v387 = vpop.f32.mrf.mxu0
    %v388 = vadd.f32 0.0, %v387
    %v389 = vpop.f32.mrf.mxu0
    %v390 = vadd.f32 0.0, %v389
    %391 = vdwg.mxu0
    %392 = vmatpush.bf16.msra.mxu0 %v361
    %393 = vmatpush.bf16.msra.mxu0 %v360
    %394 = vmatpush.bf16.msra.mxu0 %v359
    %395 = vmatpush.bf16.msra.mxu0 %v358
    %396 = vmatpush.bf16.msra.mxu0 %v357
    %397 = vmatpush.bf16.msra.mxu0 %v356
    %398 = vmatpush.bf16.msra.mxu0 %v355
    %399 = vmatpush.bf16.msra.mxu0 %v354
    %400 = vmatmul.bf16.gmra.mxu0 %v249
    %v401 = vpop.f32.mrf.mxu0
    %v402 = vadd.f32 %v388, %v401
    %v403 = vpop.f32.mrf.mxu0
    %v404 = vadd.f32 %v390, %v403
    %405 = vdwg.mxu0
    %v406 = vadd.f32 %v246, %v402
    %v407 = vadd.f32 %v247, %v404
    %408 = vst [vmem:[#allocation2] sm:$0xff] %v406
    %409 = vst [vmem:[#allocation2 + $0x8] sm:$0xff] %v407
    // Predicated region
    $region54: #{transformer_forward.40} parent=1 // pred_check
      %p410 = pneg %p98
    $region55: #{transformer_forward.40} parent=1 // pred_check_branch
      %412 = sbr.rel (%p410) target = $region57
    $region56: #{transformer_forward.40} parent=1 // pred_region
      %v413 = vld [vmem:[#allocation2] sm:$0xff]
      %v414 = vld [vmem:[#allocation2 + $0x8] sm:$0xff]
      %v415 = vld [vmem:[#allocation7] sm:$0x1]
      %v417 = vperm.slane %v415, 0
      %v419 = vadd.f32 %v413, %v417
      %v420 = vadd.f32 %v414, %v417
      %v421 = vld [vmem:[%s0] sm:$0xf]
      %v422 = vld [vmem:[%s0 + $0x4] sm:$0xf]
      %v423 = vunpack.c.l.bf16 %v421
      %v424 = vunpack.c.l.bf16 %v422
      %v425 = vadd.f32 %v419, %v423
      %v426 = vadd.f32 %v420, %v424
      %427 = vadd.xlane.f32.xlu0 %v425
      %v428 = vpop.xlane.xlu0 %427
      %429 = vadd.xlane.f32.xlu0 %v426
      %v430 = vpop.xlane.xlu0 %429
      %v431 = vrcp.pop 128.0
      %v432 = vmul.f32 128.0, %v431
      %v433 = vsub.f32 1.0, %v432
      %v434 = vmul.f32 %v431, %v433
      %v435 = vadd.f32 %v431, %v434
      %vm436 = vweird.f32 %v431
      %v437 = vsel %vm436, %v431, %v435
      %v438 = vmul.f32 %v428, %v437
      %v439 = vmul.f32 %v430, %v437
      %v440 = vsub.f32 %v425, %v438
      %v441 = vsub.f32 %v426, %v439
      %v442 = vmul.f32 %v440, %v440
      %v443 = vmul.f32 %v441, %v441
      %444 = vadd.xlane.f32.xlu0 %v442
      %v445 = vpop.xlane.xlu0 %444
      %446 = vadd.xlane.f32.xlu0 %v443
      %v447 = vpop.xlane.xlu0 %446
      %v448 = vmul.f32 %v445, %v437
      %v449 = vmul.f32 %v447, %v437
      %v450 = vadd.f32 %v448, 1e-05
      %v451 = vadd.f32 %v449, 1e-05
      %v452 = vrsqrt.pop %v450
      %v453 = vmul.f32 %v452, %v450
      %v454 = vmul.f32 %v453, %v452
      %v455 = vmul.f32 0.5, %v454
      %v456 = vsub.f32 1.5, %v455
      %v457 = vmul.f32 %v452, %v456
      %vm458 = vweird.f32 %v450
      %vm459 = vweird.f32 %v452
      %vm460 = vmor %vm458, %vm459
      %v461 = vsel %vm460, %v452, %v457
      %v462 = vrsqrt.pop %v451
      %v463 = vmul.f32 %v462, %v451
      %v464 = vmul.f32 %v463, %v462
      %v465 = vmul.f32 0.5, %v464
      %v466 = vsub.f32 1.5, %v465
      %v467 = vmul.f32 %v462, %v466
      %vm468 = vweird.f32 %v451
      %vm469 = vweird.f32 %v462
      %vm470 = vmor %vm468, %vm469
      %v471 = vsel %vm470, %v462, %v467
      %v472 = vmul.f32 %v440, %v461
      %v473 = vmul.f32 %v441, %v471
      %v474 = vld [vmem:[#allocation8] sm:$0x1]
      %v476 = vperm.slane %v474, 0
      %v478 = vmul.f32 %v472, %v476
      %v479 = vmul.f32 %v473, %v476
      %v480 = vld [vmem:[#allocation10] sm:$0x1]
      %v482 = vperm.slane %v480, 0
      %v484 = vadd.f32 %v478, %v482
      %v485 = vadd.f32 %v479, %v482
      %v486 = vpack.c.bf16 %v484, %v484
      %v487 = vpack.c.bf16 %v485, %v485
      %488 = vst [vmem:[%s7] sm:$0xf] %v486
      %489 = vst [vmem:[%s7 + $0x4] sm:$0xf] %v487
    $region57: #{transformer_forward.40} parent=1 // pred_fallthru
      _
    // Predicated region
    $region58: #{transformer_forward.40} parent=1 // pred_check
      _
    $region59: #{transformer_forward.40} parent=1 // pred_check_branch
      %491 = sbr.rel (0) target = $region61
    $region60: #{transformer_forward.40} parent=1 // pred_region
      _
    $region61: #{transformer_forward.40} parent=1 // pred_fallthru
      _
    // Predicated region
    $region62: #{transformer_forward.40} parent=1 // pred_check
      _
    $region63: #{transformer_forward.40} parent=1 // pred_check_branch
      %493 = sbr.rel (0) target = $region65
    $region64: #{transformer_forward.40} parent=1 // pred_region
      _
    $region65: #{transformer_forward.40} parent=1 // pred_fallthru
      _
    %494 = vsyncpa [#allocation4], 1
    %495 = vsyncpa [#allocation6], 1
    %496 = vsyncpa [#allocation9], 1

// kernel: transformer_forward.49
$region0: #{transformer_forward.49}
  #allocation0 [shape = 'u32[]', space=smem, size = 0x4, offset = 0x4, fixed_abs, tag = 'smem constant byte address 0x4 - core index']
  #allocation1 [shape = 'u32[72,128]{1,0:T(1,128)}', space=vmem, size = 0x9000, scoped, tag = 'internal scratch']
  #allocation2 [shape = 'f32[16,512]{1,0:T(8,128)}', space=vmem, size = 0x8000, scoped, tag = 'scratch operand']
  %s0 = inlined_call_operand.vmem [shape: bf16[16,128], index: 0, kind: input, shape index: {}]
  %s1 = inlined_call_operand.vmem [shape: bf16[128,512], index: 1, kind: input, shape index: {}]
  %s2 = inlined_call_operand.vmem [shape: f32[1,512], index: 2, kind: input, shape index: {}]
  %s3 = inlined_call_operand.hbm [shape: f32[16,512], index: 3, kind: output, shape index: {}]
  %s4 = sld [smem:[#allocation0]]
  $region30: #{transformer_forward.49} parent=0
    _
  %s6 = ssub.s32 1, %s4
  %s7 = scalar_select 0, %s6, %s4
  $region1: #{transformer_forward.49} parent=0
    #allocation3 [shape = 'u8[32768]{0}', space=vmem, size = 0x8000, scoped, tag = 'output window, operand 0, single buffered']
    #allocation4 [shape = 's32[1]{0}', space=sflag, size = 0x4, scoped, tag = 'scoped memory for transformer_forward.49']
    %8 = vsyncpa [#allocation4], 0
    // Predicated region
    $region2: #{transformer_forward.49} parent=1 // pred_check
      _
    $region3: #{transformer_forward.49} parent=1 // pred_check_branch
      %10 = sbr.rel (0) target = $region5
    $region4: #{transformer_forward.49} parent=1 // pred_region
      _
    $region5: #{transformer_forward.49} parent=1 // pred_fallthru
      _
    // Predicated region
    $region6: #{transformer_forward.49} parent=1 // pred_check
      _
    $region7: #{transformer_forward.49} parent=1 // pred_check_branch
      %12 = sbr.rel (0) target = $region9
    $region8: #{transformer_forward.49} parent=1 // pred_region
      _
    $region9: #{transformer_forward.49} parent=1 // pred_fallthru
      _
    // Predicated region
    $region10: #{transformer_forward.49} parent=1 // pred_check
      _
    $region11: #{transformer_forward.49} parent=1 // pred_check_branch
      %14 = sbr.rel (0) target = $region13
    $region12: #{transformer_forward.49} parent=1 // pred_region
      _
    $region13: #{transformer_forward.49} parent=1 // pred_fallthru
      _
    %p15 = scmp.eq.s32.totalorder 0, 0
    // Predicated region
    $region14: #{transformer_forward.49} parent=1 // pred_check
      %p16 = pneg %p15
    $region15: #{transformer_forward.49} parent=1 // pred_check_branch
      %18 = sbr.rel (%p16) target = $region17
    $region16: #{transformer_forward.49} parent=1 // pred_region
      %19 = vst [vmem:[#allocation2] sm:$0xff] 0.0
      %20 = vst [vmem:[#allocation2 + $0x8] sm:$0xff] 0.0
      %21 = vst [vmem:[#allocation2 + $0x10] sm:$0xff] 0.0
      %22 = vst [vmem:[#allocation2 + $0x18] sm:$0xff] 0.0
      %23 = vst [vmem:[#allocation2 + $0x20] sm:$0xff] 0.0
      %24 = vst [vmem:[#allocation2 + $0x28] sm:$0xff] 0.0
      %25 = vst [vmem:[#allocation2 + $0x30] sm:$0xff] 0.0
      %26 = vst [vmem:[#allocation2 + $0x38] sm:$0xff] 0.0
    $region17: #{transformer_forward.49} parent=1 // pred_fallthru
      _
    %v27 = vld [vmem:[#allocation2] sm:$0xff]
    %v28 = vld [vmem:[#allocation2 + $0x8] sm:$0xff]
    %v29 = vld [vmem:[#allocation2 + $0x10] sm:$0xff]
    %v30 = vld [vmem:[#allocation2 + $0x18] sm:$0xff]
    %v31 = vld [vmem:[#allocation2 + $0x20] sm:$0xff]
    %v32 = vld [vmem:[#allocation2 + $0x28] sm:$0xff]
    %v33 = vld [vmem:[#allocation2 + $0x30] sm:$0xff]
    %v34 = vld [vmem:[#allocation2 + $0x38] sm:$0xff]
    %v35 = vld [vmem:[%s0] sm:$0xf]
    %v36 = vld [vmem:[%s0 + $0x4] sm:$0xf]
    %v37 = vld [vmem:[%s1] sm:$0xff]
    %v38 = vld [vmem:[%s1 + $0x8] sm:$0xff]
    %v39 = vld [vmem:[%s1 + $0x10] sm:$0xff]
    %v40 = vld [vmem:[%s1 + $0x18] sm:$0xff]
    %v41 = vld [vmem:[%s1 + $0x20] sm:$0xff]
    %v42 = vld [vmem:[%s1 + $0x28] sm:$0xff]
    %v43 = vld [vmem:[%s1 + $0x30] sm:$0xff]
    %v44 = vld [vmem:[%s1 + $0x38] sm:$0xff]
    %v45 = vld [vmem:[%s1 + $0x40] sm:$0xff]
    %v46 = vld [vmem:[%s1 + $0x48] sm:$0xff]
    %v47 = vld [vmem:[%s1 + $0x50] sm:$0xff]
    %v48 = vld [vmem:[%s1 + $0x58] sm:$0xff]
    %v49 = vld [vmem:[%s1 + $0x60] sm:$0xff]
    %v50 = vld [vmem:[%s1 + $0x68] sm:$0xff]
    %v51 = vld [vmem:[%s1 + $0x70] sm:$0xff]
    %v52 = vld [vmem:[%s1 + $0x78] sm:$0xff]
    %v53 = vld [vmem:[%s1 + $0x80] sm:$0xff]
    %v54 = vld [vmem:[%s1 + $0x88] sm:$0xff]
    %v55 = vld [vmem:[%s1 + $0x90] sm:$0xff]
    %v56 = vld [vmem:[%s1 + $0x98] sm:$0xff]
    %v57 = vld [vmem:[%s1 + $0xa0] sm:$0xff]
    %v58 = vld [vmem:[%s1 + $0xa8] sm:$0xff]
    %v59 = vld [vmem:[%s1 + $0xb0] sm:$0xff]
    %v60 = vld [vmem:[%s1 + $0xb8] sm:$0xff]
    %v61 = vld [vmem:[%s1 + $0xc0] sm:$0xff]
    %v62 = vld [vmem:[%s1 + $0xc8] sm:$0xff]
    %v63 = vld [vmem:[%s1 + $0xd0] sm:$0xff]
    %v64 = vld [vmem:[%s1 + $0xd8] sm:$0xff]
    %v65 = vld [vmem:[%s1 + $0xe0] sm:$0xff]
    %v66 = vld [vmem:[%s1 + $0xe8] sm:$0xff]
    %v67 = vld [vmem:[%s1 + $0xf0] sm:$0xff]
    %v68 = vld [vmem:[%s1 + $0xf8] sm:$0xff]
    %v71 = vunpack.c.l.b16 %v35
    %v72 = vunpack.c.l.b16 %v36
    %v73 = vpack.c.b16 %v72, %v71
    %v107 = vunpack.c.l.b16 %v37
    %v108 = vunpack.c.h.b16 %v37
    %v109 = vunpack.c.l.b16 %v38
    %v110 = vunpack.c.h.b16 %v38
    %v111 = vunpack.c.l.b16 %v39
    %v112 = vunpack.c.h.b16 %v39
    %v113 = vunpack.c.l.b16 %v40
    %v114 = vunpack.c.h.b16 %v40
    %v115 = vunpack.c.l.b16 %v41
    %v116 = vunpack.c.h.b16 %v41
    %v117 = vunpack.c.l.b16 %v42
    %v118 = vunpack.c.h.b16 %v42
    %v119 = vunpack.c.l.b16 %v43
    %v120 = vunpack.c.h.b16 %v43
    %v121 = vunpack.c.l.b16 %v44
    %v122 = vunpack.c.h.b16 %v44
    %v123 = vunpack.c.l.b16 %v45
    %v124 = vunpack.c.h.b16 %v45
    %v125 = vunpack.c.l.b16 %v46
    %v126 = vunpack.c.h.b16 %v46
    %v127 = vunpack.c.l.b16 %v47
    %v128 = vunpack.c.h.b16 %v47
    %v129 = vunpack.c.l.b16 %v48
    %v130 = vunpack.c.h.b16 %v48
    %v131 = vunpack.c.l.b16 %v49
    %v132 = vunpack.c.h.b16 %v49
    %v133 = vunpack.c.l.b16 %v50
    %v134 = vunpack.c.h.b16 %v50
    %v135 = vunpack.c.l.b16 %v51
    %v136 = vunpack.c.h.b16 %v51
    %v137 = vunpack.c.l.b16 %v52
    %v138 = vunpack.c.h.b16 %v52
    %v139 = vunpack.c.l.b16 %v53
    %v140 = vunpack.c.h.b16 %v53
    %v141 = vunpack.c.l.b16 %v54
    %v142 = vunpack.c.h.b16 %v54
    %v143 = vunpack.c.l.b16 %v55
    %v144 = vunpack.c.h.b16 %v55
    %v145 = vunpack.c.l.b16 %v56
    %v146 = vunpack.c.h.b16 %v56
    %v147 = vunpack.c.l.b16 %v57
    %v148 = vunpack.c.h.b16 %v57
    %v149 = vunpack.c.l.b16 %v58
    %v150 = vunpack.c.h.b16 %v58
    %v151 = vunpack.c.l.b16 %v59
    %v152 = vunpack.c.h.b16 %v59
    %v153 = vunpack.c.l.b16 %v60
    %v154 = vunpack.c.h.b16 %v60
    %v155 = vunpack.c.l.b16 %v61
    %v156 = vunpack.c.h.b16 %v61
    %v157 = vunpack.c.l.b16 %v62
    %v158 = vunpack.c.h.b16 %v62
    %v159 = vunpack.c.l.b16 %v63
    %v160 = vunpack.c.h.b16 %v63
    %v161 = vunpack.c.l.b16 %v64
    %v162 = vunpack.c.h.b16 %v64
    %v163 = vunpack.c.l.b16 %v65
    %v164 = vunpack.c.h.b16 %v65
    %v165 = vunpack.c.l.b16 %v66
    %v166 = vunpack.c.h.b16 %v66
    %v167 = vunpack.c.l.b16 %v67
    %v168 = vunpack.c.h.b16 %v67
    %v169 = vunpack.c.l.b16 %v68
    %v170 = vunpack.c.h.b16 %v68
    %v171 = vpack.c.b16 %v111, %v107
    %v172 = vpack.c.b16 %v112, %v108
    %v173 = vpack.c.b16 %v113, %v109
    %v174 = vpack.c.b16 %v114, %v110
    %v175 = vpack.c.b16 %v119, %v115
    %v176 = vpack.c.b16 %v120, %v116
    %v177 = vpack.c.b16 %v121, %v117
    %v178 = vpack.c.b16 %v122, %v118
    %v179 = vpack.c.b16 %v127, %v123
    %v180 = vpack.c.b16 %v128, %v124
    %v181 = vpack.c.b16 %v129, %v125
    %v182 = vpack.c.b16 %v130, %v126
    %v183 = vpack.c.b16 %v135, %v131
    %v184 = vpack.c.b16 %v136, %v132
    %v185 = vpack.c.b16 %v137, %v133
    %v186 = vpack.c.b16 %v138, %v134
    %v187 = vpack.c.b16 %v143, %v139
    %v188 = vpack.c.b16 %v144, %v140
    %v189 = vpack.c.b16 %v145, %v141
    %v190 = vpack.c.b16 %v146, %v142
    %v191 = vpack.c.b16 %v151, %v147
    %v192 = vpack.c.b16 %v152, %v148
    %v193 = vpack.c.b16 %v153, %v149
    %v194 = vpack.c.b16 %v154, %v150
    %v195 = vpack.c.b16 %v159, %v155
    %v196 = vpack.c.b16 %v160, %v156
    %v197 = vpack.c.b16 %v161, %v157
    %v198 = vpack.c.b16 %v162, %v158
    %v199 = vpack.c.b16 %v167, %v163
    %v200 = vpack.c.b16 %v168, %v164
    %v201 = vpack.c.b16 %v169, %v165
    %v202 = vpack.c.b16 %v170, %v166
    %235 = vmatpush.bf16.msra.mxu0 %v199
    %236 = vmatpush.bf16.msra.mxu0 %v195
    %237 = vmatpush.bf16.msra.mxu0 %v191
    %238 = vmatpush.bf16.msra.mxu0 %v187
    %239 = vmatpush.bf16.msra.mxu0 %v183
    %240 = vmatpush.bf16.msra.mxu0 %v179
    %241 = vmatpush.bf16.msra.mxu0 %v175
    %242 = vmatpush.bf16.msra.mxu0 %v171
    %243 = vmatmul.bf16.gmra.mxu0 %v73
    %v244 = vpop.f32.mrf.mxu0
    %v245 = vadd.f32 0.0, %v244
    %v246 = vpop.f32.mrf.mxu0
    %v247 = vadd.f32 0.0, %v246
    %248 = vdwg.mxu0
    %249 = vmatpush.bf16.msra.mxu0 %v200
    %250 = vmatpush.bf16.msra.mxu0 %v196
    %251 = vmatpush.bf16.msra.mxu0 %v192
    %252 = vmatpush.bf16.msra.mxu0 %v188
    %253 = vmatpush.bf16.msra.mxu0 %v184
    %254 = vmatpush.bf16.msra.mxu0 %v180
    %255 = vmatpush.bf16.msra.mxu0 %v176
    %256 = vmatpush.bf16.msra.mxu0 %v172
    %257 = vmatmul.bf16.gmra.mxu0 %v73
    %v258 = vpop.f32.mrf.mxu0
    %v259 = vadd.f32 0.0, %v258
    %v260 = vpop.f32.mrf.mxu0
    %v261 = vadd.f32 0.0, %v260
    %262 = vdwg.mxu0
    %263 = vmatpush.bf16.msra.mxu0 %v201
    %264 = vmatpush.bf16.msra.mxu0 %v197
    %265 = vmatpush.bf16.msra.mxu0 %v193
    %266 = vmatpush.bf16.msra.mxu0 %v189
    %267 = vmatpush.bf16.msra.mxu0 %v185
    %268 = vmatpush.bf16.msra.mxu0 %v181
    %269 = vmatpush.bf16.msra.mxu0 %v177
    %270 = vmatpush.bf16.msra.mxu0 %v173
    %271 = vmatmul.bf16.gmra.mxu0 %v73
    %v272 = vpop.f32.mrf.mxu0
    %v273 = vadd.f32 0.0, %v272
    %v274 = vpop.f32.mrf.mxu0
    %v275 = vadd.f32 0.0, %v274
    %276 = vdwg.mxu0
    %277 = vmatpush.bf16.msra.mxu0 %v202
    %278 = vmatpush.bf16.msra.mxu0 %v198
    %279 = vmatpush.bf16.msra.mxu0 %v194
    %280 = vmatpush.bf16.msra.mxu0 %v190
    %281 = vmatpush.bf16.msra.mxu0 %v186
    %282 = vmatpush.bf16.msra.mxu0 %v182
    %283 = vmatpush.bf16.msra.mxu0 %v178
    %284 = vmatpush.bf16.msra.mxu0 %v174
    %285 = vmatmul.bf16.gmra.mxu0 %v73
    %v286 = vpop.f32.mrf.mxu0
    %v287 = vadd.f32 0.0, %v286
    %v288 = vpop.f32.mrf.mxu0
    %v289 = vadd.f32 0.0, %v288
    %290 = vdwg.mxu0
    %v291 = vadd.f32 %v27, %v245
    %v292 = vadd.f32 %v28, %v259
    %v293 = vadd.f32 %v29, %v273
    %v294 = vadd.f32 %v30, %v287
    %v295 = vadd.f32 %v31, %v247
    %v296 = vadd.f32 %v32, %v261
    %v297 = vadd.f32 %v33, %v275
    %v298 = vadd.f32 %v34, %v289
    %299 = vst [vmem:[#allocation2] sm:$0xff] %v291
    %300 = vst [vmem:[#allocation2 + $0x8] sm:$0xff] %v292
    %301 = vst [vmem:[#allocation2 + $0x10] sm:$0xff] %v293
    %302 = vst [vmem:[#allocation2 + $0x18] sm:$0xff] %v294
    %303 = vst [vmem:[#allocation2 + $0x20] sm:$0xff] %v295
    %304 = vst [vmem:[#allocation2 + $0x28] sm:$0xff] %v296
    %305 = vst [vmem:[#allocation2 + $0x30] sm:$0xff] %v297
    %306 = vst [vmem:[#allocation2 + $0x38] sm:$0xff] %v298
    // Predicated region
    $region18: #{transformer_forward.49} parent=1 // pred_check
      %p307 = pneg %p15
    $region19: #{transformer_forward.49} parent=1 // pred_check_branch
      %309 = sbr.rel (%p307) target = $region21
    $region20: #{transformer_forward.49} parent=1 // pred_region
      %v310 = vld [vmem:[#allocation2] sm:$0xff]
      %v311 = vld [vmem:[#allocation2 + $0x8] sm:$0xff]
      %v312 = vld [vmem:[#allocation2 + $0x10] sm:$0xff]
      %v313 = vld [vmem:[#allocation2 + $0x18] sm:$0xff]
      %v314 = vld [vmem:[#allocation2 + $0x20] sm:$0xff]
      %v315 = vld [vmem:[#allocation2 + $0x28] sm:$0xff]
      %v316 = vld [vmem:[#allocation2 + $0x30] sm:$0xff]
      %v317 = vld [vmem:[#allocation2 + $0x38] sm:$0xff]
      %v318 = vld [vmem:[%s2] sm:$0xf]
      %v320 = vperm.slane %v318, 0
      %v321 = vperm.slane %v318, 1
      %v322 = vperm.slane %v318, 2
      %v323 = vperm.slane %v318, 3
      %v328 = vadd.f32 %v310, %v320
      %v329 = vadd.f32 %v311, %v321
      %v330 = vadd.f32 %v312, %v322
      %v331 = vadd.f32 %v313, %v323
      %v332 = vadd.f32 %v314, %v320
      %v333 = vadd.f32 %v315, %v321
      %v334 = vadd.f32 %v316, %v322
      %v335 = vadd.f32 %v317, %v323
      %336 = vst [vmem:[#allocation3] sm:$0xff] %v328
      %337 = vst [vmem:[#allocation3 + $0x8] sm:$0xff] %v329
      %338 = vst [vmem:[#allocation3 + $0x10] sm:$0xff] %v330
      %339 = vst [vmem:[#allocation3 + $0x18] sm:$0xff] %v331
      %340 = vst [vmem:[#allocation3 + $0x20] sm:$0xff] %v332
      %341 = vst [vmem:[#allocation3 + $0x28] sm:$0xff] %v333
      %342 = vst [vmem:[#allocation3 + $0x30] sm:$0xff] %v334
      %343 = vst [vmem:[#allocation3 + $0x38] sm:$0xff] %v335
    $region21: #{transformer_forward.49} parent=1 // pred_fallthru
      _
    // Predicated region
    $region22: #{transformer_forward.49} parent=1 // pred_check
      _
    $region23: #{transformer_forward.49} parent=1 // pred_check_branch
      %345 = sbr.rel (0) target = $region25
    $region24: #{transformer_forward.49} parent=1 // pred_region
      %347 = vsyncadd [#allocation4], 0
      %s348 = sshll.u32 [#allocation3], 4
      %s349 = int_to_ptr.vmem [resolvable:$true] %s348
      %s350 = sshll.u32 %s3, 4
      %s351 = int_to_ptr.hbm [resolvable:$true] %s350
      %356 = dma.vmem_to_hbm [thread:$0]  %s349, 1024, %s351, [#allocation4], 512, 512, 32
    $region25: #{transformer_forward.49} parent=1 // pred_fallthru
      _
    // Predicated region
    $region26: #{transformer_forward.49} parent=1 // pred_check
      _
    $region27: #{transformer_forward.49} parent=1 // pred_check_branch
      %358 = sbr.rel (0) target = $region29
    $region28: #{transformer_forward.49} parent=1 // pred_region
      %360 = dma.done [#allocation4], 1024
    $region29: #{transformer_forward.49} parent=1 // pred_fallthru
      _
    %361 = vsyncpa [#allocation4], 1

</llo_original>
